<compile_context>
chip_gen: v7x
topology: tpu7x:2x2x1
jax: 0.10.0
libtpu: 0.0.40
codegen_flags: <defaults>
</compile_context>

<pallas_src>
import functools

import jax
import jax.numpy as jnp
from jax.experimental import pallas as pl
from jax.experimental.pallas import tpu as pltpu


def _lane_concat(pieces):
    """Pairwise concatenation along the last (lane) axis."""
    vals = list(pieces)
    while len(vals) > 1:
        nxt = []
        for a in range(0, len(vals) - 1, 2):
            nxt.append(jnp.concatenate([vals[a], vals[a + 1]], axis=-1))
        if len(vals) % 2:
            nxt.append(vals[-1])
        vals = nxt
    return vals[0]


# --------------------------------------------------------------------------
# Kernel A: all M grouped-conv branches as ONE bf16 MXU matmul over a shared
# im2col.  Outputs raw conv activations (bf16) and per-sample BN partial sums.
# --------------------------------------------------------------------------
def _conv_all_branches_kernel(x_ref, w_ref, b_ref, feas_ref, ssum_ref, ssq_ref,
                              xp_ref, lhs_ref, *, M, H, W, C, NB, Kmax, pad):
    Hp = H + 2 * pad
    Wp = W + 2 * pad

    # Zero only the padded border ring; the interior is fully overwritten each
    # step.  (No cross-step scratch dependency -> "parallel" axis stays safe.)
    if pad > 0:
        xp_ref[:, 0:pad, :, :] = jnp.zeros((NB, pad, Wp, C), xp_ref.dtype)
        xp_ref[:, pad + H:Hp, :, :] = jnp.zeros((NB, pad, Wp, C), xp_ref.dtype)
        xp_ref[:, :, 0:pad, :] = jnp.zeros((NB, Hp, pad, C), xp_ref.dtype)
        xp_ref[:, :, pad + W:Wp, :] = jnp.zeros((NB, Hp, pad, C), xp_ref.dtype)
    xp_ref[:, pad:pad + H, pad:pad + W, :] = x_ref[...]

    # Shared im2col for the largest window.  Taps are packed into 128-lane
    # chunks so the lhs stores are unmasked, 128-aligned full-lane stores.
    taps = [(t // Kmax, t % Kmax) for t in range(Kmax * Kmax)]
    chunk = 128 // C if (C <= 128 and 128 % C == 0) else 1
    for t0 in range(0, Kmax * Kmax, chunk):
        group = taps[t0:t0 + chunk]
        pieces = [xp_ref[:, dy:dy + H, dx:dx + W, :].reshape(NB * H * W, C)
                  for (dy, dx) in group]
        packed = _lane_concat(pieces)
        lhs_ref[:, t0 * C:(t0 + len(group)) * C] = packed.astype(lhs_ref.dtype)

    # One bf16 matmul for all branches: Kmax*Kmax*C-deep, M*C-wide, f32 acc.
    acc = jnp.dot(lhs_ref[...], w_ref[...], preferred_element_type=jnp.float32)
    acc = acc + b_ref[0, :][None, :]

    for m in range(M):
        a = acc[:, m * C:(m + 1) * C].reshape(NB, H * W, C)
        # Per-sample BN partial statistics (f32); reduced over N in JAX so the
        # batch grid axis can stay "parallel".
        ssum_ref[:, m, :] = jnp.sum(a, axis=1)
        ssq_ref[:, m, :] = jnp.sum(a * a, axis=1)
        # bf16 storage of the raw conv output (largest intermediate).
        feas_ref[m] = a.astype(feas_ref.dtype)


def _conv_branches(x_nhwc, w_big, b_big, Kmax, nb, M):
    N, H, W, C = x_nhwc.shape
    pad = (Kmax - 1) // 2
    Hp, Wp = H + 2 * pad, W + 2 * pad

    kern = functools.partial(_conv_all_branches_kernel, M=M, H=H, W=W, C=C,
                             NB=nb, Kmax=Kmax, pad=pad)
    feas, ssum, ssq = pl.pallas_call(
        kern,
        out_shape=(
            jax.ShapeDtypeStruct((M, N, H * W, C), jnp.bfloat16),
            jax.ShapeDtypeStruct((N, M, C), jnp.float32),
            jax.ShapeDtypeStruct((N, M, C), jnp.float32),
        ),
        grid=(N // nb,),
        in_specs=[
            pl.BlockSpec((nb, H, W, C), lambda i: (i, 0, 0, 0)),
            pl.BlockSpec((Kmax * Kmax * C, M * C), lambda i: (0, 0)),
            pl.BlockSpec((1, M * C), lambda i: (0, 0)),
        ],
        out_specs=[
            pl.BlockSpec((M, nb, H * W, C), lambda i: (0, i, 0, 0)),
            pl.BlockSpec((nb, M, C), lambda i: (i, 0, 0)),
            pl.BlockSpec((nb, M, C), lambda i: (i, 0, 0)),
        ],
        scratch_shapes=[
            pltpu.VMEM((nb, Hp, Wp, C), jnp.float32),          # padded input
            pltpu.VMEM((nb * H * W, Kmax * Kmax * C), jnp.bfloat16),  # im2col
        ],
        compiler_params=pltpu.CompilerParams(
            dimension_semantics=("parallel",),
            vmem_limit_bytes=48 * 1024 * 1024),
    )(x_nhwc, w_big, b_big)
    return feas, ssum, ssq


# --------------------------------------------------------------------------
# Kernel B: BN + ReLU per branch, branch sum, partial (over H) pool.
# Lane-dense: everything lives on a (NB, H, W*C) view.
# --------------------------------------------------------------------------
def _fuse_pool_kernel(feas_ref, scale_ref, shift_ref, s_ref, *, M, NB, H, WC):
    def branch(m):
        x = feas_ref[m].astype(jnp.float32)          # bf16 storage -> f32 math
        return jnp.maximum(
            x * scale_ref[m][None, None, :] + shift_ref[m][None, None, :], 0.0)

    u = branch(0)
    for m in range(1, M):
        u = u + branch(m)
    s_ref[...] = jnp.sum(u, axis=1)                  # (NB, W*C); W-fold in JAX


# --------------------------------------------------------------------------
# Kernel D: fc -> fused per-branch fcs -> softmax over branches.
# --------------------------------------------------------------------------
def _attention_kernel(fs_ref, wfc_ref, bfc_ref, wfcs_ref, bfcs_ref, o_ref,
                      *, M, C):
    z = jnp.dot(fs_ref[...], wfc_ref[...],
                preferred_element_type=jnp.float32) + bfc_ref[0, :][None, :]
    logits = (jnp.dot(z, wfcs_ref[...], preferred_element_type=jnp.float32)
              + bfcs_ref[0, :][None, :])                       # (N, M*C)
    mx = logits[:, 0:C]
    for m in range(1, M):
        mx = jnp.maximum(mx, logits[:, m * C:(m + 1) * C])
    es = [jnp.exp(logits[:, m * C:(m + 1) * C] - mx) for m in range(M)]
    den = es[0]
    for m in range(1, M):
        den = den + es[m]
    inv = pl.reciprocal(den, approx=True)
    for m in range(M):
        o_ref[:, m, :] = es[m] * inv


# --------------------------------------------------------------------------
# Kernel C: attention-weighted branch sum (BN+ReLU recomputed elementwise).
# attn (N, M, C) is broadcast to the lane-dense (W*C) layout in-kernel with a
# tiny MXU matmul against a constant 0/1 tiling matrix.
# --------------------------------------------------------------------------
def _weighted_sum_kernel(feas_ref, scale_ref, shift_ref, attn_ref, tile_ref,
                         o_ref, *, M, NB, H, WC, C):
    a2 = attn_ref[...].reshape(NB * M, C)
    aw = jnp.dot(a2, tile_ref[...],
                 preferred_element_type=jnp.float32).reshape(NB, M, WC)

    def branch(m):
        x = feas_ref[m].astype(jnp.float32)
        f = jnp.maximum(
            x * scale_ref[m][None, None, :] + shift_ref[m][None, None, :], 0.0)
        return f * aw[:, m, :][:, None, :]

    acc = branch(0)
    for m in range(1, M):
        acc = acc + branch(m)
    o_ref[...] = acc


# --------------------------------------------------------------------------
# Parameters & forward wrapper
# --------------------------------------------------------------------------
def _expand_grouped_weight(w, G):
    # w: (Cout, Cin//G, K, K) -> block-diagonal dense (K, K, Cin, Cout)
    Cout, cin_g, K, _ = w.shape
    C = Cout
    gs = C // G
    dense = jnp.zeros((K, K, C, C), jnp.float32)
    for g in range(G):
        blk = w[g * gs:(g + 1) * gs]               # (gs_out, gs_in, K, K)
        blk = jnp.transpose(blk, (2, 3, 1, 0))     # (K, K, gs_in, gs_out)
        dense = dense.at[:, :, g * gs:(g + 1) * gs,
                         g * gs:(g + 1) * gs].set(blk)
    return dense


def init_skconv_params(key, features, M, G, r, L=32):
    d = max(int(features / r), L)
    cin_g = features // G
    p = {"M": M, "G": G, "d": d, "features": features,
         "conv_w": [], "conv_b": [], "bn_gamma": [], "bn_beta": [],
         "fcs_w": [], "fcs_b": []}
    for i in range(M):
        k = 3 + 2 * i
        key, k1, k2 = jax.random.split(key, 3)
        fan_in = cin_g * k * k
        p["conv_w"].append(
            jax.random.normal(k1, (features, cin_g, k, k), jnp.float32)
            / jnp.sqrt(float(fan_in)))
        p["conv_b"].append(
            jax.random.normal(k2, (features,), jnp.float32) * 0.01)
        p["bn_gamma"].append(jnp.ones((features,), jnp.float32))
        p["bn_beta"].append(jnp.zeros((features,), jnp.float32))
    key, k1, k2 = jax.random.split(key, 3)
    p["fc_w"] = jax.random.normal(k1, (d, features), jnp.float32) / jnp.sqrt(
        float(features))
    p["fc_b"] = jax.random.normal(k2, (d,), jnp.float32) * 0.01
    for i in range(M):
        key, k1, k2 = jax.random.split(key, 3)
        p["fcs_w"].append(
            jax.random.normal(k1, (features, d), jnp.float32) / jnp.sqrt(float(d)))
        p["fcs_b"].append(
            jax.random.normal(k2, (features,), jnp.float32) * 0.01)
    return p


def skconv_forward(params, x_nchw, batch_block=1, elem_batch_block=None):
    M, G, d = params["M"], params["G"], params["d"]
    x = jnp.transpose(x_nchw, (0, 2, 3, 1)).astype(jnp.float32)    # NHWC
    N, H, W, C = x.shape
    nb = batch_block                         # Kernel A block (VMEM-bound)
    nbe = elem_batch_block or batch_block    # Kernels B/C block (HBM-bound)
    assert N % nb == 0 and N % nbe == 0
    WC = W * C
    eps = 1e-5
    count = float(N * H * W)

    ks = [3 + 2 * m for m in range(M)]
    Kmax = max(ks)

    # Fused conv RHS: (Kmax*Kmax*C, M*C) bf16; taps outside a smaller kernel's
    # centered window get zero rows.  Fused bias (1, M*C).
    w4 = jnp.zeros((Kmax, Kmax, C, M * C), jnp.float32)
    for m in range(M):
        K = ks[m]
        off = (Kmax - K) // 2
        dense = _expand_grouped_weight(params["conv_w"][m], G)     # (K,K,C,C)
        w4 = w4.at[off:off + K, off:off + K, :, m * C:(m + 1) * C].set(dense)
    w_big = w4.reshape(Kmax * Kmax * C, M * C).astype(jnp.bfloat16)
    b_big = jnp.concatenate(
        [params["conv_b"][m] for m in range(M)]).reshape(1, M * C)

    # ---- Kernel A: fused conv branches + per-sample BN stats ----
    feas, ssum, ssq = _conv_branches(x, w_big, b_big, Kmax, nb, M)
    # Free, contiguous re-view to the lane-dense layout used by kernels B/C.
    feas_wide = feas.reshape(M, N, H, WC)

    # Training-mode BatchNorm statistics (biased variance), reduced in JAX.
    mean = jnp.sum(ssum, axis=0) / count                           # (M, C)
    var = jnp.maximum(jnp.sum(ssq, axis=0) / count - mean * mean, 0.0)
    gamma = jnp.stack(params["bn_gamma"], axis=0)
    beta = jnp.stack(params["bn_beta"], axis=0)
    scale = gamma / jnp.sqrt(var + eps)                            # (M, C)
    shift = beta - mean * scale
    scale_w = jnp.tile(scale, (1, W))                              # (M, W*C)
    shift_w = jnp.tile(shift, (1, W))

    # ---- Kernel B: fea_s = mean_{H,W}( sum_m relu(bn(conv_m(x))) ) ----
    fea_s_wide = pl.pallas_call(
        functools.partial(_fuse_pool_kernel, M=M, NB=nbe, H=H, WC=WC),
        out_shape=jax.ShapeDtypeStruct((N, WC), jnp.float32),
        grid=(N // nbe,),
        in_specs=[
            pl.BlockSpec((M, nbe, H, WC), lambda i: (0, i, 0, 0)),
            pl.BlockSpec((M, WC), lambda i: (0, 0)),
            pl.BlockSpec((M, WC), lambda i: (0, 0)),
        ],
        out_specs=pl.BlockSpec((nbe, WC), lambda i: (i, 0)),
        compiler_params=pltpu.CompilerParams(
            dimension_semantics=("parallel",)),
    )(feas_wide, scale_w, shift_w)
    fea_s = jnp.sum(fea_s_wide.reshape(N, W, C), axis=1) / float(H * W)

    # ---- Kernel D: attention = softmax_m( fcs_m( fc(fea_s) ) ) ----
    wfc_t = params["fc_w"].T                                       # (C, d)
    wfcs_cat = jnp.concatenate([w.T for w in params["fcs_w"]], axis=1)  # (d,M*C)
    bfcs_cat = jnp.concatenate(params["fcs_b"]).reshape(1, M * C)
    attn = pl.pallas_call(
        functools.partial(_attention_kernel, M=M, C=C),
        out_shape=jax.ShapeDtypeStruct((N, M, C), jnp.float32),
        grid=(1,),
        in_specs=[
            pl.BlockSpec((N, C), lambda i: (0, 0)),
            pl.BlockSpec((C, d), lambda i: (0, 0)),
            pl.BlockSpec((1, d), lambda i: (0, 0)),
            pl.BlockSpec((d, M * C), lambda i: (0, 0)),
            pl.BlockSpec((1, M * C), lambda i: (0, 0)),
        ],
        out_specs=pl.BlockSpec((N, M, C), lambda i: (0, 0, 0)),
        compiler_params=pltpu.CompilerParams(
            dimension_semantics=("arbitrary",)),
    )(fea_s, wfc_t, params["fc_b"].reshape(1, d), wfcs_cat, bfcs_cat)

    # Constant 0/1 matrix that tiles a (*, C) row into the (W*C) lane layout.
    tilemat = jnp.tile(jnp.eye(C, dtype=jnp.float32), (1, W))      # (C, W*C)

    # ---- Kernel C: fea_v = sum_m attn_m * relu(bn(conv_m(x))) ----
    fea_v = pl.pallas_call(
        functools.partial(_weighted_sum_kernel, M=M, NB=nbe, H=H, WC=WC, C=C),
        out_shape=jax.ShapeDtypeStruct((N, H, WC), jnp.float32),
        grid=(N // nbe,),
        in_specs=[
            pl.BlockSpec((M, nbe, H, WC), lambda i: (0, i, 0, 0)),
            pl.BlockSpec((M, WC), lambda i: (0, 0)),
            pl.BlockSpec((M, WC), lambda i: (0, 0)),
            pl.BlockSpec((nbe, M, C), lambda i: (i, 0, 0)),
            pl.BlockSpec((C, WC), lambda i: (0, 0)),
        ],
        out_specs=pl.BlockSpec((nbe, H, WC), lambda i: (i, 0, 0)),
        compiler_params=pltpu.CompilerParams(
            dimension_semantics=("parallel",)),
    )(feas_wide, scale_w, shift_w, attn, tilemat)

    fea_v = fea_v.reshape(N, H, W, C)
    return jnp.transpose(fea_v, (0, 3, 1, 2))                      # NCHW


# --------------------------------------------------------------------------
# Pure-JAX reference (training-mode BN), for a loose numerical check.
# --------------------------------------------------------------------------
def _reference_forward(params, x_nchw):
    M, G = params["M"], params["G"]
    x = x_nchw.astype(jnp.float32)
    eps = 1e-5
    feas = []
    for m in range(M):
        pad = 1 + m
        y = jax.lax.conv_general_dilated(
            x, params["conv_w"][m], window_strides=(1, 1),
            padding=[(pad, pad), (pad, pad)],
            dimension_numbers=("NCHW", "OIHW", "NCHW"),
            feature_group_count=G)
        y = y + params["conv_b"][m][None, :, None, None]
        mean = jnp.mean(y, axis=(0, 2, 3))
        var = jnp.mean((y - mean[None, :, None, None]) ** 2, axis=(0, 2, 3))
        y = (y - mean[None, :, None, None]) / jnp.sqrt(
            var + eps)[None, :, None, None]
        y = (y * params["bn_gamma"][m][None, :, None, None]
             + params["bn_beta"][m][None, :, None, None])
        feas.append(jnp.maximum(y, 0.0))
    feas = jnp.stack(feas, axis=1)                       # (N, M, C, H, W)
    fea_s = jnp.mean(jnp.sum(feas, axis=1), axis=(2, 3))  # (N, C)
    fea_z = fea_s @ params["fc_w"].T + params["fc_b"]
    att = jnp.stack([fea_z @ params["fcs_w"][m].T + params["fcs_b"][m]
                     for m in range(M)], axis=1)          # (N, M, C)
    att = jax.nn.softmax(att, axis=1)
    return jnp.sum(feas * att[:, :, :, None, None], axis=1)


if __name__ == "__main__":
    key = jax.random.PRNGKey(0)
    N, features, HW = 2, 32, 16
    M, G, r = 2, 4, 2            # d = max(features // r, 32) = 32

    key, kx, kp = jax.random.split(key, 3)
    x = jax.random.normal(kx, (N, features, HW, HW), jnp.float32)
    params = init_skconv_params(kp, features, M, G, r)

    out = skconv_forward(params, x)
    out = jax.block_until_ready(out)
    assert out.shape == (N, features, HW, HW), out.shape
    assert bool(jnp.all(jnp.isfinite(out)))

    # Loose tolerance: the conv runs with bf16 MXU inputs, feas is stored in
    # bf16 and the softmax uses the approximate EUP reciprocal.
    ref = _reference_forward(params, x)
    assert bool(jnp.allclose(out, ref, rtol=7.5e-2, atol=7.5e-2)), (
        float(jnp.max(jnp.abs(out - ref))))
    print("KERNEL_OK")
</pallas_src>

<mosaic_0001>
module attributes {stable_mosaic.version = 11 : i64} {
  func.func @_conv_all_branches_kernel(%arg0: i32, %arg1: memref<1x16x16x32xf32, #tpu.memory_space<vmem>>, %arg2: memref<800x64xbf16, #tpu.memory_space<vmem>>, %arg3: memref<1x64xf32, #tpu.memory_space<vmem>>, %arg4: memref<2x1x256x32xbf16, #tpu.memory_space<vmem>>, %arg5: memref<1x2x32xf32, #tpu.memory_space<vmem>>, %arg6: memref<1x2x32xf32, #tpu.memory_space<vmem>>, %arg7: memref<1x20x20x32xf32, #tpu.memory_space<vmem>>, %arg8: memref<256x800xbf16, #tpu.memory_space<vmem>>) attributes {dimension_semantics = [#tpu.dimension_semantics<parallel>], iteration_bounds = array<i64: 2>, scalar_prefetch = 0 : i64, scratch_operands = 2 : i64, tpu.core_type = #tpu.core_type<tc>, window_params = [{transform_indices = @transform_0, window_bounds = array<i64: 1, 16, 16, 32>}, {pipeline_mode = #tpu.pipeline_mode<synchronous>, transform_indices = @transform_1, window_bounds = array<i64: 800, 64>}, {pipeline_mode = #tpu.pipeline_mode<synchronous>, transform_indices = @transform_2, window_bounds = array<i64: 1, 64>}, {transform_indices = @transform_3, window_bounds = array<i64: 2, 1, 256, 32>}, {transform_indices = @transform_4, window_bounds = array<i64: 1, 2, 32>}, {transform_indices = @transform_5, window_bounds = array<i64: 1, 2, 32>}]} {
    %cst = arith.constant 0.000000e+00 : f32
    %0 = vector.broadcast %cst : f32 to vector<1x2x20x32xf32>
    %c0 = arith.constant 0 : index
    %c0_0 = arith.constant 0 : index
    %c0_1 = arith.constant 0 : index
    %c0_2 = arith.constant 0 : index
    %1 = vector.load %arg7[%c0, %c0_0, %c0_1, %c0_2] : memref<1x20x20x32xf32, #tpu.memory_space<vmem>>, vector<1x2x20x32xf32>
    tpu.vector_store %arg7[%c0, %c0_0, %c0_1, %c0_2], %0 {strides = array<i32>} : memref<1x20x20x32xf32, #tpu.memory_space<vmem>>, vector<1x2x20x32xf32>,
    %cst_3 = arith.constant 0.000000e+00 : f32
    %2 = vector.broadcast %cst_3 : f32 to vector<1x2x20x32xf32>
    %c0_4 = arith.constant 0 : index
    %c18 = arith.constant 18 : index
    %c0_5 = arith.constant 0 : index
    %c0_6 = arith.constant 0 : index
    %3 = vector.load %arg7[%c0_4, %c18, %c0_5, %c0_6] : memref<1x20x20x32xf32, #tpu.memory_space<vmem>>, vector<1x2x20x32xf32>
    tpu.vector_store %arg7[%c0_4, %c18, %c0_5, %c0_6], %2 {strides = array<i32>} : memref<1x20x20x32xf32, #tpu.memory_space<vmem>>, vector<1x2x20x32xf32>,
    %cst_7 = arith.constant 0.000000e+00 : f32
    %4 = vector.broadcast %cst_7 : f32 to vector<1x20x2x32xf32>
    %c0_8 = arith.constant 0 : index
    %c0_9 = arith.constant 0 : index
    %c0_10 = arith.constant 0 : index
    %c0_11 = arith.constant 0 : index
    %5 = vector.load %arg7[%c0_8, %c0_9, %c0_10, %c0_11] : memref<1x20x20x32xf32, #tpu.memory_space<vmem>>, vector<1x20x2x32xf32>
    tpu.vector_store %arg7[%c0_8, %c0_9, %c0_10, %c0_11], %4 {strides = array<i32>} : memref<1x20x20x32xf32, #tpu.memory_space<vmem>>, vector<1x20x2x32xf32>,
    %cst_12 = arith.constant 0.000000e+00 : f32
    %6 = vector.broadcast %cst_12 : f32 to vector<1x20x2x32xf32>
    %c0_13 = arith.constant 0 : index
    %c0_14 = arith.constant 0 : index
    %c18_15 = arith.constant 18 : index
    %c0_16 = arith.constant 0 : index
    %7 = vector.load %arg7[%c0_13, %c0_14, %c18_15, %c0_16] : memref<1x20x20x32xf32, #tpu.memory_space<vmem>>, vector<1x20x2x32xf32>
    tpu.vector_store %arg7[%c0_13, %c0_14, %c18_15, %c0_16], %6 {strides = array<i32>} : memref<1x20x20x32xf32, #tpu.memory_space<vmem>>, vector<1x20x2x32xf32>,
    %c0_17 = arith.constant 0 : index
    %c0_18 = arith.constant 0 : index
    %c0_19 = arith.constant 0 : index
    %c0_20 = arith.constant 0 : index
    %8 = vector.load %arg1[%c0_17, %c0_18, %c0_19, %c0_20] : memref<1x16x16x32xf32, #tpu.memory_space<vmem>>, vector<1x16x16x32xf32>
    %c0_21 = arith.constant 0 : index
    %c2 = arith.constant 2 : index
    %c2_22 = arith.constant 2 : index
    %c0_23 = arith.constant 0 : index
    %9 = vector.load %arg7[%c0_21, %c2, %c2_22, %c0_23] : memref<1x20x20x32xf32, #tpu.memory_space<vmem>>, vector<1x16x16x32xf32>
    tpu.vector_store %arg7[%c0_21, %c2, %c2_22, %c0_23], %8 {strides = array<i32>} : memref<1x20x20x32xf32, #tpu.memory_space<vmem>>, vector<1x16x16x32xf32>,
    %c0_24 = arith.constant 0 : index
    %c0_25 = arith.constant 0 : index
    %c0_26 = arith.constant 0 : index
    %c0_27 = arith.constant 0 : index
    %10 = vector.load %arg7[%c0_24, %c0_25, %c0_26, %c0_27] : memref<1x20x20x32xf32, #tpu.memory_space<vmem>>, vector<1x16x16x32xf32>
    %11 = vector.shape_cast %10 : vector<1x16x16x32xf32> to vector<256x32xf32>
    %c0_28 = arith.constant 0 : index
    %c0_29 = arith.constant 0 : index
    %c1 = arith.constant 1 : index
    %c0_30 = arith.constant 0 : index
    %12 = vector.load %arg7[%c0_28, %c0_29, %c1, %c0_30] : memref<1x20x20x32xf32, #tpu.memory_space<vmem>>, vector<1x16x16x32xf32>
    %13 = vector.shape_cast %12 : vector<1x16x16x32xf32> to vector<256x32xf32>
    %c0_31 = arith.constant 0 : index
    %c0_32 = arith.constant 0 : index
    %c2_33 = arith.constant 2 : index
    %c0_34 = arith.constant 0 : index
    %14 = vector.load %arg7[%c0_31, %c0_32, %c2_33, %c0_34] : memref<1x20x20x32xf32, #tpu.memory_space<vmem>>, vector<1x16x16x32xf32>
    %15 = vector.shape_cast %14 : vector<1x16x16x32xf32> to vector<256x32xf32>
    %c0_35 = arith.constant 0 : index
    %c0_36 = arith.constant 0 : index
    %c3 = arith.constant 3 : index
    %c0_37 = arith.constant 0 : index
    %16 = vector.load %arg7[%c0_35, %c0_36, %c3, %c0_37] : memref<1x20x20x32xf32, #tpu.memory_space<vmem>>, vector<1x16x16x32xf32>
    %17 = vector.shape_cast %16 : vector<1x16x16x32xf32> to vector<256x32xf32>
    %18 = tpu.concatenate %11, %13 in 1 : vector<256x32xf32>, vector<256x32xf32> -> vector<256x64xf32>
    %19 = tpu.concatenate %15, %17 in 1 : vector<256x32xf32>, vector<256x32xf32> -> vector<256x64xf32>
    %20 = tpu.concatenate %18, %19 in 1 : vector<256x64xf32>, vector<256x64xf32> -> vector<256x128xf32>
    %21 = arith.truncf %20 : vector<256x128xf32> to vector<256x128xbf16>
    %c0_38 = arith.constant 0 : index
    %c0_39 = arith.constant 0 : index
    %22 = vector.load %arg8[%c0_38, %c0_39] : memref<256x800xbf16, #tpu.memory_space<vmem>>, vector<256x128xbf16>
    tpu.vector_store %arg8[%c0_38, %c0_39], %21 {strides = array<i32>} : memref<256x800xbf16, #tpu.memory_space<vmem>>, vector<256x128xbf16>,
    %c0_40 = arith.constant 0 : index
    %c0_41 = arith.constant 0 : index
    %c4 = arith.constant 4 : index
    %c0_42 = arith.constant 0 : index
    %23 = vector.load %arg7[%c0_40, %c0_41, %c4, %c0_42] : memref<1x20x20x32xf32, #tpu.memory_space<vmem>>, vector<1x16x16x32xf32>
    %24 = vector.shape_cast %23 : vector<1x16x16x32xf32> to vector<256x32xf32>
    %c0_43 = arith.constant 0 : index
    %c1_44 = arith.constant 1 : index
    %c0_45 = arith.constant 0 : index
    %c0_46 = arith.constant 0 : index
    %25 = vector.load %arg7[%c0_43, %c1_44, %c0_45, %c0_46] : memref<1x20x20x32xf32, #tpu.memory_space<vmem>>, vector<1x16x16x32xf32>
    %26 = vector.shape_cast %25 : vector<1x16x16x32xf32> to vector<256x32xf32>
    %c0_47 = arith.constant 0 : index
    %c1_48 = arith.constant 1 : index
    %c1_49 = arith.constant 1 : index
    %c0_50 = arith.constant 0 : index
    %27 = vector.load %arg7[%c0_47, %c1_48, %c1_49, %c0_50] : memref<1x20x20x32xf32, #tpu.memory_space<vmem>>, vector<1x16x16x32xf32>
    %28 = vector.shape_cast %27 : vector<1x16x16x32xf32> to vector<256x32xf32>
    %c0_51 = arith.constant 0 : index
    %c1_52 = arith.constant 1 : index
    %c2_53 = arith.constant 2 : index
    %c0_54 = arith.constant 0 : index
    %29 = vector.load %arg7[%c0_51, %c1_52, %c2_53, %c0_54] : memref<1x20x20x32xf32, #tpu.memory_space<vmem>>, vector<1x16x16x32xf32>
    %30 = vector.shape_cast %29 : vector<1x16x16x32xf32> to vector<256x32xf32>
    %31 = tpu.concatenate %24, %26 in 1 : vector<256x32xf32>, vector<256x32xf32> -> vector<256x64xf32>
    %32 = tpu.concatenate %28, %30 in 1 : vector<256x32xf32>, vector<256x32xf32> -> vector<256x64xf32>
    %33 = tpu.concatenate %31, %32 in 1 : vector<256x64xf32>, vector<256x64xf32> -> vector<256x128xf32>
    %34 = arith.truncf %33 : vector<256x128xf32> to vector<256x128xbf16>
    %c0_55 = arith.constant 0 : index
    %c128 = arith.constant 128 : index
    %35 = vector.load %arg8[%c0_55, %c128] : memref<256x800xbf16, #tpu.memory_space<vmem>>, vector<256x128xbf16>
    tpu.vector_store %arg8[%c0_55, %c128], %34 {strides = array<i32>} : memref<256x800xbf16, #tpu.memory_space<vmem>>, vector<256x128xbf16>,
    %c0_56 = arith.constant 0 : index
    %c1_57 = arith.constant 1 : index
    %c3_58 = arith.constant 3 : index
    %c0_59 = arith.constant 0 : index
    %36 = vector.load %arg7[%c0_56, %c1_57, %c3_58, %c0_59] : memref<1x20x20x32xf32, #tpu.memory_space<vmem>>, vector<1x16x16x32xf32>
    %37 = vector.shape_cast %36 : vector<1x16x16x32xf32> to vector<256x32xf32>
    %c0_60 = arith.constant 0 : index
    %c1_61 = arith.constant 1 : index
    %c4_62 = arith.constant 4 : index
    %c0_63 = arith.constant 0 : index
    %38 = vector.load %arg7[%c0_60, %c1_61, %c4_62, %c0_63] : memref<1x20x20x32xf32, #tpu.memory_space<vmem>>, vector<1x16x16x32xf32>
    %39 = vector.shape_cast %38 : vector<1x16x16x32xf32> to vector<256x32xf32>
    %c0_64 = arith.constant 0 : index
    %c2_65 = arith.constant 2 : index
    %c0_66 = arith.constant 0 : index
    %c0_67 = arith.constant 0 : index
    %40 = vector.load %arg7[%c0_64, %c2_65, %c0_66, %c0_67] : memref<1x20x20x32xf32, #tpu.memory_space<vmem>>, vector<1x16x16x32xf32>
    %41 = vector.shape_cast %40 : vector<1x16x16x32xf32> to vector<256x32xf32>
    %c0_68 = arith.constant 0 : index
    %c2_69 = arith.constant 2 : index
    %c1_70 = arith.constant 1 : index
    %c0_71 = arith.constant 0 : index
    %42 = vector.load %arg7[%c0_68, %c2_69, %c1_70, %c0_71] : memref<1x20x20x32xf32, #tpu.memory_space<vmem>>, vector<1x16x16x32xf32>
    %43 = vector.shape_cast %42 : vector<1x16x16x32xf32> to vector<256x32xf32>
    %44 = tpu.concatenate %37, %39 in 1 : vector<256x32xf32>, vector<256x32xf32> -> vector<256x64xf32>
    %45 = tpu.concatenate %41, %43 in 1 : vector<256x32xf32>, vector<256x32xf32> -> vector<256x64xf32>
    %46 = tpu.concatenate %44, %45 in 1 : vector<256x64xf32>, vector<256x64xf32> -> vector<256x128xf32>
    %47 = arith.truncf %46 : vector<256x128xf32> to vector<256x128xbf16>
    %c0_72 = arith.constant 0 : index
    %c256 = arith.constant 256 : index
    %48 = vector.load %arg8[%c0_72, %c256] : memref<256x800xbf16, #tpu.memory_space<vmem>>, vector<256x128xbf16>
    tpu.vector_store %arg8[%c0_72, %c256], %47 {strides = array<i32>} : memref<256x800xbf16, #tpu.memory_space<vmem>>, vector<256x128xbf16>,
    %c0_73 = arith.constant 0 : index
    %c2_74 = arith.constant 2 : index
    %c2_75 = arith.constant 2 : index
    %c0_76 = arith.constant 0 : index
    %49 = vector.load %arg7[%c0_73, %c2_74, %c2_75, %c0_76] : memref<1x20x20x32xf32, #tpu.memory_space<vmem>>, vector<1x16x16x32xf32>
    %50 = vector.shape_cast %49 : vector<1x16x16x32xf32> to vector<256x32xf32>
    %c0_77 = arith.constant 0 : index
    %c2_78 = arith.constant 2 : index
    %c3_79 = arith.constant 3 : index
    %c0_80 = arith.constant 0 : index
    %51 = vector.load %arg7[%c0_77, %c2_78, %c3_79, %c0_80] : memref<1x20x20x32xf32, #tpu.memory_space<vmem>>, vector<1x16x16x32xf32>
    %52 = vector.shape_cast %51 : vector<1x16x16x32xf32> to vector<256x32xf32>
    %c0_81 = arith.constant 0 : index
    %c2_82 = arith.constant 2 : index
    %c4_83 = arith.constant 4 : index
    %c0_84 = arith.constant 0 : index
    %53 = vector.load %arg7[%c0_81, %c2_82, %c4_83, %c0_84] : memref<1x20x20x32xf32, #tpu.memory_space<vmem>>, vector<1x16x16x32xf32>
    %54 = vector.shape_cast %53 : vector<1x16x16x32xf32> to vector<256x32xf32>
    %c0_85 = arith.constant 0 : index
    %c3_86 = arith.constant 3 : index
    %c0_87 = arith.constant 0 : index
    %c0_88 = arith.constant 0 : index
    %55 = vector.load %arg7[%c0_85, %c3_86, %c0_87, %c0_88] : memref<1x20x20x32xf32, #tpu.memory_space<vmem>>, vector<1x16x16x32xf32>
    %56 = vector.shape_cast %55 : vector<1x16x16x32xf32> to vector<256x32xf32>
    %57 = tpu.concatenate %50, %52 in 1 : vector<256x32xf32>, vector<256x32xf32> -> vector<256x64xf32>
    %58 = tpu.concatenate %54, %56 in 1 : vector<256x32xf32>, vector<256x32xf32> -> vector<256x64xf32>
    %59 = tpu.concatenate %57, %58 in 1 : vector<256x64xf32>, vector<256x64xf32> -> vector<256x128xf32>
    %60 = arith.truncf %59 : vector<256x128xf32> to vector<256x128xbf16>
    %c0_89 = arith.constant 0 : index
    %c384 = arith.constant 384 : index
    %61 = vector.load %arg8[%c0_89, %c384] : memref<256x800xbf16, #tpu.memory_space<vmem>>, vector<256x128xbf16>
    tpu.vector_store %arg8[%c0_89, %c384], %60 {strides = array<i32>} : memref<256x800xbf16, #tpu.memory_space<vmem>>, vector<256x128xbf16>,
    %c0_90 = arith.constant 0 : index
    %c3_91 = arith.constant 3 : index
    %c1_92 = arith.constant 1 : index
    %c0_93 = arith.constant 0 : index
    %62 = vector.load %arg7[%c0_90, %c3_91, %c1_92, %c0_93] : memref<1x20x20x32xf32, #tpu.memory_space<vmem>>, vector<1x16x16x32xf32>
    %63 = vector.shape_cast %62 : vector<1x16x16x32xf32> to vector<256x32xf32>
    %c0_94 = arith.constant 0 : index
    %c3_95 = arith.constant 3 : index
    %c2_96 = arith.constant 2 : index
    %c0_97 = arith.constant 0 : index
    %64 = vector.load %arg7[%c0_94, %c3_95, %c2_96, %c0_97] : memref<1x20x20x32xf32, #tpu.memory_space<vmem>>, vector<1x16x16x32xf32>
    %65 = vector.shape_cast %64 : vector<1x16x16x32xf32> to vector<256x32xf32>
    %c0_98 = arith.constant 0 : index
    %c3_99 = arith.constant 3 : index
    %c3_100 = arith.constant 3 : index
    %c0_101 = arith.constant 0 : index
    %66 = vector.load %arg7[%c0_98, %c3_99, %c3_100, %c0_101] : memref<1x20x20x32xf32, #tpu.memory_space<vmem>>, vector<1x16x16x32xf32>
    %67 = vector.shape_cast %66 : vector<1x16x16x32xf32> to vector<256x32xf32>
    %c0_102 = arith.constant 0 : index
    %c3_103 = arith.constant 3 : index
    %c4_104 = arith.constant 4 : index
    %c0_105 = arith.constant 0 : index
    %68 = vector.load %arg7[%c0_102, %c3_103, %c4_104, %c0_105] : memref<1x20x20x32xf32, #tpu.memory_space<vmem>>, vector<1x16x16x32xf32>
    %69 = vector.shape_cast %68 : vector<1x16x16x32xf32> to vector<256x32xf32>
    %70 = tpu.concatenate %63, %65 in 1 : vector<256x32xf32>, vector<256x32xf32> -> vector<256x64xf32>
    %71 = tpu.concatenate %67, %69 in 1 : vector<256x32xf32>, vector<256x32xf32> -> vector<256x64xf32>
    %72 = tpu.concatenate %70, %71 in 1 : vector<256x64xf32>, vector<256x64xf32> -> vector<256x128xf32>
    %73 = arith.truncf %72 : vector<256x128xf32> to vector<256x128xbf16>
    %c0_106 = arith.constant 0 : index
    %c512 = arith.constant 512 : index
    %74 = vector.load %arg8[%c0_106, %c512] : memref<256x800xbf16, #tpu.memory_space<vmem>>, vector<256x128xbf16>
    tpu.vector_store %arg8[%c0_106, %c512], %73 {strides = array<i32>} : memref<256x800xbf16, #tpu.memory_space<vmem>>, vector<256x128xbf16>,
    %c0_107 = arith.constant 0 : index
    %c4_108 = arith.constant 4 : index
    %c0_109 = arith.constant 0 : index
    %c0_110 = arith.constant 0 : index
    %75 = vector.load %arg7[%c0_107, %c4_108, %c0_109, %c0_110] : memref<1x20x20x32xf32, #tpu.memory_space<vmem>>, vector<1x16x16x32xf32>
    %76 = vector.shape_cast %75 : vector<1x16x16x32xf32> to vector<256x32xf32>
    %c0_111 = arith.constant 0 : index
    %c4_112 = arith.constant 4 : index
    %c1_113 = arith.constant 1 : index
    %c0_114 = arith.constant 0 : index
    %77 = vector.load %arg7[%c0_111, %c4_112, %c1_113, %c0_114] : memref<1x20x20x32xf32, #tpu.memory_space<vmem>>, vector<1x16x16x32xf32>
    %78 = vector.shape_cast %77 : vector<1x16x16x32xf32> to vector<256x32xf32>
    %c0_115 = arith.constant 0 : index
    %c4_116 = arith.constant 4 : index
    %c2_117 = arith.constant 2 : index
    %c0_118 = arith.constant 0 : index
    %79 = vector.load %arg7[%c0_115, %c4_116, %c2_117, %c0_118] : memref<1x20x20x32xf32, #tpu.memory_space<vmem>>, vector<1x16x16x32xf32>
    %80 = vector.shape_cast %79 : vector<1x16x16x32xf32> to vector<256x32xf32>
    %c0_119 = arith.constant 0 : index
    %c4_120 = arith.constant 4 : index
    %c3_121 = arith.constant 3 : index
    %c0_122 = arith.constant 0 : index
    %81 = vector.load %arg7[%c0_119, %c4_120, %c3_121, %c0_122] : memref<1x20x20x32xf32, #tpu.memory_space<vmem>>, vector<1x16x16x32xf32>
    %82 = vector.shape_cast %81 : vector<1x16x16x32xf32> to vector<256x32xf32>
    %83 = tpu.concatenate %76, %78 in 1 : vector<256x32xf32>, vector<256x32xf32> -> vector<256x64xf32>
    %84 = tpu.concatenate %80, %82 in 1 : vector<256x32xf32>, vector<256x32xf32> -> vector<256x64xf32>
    %85 = tpu.concatenate %83, %84 in 1 : vector<256x64xf32>, vector<256x64xf32> -> vector<256x128xf32>
    %86 = arith.truncf %85 : vector<256x128xf32> to vector<256x128xbf16>
    %c0_123 = arith.constant 0 : index
    %c640 = arith.constant 640 : index
    %87 = vector.load %arg8[%c0_123, %c640] : memref<256x800xbf16, #tpu.memory_space<vmem>>, vector<256x128xbf16>
    tpu.vector_store %arg8[%c0_123, %c640], %86 {strides = array<i32>} : memref<256x800xbf16, #tpu.memory_space<vmem>>, vector<256x128xbf16>,
    %c0_124 = arith.constant 0 : index
    %c4_125 = arith.constant 4 : index
    %c4_126 = arith.constant 4 : index
    %c0_127 = arith.constant 0 : index
    %88 = vector.load %arg7[%c0_124, %c4_125, %c4_126, %c0_127] : memref<1x20x20x32xf32, #tpu.memory_space<vmem>>, vector<1x16x16x32xf32>
    %89 = vector.shape_cast %88 : vector<1x16x16x32xf32> to vector<256x32xf32>
    %90 = arith.truncf %89 : vector<256x32xf32> to vector<256x32xbf16>
    %c0_128 = arith.constant 0 : index
    %c768 = arith.constant 768 : index
    %91 = vector.load %arg8[%c0_128, %c768] : memref<256x800xbf16, #tpu.memory_space<vmem>>, vector<256x32xbf16>
    tpu.vector_store %arg8[%c0_128, %c768], %90 {strides = array<i32>} : memref<256x800xbf16, #tpu.memory_space<vmem>>, vector<256x32xbf16>,
    %c0_129 = arith.constant 0 : index
    %c0_130 = arith.constant 0 : index
    %92 = vector.load %arg8[%c0_129, %c0_130] : memref<256x800xbf16, #tpu.memory_space<vmem>>, vector<256x800xbf16>
    %c0_131 = arith.constant 0 : index
    %c0_132 = arith.constant 0 : index
    %93 = vector.load %arg2[%c0_131, %c0_132] : memref<800x64xbf16, #tpu.memory_space<vmem>>, vector<800x64xbf16>
    %cst_133 = arith.constant dense<0.000000e+00> : vector<256x64xf32>
    %94 = tpu.matmul %92, %93, %cst_133 {dimension_numbers = #tpu.dot_dimension_numbers<[1], [0], [0], [1], [0, 0, 1, 1], [], []>} : vector<256x800xbf16>, vector<800x64xbf16>, vector<256x64xf32> -> vector<256x64xf32>
    %c0_134 = arith.constant 0 : index
    %c0_135 = arith.constant 0 : index
    %95 = vector.load %arg3[%c0_134, %c0_135] : memref<1x64xf32, #tpu.memory_space<vmem>>, vector<1x64xf32>
    %96 = vector.shape_cast %95 : vector<1x64xf32> to vector<64xf32>
    %97 = vector.shape_cast %96 : vector<64xf32> to vector<1x64xf32>
    %98 = vector.broadcast %97 : vector<1x64xf32> to vector<256x64xf32>
    %99 = arith.addf %94, %98 : vector<256x64xf32>
    %100 = vector.extract_strided_slice %99 {offsets = [0, 0], sizes = [256, 32], strides = [1, 1]} : vector<256x64xf32> to vector<256x32xf32>
    %101 = vector.shape_cast %100 : vector<256x32xf32> to vector<1x256x32xf32>
    %cst_136 = arith.constant dense<0.000000e+00> : vector<1x32xf32>
    %102 = vector.multi_reduction <add>, %101, %cst_136 [1] : vector<1x256x32xf32> to vector<1x32xf32>
    %c0_137 = arith.constant 0 : index
    %c0_138 = arith.constant 0 : index
    %c0_139 = arith.constant 0 : index
    %103 = vector.load %arg5[%c0_137, %c0_138, %c0_139] : memref<1x2x32xf32, #tpu.memory_space<vmem>>, vector<1x1x32xf32>
    %104 = vector.shape_cast %103 : vector<1x1x32xf32> to vector<1x32xf32>
    %105 = vector.shape_cast %102 : vector<1x32xf32> to vector<1x1x32xf32>
    tpu.vector_store %arg5[%c0_137, %c0_138, %c0_139], %105 {strides = array<i32>} : memref<1x2x32xf32, #tpu.memory_space<vmem>>, vector<1x1x32xf32>,
    %106 = arith.mulf %101, %101 : vector<1x256x32xf32>
    %cst_140 = arith.constant dense<0.000000e+00> : vector<1x32xf32>
    %107 = vector.multi_reduction <add>, %106, %cst_140 [1] : vector<1x256x32xf32> to vector<1x32xf32>
    %c0_141 = arith.constant 0 : index
    %c0_142 = arith.constant 0 : index
    %c0_143 = arith.constant 0 : index
    %108 = vector.load %arg6[%c0_141, %c0_142, %c0_143] : memref<1x2x32xf32, #tpu.memory_space<vmem>>, vector<1x1x32xf32>
    %109 = vector.shape_cast %108 : vector<1x1x32xf32> to vector<1x32xf32>
    %110 = vector.shape_cast %107 : vector<1x32xf32> to vector<1x1x32xf32>
    tpu.vector_store %arg6[%c0_141, %c0_142, %c0_143], %110 {strides = array<i32>} : memref<1x2x32xf32, #tpu.memory_space<vmem>>, vector<1x1x32xf32>,
    %111 = arith.truncf %101 : vector<1x256x32xf32> to vector<1x256x32xbf16>
    %c0_144 = arith.constant 0 : index
    %c0_145 = arith.constant 0 : index
    %c0_146 = arith.constant 0 : index
    %c0_147 = arith.constant 0 : index
    %112 = vector.load %arg4[%c0_144, %c0_145, %c0_146, %c0_147] : memref<2x1x256x32xbf16, #tpu.memory_space<vmem>>, vector<1x1x256x32xbf16>
    %113 = vector.shape_cast %112 : vector<1x1x256x32xbf16> to vector<1x256x32xbf16>
    %114 = vector.shape_cast %111 : vector<1x256x32xbf16> to vector<1x1x256x32xbf16>
    tpu.vector_store %arg4[%c0_144, %c0_145, %c0_146, %c0_147], %114 {strides = array<i32>} : memref<2x1x256x32xbf16, #tpu.memory_space<vmem>>, vector<1x1x256x32xbf16>,
    %115 = vector.extract_strided_slice %99 {offsets = [0, 32], sizes = [256, 32], strides = [1, 1]} : vector<256x64xf32> to vector<256x32xf32>
    %116 = vector.shape_cast %115 : vector<256x32xf32> to vector<1x256x32xf32>
    %cst_148 = arith.constant dense<0.000000e+00> : vector<1x32xf32>
    %117 = vector.multi_reduction <add>, %116, %cst_148 [1] : vector<1x256x32xf32> to vector<1x32xf32>
    %c0_149 = arith.constant 0 : index
    %c1_150 = arith.constant 1 : index
    %c0_151 = arith.constant 0 : index
    %118 = vector.load %arg5[%c0_149, %c1_150, %c0_151] : memref<1x2x32xf32, #tpu.memory_space<vmem>>, vector<1x1x32xf32>
    %119 = vector.shape_cast %118 : vector<1x1x32xf32> to vector<1x32xf32>
    %120 = vector.shape_cast %117 : vector<1x32xf32> to vector<1x1x32xf32>
    tpu.vector_store %arg5[%c0_149, %c1_150, %c0_151], %120 {strides = array<i32>} : memref<1x2x32xf32, #tpu.memory_space<vmem>>, vector<1x1x32xf32>,
    %121 = arith.mulf %116, %116 : vector<1x256x32xf32>
    %cst_152 = arith.constant dense<0.000000e+00> : vector<1x32xf32>
    %122 = vector.multi_reduction <add>, %121, %cst_152 [1] : vector<1x256x32xf32> to vector<1x32xf32>
    %c0_153 = arith.constant 0 : index
    %c1_154 = arith.constant 1 : index
    %c0_155 = arith.constant 0 : index
    %123 = vector.load %arg6[%c0_153, %c1_154, %c0_155] : memref<1x2x32xf32, #tpu.memory_space<vmem>>, vector<1x1x32xf32>
    %124 = vector.shape_cast %123 : vector<1x1x32xf32> to vector<1x32xf32>
    %125 = vector.shape_cast %122 : vector<1x32xf32> to vector<1x1x32xf32>
    tpu.vector_store %arg6[%c0_153, %c1_154, %c0_155], %125 {strides = array<i32>} : memref<1x2x32xf32, #tpu.memory_space<vmem>>, vector<1x1x32xf32>,
    %126 = arith.truncf %116 : vector<1x256x32xf32> to vector<1x256x32xbf16>
    %c1_156 = arith.constant 1 : index
    %c0_157 = arith.constant 0 : index
    %c0_158 = arith.constant 0 : index
    %c0_159 = arith.constant 0 : index
    %127 = vector.load %arg4[%c1_156, %c0_157, %c0_158, %c0_159] : memref<2x1x256x32xbf16, #tpu.memory_space<vmem>>, vector<1x1x256x32xbf16>
    %128 = vector.shape_cast %127 : vector<1x1x256x32xbf16> to vector<1x256x32xbf16>
    %129 = vector.shape_cast %126 : vector<1x256x32xbf16> to vector<1x1x256x32xbf16>
    tpu.vector_store %arg4[%c1_156, %c0_157, %c0_158, %c0_159], %129 {strides = array<i32>} : memref<2x1x256x32xbf16, #tpu.memory_space<vmem>>, vector<1x1x256x32xbf16>,
    return
  }
  func.func @transform_0(%arg0: i32) -> (i32, i32, i32, i32) {
    %c0_i32 = arith.constant 0 : i32
    %c0_i32_0 = arith.constant 0 : i32
    %c0_i32_1 = arith.constant 0 : i32
    %c0_i32_2 = arith.constant 0 : i32
    return %arg0, %c0_i32, %c0_i32_0, %c0_i32_1 : i32, i32, i32, i32
  }
  func.func @transform_1(%arg0: i32) -> (i32, i32) {
    %c0_i32 = arith.constant 0 : i32
    %c0_i32_0 = arith.constant 0 : i32
    %c0_i32_1 = arith.constant 0 : i32
    return %c0_i32, %c0_i32_0 : i32, i32
  }
  func.func @transform_2(%arg0: i32) -> (i32, i32) {
    %c0_i32 = arith.constant 0 : i32
    %c0_i32_0 = arith.constant 0 : i32
    %c0_i32_1 = arith.constant 0 : i32
    return %c0_i32, %c0_i32_0 : i32, i32
  }
  func.func @transform_3(%arg0: i32) -> (i32, i32, i32, i32) {
    %c0_i32 = arith.constant 0 : i32
    %c0_i32_0 = arith.constant 0 : i32
    %c0_i32_1 = arith.constant 0 : i32
    %c0_i32_2 = arith.constant 0 : i32
    return %c0_i32, %arg0, %c0_i32_0, %c0_i32_1 : i32, i32, i32, i32
  }
  func.func @transform_4(%arg0: i32) -> (i32, i32, i32) {
    %c0_i32 = arith.constant 0 : i32
    %c0_i32_0 = arith.constant 0 : i32
    %c0_i32_1 = arith.constant 0 : i32
    return %arg0, %c0_i32, %c0_i32_0 : i32, i32, i32
  }
  func.func @transform_5(%arg0: i32) -> (i32, i32, i32) {
    %c0_i32 = arith.constant 0 : i32
    %c0_i32_0 = arith.constant 0 : i32
    %c0_i32_1 = arith.constant 0 : i32
    return %arg0, %c0_i32, %c0_i32_0 : i32, i32, i32
  }
}

</mosaic_0001>

<llo_original>
// kernel: tpu_custom_call.1
$region0: #{tpu_custom_call.1}
  #allocation0 [shape = 'u32[]', space=smem, size = 0x4, offset = 0x4, fixed_abs, tag = 'smem constant byte address 0x4 - core index']
  #allocation1 [shape = 'u32[144,128]{1,0:T(1,128)}', space=vmem, size = 0x12000, scoped, tag = 'internal scratch']
  #allocation2 [shape = 'f32[1,20,20,32]{3,2,1,0:T(8,128)}', space=vmem, size = 0x3c000, scoped, tag = 'scratch operand']
  #allocation3 [shape = 'bf16[256,800]{1,0:T(16,128)(2,1)}', space=vmem, size = 0x70000, scoped, tag = 'scratch operand']
  %s0 = inlined_call_operand.vmem [shape: f32[2,16,16,32], index: 0, kind: input, shape index: {}]
  %s1 = inlined_call_operand.vmem [shape: bf16[800,64], index: 1, kind: input, shape index: {}]
  %s2 = inlined_call_operand.vmem [shape: f32[1,64], index: 2, kind: input, shape index: {}]
  %s3 = inlined_call_operand.vmem [shape: bf16[2,2,256,32], index: 3, kind: output, shape index: {0}]
  %s4 = inlined_call_operand.hbm [shape: f32[2,2,32], index: 4, kind: output, shape index: {1}]
  %s5 = inlined_call_operand.hbm [shape: f32[2,2,32], index: 5, kind: output, shape index: {2}]
  %6 = xla_tuple %s3, %s4, %s5
  %s7 = sld [smem:[#allocation0]]
  $region98: #{tpu_custom_call.1} parent=0
    _
  %s9 = ssub.s32 1, %s7
  %s10 = scalar_select 0, %s9, %s7
  $region1: #{tpu_custom_call.1} parent=0
    #allocation4 [shape = 'u8[262144]{0}', space=vmem, size = 0x40000, scoped, tag = 'output window, operand 0']
    #allocation5 [shape = 'u8[2048]{0}', space=vmem, size = 0x800, scoped, tag = 'output window, operand 1']
    #allocation6 [shape = 's32[2]{0}', space=sflag, size = 0x8, scoped, tag = 'scoped memory for tpu_custom_call.1']
    #allocation7 [shape = 'u8[2048]{0}', space=vmem, size = 0x800, scoped, tag = 'output window, operand 2']
    #allocation8 [shape = 's32[2]{0}', space=sflag, size = 0x8, scoped, tag = 'scoped memory for tpu_custom_call.1']
    %11 = vsyncpa [#allocation6], 0
    %s12 = scalar_lea.sflag [#allocation6], 1
    %13 = vsyncpa %s12, 0
    %14 = vsyncpa [#allocation8], 0
    %s15 = scalar_lea.sflag [#allocation8], 1
    %16 = vsyncpa %s15, 0
    loop: start=0, step=1, limit=4
    $region2: #{tpu_custom_call.1} parent=1 // loop_pre_header
      _
    $region3: #{tpu_custom_call.1} parent=1 // loop_header
      %s18 = sphi 0, %s22
      %p19 = scmp.ge.s32.totalorder %s18, 4
      %s28 = sphi 0, %s30
      %s31 = sphi 0, %s28
      %s32 = sphi 0, %s31
      %s48 = sphi 0, %s32
      %s52 = sphi 0, %s52
      %s54 = sphi 0, %s52
      %s55 = sphi 0, %s54
      %s69 = sphi 0, %s55
      %s73 = sphi 0, %s73
      %s75 = sphi 0, %s73
      %s76 = sphi 0, %s75
      %s90 = sphi 0, %s76
      %s96 = sphi 0, %s98
      %s99 = sphi 0, %s96
      %s100 = sphi 0, %s99
      %s116 = sphi 0, %s100
      %s122 = sphi 0, %s124
      %s125 = sphi 0, %s122
      %s126 = sphi 0, %s125
      %s142 = sphi 0, %s126
      %s148 = sphi 0, %s150
      %s151 = sphi 0, %s148
      %s152 = sphi 0, %s151
      %s168 = sphi 0, %s152
    $region4: #{tpu_custom_call.1} parent=1 // loop_header_branch
      %21 = sbr.rel (%p19) target = $region8
    $region5: #{tpu_custom_call.1} parent=1 // loop_body
      %s23 = ssub.s32 %s18, 1
      %s24 = ssub.s32 %s18, 2
      %s25 = sadd.s32 %s18, 1
      %s26 = ssub.s32 %s18, %s25
      %p27 = scmp.eq.s32.totalorder %s26, 0
      %s29 = sadd.s32 %s28, 1
      %s30 = scalar_select %p27, %s28, %s29
      %p33 = pneg %p27
      %p34 = scmp.eq.s32.totalorder %s18, 1
      %p35 = por %p33, %p34
      %p36 = scmp.ne.s32.totalorder %s28, %s31
      %p37 = scmp.eq.s32.totalorder %s18, 0
      %p38 = por %p36, %p37
      %p39 = scmp.ne.s32.totalorder %s28, %s31
      %p40 = scmp.eq.s32.totalorder %s23, 1
      %p41 = por %p39, %p40
      %p42 = scmp.ne.s32.totalorder %s31, %s32
      %p43 = scmp.eq.s32.totalorder %s23, 0
      %p44 = por %p42, %p43
      %p45 = scmp.ne.s32.totalorder %s31, %s32
      %p46 = scmp.eq.s32.totalorder %s24, 1
      %p47 = por %p45, %p46
      %p49 = scmp.ne.s32.totalorder %s32, %s48
      %p50 = scmp.eq.s32.totalorder %s24, 0
      %p51 = por %p49, %p50
      %s53 = sadd.s32 %s52, 1
      %p56 = scmp.eq.s32.totalorder %s18, 1
      %p57 = scmp.ne.s32.totalorder %s52, %s54
      %p58 = scmp.eq.s32.totalorder %s18, 0
      %p59 = por %p57, %p58
      %p60 = scmp.ne.s32.totalorder %s52, %s54
      %p61 = scmp.eq.s32.totalorder %s23, 1
      %p62 = por %p60, %p61
      %p63 = scmp.ne.s32.totalorder %s54, %s55
      %p64 = scmp.eq.s32.totalorder %s23, 0
      %p65 = por %p63, %p64
      %p66 = scmp.ne.s32.totalorder %s54, %s55
      %p67 = scmp.eq.s32.totalorder %s24, 1
      %p68 = por %p66, %p67
      %p70 = scmp.ne.s32.totalorder %s55, %s69
      %p71 = scmp.eq.s32.totalorder %s24, 0
      %p72 = por %p70, %p71
      %s74 = sadd.s32 %s73, 1
      %p77 = scmp.eq.s32.totalorder %s18, 1
      %p78 = scmp.ne.s32.totalorder %s73, %s75
      %p79 = scmp.eq.s32.totalorder %s18, 0
      %p80 = por %p78, %p79
      %p81 = scmp.ne.s32.totalorder %s73, %s75
      %p82 = scmp.eq.s32.totalorder %s23, 1
      %p83 = por %p81, %p82
      %p84 = scmp.ne.s32.totalorder %s75, %s76
      %p85 = scmp.eq.s32.totalorder %s23, 0
      %p86 = por %p84, %p85
      %p87 = scmp.ne.s32.totalorder %s75, %s76
      %p88 = scmp.eq.s32.totalorder %s24, 1
      %p89 = por %p87, %p88
      %p91 = scmp.ne.s32.totalorder %s76, %s90
      %p92 = scmp.eq.s32.totalorder %s24, 0
      %p93 = por %p91, %p92
      %s94 = ssub.s32 %s18, %s25
      %p95 = scmp.eq.s32.totalorder %s94, 0
      %s97 = sadd.s32 %s96, 1
      %s98 = scalar_select %p95, %s96, %s97
      %p101 = pneg %p95
      %p102 = scmp.eq.s32.totalorder %s18, 1
      %p103 = por %p101, %p102
      %p104 = scmp.ne.s32.totalorder %s96, %s99
      %p105 = scmp.eq.s32.totalorder %s18, 0
      %p106 = por %p104, %p105
      %p107 = scmp.ne.s32.totalorder %s96, %s99
      %p108 = scmp.eq.s32.totalorder %s23, 1
      %p109 = por %p107, %p108
      %p110 = scmp.ne.s32.totalorder %s99, %s100
      %p111 = scmp.eq.s32.totalorder %s23, 0
      %p112 = por %p110, %p111
      %p113 = scmp.ne.s32.totalorder %s99, %s100
      %p114 = scmp.eq.s32.totalorder %s24, 1
      %p115 = por %p113, %p114
      %p117 = scmp.ne.s32.totalorder %s100, %s116
      %p118 = scmp.eq.s32.totalorder %s24, 0
      %p119 = por %p117, %p118
      %s120 = ssub.s32 %s18, %s25
      %p121 = scmp.eq.s32.totalorder %s120, 0
      %s123 = sadd.s32 %s122, 1
      %s124 = scalar_select %p121, %s122, %s123
      %p127 = pneg %p121
      %p128 = scmp.eq.s32.totalorder %s18, 1
      %p129 = por %p127, %p128
      %p130 = scmp.ne.s32.totalorder %s122, %s125
      %p131 = scmp.eq.s32.totalorder %s18, 0
      %p132 = por %p130, %p131
      %p133 = scmp.ne.s32.totalorder %s122, %s125
      %p134 = scmp.eq.s32.totalorder %s23, 1
      %p135 = por %p133, %p134
      %p136 = scmp.ne.s32.totalorder %s125, %s126
      %p137 = scmp.eq.s32.totalorder %s23, 0
      %p138 = por %p136, %p137
      %p139 = scmp.ne.s32.totalorder %s125, %s126
      %p140 = scmp.eq.s32.totalorder %s24, 1
      %p141 = por %p139, %p140
      %p143 = scmp.ne.s32.totalorder %s126, %s142
      %p144 = scmp.eq.s32.totalorder %s24, 0
      %p145 = por %p143, %p144
      %s146 = ssub.s32 %s18, %s25
      %p147 = scmp.eq.s32.totalorder %s146, 0
      %s149 = sadd.s32 %s148, 1
      %s150 = scalar_select %p147, %s148, %s149
      %p153 = pneg %p147
      %p154 = scmp.eq.s32.totalorder %s18, 1
      %p155 = por %p153, %p154
      %p156 = scmp.ne.s32.totalorder %s148, %s151
      %p157 = scmp.eq.s32.totalorder %s18, 0
      %p158 = por %p156, %p157
      %p159 = scmp.ne.s32.totalorder %s148, %s151
      %p160 = scmp.eq.s32.totalorder %s23, 1
      %p161 = por %p159, %p160
      %p162 = scmp.ne.s32.totalorder %s151, %s152
      %p163 = scmp.eq.s32.totalorder %s23, 0
      %p164 = por %p162, %p163
      %p165 = scmp.ne.s32.totalorder %s151, %s152
      %p166 = scmp.eq.s32.totalorder %s24, 1
      %p167 = por %p165, %p166
      %p169 = scmp.ne.s32.totalorder %s152, %s168
      %p170 = scmp.eq.s32.totalorder %s24, 0
      %p171 = por %p169, %p170
      %p172 = scmp.le.s32.totalorder 1, %s18
      %p173 = scmp.lt.s32.totalorder %s18, 3
      %p174 = pnand %p172, %p173
      %p175 = pneg %p174
      // Predicated region
      $region9: #{tpu_custom_call.1} parent=5 // pred_check
        _
      $region10: #{tpu_custom_call.1} parent=5 // pred_check_branch
        %177 = sbr.rel (%p174) target = $region12
      $region11: #{tpu_custom_call.1} parent=5 // pred_region
        %s178 = ssub.s32 %s18, 1
        // Predicated region
        $region13: #{tpu_custom_call.1} parent=11 // pred_check
          %p179 = pneg %p65
        $region14: #{tpu_custom_call.1} parent=11 // pred_check_branch
          %181 = sbr.rel (%p179) target = $region16
        $region15: #{tpu_custom_call.1} parent=11 // pred_region
          _
        $region16: #{tpu_custom_call.1} parent=11 // pred_fallthru
          _
        // Predicated region
        $region17: #{tpu_custom_call.1} parent=11 // pred_check
          %p182 = pneg %p86
        $region18: #{tpu_custom_call.1} parent=11 // pred_check_branch
          %184 = sbr.rel (%p182) target = $region20
        $region19: #{tpu_custom_call.1} parent=11 // pred_region
          _
        $region20: #{tpu_custom_call.1} parent=11 // pred_fallthru
          _
      $region12: #{tpu_custom_call.1} parent=5 // pred_fallthru
        _
      %p185 = scmp.lt.s32.totalorder %s18, 2
      // Predicated region
      $region21: #{tpu_custom_call.1} parent=5 // pred_check
        %p186 = pneg %p185
      $region22: #{tpu_custom_call.1} parent=5 // pred_check_branch
        %188 = sbr.rel (%p186) target = $region24
      $region23: #{tpu_custom_call.1} parent=5 // pred_region
        // Predicated region
        $region25: #{tpu_custom_call.1} parent=23 // pred_check
          %p189 = pneg %p38
        $region26: #{tpu_custom_call.1} parent=23 // pred_check_branch
          %191 = sbr.rel (%p189) target = $region28
        $region27: #{tpu_custom_call.1} parent=23 // pred_region
          %p192 = scmp.lt.s32.totalorder %s18, 1
          %s193 = scalar_select %p192, %s18, 1
          %s194 = smul.addr %s193, 32
          %s195 = smul.addr %s194, 8
          %s196 = scalar_lea.vmem %s0, %s195
        $region28: #{tpu_custom_call.1} parent=23 // pred_fallthru
          _
      $region24: #{tpu_custom_call.1} parent=5 // pred_fallthru
        _
      %p197 = scmp.le.s32.totalorder 1, %s18
      %p198 = scmp.lt.s32.totalorder %s18, 3
      %p199 = pnand %p197, %p198
      %p200 = pneg %p199
      // Predicated region
      $region29: #{tpu_custom_call.1} parent=5 // pred_check
        _
      $region30: #{tpu_custom_call.1} parent=5 // pred_check_branch
        %202 = sbr.rel (%p199) target = $region32
      $region31: #{tpu_custom_call.1} parent=5 // pred_region
        %s203 = ssub.s32 %s18, 1
        %p204 = scmp.lt.s32.totalorder %s23, 1
        %s205 = scalar_select %p204, %s23, 1
        %s206 = smul.addr %s205, 32
        %s207 = smul.addr %s206, 8
        %s208 = scalar_lea.vmem %s0, %s207
        %p209 = pneg %p44
        %p210 = pneg %p41
        %p211 = pneg %p65
        %p212 = pneg %p62
        %p213 = pneg %p86
        %p214 = pneg %p83
        %p215 = pneg %p112
        %p216 = pneg %p109
        %s217 = sand.u32 %s99, 1
        %s218 = sand.u32 %s99, 1
        %s219 = smul.addr %s218, 256
        %s220 = scalar_lea.vmem [#allocation4], %s219
        %p221 = pneg %p138
        %p222 = pneg %p135
        %s223 = sand.u32 %s125, 1
        %s224 = scalar_lea.sflag [#allocation6], %s223
        %s225 = sand.u32 %s125, 1
        %s226 = smul.addr %s225, 2
        %s227 = scalar_lea.vmem [#allocation5], %s226
        %p228 = pneg %p164
        %p229 = pneg %p161
        %s230 = sand.u32 %s151, 1
        %s231 = scalar_lea.sflag [#allocation8], %s230
        %s232 = sand.u32 %s151, 1
        %s233 = smul.addr %s232, 2
        %s234 = scalar_lea.vmem [#allocation7], %s233
        %p235 = scmp.lt.s32.totalorder %s23, 1
        %s236 = scalar_select %p235, %s23, 1
        %s237 = smul.addr %s236, 32
        %s238 = smul.addr %s237, 8
        %s239 = scalar_lea.vmem %s0, %s238
        %vm241 = vcmask 261120
        %242 = vst.msk [vmem:[#allocation2] sm:$0xff] %vm241, 0.0
        %243 = vst.msk [vmem:[#allocation2 + $0x8] sm:$0xff] %vm241, 0.0
        %vm244 = vcmask 257024
        %245 = vst.msk [vmem:[#allocation2 + $0x10] sm:$0xf] %vm244, 0.0
        %246 = vst.msk [vmem:[#allocation2 + $0x18] sm:$0xff] %vm241, 0.0
        %247 = vst.msk [vmem:[#allocation2 + $0x20] sm:$0xff] %vm241, 0.0
        %248 = vst.msk [vmem:[#allocation2 + $0x28] sm:$0xf] %vm244, 0.0
        %s249 = scalar_lea.vmem [#allocation2], 432
        %250 = vst.msk [vmem:[%s249] sm:$0xff] %vm241, 0.0
        %251 = vst.msk [vmem:[%s249 + $0x8] sm:$0xff] %vm241, 0.0
        %252 = vst.msk [vmem:[%s249 + $0x10] sm:$0xf] %vm244, 0.0
        %253 = vst.msk [vmem:[%s249 + $0x18] sm:$0xff] %vm241, 0.0
        %254 = vst.msk [vmem:[%s249 + $0x20] sm:$0xff] %vm241, 0.0
        %255 = vst.msk [vmem:[%s249 + $0x28] sm:$0xf] %vm244, 0.0
        %vm256 = vcmask 254976
        %257 = vst.msk [vmem:[#allocation2] sm:$0x3] %vm256, 0.0
        %258 = vst.msk [vmem:[#allocation2 + $0x18] sm:$0x3] %vm256, 0.0
        %259 = vst.msk [vmem:[#allocation2 + $0x30] sm:$0x3] %vm256, 0.0
        %260 = vst.msk [vmem:[#allocation2 + $0x48] sm:$0x3] %vm256, 0.0
        %261 = vst.msk [vmem:[#allocation2 + $0x60] sm:$0x3] %vm256, 0.0
        %262 = vst.msk [vmem:[#allocation2 + $0x78] sm:$0x3] %vm256, 0.0
        %263 = vst.msk [vmem:[#allocation2 + $0x90] sm:$0x3] %vm256, 0.0
        %264 = vst.msk [vmem:[#allocation2 + $0xa8] sm:$0x3] %vm256, 0.0
        %265 = vst.msk [vmem:[#allocation2 + $0xc0] sm:$0x3] %vm256, 0.0
        %266 = vst.msk [vmem:[#allocation2 + $0xd8] sm:$0x3] %vm256, 0.0
        %267 = vst.msk [vmem:[#allocation2 + $0xf0] sm:$0x3] %vm256, 0.0
        %268 = vst.msk [vmem:[#allocation2 + $0x108] sm:$0x3] %vm256, 0.0
        %269 = vst.msk [vmem:[#allocation2 + $0x120] sm:$0x3] %vm256, 0.0
        %270 = vst.msk [vmem:[#allocation2 + $0x138] sm:$0x3] %vm256, 0.0
        %271 = vst.msk [vmem:[#allocation2 + $0x150] sm:$0x3] %vm256, 0.0
        %272 = vst.msk [vmem:[#allocation2 + $0x168] sm:$0x3] %vm256, 0.0
        %273 = vst.msk [vmem:[#allocation2 + $0x180] sm:$0x3] %vm256, 0.0
        %274 = vst.msk [vmem:[#allocation2 + $0x198] sm:$0x3] %vm256, 0.0
        %275 = vst.msk [vmem:[#allocation2 + $0x1b0] sm:$0x3] %vm256, 0.0
        %276 = vst.msk [vmem:[#allocation2 + $0x1c8] sm:$0x3] %vm256, 0.0
        %277 = vst.msk [vmem:[#allocation2 + $0x12] sm:$0x3] %vm256, 0.0
        %278 = vst.msk [vmem:[#allocation2 + $0x2a] sm:$0x3] %vm256, 0.0
        %279 = vst.msk [vmem:[#allocation2 + $0x42] sm:$0x3] %vm256, 0.0
        %280 = vst.msk [vmem:[#allocation2 + $0x5a] sm:$0x3] %vm256, 0.0
        %281 = vst.msk [vmem:[#allocation2 + $0x72] sm:$0x3] %vm256, 0.0
        %282 = vst.msk [vmem:[#allocation2 + $0x8a] sm:$0x3] %vm256, 0.0
        %283 = vst.msk [vmem:[#allocation2 + $0xa2] sm:$0x3] %vm256, 0.0
        %284 = vst.msk [vmem:[#allocation2 + $0xba] sm:$0x3] %vm256, 0.0
        %285 = vst.msk [vmem:[#allocation2 + $0xd2] sm:$0x3] %vm256, 0.0
        %286 = vst.msk [vmem:[#allocation2 + $0xea] sm:$0x3] %vm256, 0.0
        %287 = vst.msk [vmem:[#allocation2 + $0x102] sm:$0x3] %vm256, 0.0
        %288 = vst.msk [vmem:[#allocation2 + $0x11a] sm:$0x3] %vm256, 0.0
        %289 = vst.msk [vmem:[#allocation2 + $0x132] sm:$0x3] %vm256, 0.0
        %290 = vst.msk [vmem:[#allocation2 + $0x14a] sm:$0x3] %vm256, 0.0
        %291 = vst.msk [vmem:[#allocation2 + $0x162] sm:$0x3] %vm256, 0.0
        %292 = vst.msk [vmem:[#allocation2 + $0x17a] sm:$0x3] %vm256, 0.0
        %293 = vst.msk [vmem:[#allocation2 + $0x192] sm:$0x3] %vm256, 0.0
        %294 = vst.msk [vmem:[#allocation2 + $0x1aa] sm:$0x3] %vm256, 0.0
        %295 = vst.msk [vmem:[#allocation2 + $0x1c2] sm:$0x3] %vm256, 0.0
        %296 = vst.msk [vmem:[#allocation2 + $0x1da] sm:$0x3] %vm256, 0.0
        %v297 = vld [vmem:[%s239] sm:$0xff]
        %v298 = vld [vmem:[%s239 + $0x8] sm:$0xff]
        %v299 = vld [vmem:[%s239 + $0x10] sm:$0xff]
        %v300 = vld [vmem:[%s239 + $0x18] sm:$0xff]
        %v301 = vld [vmem:[%s239 + $0x20] sm:$0xff]
        %v302 = vld [vmem:[%s239 + $0x28] sm:$0xff]
        %v303 = vld [vmem:[%s239 + $0x30] sm:$0xff]
        %v304 = vld [vmem:[%s239 + $0x38] sm:$0xff]
        %v305 = vld [vmem:[%s239 + $0x40] sm:$0xff]
        %v306 = vld [vmem:[%s239 + $0x48] sm:$0xff]
        %v307 = vld [vmem:[%s239 + $0x50] sm:$0xff]
        %v308 = vld [vmem:[%s239 + $0x58] sm:$0xff]
        %v309 = vld [vmem:[%s239 + $0x60] sm:$0xff]
        %v310 = vld [vmem:[%s239 + $0x68] sm:$0xff]
        %v311 = vld [vmem:[%s239 + $0x70] sm:$0xff]
        %v312 = vld [vmem:[%s239 + $0x78] sm:$0xff]
        %v313 = vld [vmem:[%s239 + $0x80] sm:$0xff]
        %v314 = vld [vmem:[%s239 + $0x88] sm:$0xff]
        %v315 = vld [vmem:[%s239 + $0x90] sm:$0xff]
        %v316 = vld [vmem:[%s239 + $0x98] sm:$0xff]
        %v317 = vld [vmem:[%s239 + $0xa0] sm:$0xff]
        %v318 = vld [vmem:[%s239 + $0xa8] sm:$0xff]
        %v319 = vld [vmem:[%s239 + $0xb0] sm:$0xff]
        %v320 = vld [vmem:[%s239 + $0xb8] sm:$0xff]
        %v321 = vld [vmem:[%s239 + $0xc0] sm:$0xff]
        %v322 = vld [vmem:[%s239 + $0xc8] sm:$0xff]
        %v323 = vld [vmem:[%s239 + $0xd0] sm:$0xff]
        %v324 = vld [vmem:[%s239 + $0xd8] sm:$0xff]
        %v325 = vld [vmem:[%s239 + $0xe0] sm:$0xff]
        %v326 = vld [vmem:[%s239 + $0xe8] sm:$0xff]
        %v327 = vld [vmem:[%s239 + $0xf0] sm:$0xff]
        %v328 = vld [vmem:[%s239 + $0xf8] sm:$0xff]
        %s329 = scalar_lea.vmem [#allocation2], 48
        %330 = vst.msk [vmem:[%s329 + $0x2] sm:$0xff] %vm241, %v297
        %331 = vst.msk [vmem:[%s329 + $0xa] sm:$0xff] %vm241, %v298
        %332 = vst.msk [vmem:[%s329 + $0x1a] sm:$0xff] %vm241, %v299
        %333 = vst.msk [vmem:[%s329 + $0x22] sm:$0xff] %vm241, %v300
        %334 = vst.msk [vmem:[%s329 + $0x32] sm:$0xff] %vm241, %v301
        %335 = vst.msk [vmem:[%s329 + $0x3a] sm:$0xff] %vm241, %v302
        %336 = vst.msk [vmem:[%s329 + $0x4a] sm:$0xff] %vm241, %v303
        %337 = vst.msk [vmem:[%s329 + $0x52] sm:$0xff] %vm241, %v304
        %338 = vst.msk [vmem:[%s329 + $0x62] sm:$0xff] %vm241, %v305
        %339 = vst.msk [vmem:[%s329 + $0x6a] sm:$0xff] %vm241, %v306
        %340 = vst.msk [vmem:[%s329 + $0x7a] sm:$0xff] %vm241, %v307
        %341 = vst.msk [vmem:[%s329 + $0x82] sm:$0xff] %vm241, %v308
        %342 = vst.msk [vmem:[%s329 + $0x92] sm:$0xff] %vm241, %v309
        %343 = vst.msk [vmem:[%s329 + $0x9a] sm:$0xff] %vm241, %v310
        %344 = vst.msk [vmem:[%s329 + $0xaa] sm:$0xff] %vm241, %v311
        %345 = vst.msk [vmem:[%s329 + $0xb2] sm:$0xff] %vm241, %v312
        %346 = vst.msk [vmem:[%s329 + $0xc2] sm:$0xff] %vm241, %v313
        %347 = vst.msk [vmem:[%s329 + $0xca] sm:$0xff] %vm241, %v314
        %348 = vst.msk [vmem:[%s329 + $0xda] sm:$0xff] %vm241, %v315
        %349 = vst.msk [vmem:[%s329 + $0xe2] sm:$0xff] %vm241, %v316
        %350 = vst.msk [vmem:[%s329 + $0xf2] sm:$0xff] %vm241, %v317
        %351 = vst.msk [vmem:[%s329 + $0xfa] sm:$0xff] %vm241, %v318
        %352 = vst.msk [vmem:[%s329 + $0x10a] sm:$0xff] %vm241, %v319
        %353 = vst.msk [vmem:[%s329 + $0x112] sm:$0xff] %vm241, %v320
        %354 = vst.msk [vmem:[%s329 + $0x122] sm:$0xff] %vm241, %v321
        %355 = vst.msk [vmem:[%s329 + $0x12a] sm:$0xff] %vm241, %v322
        %356 = vst.msk [vmem:[%s329 + $0x13a] sm:$0xff] %vm241, %v323
        %357 = vst.msk [vmem:[%s329 + $0x142] sm:$0xff] %vm241, %v324
        %358 = vst.msk [vmem:[%s329 + $0x152] sm:$0xff] %vm241, %v325
        %359 = vst.msk [vmem:[%s329 + $0x15a] sm:$0xff] %vm241, %v326
        %360 = vst.msk [vmem:[%s329 + $0x16a] sm:$0xff] %vm241, %v327
        %361 = vst.msk [vmem:[%s329 + $0x172] sm:$0xff] %vm241, %v328
        %v362 = vld [vmem:[#allocation2] sm:$0xff]
        %v363 = vld [vmem:[#allocation2 + $0x8] sm:$0xff]
        %v364 = vld [vmem:[#allocation2 + $0x18] sm:$0xff]
        %v365 = vld [vmem:[#allocation2 + $0x20] sm:$0xff]
        %v366 = vld [vmem:[#allocation2 + $0x30] sm:$0xff]
        %v367 = vld [vmem:[#allocation2 + $0x38] sm:$0xff]
        %v368 = vld [vmem:[#allocation2 + $0x48] sm:$0xff]
        %v369 = vld [vmem:[#allocation2 + $0x50] sm:$0xff]
        %v370 = vld [vmem:[#allocation2 + $0x60] sm:$0xff]
        %v371 = vld [vmem:[#allocation2 + $0x68] sm:$0xff]
        %v372 = vld [vmem:[#allocation2 + $0x78] sm:$0xff]
        %v373 = vld [vmem:[#allocation2 + $0x80] sm:$0xff]
        %v374 = vld [vmem:[#allocation2 + $0x90] sm:$0xff]
        %v375 = vld [vmem:[#allocation2 + $0x98] sm:$0xff]
        %v376 = vld [vmem:[#allocation2 + $0xa8] sm:$0xff]
        %v377 = vld [vmem:[#allocation2 + $0xb0] sm:$0xff]
        %v378 = vld [vmem:[#allocation2 + $0xc0] sm:$0xff]
        %v379 = vld [vmem:[#allocation2 + $0xc8] sm:$0xff]
        %v380 = vld [vmem:[#allocation2 + $0xd8] sm:$0xff]
        %v381 = vld [vmem:[#allocation2 + $0xe0] sm:$0xff]
        %v382 = vld [vmem:[#allocation2 + $0xf0] sm:$0xff]
        %v383 = vld [vmem:[#allocation2 + $0xf8] sm:$0xff]
        %v384 = vld [vmem:[#allocation2 + $0x108] sm:$0xff]
        %v385 = vld [vmem:[#allocation2 + $0x110] sm:$0xff]
        %v386 = vld [vmem:[#allocation2 + $0x120] sm:$0xff]
        %v387 = vld [vmem:[#allocation2 + $0x128] sm:$0xff]
        %v388 = vld [vmem:[#allocation2 + $0x138] sm:$0xff]
        %v389 = vld [vmem:[#allocation2 + $0x140] sm:$0xff]
        %v390 = vld [vmem:[#allocation2 + $0x150] sm:$0xff]
        %v391 = vld [vmem:[#allocation2 + $0x158] sm:$0xff]
        %v392 = vld [vmem:[#allocation2 + $0x168] sm:$0xff]
        %v393 = vld [vmem:[#allocation2 + $0x170] sm:$0xff]
        %v394 = vld [vmem:[#allocation2 + $0x1] sm:$0xff]
        %v395 = vld [vmem:[#allocation2 + $0x9] sm:$0xff]
        %v396 = vld [vmem:[#allocation2 + $0x19] sm:$0xff]
        %v397 = vld [vmem:[#allocation2 + $0x21] sm:$0xff]
        %v398 = vld [vmem:[#allocation2 + $0x31] sm:$0xff]
        %v399 = vld [vmem:[#allocation2 + $0x39] sm:$0xff]
        %v400 = vld [vmem:[#allocation2 + $0x49] sm:$0xff]
        %v401 = vld [vmem:[#allocation2 + $0x51] sm:$0xff]
        %v402 = vld [vmem:[#allocation2 + $0x61] sm:$0xff]
        %v403 = vld [vmem:[#allocation2 + $0x69] sm:$0xff]
        %v404 = vld [vmem:[#allocation2 + $0x79] sm:$0xff]
        %v405 = vld [vmem:[#allocation2 + $0x81] sm:$0xff]
        %v406 = vld [vmem:[#allocation2 + $0x91] sm:$0xff]
        %v407 = vld [vmem:[#allocation2 + $0x99] sm:$0xff]
        %v408 = vld [vmem:[#allocation2 + $0xa9] sm:$0xff]
        %v409 = vld [vmem:[#allocation2 + $0xb1] sm:$0xff]
        %v410 = vld [vmem:[#allocation2 + $0xc1] sm:$0xff]
        %v411 = vld [vmem:[#allocation2 + $0xc9] sm:$0xff]
        %v412 = vld [vmem:[#allocation2 + $0xd9] sm:$0xff]
        %v413 = vld [vmem:[#allocation2 + $0xe1] sm:$0xff]
        %v414 = vld [vmem:[#allocation2 + $0xf1] sm:$0xff]
        %v415 = vld [vmem:[#allocation2 + $0xf9] sm:$0xff]
        %v416 = vld [vmem:[#allocation2 + $0x109] sm:$0xff]
        %v417 = vld [vmem:[#allocation2 + $0x111] sm:$0xff]
        %v418 = vld [vmem:[#allocation2 + $0x121] sm:$0xff]
        %v419 = vld [vmem:[#allocation2 + $0x129] sm:$0xff]
        %v420 = vld [vmem:[#allocation2 + $0x139] sm:$0xff]
        %v421 = vld [vmem:[#allocation2 + $0x141] sm:$0xff]
        %v422 = vld [vmem:[#allocation2 + $0x151] sm:$0xff]
        %v423 = vld [vmem:[#allocation2 + $0x159] sm:$0xff]
        %v424 = vld [vmem:[#allocation2 + $0x169] sm:$0xff]
        %v425 = vld [vmem:[#allocation2 + $0x171] sm:$0xff]
        %v426 = vld [vmem:[#allocation2 + $0x2] sm:$0xff]
        %v427 = vld [vmem:[#allocation2 + $0xa] sm:$0xff]
        %v428 = vld [vmem:[#allocation2 + $0x1a] sm:$0xff]
        %v429 = vld [vmem:[#allocation2 + $0x22] sm:$0xff]
        %v430 = vld [vmem:[#allocation2 + $0x32] sm:$0xff]
        %v431 = vld [vmem:[#allocation2 + $0x3a] sm:$0xff]
        %v432 = vld [vmem:[#allocation2 + $0x4a] sm:$0xff]
        %v433 = vld [vmem:[#allocation2 + $0x52] sm:$0xff]
        %v434 = vld [vmem:[#allocation2 + $0x62] sm:$0xff]
        %v435 = vld [vmem:[#allocation2 + $0x6a] sm:$0xff]
        %v436 = vld [vmem:[#allocation2 + $0x7a] sm:$0xff]
        %v437 = vld [vmem:[#allocation2 + $0x82] sm:$0xff]
        %v438 = vld [vmem:[#allocation2 + $0x92] sm:$0xff]
        %v439 = vld [vmem:[#allocation2 + $0x9a] sm:$0xff]
        %v440 = vld [vmem:[#allocation2 + $0xaa] sm:$0xff]
        %v441 = vld [vmem:[#allocation2 + $0xb2] sm:$0xff]
        %v442 = vld [vmem:[#allocation2 + $0xc2] sm:$0xff]
        %v443 = vld [vmem:[#allocation2 + $0xca] sm:$0xff]
        %v444 = vld [vmem:[#allocation2 + $0xda] sm:$0xff]
        %v445 = vld [vmem:[#allocation2 + $0xe2] sm:$0xff]
        %v446 = vld [vmem:[#allocation2 + $0xf2] sm:$0xff]
        %v447 = vld [vmem:[#allocation2 + $0xfa] sm:$0xff]
        %v448 = vld [vmem:[#allocation2 + $0x10a] sm:$0xff]
        %v449 = vld [vmem:[#allocation2 + $0x112] sm:$0xff]
        %v450 = vld [vmem:[#allocation2 + $0x122] sm:$0xff]
        %v451 = vld [vmem:[#allocation2 + $0x12a] sm:$0xff]
        %v452 = vld [vmem:[#allocation2 + $0x13a] sm:$0xff]
        %v453 = vld [vmem:[#allocation2 + $0x142] sm:$0xff]
        %v454 = vld [vmem:[#allocation2 + $0x152] sm:$0xff]
        %v455 = vld [vmem:[#allocation2 + $0x15a] sm:$0xff]
        %v456 = vld [vmem:[#allocation2 + $0x16a] sm:$0xff]
        %v457 = vld [vmem:[#allocation2 + $0x172] sm:$0xff]
        %v458 = vld [vmem:[#allocation2 + $0x3] sm:$0xff]
        %v459 = vld [vmem:[#allocation2 + $0xb] sm:$0xff]
        %v460 = vld [vmem:[#allocation2 + $0x1b] sm:$0xff]
        %v461 = vld [vmem:[#allocation2 + $0x23] sm:$0xff]
        %v462 = vld [vmem:[#allocation2 + $0x33] sm:$0xff]
        %v463 = vld [vmem:[#allocation2 + $0x3b] sm:$0xff]
        %v464 = vld [vmem:[#allocation2 + $0x4b] sm:$0xff]
        %v465 = vld [vmem:[#allocation2 + $0x53] sm:$0xff]
        %v466 = vld [vmem:[#allocation2 + $0x63] sm:$0xff]
        %v467 = vld [vmem:[#allocation2 + $0x6b] sm:$0xff]
        %v468 = vld [vmem:[#allocation2 + $0x7b] sm:$0xff]
        %v469 = vld [vmem:[#allocation2 + $0x83] sm:$0xff]
        %v470 = vld [vmem:[#allocation2 + $0x93] sm:$0xff]
        %v471 = vld [vmem:[#allocation2 + $0x9b] sm:$0xff]
        %v472 = vld [vmem:[#allocation2 + $0xab] sm:$0xff]
        %v473 = vld [vmem:[#allocation2 + $0xb3] sm:$0xff]
        %v474 = vld [vmem:[#allocation2 + $0xc3] sm:$0xff]
        %v475 = vld [vmem:[#allocation2 + $0xcb] sm:$0xff]
        %v476 = vld [vmem:[#allocation2 + $0xdb] sm:$0xff]
        %v477 = vld [vmem:[#allocation2 + $0xe3] sm:$0xff]
        %v478 = vld [vmem:[#allocation2 + $0xf3] sm:$0xff]
        %v479 = vld [vmem:[#allocation2 + $0xfb] sm:$0xff]
        %v480 = vld [vmem:[#allocation2 + $0x10b] sm:$0xff]
        %v481 = vld [vmem:[#allocation2 + $0x113] sm:$0xff]
        %v482 = vld [vmem:[#allocation2 + $0x123] sm:$0xff]
        %v483 = vld [vmem:[#allocation2 + $0x12b] sm:$0xff]
        %v484 = vld [vmem:[#allocation2 + $0x13b] sm:$0xff]
        %v485 = vld [vmem:[#allocation2 + $0x143] sm:$0xff]
        %v486 = vld [vmem:[#allocation2 + $0x153] sm:$0xff]
        %v487 = vld [vmem:[#allocation2 + $0x15b] sm:$0xff]
        %v488 = vld [vmem:[#allocation2 + $0x16b] sm:$0xff]
        %v489 = vld [vmem:[#allocation2 + $0x173] sm:$0xff]
        %522 = vrot.lane.b32.xlu0 %v394, 32
        %v523 = vpop.permute.xlu0 %522
        %524 = vrot.lane.b32.xlu0 %v395, 32
        %v525 = vpop.permute.xlu0 %524
        %526 = vrot.lane.b32.xlu0 %v396, 32
        %v527 = vpop.permute.xlu0 %526
        %528 = vrot.lane.b32.xlu0 %v397, 32
        %v529 = vpop.permute.xlu0 %528
        %530 = vrot.lane.b32.xlu0 %v398, 32
        %v531 = vpop.permute.xlu0 %530
        %532 = vrot.lane.b32.xlu0 %v399, 32
        %v533 = vpop.permute.xlu0 %532
        %534 = vrot.lane.b32.xlu0 %v400, 32
        %v535 = vpop.permute.xlu0 %534
        %536 = vrot.lane.b32.xlu0 %v401, 32
        %v537 = vpop.permute.xlu0 %536
        %538 = vrot.lane.b32.xlu0 %v402, 32
        %v539 = vpop.permute.xlu0 %538
        %540 = vrot.lane.b32.xlu0 %v403, 32
        %v541 = vpop.permute.xlu0 %540
        %542 = vrot.lane.b32.xlu0 %v404, 32
        %v543 = vpop.permute.xlu0 %542
        %544 = vrot.lane.b32.xlu0 %v405, 32
        %v545 = vpop.permute.xlu0 %544
        %546 = vrot.lane.b32.xlu0 %v406, 32
        %v547 = vpop.permute.xlu0 %546
        %548 = vrot.lane.b32.xlu0 %v407, 32
        %v549 = vpop.permute.xlu0 %548
        %550 = vrot.lane.b32.xlu0 %v408, 32
        %v551 = vpop.permute.xlu0 %550
        %552 = vrot.lane.b32.xlu0 %v409, 32
        %v553 = vpop.permute.xlu0 %552
        %554 = vrot.lane.b32.xlu0 %v410, 32
        %v555 = vpop.permute.xlu0 %554
        %556 = vrot.lane.b32.xlu0 %v411, 32
        %v557 = vpop.permute.xlu0 %556
        %558 = vrot.lane.b32.xlu0 %v412, 32
        %v559 = vpop.permute.xlu0 %558
        %560 = vrot.lane.b32.xlu0 %v413, 32
        %v561 = vpop.permute.xlu0 %560
        %562 = vrot.lane.b32.xlu0 %v414, 32
        %v563 = vpop.permute.xlu0 %562
        %564 = vrot.lane.b32.xlu0 %v415, 32
        %v565 = vpop.permute.xlu0 %564
        %566 = vrot.lane.b32.xlu0 %v416, 32
        %v567 = vpop.permute.xlu0 %566
        %568 = vrot.lane.b32.xlu0 %v417, 32
        %v569 = vpop.permute.xlu0 %568
        %570 = vrot.lane.b32.xlu0 %v418, 32
        %v571 = vpop.permute.xlu0 %570
        %572 = vrot.lane.b32.xlu0 %v419, 32
        %v573 = vpop.permute.xlu0 %572
        %574 = vrot.lane.b32.xlu0 %v420, 32
        %v575 = vpop.permute.xlu0 %574
        %576 = vrot.lane.b32.xlu0 %v421, 32
        %v577 = vpop.permute.xlu0 %576
        %578 = vrot.lane.b32.xlu0 %v422, 32
        %v579 = vpop.permute.xlu0 %578
        %580 = vrot.lane.b32.xlu0 %v423, 32
        %v581 = vpop.permute.xlu0 %580
        %582 = vrot.lane.b32.xlu0 %v424, 32
        %v583 = vpop.permute.xlu0 %582
        %584 = vrot.lane.b32.xlu0 %v425, 32
        %v585 = vpop.permute.xlu0 %584
        %v618 = vsel %vm241, %v362, %v523
        %v619 = vsel %vm241, %v363, %v525
        %v620 = vsel %vm241, %v364, %v527
        %v621 = vsel %vm241, %v365, %v529
        %v622 = vsel %vm241, %v366, %v531
        %v623 = vsel %vm241, %v367, %v533
        %v624 = vsel %vm241, %v368, %v535
        %v625 = vsel %vm241, %v369, %v537
        %v626 = vsel %vm241, %v370, %v539
        %v627 = vsel %vm241, %v371, %v541
        %v628 = vsel %vm241, %v372, %v543
        %v629 = vsel %vm241, %v373, %v545
        %v630 = vsel %vm241, %v374, %v547
        %v631 = vsel %vm241, %v375, %v549
        %v632 = vsel %vm241, %v376, %v551
        %v633 = vsel %vm241, %v377, %v553
        %v634 = vsel %vm241, %v378, %v555
        %v635 = vsel %vm241, %v379, %v557
        %v636 = vsel %vm241, %v380, %v559
        %v637 = vsel %vm241, %v381, %v561
        %v638 = vsel %vm241, %v382, %v563
        %v639 = vsel %vm241, %v383, %v565
        %v640 = vsel %vm241, %v384, %v567
        %v641 = vsel %vm241, %v385, %v569
        %v642 = vsel %vm241, %v386, %v571
        %v643 = vsel %vm241, %v387, %v573
        %v644 = vsel %vm241, %v388, %v575
        %v645 = vsel %vm241, %v389, %v577
        %v646 = vsel %vm241, %v390, %v579
        %v647 = vsel %vm241, %v391, %v581
        %v648 = vsel %vm241, %v392, %v583
        %v649 = vsel %vm241, %v393, %v585
        %682 = vrot.lane.b32.xlu0 %v458, 32
        %v683 = vpop.permute.xlu0 %682
        %684 = vrot.lane.b32.xlu0 %v459, 32
        %v685 = vpop.permute.xlu0 %684
        %686 = vrot.lane.b32.xlu0 %v460, 32
        %v687 = vpop.permute.xlu0 %686
        %688 = vrot.lane.b32.xlu0 %v461, 32
        %v689 = vpop.permute.xlu0 %688
        %690 = vrot.lane.b32.xlu0 %v462, 32
        %v691 = vpop.permute.xlu0 %690
        %692 = vrot.lane.b32.xlu0 %v463, 32
        %v693 = vpop.permute.xlu0 %692
        %694 = vrot.lane.b32.xlu0 %v464, 32
        %v695 = vpop.permute.xlu0 %694
        %696 = vrot.lane.b32.xlu0 %v465, 32
        %v697 = vpop.permute.xlu0 %696
        %698 = vrot.lane.b32.xlu0 %v466, 32
        %v699 = vpop.permute.xlu0 %698
        %700 = vrot.lane.b32.xlu0 %v467, 32
        %v701 = vpop.permute.xlu0 %700
        %702 = vrot.lane.b32.xlu0 %v468, 32
        %v703 = vpop.permute.xlu0 %702
        %704 = vrot.lane.b32.xlu0 %v469, 32
        %v705 = vpop.permute.xlu0 %704
        %706 = vrot.lane.b32.xlu0 %v470, 32
        %v707 = vpop.permute.xlu0 %706
        %708 = vrot.lane.b32.xlu0 %v471, 32
        %v709 = vpop.permute.xlu0 %708
        %710 = vrot.lane.b32.xlu0 %v472, 32
        %v711 = vpop.permute.xlu0 %710
        %712 = vrot.lane.b32.xlu0 %v473, 32
        %v713 = vpop.permute.xlu0 %712
        %714 = vrot.lane.b32.xlu0 %v474, 32
        %v715 = vpop.permute.xlu0 %714
        %716 = vrot.lane.b32.xlu0 %v475, 32
        %v717 = vpop.permute.xlu0 %716
        %718 = vrot.lane.b32.xlu0 %v476, 32
        %v719 = vpop.permute.xlu0 %718
        %720 = vrot.lane.b32.xlu0 %v477, 32
        %v721 = vpop.permute.xlu0 %720
        %722 = vrot.lane.b32.xlu0 %v478, 32
        %v723 = vpop.permute.xlu0 %722
        %724 = vrot.lane.b32.xlu0 %v479, 32
        %v725 = vpop.permute.xlu0 %724
        %726 = vrot.lane.b32.xlu0 %v480, 32
        %v727 = vpop.permute.xlu0 %726
        %728 = vrot.lane.b32.xlu0 %v481, 32
        %v729 = vpop.permute.xlu0 %728
        %730 = vrot.lane.b32.xlu0 %v482, 32
        %v731 = vpop.permute.xlu0 %730
        %732 = vrot.lane.b32.xlu0 %v483, 32
        %v733 = vpop.permute.xlu0 %732
        %734 = vrot.lane.b32.xlu0 %v484, 32
        %v735 = vpop.permute.xlu0 %734
        %736 = vrot.lane.b32.xlu0 %v485, 32
        %v737 = vpop.permute.xlu0 %736
        %738 = vrot.lane.b32.xlu0 %v486, 32
        %v739 = vpop.permute.xlu0 %738
        %740 = vrot.lane.b32.xlu0 %v487, 32
        %v741 = vpop.permute.xlu0 %740
        %742 = vrot.lane.b32.xlu0 %v488, 32
        %v743 = vpop.permute.xlu0 %742
        %744 = vrot.lane.b32.xlu0 %v489, 32
        %v745 = vpop.permute.xlu0 %744
        %v778 = vsel %vm241, %v426, %v683
        %v779 = vsel %vm241, %v427, %v685
        %v780 = vsel %vm241, %v428, %v687
        %v781 = vsel %vm241, %v429, %v689
        %v782 = vsel %vm241, %v430, %v691
        %v783 = vsel %vm241, %v431, %v693
        %v784 = vsel %vm241, %v432, %v695
        %v785 = vsel %vm241, %v433, %v697
        %v786 = vsel %vm241, %v434, %v699
        %v787 = vsel %vm241, %v435, %v701
        %v788 = vsel %vm241, %v436, %v703
        %v789 = vsel %vm241, %v437, %v705
        %v790 = vsel %vm241, %v438, %v707
        %v791 = vsel %vm241, %v439, %v709
        %v792 = vsel %vm241, %v440, %v711
        %v793 = vsel %vm241, %v441, %v713
        %v794 = vsel %vm241, %v442, %v715
        %v795 = vsel %vm241, %v443, %v717
        %v796 = vsel %vm241, %v444, %v719
        %v797 = vsel %vm241, %v445, %v721
        %v798 = vsel %vm241, %v446, %v723
        %v799 = vsel %vm241, %v447, %v725
        %v800 = vsel %vm241, %v448, %v727
        %v801 = vsel %vm241, %v449, %v729
        %v802 = vsel %vm241, %v450, %v731
        %v803 = vsel %vm241, %v451, %v733
        %v804 = vsel %vm241, %v452, %v735
        %v805 = vsel %vm241, %v453, %v737
        %v806 = vsel %vm241, %v454, %v739
        %v807 = vsel %vm241, %v455, %v741
        %v808 = vsel %vm241, %v456, %v743
        %v809 = vsel %vm241, %v457, %v745
        %842 = vrot.lane.b32.xlu0 %v778, 64
        %v843 = vpop.permute.xlu0 %842
        %844 = vrot.lane.b32.xlu0 %v779, 64
        %v845 = vpop.permute.xlu0 %844
        %846 = vrot.lane.b32.xlu0 %v780, 64
        %v847 = vpop.permute.xlu0 %846
        %848 = vrot.lane.b32.xlu0 %v781, 64
        %v849 = vpop.permute.xlu0 %848
        %850 = vrot.lane.b32.xlu0 %v782, 64
        %v851 = vpop.permute.xlu0 %850
        %852 = vrot.lane.b32.xlu0 %v783, 64
        %v853 = vpop.permute.xlu0 %852
        %854 = vrot.lane.b32.xlu0 %v784, 64
        %v855 = vpop.permute.xlu0 %854
        %856 = vrot.lane.b32.xlu0 %v785, 64
        %v857 = vpop.permute.xlu0 %856
        %858 = vrot.lane.b32.xlu0 %v786, 64
        %v859 = vpop.permute.xlu0 %858
        %860 = vrot.lane.b32.xlu0 %v787, 64
        %v861 = vpop.permute.xlu0 %860
        %862 = vrot.lane.b32.xlu0 %v788, 64
        %v863 = vpop.permute.xlu0 %862
        %864 = vrot.lane.b32.xlu0 %v789, 64
        %v865 = vpop.permute.xlu0 %864
        %866 = vrot.lane.b32.xlu0 %v790, 64
        %v867 = vpop.permute.xlu0 %866
        %868 = vrot.lane.b32.xlu0 %v791, 64
        %v869 = vpop.permute.xlu0 %868
        %870 = vrot.lane.b32.xlu0 %v792, 64
        %v871 = vpop.permute.xlu0 %870
        %872 = vrot.lane.b32.xlu0 %v793, 64
        %v873 = vpop.permute.xlu0 %872
        %874 = vrot.lane.b32.xlu0 %v794, 64
        %v875 = vpop.permute.xlu0 %874
        %876 = vrot.lane.b32.xlu0 %v795, 64
        %v877 = vpop.permute.xlu0 %876
        %878 = vrot.lane.b32.xlu0 %v796, 64
        %v879 = vpop.permute.xlu0 %878
        %880 = vrot.lane.b32.xlu0 %v797, 64
        %v881 = vpop.permute.xlu0 %880
        %882 = vrot.lane.b32.xlu0 %v798, 64
        %v883 = vpop.permute.xlu0 %882
        %884 = vrot.lane.b32.xlu0 %v799, 64
        %v885 = vpop.permute.xlu0 %884
        %886 = vrot.lane.b32.xlu0 %v800, 64
        %v887 = vpop.permute.xlu0 %886
        %888 = vrot.lane.b32.xlu0 %v801, 64
        %v889 = vpop.permute.xlu0 %888
        %890 = vrot.lane.b32.xlu0 %v802, 64
        %v891 = vpop.permute.xlu0 %890
        %892 = vrot.lane.b32.xlu0 %v803, 64
        %v893 = vpop.permute.xlu0 %892
        %894 = vrot.lane.b32.xlu0 %v804, 64
        %v895 = vpop.permute.xlu0 %894
        %896 = vrot.lane.b32.xlu0 %v805, 64
        %v897 = vpop.permute.xlu0 %896
        %898 = vrot.lane.b32.xlu0 %v806, 64
        %v899 = vpop.permute.xlu0 %898
        %900 = vrot.lane.b32.xlu0 %v807, 64
        %v901 = vpop.permute.xlu0 %900
        %902 = vrot.lane.b32.xlu0 %v808, 64
        %v903 = vpop.permute.xlu0 %902
        %904 = vrot.lane.b32.xlu0 %v809, 64
        %v905 = vpop.permute.xlu0 %904
        %vm938 = vcmask 523264
        %v939 = vsel %vm938, %v618, %v843
        %v940 = vsel %vm938, %v619, %v845
        %v941 = vsel %vm938, %v620, %v847
        %v942 = vsel %vm938, %v621, %v849
        %v943 = vsel %vm938, %v622, %v851
        %v944 = vsel %vm938, %v623, %v853
        %v945 = vsel %vm938, %v624, %v855
        %v946 = vsel %vm938, %v625, %v857
        %v947 = vsel %vm938, %v626, %v859
        %v948 = vsel %vm938, %v627, %v861
        %v949 = vsel %vm938, %v628, %v863
        %v950 = vsel %vm938, %v629, %v865
        %v951 = vsel %vm938, %v630, %v867
        %v952 = vsel %vm938, %v631, %v869
        %v953 = vsel %vm938, %v632, %v871
        %v954 = vsel %vm938, %v633, %v873
        %v955 = vsel %vm938, %v634, %v875
        %v956 = vsel %vm938, %v635, %v877
        %v957 = vsel %vm938, %v636, %v879
        %v958 = vsel %vm938, %v637, %v881
        %v959 = vsel %vm938, %v638, %v883
        %v960 = vsel %vm938, %v639, %v885
        %v961 = vsel %vm938, %v640, %v887
        %v962 = vsel %vm938, %v641, %v889
        %v963 = vsel %vm938, %v642, %v891
        %v964 = vsel %vm938, %v643, %v893
        %v965 = vsel %vm938, %v644, %v895
        %v966 = vsel %vm938, %v645, %v897
        %v967 = vsel %vm938, %v646, %v899
        %v968 = vsel %vm938, %v647, %v901
        %v969 = vsel %vm938, %v648, %v903
        %v970 = vsel %vm938, %v649, %v905
        %v971 = vpack.c.bf16 %v940, %v939
        %v972 = vpack.c.bf16 %v942, %v941
        %v973 = vpack.c.bf16 %v944, %v943
        %v974 = vpack.c.bf16 %v946, %v945
        %v975 = vpack.c.bf16 %v948, %v947
        %v976 = vpack.c.bf16 %v950, %v949
        %v977 = vpack.c.bf16 %v952, %v951
        %v978 = vpack.c.bf16 %v954, %v953
        %v979 = vpack.c.bf16 %v956, %v955
        %v980 = vpack.c.bf16 %v958, %v957
        %v981 = vpack.c.bf16 %v960, %v959
        %v982 = vpack.c.bf16 %v962, %v961
        %v983 = vpack.c.bf16 %v964, %v963
        %v984 = vpack.c.bf16 %v966, %v965
        %v985 = vpack.c.bf16 %v968, %v967
        %v986 = vpack.c.bf16 %v970, %v969
        %987 = vst [vmem:[#allocation3] sm:$0xff] %v971
        %988 = vst [vmem:[#allocation3 + $0x38] sm:$0xff] %v972
        %989 = vst [vmem:[#allocation3 + $0x70] sm:$0xff] %v973
        %990 = vst [vmem:[#allocation3 + $0xa8] sm:$0xff] %v974
        %991 = vst [vmem:[#allocation3 + $0xe0] sm:$0xff] %v975
        %992 = vst [vmem:[#allocation3 + $0x118] sm:$0xff] %v976
        %993 = vst [vmem:[#allocation3 + $0x150] sm:$0xff] %v977
        %994 = vst [vmem:[#allocation3 + $0x188] sm:$0xff] %v978
        %995 = vst [vmem:[#allocation3 + $0x1c0] sm:$0xff] %v979
        %996 = vst [vmem:[#allocation3 + $0x1f8] sm:$0xff] %v980
        %997 = vst [vmem:[#allocation3 + $0x230] sm:$0xff] %v981
        %998 = vst [vmem:[#allocation3 + $0x268] sm:$0xff] %v982
        %999 = vst [vmem:[#allocation3 + $0x2a0] sm:$0xff] %v983
        %1000 = vst [vmem:[#allocation3 + $0x2d8] sm:$0xff] %v984
        %1001 = vst [vmem:[#allocation3 + $0x310] sm:$0xff] %v985
        %1002 = vst [vmem:[#allocation3 + $0x348] sm:$0xff] %v986
        %v1003 = vld [vmem:[#allocation2 + $0x4] sm:$0xff]
        %v1004 = vld [vmem:[#allocation2 + $0xc] sm:$0xff]
        %v1005 = vld [vmem:[#allocation2 + $0x1c] sm:$0xff]
        %v1006 = vld [vmem:[#allocation2 + $0x24] sm:$0xff]
        %v1007 = vld [vmem:[#allocation2 + $0x34] sm:$0xff]
        %v1008 = vld [vmem:[#allocation2 + $0x3c] sm:$0xff]
        %v1009 = vld [vmem:[#allocation2 + $0x4c] sm:$0xff]
        %v1010 = vld [vmem:[#allocation2 + $0x54] sm:$0xff]
        %v1011 = vld [vmem:[#allocation2 + $0x64] sm:$0xff]
        %v1012 = vld [vmem:[#allocation2 + $0x6c] sm:$0xff]
        %v1013 = vld [vmem:[#allocation2 + $0x7c] sm:$0xff]
        %v1014 = vld [vmem:[#allocation2 + $0x84] sm:$0xff]
        %v1015 = vld [vmem:[#allocation2 + $0x94] sm:$0xff]
        %v1016 = vld [vmem:[#allocation2 + $0x9c] sm:$0xff]
        %v1017 = vld [vmem:[#allocation2 + $0xac] sm:$0xff]
        %v1018 = vld [vmem:[#allocation2 + $0xb4] sm:$0xff]
        %v1019 = vld [vmem:[#allocation2 + $0xc4] sm:$0xff]
        %v1020 = vld [vmem:[#allocation2 + $0xcc] sm:$0xff]
        %v1021 = vld [vmem:[#allocation2 + $0xdc] sm:$0xff]
        %v1022 = vld [vmem:[#allocation2 + $0xe4] sm:$0xff]
        %v1023 = vld [vmem:[#allocation2 + $0xf4] sm:$0xff]
        %v1024 = vld [vmem:[#allocation2 + $0xfc] sm:$0xff]
        %v1025 = vld [vmem:[#allocation2 + $0x10c] sm:$0xff]
        %v1026 = vld [vmem:[#allocation2 + $0x114] sm:$0xff]
        %v1027 = vld [vmem:[#allocation2 + $0x124] sm:$0xff]
        %v1028 = vld [vmem:[#allocation2 + $0x12c] sm:$0xff]
        %v1029 = vld [vmem:[#allocation2 + $0x13c] sm:$0xff]
        %v1030 = vld [vmem:[#allocation2 + $0x144] sm:$0xff]
        %v1031 = vld [vmem:[#allocation2 + $0x154] sm:$0xff]
        %v1032 = vld [vmem:[#allocation2 + $0x15c] sm:$0xff]
        %v1033 = vld [vmem:[#allocation2 + $0x16c] sm:$0xff]
        %v1034 = vld [vmem:[#allocation2 + $0x174] sm:$0xff]
        %s1035 = scalar_lea.vmem [#allocation2], 24
        %v1036 = vld [vmem:[%s1035] sm:$0xff]
        %v1037 = vld [vmem:[%s1035 + $0x8] sm:$0xff]
        %v1038 = vld [vmem:[%s1035 + $0x18] sm:$0xff]
        %v1039 = vld [vmem:[%s1035 + $0x20] sm:$0xff]
        %v1040 = vld [vmem:[%s1035 + $0x30] sm:$0xff]
        %v1041 = vld [vmem:[%s1035 + $0x38] sm:$0xff]
        %v1042 = vld [vmem:[%s1035 + $0x48] sm:$0xff]
        %v1043 = vld [vmem:[%s1035 + $0x50] sm:$0xff]
        %v1044 = vld [vmem:[%s1035 + $0x60] sm:$0xff]
        %v1045 = vld [vmem:[%s1035 + $0x68] sm:$0xff]
        %v1046 = vld [vmem:[%s1035 + $0x78] sm:$0xff]
        %v1047 = vld [vmem:[%s1035 + $0x80] sm:$0xff]
        %v1048 = vld [vmem:[%s1035 + $0x90] sm:$0xff]
        %v1049 = vld [vmem:[%s1035 + $0x98] sm:$0xff]
        %v1050 = vld [vmem:[%s1035 + $0xa8] sm:$0xff]
        %v1051 = vld [vmem:[%s1035 + $0xb0] sm:$0xff]
        %v1052 = vld [vmem:[%s1035 + $0xc0] sm:$0xff]
        %v1053 = vld [vmem:[%s1035 + $0xc8] sm:$0xff]
        %v1054 = vld [vmem:[%s1035 + $0xd8] sm:$0xff]
        %v1055 = vld [vmem:[%s1035 + $0xe0] sm:$0xff]
        %v1056 = vld [vmem:[%s1035 + $0xf0] sm:$0xff]
        %v1057 = vld [vmem:[%s1035 + $0xf8] sm:$0xff]
        %v1058 = vld [vmem:[%s1035 + $0x108] sm:$0xff]
        %v1059 = vld [vmem:[%s1035 + $0x110] sm:$0xff]
        %v1060 = vld [vmem:[%s1035 + $0x120] sm:$0xff]
        %v1061 = vld [vmem:[%s1035 + $0x128] sm:$0xff]
        %v1062 = vld [vmem:[%s1035 + $0x138] sm:$0xff]
        %v1063 = vld [vmem:[%s1035 + $0x140] sm:$0xff]
        %v1064 = vld [vmem:[%s1035 + $0x150] sm:$0xff]
        %v1065 = vld [vmem:[%s1035 + $0x158] sm:$0xff]
        %v1066 = vld [vmem:[%s1035 + $0x168] sm:$0xff]
        %v1067 = vld [vmem:[%s1035 + $0x170] sm:$0xff]
        %v1068 = vld [vmem:[%s1035 + $0x1] sm:$0xff]
        %v1069 = vld [vmem:[%s1035 + $0x9] sm:$0xff]
        %v1070 = vld [vmem:[%s1035 + $0x19] sm:$0xff]
        %v1071 = vld [vmem:[%s1035 + $0x21] sm:$0xff]
        %v1072 = vld [vmem:[%s1035 + $0x31] sm:$0xff]
        %v1073 = vld [vmem:[%s1035 + $0x39] sm:$0xff]
        %v1074 = vld [vmem:[%s1035 + $0x49] sm:$0xff]
        %v1075 = vld [vmem:[%s1035 + $0x51] sm:$0xff]
        %v1076 = vld [vmem:[%s1035 + $0x61] sm:$0xff]
        %v1077 = vld [vmem:[%s1035 + $0x69] sm:$0xff]
        %v1078 = vld [vmem:[%s1035 + $0x79] sm:$0xff]
        %v1079 = vld [vmem:[%s1035 + $0x81] sm:$0xff]
        %v1080 = vld [vmem:[%s1035 + $0x91] sm:$0xff]
        %v1081 = vld [vmem:[%s1035 + $0x99] sm:$0xff]
        %v1082 = vld [vmem:[%s1035 + $0xa9] sm:$0xff]
        %v1083 = vld [vmem:[%s1035 + $0xb1] sm:$0xff]
        %v1084 = vld [vmem:[%s1035 + $0xc1] sm:$0xff]
        %v1085 = vld [vmem:[%s1035 + $0xc9] sm:$0xff]
        %v1086 = vld [vmem:[%s1035 + $0xd9] sm:$0xff]
        %v1087 = vld [vmem:[%s1035 + $0xe1] sm:$0xff]
        %v1088 = vld [vmem:[%s1035 + $0xf1] sm:$0xff]
        %v1089 = vld [vmem:[%s1035 + $0xf9] sm:$0xff]
        %v1090 = vld [vmem:[%s1035 + $0x109] sm:$0xff]
        %v1091 = vld [vmem:[%s1035 + $0x111] sm:$0xff]
        %v1092 = vld [vmem:[%s1035 + $0x121] sm:$0xff]
        %v1093 = vld [vmem:[%s1035 + $0x129] sm:$0xff]
        %v1094 = vld [vmem:[%s1035 + $0x139] sm:$0xff]
        %v1095 = vld [vmem:[%s1035 + $0x141] sm:$0xff]
        %v1096 = vld [vmem:[%s1035 + $0x151] sm:$0xff]
        %v1097 = vld [vmem:[%s1035 + $0x159] sm:$0xff]
        %v1098 = vld [vmem:[%s1035 + $0x169] sm:$0xff]
        %v1099 = vld [vmem:[%s1035 + $0x171] sm:$0xff]
        %v1100 = vld [vmem:[%s1035 + $0x2] sm:$0xff]
        %v1101 = vld [vmem:[%s1035 + $0xa] sm:$0xff]
        %v1102 = vld [vmem:[%s1035 + $0x1a] sm:$0xff]
        %v1103 = vld [vmem:[%s1035 + $0x22] sm:$0xff]
        %v1104 = vld [vmem:[%s1035 + $0x32] sm:$0xff]
        %v1105 = vld [vmem:[%s1035 + $0x3a] sm:$0xff]
        %v1106 = vld [vmem:[%s1035 + $0x4a] sm:$0xff]
        %v1107 = vld [vmem:[%s1035 + $0x52] sm:$0xff]
        %v1108 = vld [vmem:[%s1035 + $0x62] sm:$0xff]
        %v1109 = vld [vmem:[%s1035 + $0x6a] sm:$0xff]
        %v1110 = vld [vmem:[%s1035 + $0x7a] sm:$0xff]
        %v1111 = vld [vmem:[%s1035 + $0x82] sm:$0xff]
        %v1112 = vld [vmem:[%s1035 + $0x92] sm:$0xff]
        %v1113 = vld [vmem:[%s1035 + $0x9a] sm:$0xff]
        %v1114 = vld [vmem:[%s1035 + $0xaa] sm:$0xff]
        %v1115 = vld [vmem:[%s1035 + $0xb2] sm:$0xff]
        %v1116 = vld [vmem:[%s1035 + $0xc2] sm:$0xff]
        %v1117 = vld [vmem:[%s1035 + $0xca] sm:$0xff]
        %v1118 = vld [vmem:[%s1035 + $0xda] sm:$0xff]
        %v1119 = vld [vmem:[%s1035 + $0xe2] sm:$0xff]
        %v1120 = vld [vmem:[%s1035 + $0xf2] sm:$0xff]
        %v1121 = vld [vmem:[%s1035 + $0xfa] sm:$0xff]
        %v1122 = vld [vmem:[%s1035 + $0x10a] sm:$0xff]
        %v1123 = vld [vmem:[%s1035 + $0x112] sm:$0xff]
        %v1124 = vld [vmem:[%s1035 + $0x122] sm:$0xff]
        %v1125 = vld [vmem:[%s1035 + $0x12a] sm:$0xff]
        %v1126 = vld [vmem:[%s1035 + $0x13a] sm:$0xff]
        %v1127 = vld [vmem:[%s1035 + $0x142] sm:$0xff]
        %v1128 = vld [vmem:[%s1035 + $0x152] sm:$0xff]
        %v1129 = vld [vmem:[%s1035 + $0x15a] sm:$0xff]
        %v1130 = vld [vmem:[%s1035 + $0x16a] sm:$0xff]
        %v1131 = vld [vmem:[%s1035 + $0x172] sm:$0xff]
        %1164 = vrot.lane.b32.xlu0 %v1036, 32
        %v1165 = vpop.permute.xlu0 %1164
        %1166 = vrot.lane.b32.xlu0 %v1037, 32
        %v1167 = vpop.permute.xlu0 %1166
        %1168 = vrot.lane.b32.xlu0 %v1038, 32
        %v1169 = vpop.permute.xlu0 %1168
        %1170 = vrot.lane.b32.xlu0 %v1039, 32
        %v1171 = vpop.permute.xlu0 %1170
        %1172 = vrot.lane.b32.xlu0 %v1040, 32
        %v1173 = vpop.permute.xlu0 %1172
        %1174 = vrot.lane.b32.xlu0 %v1041, 32
        %v1175 = vpop.permute.xlu0 %1174
        %1176 = vrot.lane.b32.xlu0 %v1042, 32
        %v1177 = vpop.permute.xlu0 %1176
        %1178 = vrot.lane.b32.xlu0 %v1043, 32
        %v1179 = vpop.permute.xlu0 %1178
        %1180 = vrot.lane.b32.xlu0 %v1044, 32
        %v1181 = vpop.permute.xlu0 %1180
        %1182 = vrot.lane.b32.xlu0 %v1045, 32
        %v1183 = vpop.permute.xlu0 %1182
        %1184 = vrot.lane.b32.xlu0 %v1046, 32
        %v1185 = vpop.permute.xlu0 %1184
        %1186 = vrot.lane.b32.xlu0 %v1047, 32
        %v1187 = vpop.permute.xlu0 %1186
        %1188 = vrot.lane.b32.xlu0 %v1048, 32
        %v1189 = vpop.permute.xlu0 %1188
        %1190 = vrot.lane.b32.xlu0 %v1049, 32
        %v1191 = vpop.permute.xlu0 %1190
        %1192 = vrot.lane.b32.xlu0 %v1050, 32
        %v1193 = vpop.permute.xlu0 %1192
        %1194 = vrot.lane.b32.xlu0 %v1051, 32
        %v1195 = vpop.permute.xlu0 %1194
        %1196 = vrot.lane.b32.xlu0 %v1052, 32
        %v1197 = vpop.permute.xlu0 %1196
        %1198 = vrot.lane.b32.xlu0 %v1053, 32
        %v1199 = vpop.permute.xlu0 %1198
        %1200 = vrot.lane.b32.xlu0 %v1054, 32
        %v1201 = vpop.permute.xlu0 %1200
        %1202 = vrot.lane.b32.xlu0 %v1055, 32
        %v1203 = vpop.permute.xlu0 %1202
        %1204 = vrot.lane.b32.xlu0 %v1056, 32
        %v1205 = vpop.permute.xlu0 %1204
        %1206 = vrot.lane.b32.xlu0 %v1057, 32
        %v1207 = vpop.permute.xlu0 %1206
        %1208 = vrot.lane.b32.xlu0 %v1058, 32
        %v1209 = vpop.permute.xlu0 %1208
        %1210 = vrot.lane.b32.xlu0 %v1059, 32
        %v1211 = vpop.permute.xlu0 %1210
        %1212 = vrot.lane.b32.xlu0 %v1060, 32
        %v1213 = vpop.permute.xlu0 %1212
        %1214 = vrot.lane.b32.xlu0 %v1061, 32
        %v1215 = vpop.permute.xlu0 %1214
        %1216 = vrot.lane.b32.xlu0 %v1062, 32
        %v1217 = vpop.permute.xlu0 %1216
        %1218 = vrot.lane.b32.xlu0 %v1063, 32
        %v1219 = vpop.permute.xlu0 %1218
        %1220 = vrot.lane.b32.xlu0 %v1064, 32
        %v1221 = vpop.permute.xlu0 %1220
        %1222 = vrot.lane.b32.xlu0 %v1065, 32
        %v1223 = vpop.permute.xlu0 %1222
        %1224 = vrot.lane.b32.xlu0 %v1066, 32
        %v1225 = vpop.permute.xlu0 %1224
        %1226 = vrot.lane.b32.xlu0 %v1067, 32
        %v1227 = vpop.permute.xlu0 %1226
        %v1260 = vsel %vm241, %v1003, %v1165
        %v1261 = vsel %vm241, %v1004, %v1167
        %v1262 = vsel %vm241, %v1005, %v1169
        %v1263 = vsel %vm241, %v1006, %v1171
        %v1264 = vsel %vm241, %v1007, %v1173
        %v1265 = vsel %vm241, %v1008, %v1175
        %v1266 = vsel %vm241, %v1009, %v1177
        %v1267 = vsel %vm241, %v1010, %v1179
        %v1268 = vsel %vm241, %v1011, %v1181
        %v1269 = vsel %vm241, %v1012, %v1183
        %v1270 = vsel %vm241, %v1013, %v1185
        %v1271 = vsel %vm241, %v1014, %v1187
        %v1272 = vsel %vm241, %v1015, %v1189
        %v1273 = vsel %vm241, %v1016, %v1191
        %v1274 = vsel %vm241, %v1017, %v1193
        %v1275 = vsel %vm241, %v1018, %v1195
        %v1276 = vsel %vm241, %v1019, %v1197
        %v1277 = vsel %vm241, %v1020, %v1199
        %v1278 = vsel %vm241, %v1021, %v1201
        %v1279 = vsel %vm241, %v1022, %v1203
        %v1280 = vsel %vm241, %v1023, %v1205
        %v1281 = vsel %vm241, %v1024, %v1207
        %v1282 = vsel %vm241, %v1025, %v1209
        %v1283 = vsel %vm241, %v1026, %v1211
        %v1284 = vsel %vm241, %v1027, %v1213
        %v1285 = vsel %vm241, %v1028, %v1215
        %v1286 = vsel %vm241, %v1029, %v1217
        %v1287 = vsel %vm241, %v1030, %v1219
        %v1288 = vsel %vm241, %v1031, %v1221
        %v1289 = vsel %vm241, %v1032, %v1223
        %v1290 = vsel %vm241, %v1033, %v1225
        %v1291 = vsel %vm241, %v1034, %v1227
        %1324 = vrot.lane.b32.xlu0 %v1100, 32
        %v1325 = vpop.permute.xlu0 %1324
        %1326 = vrot.lane.b32.xlu0 %v1101, 32
        %v1327 = vpop.permute.xlu0 %1326
        %1328 = vrot.lane.b32.xlu0 %v1102, 32
        %v1329 = vpop.permute.xlu0 %1328
        %1330 = vrot.lane.b32.xlu0 %v1103, 32
        %v1331 = vpop.permute.xlu0 %1330
        %1332 = vrot.lane.b32.xlu0 %v1104, 32
        %v1333 = vpop.permute.xlu0 %1332
        %1334 = vrot.lane.b32.xlu0 %v1105, 32
        %v1335 = vpop.permute.xlu0 %1334
        %1336 = vrot.lane.b32.xlu0 %v1106, 32
        %v1337 = vpop.permute.xlu0 %1336
        %1338 = vrot.lane.b32.xlu0 %v1107, 32
        %v1339 = vpop.permute.xlu0 %1338
        %1340 = vrot.lane.b32.xlu0 %v1108, 32
        %v1341 = vpop.permute.xlu0 %1340
        %1342 = vrot.lane.b32.xlu0 %v1109, 32
        %v1343 = vpop.permute.xlu0 %1342
        %1344 = vrot.lane.b32.xlu0 %v1110, 32
        %v1345 = vpop.permute.xlu0 %1344
        %1346 = vrot.lane.b32.xlu0 %v1111, 32
        %v1347 = vpop.permute.xlu0 %1346
        %1348 = vrot.lane.b32.xlu0 %v1112, 32
        %v1349 = vpop.permute.xlu0 %1348
        %1350 = vrot.lane.b32.xlu0 %v1113, 32
        %v1351 = vpop.permute.xlu0 %1350
        %1352 = vrot.lane.b32.xlu0 %v1114, 32
        %v1353 = vpop.permute.xlu0 %1352
        %1354 = vrot.lane.b32.xlu0 %v1115, 32
        %v1355 = vpop.permute.xlu0 %1354
        %1356 = vrot.lane.b32.xlu0 %v1116, 32
        %v1357 = vpop.permute.xlu0 %1356
        %1358 = vrot.lane.b32.xlu0 %v1117, 32
        %v1359 = vpop.permute.xlu0 %1358
        %1360 = vrot.lane.b32.xlu0 %v1118, 32
        %v1361 = vpop.permute.xlu0 %1360
        %1362 = vrot.lane.b32.xlu0 %v1119, 32
        %v1363 = vpop.permute.xlu0 %1362
        %1364 = vrot.lane.b32.xlu0 %v1120, 32
        %v1365 = vpop.permute.xlu0 %1364
        %1366 = vrot.lane.b32.xlu0 %v1121, 32
        %v1367 = vpop.permute.xlu0 %1366
        %1368 = vrot.lane.b32.xlu0 %v1122, 32
        %v1369 = vpop.permute.xlu0 %1368
        %1370 = vrot.lane.b32.xlu0 %v1123, 32
        %v1371 = vpop.permute.xlu0 %1370
        %1372 = vrot.lane.b32.xlu0 %v1124, 32
        %v1373 = vpop.permute.xlu0 %1372
        %1374 = vrot.lane.b32.xlu0 %v1125, 32
        %v1375 = vpop.permute.xlu0 %1374
        %1376 = vrot.lane.b32.xlu0 %v1126, 32
        %v1377 = vpop.permute.xlu0 %1376
        %1378 = vrot.lane.b32.xlu0 %v1127, 32
        %v1379 = vpop.permute.xlu0 %1378
        %1380 = vrot.lane.b32.xlu0 %v1128, 32
        %v1381 = vpop.permute.xlu0 %1380
        %1382 = vrot.lane.b32.xlu0 %v1129, 32
        %v1383 = vpop.permute.xlu0 %1382
        %1384 = vrot.lane.b32.xlu0 %v1130, 32
        %v1385 = vpop.permute.xlu0 %1384
        %1386 = vrot.lane.b32.xlu0 %v1131, 32
        %v1387 = vpop.permute.xlu0 %1386
        %v1420 = vsel %vm241, %v1068, %v1325
        %v1421 = vsel %vm241, %v1069, %v1327
        %v1422 = vsel %vm241, %v1070, %v1329
        %v1423 = vsel %vm241, %v1071, %v1331
        %v1424 = vsel %vm241, %v1072, %v1333
        %v1425 = vsel %vm241, %v1073, %v1335
        %v1426 = vsel %vm241, %v1074, %v1337
        %v1427 = vsel %vm241, %v1075, %v1339
        %v1428 = vsel %vm241, %v1076, %v1341
        %v1429 = vsel %vm241, %v1077, %v1343
        %v1430 = vsel %vm241, %v1078, %v1345
        %v1431 = vsel %vm241, %v1079, %v1347
        %v1432 = vsel %vm241, %v1080, %v1349
        %v1433 = vsel %vm241, %v1081, %v1351
        %v1434 = vsel %vm241, %v1082, %v1353
        %v1435 = vsel %vm241, %v1083, %v1355
        %v1436 = vsel %vm241, %v1084, %v1357
        %v1437 = vsel %vm241, %v1085, %v1359
        %v1438 = vsel %vm241, %v1086, %v1361
        %v1439 = vsel %vm241, %v1087, %v1363
        %v1440 = vsel %vm241, %v1088, %v1365
        %v1441 = vsel %vm241, %v1089, %v1367
        %v1442 = vsel %vm241, %v1090, %v1369
        %v1443 = vsel %vm241, %v1091, %v1371
        %v1444 = vsel %vm241, %v1092, %v1373
        %v1445 = vsel %vm241, %v1093, %v1375
        %v1446 = vsel %vm241, %v1094, %v1377
        %v1447 = vsel %vm241, %v1095, %v1379
        %v1448 = vsel %vm241, %v1096, %v1381
        %v1449 = vsel %vm241, %v1097, %v1383
        %v1450 = vsel %vm241, %v1098, %v1385
        %v1451 = vsel %vm241, %v1099, %v1387
        %1484 = vrot.lane.b32.xlu0 %v1420, 64
        %v1485 = vpop.permute.xlu0 %1484
        %1486 = vrot.lane.b32.xlu0 %v1421, 64
        %v1487 = vpop.permute.xlu0 %1486
        %1488 = vrot.lane.b32.xlu0 %v1422, 64
        %v1489 = vpop.permute.xlu0 %1488
        %1490 = vrot.lane.b32.xlu0 %v1423, 64
        %v1491 = vpop.permute.xlu0 %1490
        %1492 = vrot.lane.b32.xlu0 %v1424, 64
        %v1493 = vpop.permute.xlu0 %1492
        %1494 = vrot.lane.b32.xlu0 %v1425, 64
        %v1495 = vpop.permute.xlu0 %1494
        %1496 = vrot.lane.b32.xlu0 %v1426, 64
        %v1497 = vpop.permute.xlu0 %1496
        %1498 = vrot.lane.b32.xlu0 %v1427, 64
        %v1499 = vpop.permute.xlu0 %1498
        %1500 = vrot.lane.b32.xlu0 %v1428, 64
        %v1501 = vpop.permute.xlu0 %1500
        %1502 = vrot.lane.b32.xlu0 %v1429, 64
        %v1503 = vpop.permute.xlu0 %1502
        %1504 = vrot.lane.b32.xlu0 %v1430, 64
        %v1505 = vpop.permute.xlu0 %1504
        %1506 = vrot.lane.b32.xlu0 %v1431, 64
        %v1507 = vpop.permute.xlu0 %1506
        %1508 = vrot.lane.b32.xlu0 %v1432, 64
        %v1509 = vpop.permute.xlu0 %1508
        %1510 = vrot.lane.b32.xlu0 %v1433, 64
        %v1511 = vpop.permute.xlu0 %1510
        %1512 = vrot.lane.b32.xlu0 %v1434, 64
        %v1513 = vpop.permute.xlu0 %1512
        %1514 = vrot.lane.b32.xlu0 %v1435, 64
        %v1515 = vpop.permute.xlu0 %1514
        %1516 = vrot.lane.b32.xlu0 %v1436, 64
        %v1517 = vpop.permute.xlu0 %1516
        %1518 = vrot.lane.b32.xlu0 %v1437, 64
        %v1519 = vpop.permute.xlu0 %1518
        %1520 = vrot.lane.b32.xlu0 %v1438, 64
        %v1521 = vpop.permute.xlu0 %1520
        %1522 = vrot.lane.b32.xlu0 %v1439, 64
        %v1523 = vpop.permute.xlu0 %1522
        %1524 = vrot.lane.b32.xlu0 %v1440, 64
        %v1525 = vpop.permute.xlu0 %1524
        %1526 = vrot.lane.b32.xlu0 %v1441, 64
        %v1527 = vpop.permute.xlu0 %1526
        %1528 = vrot.lane.b32.xlu0 %v1442, 64
        %v1529 = vpop.permute.xlu0 %1528
        %1530 = vrot.lane.b32.xlu0 %v1443, 64
        %v1531 = vpop.permute.xlu0 %1530
        %1532 = vrot.lane.b32.xlu0 %v1444, 64
        %v1533 = vpop.permute.xlu0 %1532
        %1534 = vrot.lane.b32.xlu0 %v1445, 64
        %v1535 = vpop.permute.xlu0 %1534
        %1536 = vrot.lane.b32.xlu0 %v1446, 64
        %v1537 = vpop.permute.xlu0 %1536
        %1538 = vrot.lane.b32.xlu0 %v1447, 64
        %v1539 = vpop.permute.xlu0 %1538
        %1540 = vrot.lane.b32.xlu0 %v1448, 64
        %v1541 = vpop.permute.xlu0 %1540
        %1542 = vrot.lane.b32.xlu0 %v1449, 64
        %v1543 = vpop.permute.xlu0 %1542
        %1544 = vrot.lane.b32.xlu0 %v1450, 64
        %v1545 = vpop.permute.xlu0 %1544
        %1546 = vrot.lane.b32.xlu0 %v1451, 64
        %v1547 = vpop.permute.xlu0 %1546
        %v1580 = vsel %vm938, %v1260, %v1485
        %v1581 = vsel %vm938, %v1261, %v1487
        %v1582 = vsel %vm938, %v1262, %v1489
        %v1583 = vsel %vm938, %v1263, %v1491
        %v1584 = vsel %vm938, %v1264, %v1493
        %v1585 = vsel %vm938, %v1265, %v1495
        %v1586 = vsel %vm938, %v1266, %v1497
        %v1587 = vsel %vm938, %v1267, %v1499
        %v1588 = vsel %vm938, %v1268, %v1501
        %v1589 = vsel %vm938, %v1269, %v1503
        %v1590 = vsel %vm938, %v1270, %v1505
        %v1591 = vsel %vm938, %v1271, %v1507
        %v1592 = vsel %vm938, %v1272, %v1509
        %v1593 = vsel %vm938, %v1273, %v1511
        %v1594 = vsel %vm938, %v1274, %v1513
        %v1595 = vsel %vm938, %v1275, %v1515
        %v1596 = vsel %vm938, %v1276, %v1517
        %v1597 = vsel %vm938, %v1277, %v1519
        %v1598 = vsel %vm938, %v1278, %v1521
        %v1599 = vsel %vm938, %v1279, %v1523
        %v1600 = vsel %vm938, %v1280, %v1525
        %v1601 = vsel %vm938, %v1281, %v1527
        %v1602 = vsel %vm938, %v1282, %v1529
        %v1603 = vsel %vm938, %v1283, %v1531
        %v1604 = vsel %vm938, %v1284, %v1533
        %v1605 = vsel %vm938, %v1285, %v1535
        %v1606 = vsel %vm938, %v1286, %v1537
        %v1607 = vsel %vm938, %v1287, %v1539
        %v1608 = vsel %vm938, %v1288, %v1541
        %v1609 = vsel %vm938, %v1289, %v1543
        %v1610 = vsel %vm938, %v1290, %v1545
        %v1611 = vsel %vm938, %v1291, %v1547
        %v1612 = vpack.c.bf16 %v1581, %v1580
        %v1613 = vpack.c.bf16 %v1583, %v1582
        %v1614 = vpack.c.bf16 %v1585, %v1584
        %v1615 = vpack.c.bf16 %v1587, %v1586
        %v1616 = vpack.c.bf16 %v1589, %v1588
        %v1617 = vpack.c.bf16 %v1591, %v1590
        %v1618 = vpack.c.bf16 %v1593, %v1592
        %v1619 = vpack.c.bf16 %v1595, %v1594
        %v1620 = vpack.c.bf16 %v1597, %v1596
        %v1621 = vpack.c.bf16 %v1599, %v1598
        %v1622 = vpack.c.bf16 %v1601, %v1600
        %v1623 = vpack.c.bf16 %v1603, %v1602
        %v1624 = vpack.c.bf16 %v1605, %v1604
        %v1625 = vpack.c.bf16 %v1607, %v1606
        %v1626 = vpack.c.bf16 %v1609, %v1608
        %v1627 = vpack.c.bf16 %v1611, %v1610
        %1628 = vst [vmem:[#allocation3 + $0x8] sm:$0xff] %v1612
        %1629 = vst [vmem:[#allocation3 + $0x40] sm:$0xff] %v1613
        %1630 = vst [vmem:[#allocation3 + $0x78] sm:$0xff] %v1614
        %1631 = vst [vmem:[#allocation3 + $0xb0] sm:$0xff] %v1615
        %1632 = vst [vmem:[#allocation3 + $0xe8] sm:$0xff] %v1616
        %1633 = vst [vmem:[#allocation3 + $0x120] sm:$0xff] %v1617
        %1634 = vst [vmem:[#allocation3 + $0x158] sm:$0xff] %v1618
        %1635 = vst [vmem:[#allocation3 + $0x190] sm:$0xff] %v1619
        %1636 = vst [vmem:[#allocation3 + $0x1c8] sm:$0xff] %v1620
        %1637 = vst [vmem:[#allocation3 + $0x200] sm:$0xff] %v1621
        %1638 = vst [vmem:[#allocation3 + $0x238] sm:$0xff] %v1622
        %1639 = vst [vmem:[#allocation3 + $0x270] sm:$0xff] %v1623
        %1640 = vst [vmem:[#allocation3 + $0x2a8] sm:$0xff] %v1624
        %1641 = vst [vmem:[#allocation3 + $0x2e0] sm:$0xff] %v1625
        %1642 = vst [vmem:[#allocation3 + $0x318] sm:$0xff] %v1626
        %1643 = vst [vmem:[#allocation3 + $0x350] sm:$0xff] %v1627
        %v1644 = vld [vmem:[%s1035 + $0x3] sm:$0xff]
        %v1645 = vld [vmem:[%s1035 + $0xb] sm:$0xff]
        %v1646 = vld [vmem:[%s1035 + $0x1b] sm:$0xff]
        %v1647 = vld [vmem:[%s1035 + $0x23] sm:$0xff]
        %v1648 = vld [vmem:[%s1035 + $0x33] sm:$0xff]
        %v1649 = vld [vmem:[%s1035 + $0x3b] sm:$0xff]
        %v1650 = vld [vmem:[%s1035 + $0x4b] sm:$0xff]
        %v1651 = vld [vmem:[%s1035 + $0x53] sm:$0xff]
        %v1652 = vld [vmem:[%s1035 + $0x63] sm:$0xff]
        %v1653 = vld [vmem:[%s1035 + $0x6b] sm:$0xff]
        %v1654 = vld [vmem:[%s1035 + $0x7b] sm:$0xff]
        %v1655 = vld [vmem:[%s1035 + $0x83] sm:$0xff]
        %v1656 = vld [vmem:[%s1035 + $0x93] sm:$0xff]
        %v1657 = vld [vmem:[%s1035 + $0x9b] sm:$0xff]
        %v1658 = vld [vmem:[%s1035 + $0xab] sm:$0xff]
        %v1659 = vld [vmem:[%s1035 + $0xb3] sm:$0xff]
        %v1660 = vld [vmem:[%s1035 + $0xc3] sm:$0xff]
        %v1661 = vld [vmem:[%s1035 + $0xcb] sm:$0xff]
        %v1662 = vld [vmem:[%s1035 + $0xdb] sm:$0xff]
        %v1663 = vld [vmem:[%s1035 + $0xe3] sm:$0xff]
        %v1664 = vld [vmem:[%s1035 + $0xf3] sm:$0xff]
        %v1665 = vld [vmem:[%s1035 + $0xfb] sm:$0xff]
        %v1666 = vld [vmem:[%s1035 + $0x10b] sm:$0xff]
        %v1667 = vld [vmem:[%s1035 + $0x113] sm:$0xff]
        %v1668 = vld [vmem:[%s1035 + $0x123] sm:$0xff]
        %v1669 = vld [vmem:[%s1035 + $0x12b] sm:$0xff]
        %v1670 = vld [vmem:[%s1035 + $0x13b] sm:$0xff]
        %v1671 = vld [vmem:[%s1035 + $0x143] sm:$0xff]
        %v1672 = vld [vmem:[%s1035 + $0x153] sm:$0xff]
        %v1673 = vld [vmem:[%s1035 + $0x15b] sm:$0xff]
        %v1674 = vld [vmem:[%s1035 + $0x16b] sm:$0xff]
        %v1675 = vld [vmem:[%s1035 + $0x173] sm:$0xff]
        %v1676 = vld [vmem:[%s1035 + $0x4] sm:$0xff]
        %v1677 = vld [vmem:[%s1035 + $0xc] sm:$0xff]
        %v1678 = vld [vmem:[%s1035 + $0x1c] sm:$0xff]
        %v1679 = vld [vmem:[%s1035 + $0x24] sm:$0xff]
        %v1680 = vld [vmem:[%s1035 + $0x34] sm:$0xff]
        %v1681 = vld [vmem:[%s1035 + $0x3c] sm:$0xff]
        %v1682 = vld [vmem:[%s1035 + $0x4c] sm:$0xff]
        %v1683 = vld [vmem:[%s1035 + $0x54] sm:$0xff]
        %v1684 = vld [vmem:[%s1035 + $0x64] sm:$0xff]
        %v1685 = vld [vmem:[%s1035 + $0x6c] sm:$0xff]
        %v1686 = vld [vmem:[%s1035 + $0x7c] sm:$0xff]
        %v1687 = vld [vmem:[%s1035 + $0x84] sm:$0xff]
        %v1688 = vld [vmem:[%s1035 + $0x94] sm:$0xff]
        %v1689 = vld [vmem:[%s1035 + $0x9c] sm:$0xff]
        %v1690 = vld [vmem:[%s1035 + $0xac] sm:$0xff]
        %v1691 = vld [vmem:[%s1035 + $0xb4] sm:$0xff]
        %v1692 = vld [vmem:[%s1035 + $0xc4] sm:$0xff]
        %v1693 = vld [vmem:[%s1035 + $0xcc] sm:$0xff]
        %v1694 = vld [vmem:[%s1035 + $0xdc] sm:$0xff]
        %v1695 = vld [vmem:[%s1035 + $0xe4] sm:$0xff]
        %v1696 = vld [vmem:[%s1035 + $0xf4] sm:$0xff]
        %v1697 = vld [vmem:[%s1035 + $0xfc] sm:$0xff]
        %v1698 = vld [vmem:[%s1035 + $0x10c] sm:$0xff]
        %v1699 = vld [vmem:[%s1035 + $0x114] sm:$0xff]
        %v1700 = vld [vmem:[%s1035 + $0x124] sm:$0xff]
        %v1701 = vld [vmem:[%s1035 + $0x12c] sm:$0xff]
        %v1702 = vld [vmem:[%s1035 + $0x13c] sm:$0xff]
        %v1703 = vld [vmem:[%s1035 + $0x144] sm:$0xff]
        %v1704 = vld [vmem:[%s1035 + $0x154] sm:$0xff]
        %v1705 = vld [vmem:[%s1035 + $0x15c] sm:$0xff]
        %v1706 = vld [vmem:[%s1035 + $0x16c] sm:$0xff]
        %v1707 = vld [vmem:[%s1035 + $0x174] sm:$0xff]
        %v1708 = vld [vmem:[%s329] sm:$0xff]
        %v1709 = vld [vmem:[%s329 + $0x8] sm:$0xff]
        %v1710 = vld [vmem:[%s329 + $0x18] sm:$0xff]
        %v1711 = vld [vmem:[%s329 + $0x20] sm:$0xff]
        %v1712 = vld [vmem:[%s329 + $0x30] sm:$0xff]
        %v1713 = vld [vmem:[%s329 + $0x38] sm:$0xff]
        %v1714 = vld [vmem:[%s329 + $0x48] sm:$0xff]
        %v1715 = vld [vmem:[%s329 + $0x50] sm:$0xff]
        %v1716 = vld [vmem:[%s329 + $0x60] sm:$0xff]
        %v1717 = vld [vmem:[%s329 + $0x68] sm:$0xff]
        %v1718 = vld [vmem:[%s329 + $0x78] sm:$0xff]
        %v1719 = vld [vmem:[%s329 + $0x80] sm:$0xff]
        %v1720 = vld [vmem:[%s329 + $0x90] sm:$0xff]
        %v1721 = vld [vmem:[%s329 + $0x98] sm:$0xff]
        %v1722 = vld [vmem:[%s329 + $0xa8] sm:$0xff]
        %v1723 = vld [vmem:[%s329 + $0xb0] sm:$0xff]
        %v1724 = vld [vmem:[%s329 + $0xc0] sm:$0xff]
        %v1725 = vld [vmem:[%s329 + $0xc8] sm:$0xff]
        %v1726 = vld [vmem:[%s329 + $0xd8] sm:$0xff]
        %v1727 = vld [vmem:[%s329 + $0xe0] sm:$0xff]
        %v1728 = vld [vmem:[%s329 + $0xf0] sm:$0xff]
        %v1729 = vld [vmem:[%s329 + $0xf8] sm:$0xff]
        %v1730 = vld [vmem:[%s329 + $0x108] sm:$0xff]
        %v1731 = vld [vmem:[%s329 + $0x110] sm:$0xff]
        %v1732 = vld [vmem:[%s329 + $0x120] sm:$0xff]
        %v1733 = vld [vmem:[%s329 + $0x128] sm:$0xff]
        %v1734 = vld [vmem:[%s329 + $0x138] sm:$0xff]
        %v1735 = vld [vmem:[%s329 + $0x140] sm:$0xff]
        %v1736 = vld [vmem:[%s329 + $0x150] sm:$0xff]
        %v1737 = vld [vmem:[%s329 + $0x158] sm:$0xff]
        %v1738 = vld [vmem:[%s329 + $0x168] sm:$0xff]
        %v1739 = vld [vmem:[%s329 + $0x170] sm:$0xff]
        %v1740 = vld [vmem:[%s329 + $0x1] sm:$0xff]
        %v1741 = vld [vmem:[%s329 + $0x9] sm:$0xff]
        %v1742 = vld [vmem:[%s329 + $0x19] sm:$0xff]
        %v1743 = vld [vmem:[%s329 + $0x21] sm:$0xff]
        %v1744 = vld [vmem:[%s329 + $0x31] sm:$0xff]
        %v1745 = vld [vmem:[%s329 + $0x39] sm:$0xff]
        %v1746 = vld [vmem:[%s329 + $0x49] sm:$0xff]
        %v1747 = vld [vmem:[%s329 + $0x51] sm:$0xff]
        %v1748 = vld [vmem:[%s329 + $0x61] sm:$0xff]
        %v1749 = vld [vmem:[%s329 + $0x69] sm:$0xff]
        %v1750 = vld [vmem:[%s329 + $0x79] sm:$0xff]
        %v1751 = vld [vmem:[%s329 + $0x81] sm:$0xff]
        %v1752 = vld [vmem:[%s329 + $0x91] sm:$0xff]
        %v1753 = vld [vmem:[%s329 + $0x99] sm:$0xff]
        %v1754 = vld [vmem:[%s329 + $0xa9] sm:$0xff]
        %v1755 = vld [vmem:[%s329 + $0xb1] sm:$0xff]
        %v1756 = vld [vmem:[%s329 + $0xc1] sm:$0xff]
        %v1757 = vld [vmem:[%s329 + $0xc9] sm:$0xff]
        %v1758 = vld [vmem:[%s329 + $0xd9] sm:$0xff]
        %v1759 = vld [vmem:[%s329 + $0xe1] sm:$0xff]
        %v1760 = vld [vmem:[%s329 + $0xf1] sm:$0xff]
        %v1761 = vld [vmem:[%s329 + $0xf9] sm:$0xff]
        %v1762 = vld [vmem:[%s329 + $0x109] sm:$0xff]
        %v1763 = vld [vmem:[%s329 + $0x111] sm:$0xff]
        %v1764 = vld [vmem:[%s329 + $0x121] sm:$0xff]
        %v1765 = vld [vmem:[%s329 + $0x129] sm:$0xff]
        %v1766 = vld [vmem:[%s329 + $0x139] sm:$0xff]
        %v1767 = vld [vmem:[%s329 + $0x141] sm:$0xff]
        %v1768 = vld [vmem:[%s329 + $0x151] sm:$0xff]
        %v1769 = vld [vmem:[%s329 + $0x159] sm:$0xff]
        %v1770 = vld [vmem:[%s329 + $0x169] sm:$0xff]
        %v1771 = vld [vmem:[%s329 + $0x171] sm:$0xff]
        %1804 = vrot.lane.b32.xlu0 %v1676, 32
        %v1805 = vpop.permute.xlu0 %1804
        %1806 = vrot.lane.b32.xlu0 %v1677, 32
        %v1807 = vpop.permute.xlu0 %1806
        %1808 = vrot.lane.b32.xlu0 %v1678, 32
        %v1809 = vpop.permute.xlu0 %1808
        %1810 = vrot.lane.b32.xlu0 %v1679, 32
        %v1811 = vpop.permute.xlu0 %1810
        %1812 = vrot.lane.b32.xlu0 %v1680, 32
        %v1813 = vpop.permute.xlu0 %1812
        %1814 = vrot.lane.b32.xlu0 %v1681, 32
        %v1815 = vpop.permute.xlu0 %1814
        %1816 = vrot.lane.b32.xlu0 %v1682, 32
        %v1817 = vpop.permute.xlu0 %1816
        %1818 = vrot.lane.b32.xlu0 %v1683, 32
        %v1819 = vpop.permute.xlu0 %1818
        %1820 = vrot.lane.b32.xlu0 %v1684, 32
        %v1821 = vpop.permute.xlu0 %1820
        %1822 = vrot.lane.b32.xlu0 %v1685, 32
        %v1823 = vpop.permute.xlu0 %1822
        %1824 = vrot.lane.b32.xlu0 %v1686, 32
        %v1825 = vpop.permute.xlu0 %1824
        %1826 = vrot.lane.b32.xlu0 %v1687, 32
        %v1827 = vpop.permute.xlu0 %1826
        %1828 = vrot.lane.b32.xlu0 %v1688, 32
        %v1829 = vpop.permute.xlu0 %1828
        %1830 = vrot.lane.b32.xlu0 %v1689, 32
        %v1831 = vpop.permute.xlu0 %1830
        %1832 = vrot.lane.b32.xlu0 %v1690, 32
        %v1833 = vpop.permute.xlu0 %1832
        %1834 = vrot.lane.b32.xlu0 %v1691, 32
        %v1835 = vpop.permute.xlu0 %1834
        %1836 = vrot.lane.b32.xlu0 %v1692, 32
        %v1837 = vpop.permute.xlu0 %1836
        %1838 = vrot.lane.b32.xlu0 %v1693, 32
        %v1839 = vpop.permute.xlu0 %1838
        %1840 = vrot.lane.b32.xlu0 %v1694, 32
        %v1841 = vpop.permute.xlu0 %1840
        %1842 = vrot.lane.b32.xlu0 %v1695, 32
        %v1843 = vpop.permute.xlu0 %1842
        %1844 = vrot.lane.b32.xlu0 %v1696, 32
        %v1845 = vpop.permute.xlu0 %1844
        %1846 = vrot.lane.b32.xlu0 %v1697, 32
        %v1847 = vpop.permute.xlu0 %1846
        %1848 = vrot.lane.b32.xlu0 %v1698, 32
        %v1849 = vpop.permute.xlu0 %1848
        %1850 = vrot.lane.b32.xlu0 %v1699, 32
        %v1851 = vpop.permute.xlu0 %1850
        %1852 = vrot.lane.b32.xlu0 %v1700, 32
        %v1853 = vpop.permute.xlu0 %1852
        %1854 = vrot.lane.b32.xlu0 %v1701, 32
        %v1855 = vpop.permute.xlu0 %1854
        %1856 = vrot.lane.b32.xlu0 %v1702, 32
        %v1857 = vpop.permute.xlu0 %1856
        %1858 = vrot.lane.b32.xlu0 %v1703, 32
        %v1859 = vpop.permute.xlu0 %1858
        %1860 = vrot.lane.b32.xlu0 %v1704, 32
        %v1861 = vpop.permute.xlu0 %1860
        %1862 = vrot.lane.b32.xlu0 %v1705, 32
        %v1863 = vpop.permute.xlu0 %1862
        %1864 = vrot.lane.b32.xlu0 %v1706, 32
        %v1865 = vpop.permute.xlu0 %1864
        %1866 = vrot.lane.b32.xlu0 %v1707, 32
        %v1867 = vpop.permute.xlu0 %1866
        %v1900 = vsel %vm241, %v1644, %v1805
        %v1901 = vsel %vm241, %v1645, %v1807
        %v1902 = vsel %vm241, %v1646, %v1809
        %v1903 = vsel %vm241, %v1647, %v1811
        %v1904 = vsel %vm241, %v1648, %v1813
        %v1905 = vsel %vm241, %v1649, %v1815
        %v1906 = vsel %vm241, %v1650, %v1817
        %v1907 = vsel %vm241, %v1651, %v1819
        %v1908 = vsel %vm241, %v1652, %v1821
        %v1909 = vsel %vm241, %v1653, %v1823
        %v1910 = vsel %vm241, %v1654, %v1825
        %v1911 = vsel %vm241, %v1655, %v1827
        %v1912 = vsel %vm241, %v1656, %v1829
        %v1913 = vsel %vm241, %v1657, %v1831
        %v1914 = vsel %vm241, %v1658, %v1833
        %v1915 = vsel %vm241, %v1659, %v1835
        %v1916 = vsel %vm241, %v1660, %v1837
        %v1917 = vsel %vm241, %v1661, %v1839
        %v1918 = vsel %vm241, %v1662, %v1841
        %v1919 = vsel %vm241, %v1663, %v1843
        %v1920 = vsel %vm241, %v1664, %v1845
        %v1921 = vsel %vm241, %v1665, %v1847
        %v1922 = vsel %vm241, %v1666, %v1849
        %v1923 = vsel %vm241, %v1667, %v1851
        %v1924 = vsel %vm241, %v1668, %v1853
        %v1925 = vsel %vm241, %v1669, %v1855
        %v1926 = vsel %vm241, %v1670, %v1857
        %v1927 = vsel %vm241, %v1671, %v1859
        %v1928 = vsel %vm241, %v1672, %v1861
        %v1929 = vsel %vm241, %v1673, %v1863
        %v1930 = vsel %vm241, %v1674, %v1865
        %v1931 = vsel %vm241, %v1675, %v1867
        %1964 = vrot.lane.b32.xlu0 %v1740, 32
        %v1965 = vpop.permute.xlu0 %1964
        %1966 = vrot.lane.b32.xlu0 %v1741, 32
        %v1967 = vpop.permute.xlu0 %1966
        %1968 = vrot.lane.b32.xlu0 %v1742, 32
        %v1969 = vpop.permute.xlu0 %1968
        %1970 = vrot.lane.b32.xlu0 %v1743, 32
        %v1971 = vpop.permute.xlu0 %1970
        %1972 = vrot.lane.b32.xlu0 %v1744, 32
        %v1973 = vpop.permute.xlu0 %1972
        %1974 = vrot.lane.b32.xlu0 %v1745, 32
        %v1975 = vpop.permute.xlu0 %1974
        %1976 = vrot.lane.b32.xlu0 %v1746, 32
        %v1977 = vpop.permute.xlu0 %1976
        %1978 = vrot.lane.b32.xlu0 %v1747, 32
        %v1979 = vpop.permute.xlu0 %1978
        %1980 = vrot.lane.b32.xlu0 %v1748, 32
        %v1981 = vpop.permute.xlu0 %1980
        %1982 = vrot.lane.b32.xlu0 %v1749, 32
        %v1983 = vpop.permute.xlu0 %1982
        %1984 = vrot.lane.b32.xlu0 %v1750, 32
        %v1985 = vpop.permute.xlu0 %1984
        %1986 = vrot.lane.b32.xlu0 %v1751, 32
        %v1987 = vpop.permute.xlu0 %1986
        %1988 = vrot.lane.b32.xlu0 %v1752, 32
        %v1989 = vpop.permute.xlu0 %1988
        %1990 = vrot.lane.b32.xlu0 %v1753, 32
        %v1991 = vpop.permute.xlu0 %1990
        %1992 = vrot.lane.b32.xlu0 %v1754, 32
        %v1993 = vpop.permute.xlu0 %1992
        %1994 = vrot.lane.b32.xlu0 %v1755, 32
        %v1995 = vpop.permute.xlu0 %1994
        %1996 = vrot.lane.b32.xlu0 %v1756, 32
        %v1997 = vpop.permute.xlu0 %1996
        %1998 = vrot.lane.b32.xlu0 %v1757, 32
        %v1999 = vpop.permute.xlu0 %1998
        %2000 = vrot.lane.b32.xlu0 %v1758, 32
        %v2001 = vpop.permute.xlu0 %2000
        %2002 = vrot.lane.b32.xlu0 %v1759, 32
        %v2003 = vpop.permute.xlu0 %2002
        %2004 = vrot.lane.b32.xlu0 %v1760, 32
        %v2005 = vpop.permute.xlu0 %2004
        %2006 = vrot.lane.b32.xlu0 %v1761, 32
        %v2007 = vpop.permute.xlu0 %2006
        %2008 = vrot.lane.b32.xlu0 %v1762, 32
        %v2009 = vpop.permute.xlu0 %2008
        %2010 = vrot.lane.b32.xlu0 %v1763, 32
        %v2011 = vpop.permute.xlu0 %2010
        %2012 = vrot.lane.b32.xlu0 %v1764, 32
        %v2013 = vpop.permute.xlu0 %2012
        %2014 = vrot.lane.b32.xlu0 %v1765, 32
        %v2015 = vpop.permute.xlu0 %2014
        %2016 = vrot.lane.b32.xlu0 %v1766, 32
        %v2017 = vpop.permute.xlu0 %2016
        %2018 = vrot.lane.b32.xlu0 %v1767, 32
        %v2019 = vpop.permute.xlu0 %2018
        %2020 = vrot.lane.b32.xlu0 %v1768, 32
        %v2021 = vpop.permute.xlu0 %2020
        %2022 = vrot.lane.b32.xlu0 %v1769, 32
        %v2023 = vpop.permute.xlu0 %2022
        %2024 = vrot.lane.b32.xlu0 %v1770, 32
        %v2025 = vpop.permute.xlu0 %2024
        %2026 = vrot.lane.b32.xlu0 %v1771, 32
        %v2027 = vpop.permute.xlu0 %2026
        %v2060 = vsel %vm241, %v1708, %v1965
        %v2061 = vsel %vm241, %v1709, %v1967
        %v2062 = vsel %vm241, %v1710, %v1969
        %v2063 = vsel %vm241, %v1711, %v1971
        %v2064 = vsel %vm241, %v1712, %v1973
        %v2065 = vsel %vm241, %v1713, %v1975
        %v2066 = vsel %vm241, %v1714, %v1977
        %v2067 = vsel %vm241, %v1715, %v1979
        %v2068 = vsel %vm241, %v1716, %v1981
        %v2069 = vsel %vm241, %v1717, %v1983
        %v2070 = vsel %vm241, %v1718, %v1985
        %v2071 = vsel %vm241, %v1719, %v1987
        %v2072 = vsel %vm241, %v1720, %v1989
        %v2073 = vsel %vm241, %v1721, %v1991
        %v2074 = vsel %vm241, %v1722, %v1993
        %v2075 = vsel %vm241, %v1723, %v1995
        %v2076 = vsel %vm241, %v1724, %v1997
        %v2077 = vsel %vm241, %v1725, %v1999
        %v2078 = vsel %vm241, %v1726, %v2001
        %v2079 = vsel %vm241, %v1727, %v2003
        %v2080 = vsel %vm241, %v1728, %v2005
        %v2081 = vsel %vm241, %v1729, %v2007
        %v2082 = vsel %vm241, %v1730, %v2009
        %v2083 = vsel %vm241, %v1731, %v2011
        %v2084 = vsel %vm241, %v1732, %v2013
        %v2085 = vsel %vm241, %v1733, %v2015
        %v2086 = vsel %vm241, %v1734, %v2017
        %v2087 = vsel %vm241, %v1735, %v2019
        %v2088 = vsel %vm241, %v1736, %v2021
        %v2089 = vsel %vm241, %v1737, %v2023
        %v2090 = vsel %vm241, %v1738, %v2025
        %v2091 = vsel %vm241, %v1739, %v2027
        %2124 = vrot.lane.b32.xlu0 %v2060, 64
        %v2125 = vpop.permute.xlu0 %2124
        %2126 = vrot.lane.b32.xlu0 %v2061, 64
        %v2127 = vpop.permute.xlu0 %2126
        %2128 = vrot.lane.b32.xlu0 %v2062, 64
        %v2129 = vpop.permute.xlu0 %2128
        %2130 = vrot.lane.b32.xlu0 %v2063, 64
        %v2131 = vpop.permute.xlu0 %2130
        %2132 = vrot.lane.b32.xlu0 %v2064, 64
        %v2133 = vpop.permute.xlu0 %2132
        %2134 = vrot.lane.b32.xlu0 %v2065, 64
        %v2135 = vpop.permute.xlu0 %2134
        %2136 = vrot.lane.b32.xlu0 %v2066, 64
        %v2137 = vpop.permute.xlu0 %2136
        %2138 = vrot.lane.b32.xlu0 %v2067, 64
        %v2139 = vpop.permute.xlu0 %2138
        %2140 = vrot.lane.b32.xlu0 %v2068, 64
        %v2141 = vpop.permute.xlu0 %2140
        %2142 = vrot.lane.b32.xlu0 %v2069, 64
        %v2143 = vpop.permute.xlu0 %2142
        %2144 = vrot.lane.b32.xlu0 %v2070, 64
        %v2145 = vpop.permute.xlu0 %2144
        %2146 = vrot.lane.b32.xlu0 %v2071, 64
        %v2147 = vpop.permute.xlu0 %2146
        %2148 = vrot.lane.b32.xlu0 %v2072, 64
        %v2149 = vpop.permute.xlu0 %2148
        %2150 = vrot.lane.b32.xlu0 %v2073, 64
        %v2151 = vpop.permute.xlu0 %2150
        %2152 = vrot.lane.b32.xlu0 %v2074, 64
        %v2153 = vpop.permute.xlu0 %2152
        %2154 = vrot.lane.b32.xlu0 %v2075, 64
        %v2155 = vpop.permute.xlu0 %2154
        %2156 = vrot.lane.b32.xlu0 %v2076, 64
        %v2157 = vpop.permute.xlu0 %2156
        %2158 = vrot.lane.b32.xlu0 %v2077, 64
        %v2159 = vpop.permute.xlu0 %2158
        %2160 = vrot.lane.b32.xlu0 %v2078, 64
        %v2161 = vpop.permute.xlu0 %2160
        %2162 = vrot.lane.b32.xlu0 %v2079, 64
        %v2163 = vpop.permute.xlu0 %2162
        %2164 = vrot.lane.b32.xlu0 %v2080, 64
        %v2165 = vpop.permute.xlu0 %2164
        %2166 = vrot.lane.b32.xlu0 %v2081, 64
        %v2167 = vpop.permute.xlu0 %2166
        %2168 = vrot.lane.b32.xlu0 %v2082, 64
        %v2169 = vpop.permute.xlu0 %2168
        %2170 = vrot.lane.b32.xlu0 %v2083, 64
        %v2171 = vpop.permute.xlu0 %2170
        %2172 = vrot.lane.b32.xlu0 %v2084, 64
        %v2173 = vpop.permute.xlu0 %2172
        %2174 = vrot.lane.b32.xlu0 %v2085, 64
        %v2175 = vpop.permute.xlu0 %2174
        %2176 = vrot.lane.b32.xlu0 %v2086, 64
        %v2177 = vpop.permute.xlu0 %2176
        %2178 = vrot.lane.b32.xlu0 %v2087, 64
        %v2179 = vpop.permute.xlu0 %2178
        %2180 = vrot.lane.b32.xlu0 %v2088, 64
        %v2181 = vpop.permute.xlu0 %2180
        %2182 = vrot.lane.b32.xlu0 %v2089, 64
        %v2183 = vpop.permute.xlu0 %2182
        %2184 = vrot.lane.b32.xlu0 %v2090, 64
        %v2185 = vpop.permute.xlu0 %2184
        %2186 = vrot.lane.b32.xlu0 %v2091, 64
        %v2187 = vpop.permute.xlu0 %2186
        %v2220 = vsel %vm938, %v1900, %v2125
        %v2221 = vsel %vm938, %v1901, %v2127
        %v2222 = vsel %vm938, %v1902, %v2129
        %v2223 = vsel %vm938, %v1903, %v2131
        %v2224 = vsel %vm938, %v1904, %v2133
        %v2225 = vsel %vm938, %v1905, %v2135
        %v2226 = vsel %vm938, %v1906, %v2137
        %v2227 = vsel %vm938, %v1907, %v2139
        %v2228 = vsel %vm938, %v1908, %v2141
        %v2229 = vsel %vm938, %v1909, %v2143
        %v2230 = vsel %vm938, %v1910, %v2145
        %v2231 = vsel %vm938, %v1911, %v2147
        %v2232 = vsel %vm938, %v1912, %v2149
        %v2233 = vsel %vm938, %v1913, %v2151
        %v2234 = vsel %vm938, %v1914, %v2153
        %v2235 = vsel %vm938, %v1915, %v2155
        %v2236 = vsel %vm938, %v1916, %v2157
        %v2237 = vsel %vm938, %v1917, %v2159
        %v2238 = vsel %vm938, %v1918, %v2161
        %v2239 = vsel %vm938, %v1919, %v2163
        %v2240 = vsel %vm938, %v1920, %v2165
        %v2241 = vsel %vm938, %v1921, %v2167
        %v2242 = vsel %vm938, %v1922, %v2169
        %v2243 = vsel %vm938, %v1923, %v2171
        %v2244 = vsel %vm938, %v1924, %v2173
        %v2245 = vsel %vm938, %v1925, %v2175
        %v2246 = vsel %vm938, %v1926, %v2177
        %v2247 = vsel %vm938, %v1927, %v2179
        %v2248 = vsel %vm938, %v1928, %v2181
        %v2249 = vsel %vm938, %v1929, %v2183
        %v2250 = vsel %vm938, %v1930, %v2185
        %v2251 = vsel %vm938, %v1931, %v2187
        %v2252 = vpack.c.bf16 %v2221, %v2220
        %v2253 = vpack.c.bf16 %v2223, %v2222
        %v2254 = vpack.c.bf16 %v2225, %v2224
        %v2255 = vpack.c.bf16 %v2227, %v2226
        %v2256 = vpack.c.bf16 %v2229, %v2228
        %v2257 = vpack.c.bf16 %v2231, %v2230
        %v2258 = vpack.c.bf16 %v2233, %v2232
        %v2259 = vpack.c.bf16 %v2235, %v2234
        %v2260 = vpack.c.bf16 %v2237, %v2236
        %v2261 = vpack.c.bf16 %v2239, %v2238
        %v2262 = vpack.c.bf16 %v2241, %v2240
        %v2263 = vpack.c.bf16 %v2243, %v2242
        %v2264 = vpack.c.bf16 %v2245, %v2244
        %v2265 = vpack.c.bf16 %v2247, %v2246
        %v2266 = vpack.c.bf16 %v2249, %v2248
        %v2267 = vpack.c.bf16 %v2251, %v2250
        %2268 = vst [vmem:[#allocation3 + $0x10] sm:$0xff] %v2252
        %2269 = vst [vmem:[#allocation3 + $0x48] sm:$0xff] %v2253
        %2270 = vst [vmem:[#allocation3 + $0x80] sm:$0xff] %v2254
        %2271 = vst [vmem:[#allocation3 + $0xb8] sm:$0xff] %v2255
        %2272 = vst [vmem:[#allocation3 + $0xf0] sm:$0xff] %v2256
        %2273 = vst [vmem:[#allocation3 + $0x128] sm:$0xff] %v2257
        %2274 = vst [vmem:[#allocation3 + $0x160] sm:$0xff] %v2258
        %2275 = vst [vmem:[#allocation3 + $0x198] sm:$0xff] %v2259
        %2276 = vst [vmem:[#allocation3 + $0x1d0] sm:$0xff] %v2260
        %2277 = vst [vmem:[#allocation3 + $0x208] sm:$0xff] %v2261
        %2278 = vst [vmem:[#allocation3 + $0x240] sm:$0xff] %v2262
        %2279 = vst [vmem:[#allocation3 + $0x278] sm:$0xff] %v2263
        %2280 = vst [vmem:[#allocation3 + $0x2b0] sm:$0xff] %v2264
        %2281 = vst [vmem:[#allocation3 + $0x2e8] sm:$0xff] %v2265
        %2282 = vst [vmem:[#allocation3 + $0x320] sm:$0xff] %v2266
        %2283 = vst [vmem:[#allocation3 + $0x358] sm:$0xff] %v2267
        %v2284 = vld [vmem:[%s329 + $0x2] sm:$0xff]
        %v2285 = vld [vmem:[%s329 + $0xa] sm:$0xff]
        %v2286 = vld [vmem:[%s329 + $0x1a] sm:$0xff]
        %v2287 = vld [vmem:[%s329 + $0x22] sm:$0xff]
        %v2288 = vld [vmem:[%s329 + $0x32] sm:$0xff]
        %v2289 = vld [vmem:[%s329 + $0x3a] sm:$0xff]
        %v2290 = vld [vmem:[%s329 + $0x4a] sm:$0xff]
        %v2291 = vld [vmem:[%s329 + $0x52] sm:$0xff]
        %v2292 = vld [vmem:[%s329 + $0x62] sm:$0xff]
        %v2293 = vld [vmem:[%s329 + $0x6a] sm:$0xff]
        %v2294 = vld [vmem:[%s329 + $0x7a] sm:$0xff]
        %v2295 = vld [vmem:[%s329 + $0x82] sm:$0xff]
        %v2296 = vld [vmem:[%s329 + $0x92] sm:$0xff]
        %v2297 = vld [vmem:[%s329 + $0x9a] sm:$0xff]
        %v2298 = vld [vmem:[%s329 + $0xaa] sm:$0xff]
        %v2299 = vld [vmem:[%s329 + $0xb2] sm:$0xff]
        %v2300 = vld [vmem:[%s329 + $0xc2] sm:$0xff]
        %v2301 = vld [vmem:[%s329 + $0xca] sm:$0xff]
        %v2302 = vld [vmem:[%s329 + $0xda] sm:$0xff]
        %v2303 = vld [vmem:[%s329 + $0xe2] sm:$0xff]
        %v2304 = vld [vmem:[%s329 + $0xf2] sm:$0xff]
        %v2305 = vld [vmem:[%s329 + $0xfa] sm:$0xff]
        %v2306 = vld [vmem:[%s329 + $0x10a] sm:$0xff]
        %v2307 = vld [vmem:[%s329 + $0x112] sm:$0xff]
        %v2308 = vld [vmem:[%s329 + $0x122] sm:$0xff]
        %v2309 = vld [vmem:[%s329 + $0x12a] sm:$0xff]
        %v2310 = vld [vmem:[%s329 + $0x13a] sm:$0xff]
        %v2311 = vld [vmem:[%s329 + $0x142] sm:$0xff]
        %v2312 = vld [vmem:[%s329 + $0x152] sm:$0xff]
        %v2313 = vld [vmem:[%s329 + $0x15a] sm:$0xff]
        %v2314 = vld [vmem:[%s329 + $0x16a] sm:$0xff]
        %v2315 = vld [vmem:[%s329 + $0x172] sm:$0xff]
        %v2316 = vld [vmem:[%s329 + $0x3] sm:$0xff]
        %v2317 = vld [vmem:[%s329 + $0xb] sm:$0xff]
        %v2318 = vld [vmem:[%s329 + $0x1b] sm:$0xff]
        %v2319 = vld [vmem:[%s329 + $0x23] sm:$0xff]
        %v2320 = vld [vmem:[%s329 + $0x33] sm:$0xff]
        %v2321 = vld [vmem:[%s329 + $0x3b] sm:$0xff]
        %v2322 = vld [vmem:[%s329 + $0x4b] sm:$0xff]
        %v2323 = vld [vmem:[%s329 + $0x53] sm:$0xff]
        %v2324 = vld [vmem:[%s329 + $0x63] sm:$0xff]
        %v2325 = vld [vmem:[%s329 + $0x6b] sm:$0xff]
        %v2326 = vld [vmem:[%s329 + $0x7b] sm:$0xff]
        %v2327 = vld [vmem:[%s329 + $0x83] sm:$0xff]
        %v2328 = vld [vmem:[%s329 + $0x93] sm:$0xff]
        %v2329 = vld [vmem:[%s329 + $0x9b] sm:$0xff]
        %v2330 = vld [vmem:[%s329 + $0xab] sm:$0xff]
        %v2331 = vld [vmem:[%s329 + $0xb3] sm:$0xff]
        %v2332 = vld [vmem:[%s329 + $0xc3] sm:$0xff]
        %v2333 = vld [vmem:[%s329 + $0xcb] sm:$0xff]
        %v2334 = vld [vmem:[%s329 + $0xdb] sm:$0xff]
        %v2335 = vld [vmem:[%s329 + $0xe3] sm:$0xff]
        %v2336 = vld [vmem:[%s329 + $0xf3] sm:$0xff]
        %v2337 = vld [vmem:[%s329 + $0xfb] sm:$0xff]
        %v2338 = vld [vmem:[%s329 + $0x10b] sm:$0xff]
        %v2339 = vld [vmem:[%s329 + $0x113] sm:$0xff]
        %v2340 = vld [vmem:[%s329 + $0x123] sm:$0xff]
        %v2341 = vld [vmem:[%s329 + $0x12b] sm:$0xff]
        %v2342 = vld [vmem:[%s329 + $0x13b] sm:$0xff]
        %v2343 = vld [vmem:[%s329 + $0x143] sm:$0xff]
        %v2344 = vld [vmem:[%s329 + $0x153] sm:$0xff]
        %v2345 = vld [vmem:[%s329 + $0x15b] sm:$0xff]
        %v2346 = vld [vmem:[%s329 + $0x16b] sm:$0xff]
        %v2347 = vld [vmem:[%s329 + $0x173] sm:$0xff]
        %v2348 = vld [vmem:[%s329 + $0x4] sm:$0xff]
        %v2349 = vld [vmem:[%s329 + $0xc] sm:$0xff]
        %v2350 = vld [vmem:[%s329 + $0x1c] sm:$0xff]
        %v2351 = vld [vmem:[%s329 + $0x24] sm:$0xff]
        %v2352 = vld [vmem:[%s329 + $0x34] sm:$0xff]
        %v2353 = vld [vmem:[%s329 + $0x3c] sm:$0xff]
        %v2354 = vld [vmem:[%s329 + $0x4c] sm:$0xff]
        %v2355 = vld [vmem:[%s329 + $0x54] sm:$0xff]
        %v2356 = vld [vmem:[%s329 + $0x64] sm:$0xff]
        %v2357 = vld [vmem:[%s329 + $0x6c] sm:$0xff]
        %v2358 = vld [vmem:[%s329 + $0x7c] sm:$0xff]
        %v2359 = vld [vmem:[%s329 + $0x84] sm:$0xff]
        %v2360 = vld [vmem:[%s329 + $0x94] sm:$0xff]
        %v2361 = vld [vmem:[%s329 + $0x9c] sm:$0xff]
        %v2362 = vld [vmem:[%s329 + $0xac] sm:$0xff]
        %v2363 = vld [vmem:[%s329 + $0xb4] sm:$0xff]
        %v2364 = vld [vmem:[%s329 + $0xc4] sm:$0xff]
        %v2365 = vld [vmem:[%s329 + $0xcc] sm:$0xff]
        %v2366 = vld [vmem:[%s329 + $0xdc] sm:$0xff]
        %v2367 = vld [vmem:[%s329 + $0xe4] sm:$0xff]
        %v2368 = vld [vmem:[%s329 + $0xf4] sm:$0xff]
        %v2369 = vld [vmem:[%s329 + $0xfc] sm:$0xff]
        %v2370 = vld [vmem:[%s329 + $0x10c] sm:$0xff]
        %v2371 = vld [vmem:[%s329 + $0x114] sm:$0xff]
        %v2372 = vld [vmem:[%s329 + $0x124] sm:$0xff]
        %v2373 = vld [vmem:[%s329 + $0x12c] sm:$0xff]
        %v2374 = vld [vmem:[%s329 + $0x13c] sm:$0xff]
        %v2375 = vld [vmem:[%s329 + $0x144] sm:$0xff]
        %v2376 = vld [vmem:[%s329 + $0x154] sm:$0xff]
        %v2377 = vld [vmem:[%s329 + $0x15c] sm:$0xff]
        %v2378 = vld [vmem:[%s329 + $0x16c] sm:$0xff]
        %v2379 = vld [vmem:[%s329 + $0x174] sm:$0xff]
        %s2380 = scalar_lea.vmem [#allocation2], 72
        %v2381 = vld [vmem:[%s2380] sm:$0xff]
        %v2382 = vld [vmem:[%s2380 + $0x8] sm:$0xff]
        %v2383 = vld [vmem:[%s2380 + $0x18] sm:$0xff]
        %v2384 = vld [vmem:[%s2380 + $0x20] sm:$0xff]
        %v2385 = vld [vmem:[%s2380 + $0x30] sm:$0xff]
        %v2386 = vld [vmem:[%s2380 + $0x38] sm:$0xff]
        %v2387 = vld [vmem:[%s2380 + $0x48] sm:$0xff]
        %v2388 = vld [vmem:[%s2380 + $0x50] sm:$0xff]
        %v2389 = vld [vmem:[%s2380 + $0x60] sm:$0xff]
        %v2390 = vld [vmem:[%s2380 + $0x68] sm:$0xff]
        %v2391 = vld [vmem:[%s2380 + $0x78] sm:$0xff]
        %v2392 = vld [vmem:[%s2380 + $0x80] sm:$0xff]
        %v2393 = vld [vmem:[%s2380 + $0x90] sm:$0xff]
        %v2394 = vld [vmem:[%s2380 + $0x98] sm:$0xff]
        %v2395 = vld [vmem:[%s2380 + $0xa8] sm:$0xff]
        %v2396 = vld [vmem:[%s2380 + $0xb0] sm:$0xff]
        %v2397 = vld [vmem:[%s2380 + $0xc0] sm:$0xff]
        %v2398 = vld [vmem:[%s2380 + $0xc8] sm:$0xff]
        %v2399 = vld [vmem:[%s2380 + $0xd8] sm:$0xff]
        %v2400 = vld [vmem:[%s2380 + $0xe0] sm:$0xff]
        %v2401 = vld [vmem:[%s2380 + $0xf0] sm:$0xff]
        %v2402 = vld [vmem:[%s2380 + $0xf8] sm:$0xff]
        %v2403 = vld [vmem:[%s2380 + $0x108] sm:$0xff]
        %v2404 = vld [vmem:[%s2380 + $0x110] sm:$0xff]
        %v2405 = vld [vmem:[%s2380 + $0x120] sm:$0xff]
        %v2406 = vld [vmem:[%s2380 + $0x128] sm:$0xff]
        %v2407 = vld [vmem:[%s2380 + $0x138] sm:$0xff]
        %v2408 = vld [vmem:[%s2380 + $0x140] sm:$0xff]
        %v2409 = vld [vmem:[%s2380 + $0x150] sm:$0xff]
        %v2410 = vld [vmem:[%s2380 + $0x158] sm:$0xff]
        %v2411 = vld [vmem:[%s2380 + $0x168] sm:$0xff]
        %v2412 = vld [vmem:[%s2380 + $0x170] sm:$0xff]
        %2445 = vrot.lane.b32.xlu0 %v2316, 32
        %v2446 = vpop.permute.xlu0 %2445
        %2447 = vrot.lane.b32.xlu0 %v2317, 32
        %v2448 = vpop.permute.xlu0 %2447
        %2449 = vrot.lane.b32.xlu0 %v2318, 32
        %v2450 = vpop.permute.xlu0 %2449
        %2451 = vrot.lane.b32.xlu0 %v2319, 32
        %v2452 = vpop.permute.xlu0 %2451
        %2453 = vrot.lane.b32.xlu0 %v2320, 32
        %v2454 = vpop.permute.xlu0 %2453
        %2455 = vrot.lane.b32.xlu0 %v2321, 32
        %v2456 = vpop.permute.xlu0 %2455
        %2457 = vrot.lane.b32.xlu0 %v2322, 32
        %v2458 = vpop.permute.xlu0 %2457
        %2459 = vrot.lane.b32.xlu0 %v2323, 32
        %v2460 = vpop.permute.xlu0 %2459
        %2461 = vrot.lane.b32.xlu0 %v2324, 32
        %v2462 = vpop.permute.xlu0 %2461
        %2463 = vrot.lane.b32.xlu0 %v2325, 32
        %v2464 = vpop.permute.xlu0 %2463
        %2465 = vrot.lane.b32.xlu0 %v2326, 32
        %v2466 = vpop.permute.xlu0 %2465
        %2467 = vrot.lane.b32.xlu0 %v2327, 32
        %v2468 = vpop.permute.xlu0 %2467
        %2469 = vrot.lane.b32.xlu0 %v2328, 32
        %v2470 = vpop.permute.xlu0 %2469
        %2471 = vrot.lane.b32.xlu0 %v2329, 32
        %v2472 = vpop.permute.xlu0 %2471
        %2473 = vrot.lane.b32.xlu0 %v2330, 32
        %v2474 = vpop.permute.xlu0 %2473
        %2475 = vrot.lane.b32.xlu0 %v2331, 32
        %v2476 = vpop.permute.xlu0 %2475
        %2477 = vrot.lane.b32.xlu0 %v2332, 32
        %v2478 = vpop.permute.xlu0 %2477
        %2479 = vrot.lane.b32.xlu0 %v2333, 32
        %v2480 = vpop.permute.xlu0 %2479
        %2481 = vrot.lane.b32.xlu0 %v2334, 32
        %v2482 = vpop.permute.xlu0 %2481
        %2483 = vrot.lane.b32.xlu0 %v2335, 32
        %v2484 = vpop.permute.xlu0 %2483
        %2485 = vrot.lane.b32.xlu0 %v2336, 32
        %v2486 = vpop.permute.xlu0 %2485
        %2487 = vrot.lane.b32.xlu0 %v2337, 32
        %v2488 = vpop.permute.xlu0 %2487
        %2489 = vrot.lane.b32.xlu0 %v2338, 32
        %v2490 = vpop.permute.xlu0 %2489
        %2491 = vrot.lane.b32.xlu0 %v2339, 32
        %v2492 = vpop.permute.xlu0 %2491
        %2493 = vrot.lane.b32.xlu0 %v2340, 32
        %v2494 = vpop.permute.xlu0 %2493
        %2495 = vrot.lane.b32.xlu0 %v2341, 32
        %v2496 = vpop.permute.xlu0 %2495
        %2497 = vrot.lane.b32.xlu0 %v2342, 32
        %v2498 = vpop.permute.xlu0 %2497
        %2499 = vrot.lane.b32.xlu0 %v2343, 32
        %v2500 = vpop.permute.xlu0 %2499
        %2501 = vrot.lane.b32.xlu0 %v2344, 32
        %v2502 = vpop.permute.xlu0 %2501
        %2503 = vrot.lane.b32.xlu0 %v2345, 32
        %v2504 = vpop.permute.xlu0 %2503
        %2505 = vrot.lane.b32.xlu0 %v2346, 32
        %v2506 = vpop.permute.xlu0 %2505
        %2507 = vrot.lane.b32.xlu0 %v2347, 32
        %v2508 = vpop.permute.xlu0 %2507
        %v2541 = vsel %vm241, %v2284, %v2446
        %v2542 = vsel %vm241, %v2285, %v2448
        %v2543 = vsel %vm241, %v2286, %v2450
        %v2544 = vsel %vm241, %v2287, %v2452
        %v2545 = vsel %vm241, %v2288, %v2454
        %v2546 = vsel %vm241, %v2289, %v2456
        %v2547 = vsel %vm241, %v2290, %v2458
        %v2548 = vsel %vm241, %v2291, %v2460
        %v2549 = vsel %vm241, %v2292, %v2462
        %v2550 = vsel %vm241, %v2293, %v2464
        %v2551 = vsel %vm241, %v2294, %v2466
        %v2552 = vsel %vm241, %v2295, %v2468
        %v2553 = vsel %vm241, %v2296, %v2470
        %v2554 = vsel %vm241, %v2297, %v2472
        %v2555 = vsel %vm241, %v2298, %v2474
        %v2556 = vsel %vm241, %v2299, %v2476
        %v2557 = vsel %vm241, %v2300, %v2478
        %v2558 = vsel %vm241, %v2301, %v2480
        %v2559 = vsel %vm241, %v2302, %v2482
        %v2560 = vsel %vm241, %v2303, %v2484
        %v2561 = vsel %vm241, %v2304, %v2486
        %v2562 = vsel %vm241, %v2305, %v2488
        %v2563 = vsel %vm241, %v2306, %v2490
        %v2564 = vsel %vm241, %v2307, %v2492
        %v2565 = vsel %vm241, %v2308, %v2494
        %v2566 = vsel %vm241, %v2309, %v2496
        %v2567 = vsel %vm241, %v2310, %v2498
        %v2568 = vsel %vm241, %v2311, %v2500
        %v2569 = vsel %vm241, %v2312, %v2502
        %v2570 = vsel %vm241, %v2313, %v2504
        %v2571 = vsel %vm241, %v2314, %v2506
        %v2572 = vsel %vm241, %v2315, %v2508
        %2605 = vrot.lane.b32.xlu0 %v2381, 32
        %v2606 = vpop.permute.xlu0 %2605
        %2607 = vrot.lane.b32.xlu0 %v2382, 32
        %v2608 = vpop.permute.xlu0 %2607
        %2609 = vrot.lane.b32.xlu0 %v2383, 32
        %v2610 = vpop.permute.xlu0 %2609
        %2611 = vrot.lane.b32.xlu0 %v2384, 32
        %v2612 = vpop.permute.xlu0 %2611
        %2613 = vrot.lane.b32.xlu0 %v2385, 32
        %v2614 = vpop.permute.xlu0 %2613
        %2615 = vrot.lane.b32.xlu0 %v2386, 32
        %v2616 = vpop.permute.xlu0 %2615
        %2617 = vrot.lane.b32.xlu0 %v2387, 32
        %v2618 = vpop.permute.xlu0 %2617
        %2619 = vrot.lane.b32.xlu0 %v2388, 32
        %v2620 = vpop.permute.xlu0 %2619
        %2621 = vrot.lane.b32.xlu0 %v2389, 32
        %v2622 = vpop.permute.xlu0 %2621
        %2623 = vrot.lane.b32.xlu0 %v2390, 32
        %v2624 = vpop.permute.xlu0 %2623
        %2625 = vrot.lane.b32.xlu0 %v2391, 32
        %v2626 = vpop.permute.xlu0 %2625
        %2627 = vrot.lane.b32.xlu0 %v2392, 32
        %v2628 = vpop.permute.xlu0 %2627
        %2629 = vrot.lane.b32.xlu0 %v2393, 32
        %v2630 = vpop.permute.xlu0 %2629
        %2631 = vrot.lane.b32.xlu0 %v2394, 32
        %v2632 = vpop.permute.xlu0 %2631
        %2633 = vrot.lane.b32.xlu0 %v2395, 32
        %v2634 = vpop.permute.xlu0 %2633
        %2635 = vrot.lane.b32.xlu0 %v2396, 32
        %v2636 = vpop.permute.xlu0 %2635
        %2637 = vrot.lane.b32.xlu0 %v2397, 32
        %v2638 = vpop.permute.xlu0 %2637
        %2639 = vrot.lane.b32.xlu0 %v2398, 32
        %v2640 = vpop.permute.xlu0 %2639
        %2641 = vrot.lane.b32.xlu0 %v2399, 32
        %v2642 = vpop.permute.xlu0 %2641
        %2643 = vrot.lane.b32.xlu0 %v2400, 32
        %v2644 = vpop.permute.xlu0 %2643
        %2645 = vrot.lane.b32.xlu0 %v2401, 32
        %v2646 = vpop.permute.xlu0 %2645
        %2647 = vrot.lane.b32.xlu0 %v2402, 32
        %v2648 = vpop.permute.xlu0 %2647
        %2649 = vrot.lane.b32.xlu0 %v2403, 32
        %v2650 = vpop.permute.xlu0 %2649
        %2651 = vrot.lane.b32.xlu0 %v2404, 32
        %v2652 = vpop.permute.xlu0 %2651
        %2653 = vrot.lane.b32.xlu0 %v2405, 32
        %v2654 = vpop.permute.xlu0 %2653
        %2655 = vrot.lane.b32.xlu0 %v2406, 32
        %v2656 = vpop.permute.xlu0 %2655
        %2657 = vrot.lane.b32.xlu0 %v2407, 32
        %v2658 = vpop.permute.xlu0 %2657
        %2659 = vrot.lane.b32.xlu0 %v2408, 32
        %v2660 = vpop.permute.xlu0 %2659
        %2661 = vrot.lane.b32.xlu0 %v2409, 32
        %v2662 = vpop.permute.xlu0 %2661
        %2663 = vrot.lane.b32.xlu0 %v2410, 32
        %v2664 = vpop.permute.xlu0 %2663
        %2665 = vrot.lane.b32.xlu0 %v2411, 32
        %v2666 = vpop.permute.xlu0 %2665
        %2667 = vrot.lane.b32.xlu0 %v2412, 32
        %v2668 = vpop.permute.xlu0 %2667
        %v2701 = vsel %vm241, %v2348, %v2606
        %v2702 = vsel %vm241, %v2349, %v2608
        %v2703 = vsel %vm241, %v2350, %v2610
        %v2704 = vsel %vm241, %v2351, %v2612
        %v2705 = vsel %vm241, %v2352, %v2614
        %v2706 = vsel %vm241, %v2353, %v2616
        %v2707 = vsel %vm241, %v2354, %v2618
        %v2708 = vsel %vm241, %v2355, %v2620
        %v2709 = vsel %vm241, %v2356, %v2622
        %v2710 = vsel %vm241, %v2357, %v2624
        %v2711 = vsel %vm241, %v2358, %v2626
        %v2712 = vsel %vm241, %v2359, %v2628
        %v2713 = vsel %vm241, %v2360, %v2630
        %v2714 = vsel %vm241, %v2361, %v2632
        %v2715 = vsel %vm241, %v2362, %v2634
        %v2716 = vsel %vm241, %v2363, %v2636
        %v2717 = vsel %vm241, %v2364, %v2638
        %v2718 = vsel %vm241, %v2365, %v2640
        %v2719 = vsel %vm241, %v2366, %v2642
        %v2720 = vsel %vm241, %v2367, %v2644
        %v2721 = vsel %vm241, %v2368, %v2646
        %v2722 = vsel %vm241, %v2369, %v2648
        %v2723 = vsel %vm241, %v2370, %v2650
        %v2724 = vsel %vm241, %v2371, %v2652
        %v2725 = vsel %vm241, %v2372, %v2654
        %v2726 = vsel %vm241, %v2373, %v2656
        %v2727 = vsel %vm241, %v2374, %v2658
        %v2728 = vsel %vm241, %v2375, %v2660
        %v2729 = vsel %vm241, %v2376, %v2662
        %v2730 = vsel %vm241, %v2377, %v2664
        %v2731 = vsel %vm241, %v2378, %v2666
        %v2732 = vsel %vm241, %v2379, %v2668
        %2765 = vrot.lane.b32.xlu0 %v2701, 64
        %v2766 = vpop.permute.xlu0 %2765
        %2767 = vrot.lane.b32.xlu0 %v2702, 64
        %v2768 = vpop.permute.xlu0 %2767
        %2769 = vrot.lane.b32.xlu0 %v2703, 64
        %v2770 = vpop.permute.xlu0 %2769
        %2771 = vrot.lane.b32.xlu0 %v2704, 64
        %v2772 = vpop.permute.xlu0 %2771
        %2773 = vrot.lane.b32.xlu0 %v2705, 64
        %v2774 = vpop.permute.xlu0 %2773
        %2775 = vrot.lane.b32.xlu0 %v2706, 64
        %v2776 = vpop.permute.xlu0 %2775
        %2777 = vrot.lane.b32.xlu0 %v2707, 64
        %v2778 = vpop.permute.xlu0 %2777
        %2779 = vrot.lane.b32.xlu0 %v2708, 64
        %v2780 = vpop.permute.xlu0 %2779
        %2781 = vrot.lane.b32.xlu0 %v2709, 64
        %v2782 = vpop.permute.xlu0 %2781
        %2783 = vrot.lane.b32.xlu0 %v2710, 64
        %v2784 = vpop.permute.xlu0 %2783
        %2785 = vrot.lane.b32.xlu0 %v2711, 64
        %v2786 = vpop.permute.xlu0 %2785
        %2787 = vrot.lane.b32.xlu0 %v2712, 64
        %v2788 = vpop.permute.xlu0 %2787
        %2789 = vrot.lane.b32.xlu0 %v2713, 64
        %v2790 = vpop.permute.xlu0 %2789
        %2791 = vrot.lane.b32.xlu0 %v2714, 64
        %v2792 = vpop.permute.xlu0 %2791
        %2793 = vrot.lane.b32.xlu0 %v2715, 64
        %v2794 = vpop.permute.xlu0 %2793
        %2795 = vrot.lane.b32.xlu0 %v2716, 64
        %v2796 = vpop.permute.xlu0 %2795
        %2797 = vrot.lane.b32.xlu0 %v2717, 64
        %v2798 = vpop.permute.xlu0 %2797
        %2799 = vrot.lane.b32.xlu0 %v2718, 64
        %v2800 = vpop.permute.xlu0 %2799
        %2801 = vrot.lane.b32.xlu0 %v2719, 64
        %v2802 = vpop.permute.xlu0 %2801
        %2803 = vrot.lane.b32.xlu0 %v2720, 64
        %v2804 = vpop.permute.xlu0 %2803
        %2805 = vrot.lane.b32.xlu0 %v2721, 64
        %v2806 = vpop.permute.xlu0 %2805
        %2807 = vrot.lane.b32.xlu0 %v2722, 64
        %v2808 = vpop.permute.xlu0 %2807
        %2809 = vrot.lane.b32.xlu0 %v2723, 64
        %v2810 = vpop.permute.xlu0 %2809
        %2811 = vrot.lane.b32.xlu0 %v2724, 64
        %v2812 = vpop.permute.xlu0 %2811
        %2813 = vrot.lane.b32.xlu0 %v2725, 64
        %v2814 = vpop.permute.xlu0 %2813
        %2815 = vrot.lane.b32.xlu0 %v2726, 64
        %v2816 = vpop.permute.xlu0 %2815
        %2817 = vrot.lane.b32.xlu0 %v2727, 64
        %v2818 = vpop.permute.xlu0 %2817
        %2819 = vrot.lane.b32.xlu0 %v2728, 64
        %v2820 = vpop.permute.xlu0 %2819
        %2821 = vrot.lane.b32.xlu0 %v2729, 64
        %v2822 = vpop.permute.xlu0 %2821
        %2823 = vrot.lane.b32.xlu0 %v2730, 64
        %v2824 = vpop.permute.xlu0 %2823
        %2825 = vrot.lane.b32.xlu0 %v2731, 64
        %v2826 = vpop.permute.xlu0 %2825
        %2827 = vrot.lane.b32.xlu0 %v2732, 64
        %v2828 = vpop.permute.xlu0 %2827
        %v2861 = vsel %vm938, %v2541, %v2766
        %v2862 = vsel %vm938, %v2542, %v2768
        %v2863 = vsel %vm938, %v2543, %v2770
        %v2864 = vsel %vm938, %v2544, %v2772
        %v2865 = vsel %vm938, %v2545, %v2774
        %v2866 = vsel %vm938, %v2546, %v2776
        %v2867 = vsel %vm938, %v2547, %v2778
        %v2868 = vsel %vm938, %v2548, %v2780
        %v2869 = vsel %vm938, %v2549, %v2782
        %v2870 = vsel %vm938, %v2550, %v2784
        %v2871 = vsel %vm938, %v2551, %v2786
        %v2872 = vsel %vm938, %v2552, %v2788
        %v2873 = vsel %vm938, %v2553, %v2790
        %v2874 = vsel %vm938, %v2554, %v2792
        %v2875 = vsel %vm938, %v2555, %v2794
        %v2876 = vsel %vm938, %v2556, %v2796
        %v2877 = vsel %vm938, %v2557, %v2798
        %v2878 = vsel %vm938, %v2558, %v2800
        %v2879 = vsel %vm938, %v2559, %v2802
        %v2880 = vsel %vm938, %v2560, %v2804
        %v2881 = vsel %vm938, %v2561, %v2806
        %v2882 = vsel %vm938, %v2562, %v2808
        %v2883 = vsel %vm938, %v2563, %v2810
        %v2884 = vsel %vm938, %v2564, %v2812
        %v2885 = vsel %vm938, %v2565, %v2814
        %v2886 = vsel %vm938, %v2566, %v2816
        %v2887 = vsel %vm938, %v2567, %v2818
        %v2888 = vsel %vm938, %v2568, %v2820
        %v2889 = vsel %vm938, %v2569, %v2822
        %v2890 = vsel %vm938, %v2570, %v2824
        %v2891 = vsel %vm938, %v2571, %v2826
        %v2892 = vsel %vm938, %v2572, %v2828
        %v2893 = vpack.c.bf16 %v2862, %v2861
        %v2894 = vpack.c.bf16 %v2864, %v2863
        %v2895 = vpack.c.bf16 %v2866, %v2865
        %v2896 = vpack.c.bf16 %v2868, %v2867
        %v2897 = vpack.c.bf16 %v2870, %v2869
        %v2898 = vpack.c.bf16 %v2872, %v2871
        %v2899 = vpack.c.bf16 %v2874, %v2873
        %v2900 = vpack.c.bf16 %v2876, %v2875
        %v2901 = vpack.c.bf16 %v2878, %v2877
        %v2902 = vpack.c.bf16 %v2880, %v2879
        %v2903 = vpack.c.bf16 %v2882, %v2881
        %v2904 = vpack.c.bf16 %v2884, %v2883
        %v2905 = vpack.c.bf16 %v2886, %v2885
        %v2906 = vpack.c.bf16 %v2888, %v2887
        %v2907 = vpack.c.bf16 %v2890, %v2889
        %v2908 = vpack.c.bf16 %v2892, %v2891
        %2909 = vst [vmem:[#allocation3 + $0x18] sm:$0xff] %v2893
        %2910 = vst [vmem:[#allocation3 + $0x50] sm:$0xff] %v2894
        %2911 = vst [vmem:[#allocation3 + $0x88] sm:$0xff] %v2895
        %2912 = vst [vmem:[#allocation3 + $0xc0] sm:$0xff] %v2896
        %2913 = vst [vmem:[#allocation3 + $0xf8] sm:$0xff] %v2897
        %2914 = vst [vmem:[#allocation3 + $0x130] sm:$0xff] %v2898
        %2915 = vst [vmem:[#allocation3 + $0x168] sm:$0xff] %v2899
        %2916 = vst [vmem:[#allocation3 + $0x1a0] sm:$0xff] %v2900
        %2917 = vst [vmem:[#allocation3 + $0x1d8] sm:$0xff] %v2901
        %2918 = vst [vmem:[#allocation3 + $0x210] sm:$0xff] %v2902
        %2919 = vst [vmem:[#allocation3 + $0x248] sm:$0xff] %v2903
        %2920 = vst [vmem:[#allocation3 + $0x280] sm:$0xff] %v2904
        %2921 = vst [vmem:[#allocation3 + $0x2b8] sm:$0xff] %v2905
        %2922 = vst [vmem:[#allocation3 + $0x2f0] sm:$0xff] %v2906
        %2923 = vst [vmem:[#allocation3 + $0x328] sm:$0xff] %v2907
        %2924 = vst [vmem:[#allocation3 + $0x360] sm:$0xff] %v2908
        %v2925 = vld [vmem:[%s2380 + $0x1] sm:$0xff]
        %v2926 = vld [vmem:[%s2380 + $0x9] sm:$0xff]
        %v2927 = vld [vmem:[%s2380 + $0x19] sm:$0xff]
        %v2928 = vld [vmem:[%s2380 + $0x21] sm:$0xff]
        %v2929 = vld [vmem:[%s2380 + $0x31] sm:$0xff]
        %v2930 = vld [vmem:[%s2380 + $0x39] sm:$0xff]
        %v2931 = vld [vmem:[%s2380 + $0x49] sm:$0xff]
        %v2932 = vld [vmem:[%s2380 + $0x51] sm:$0xff]
        %v2933 = vld [vmem:[%s2380 + $0x61] sm:$0xff]
        %v2934 = vld [vmem:[%s2380 + $0x69] sm:$0xff]
        %v2935 = vld [vmem:[%s2380 + $0x79] sm:$0xff]
        %v2936 = vld [vmem:[%s2380 + $0x81] sm:$0xff]
        %v2937 = vld [vmem:[%s2380 + $0x91] sm:$0xff]
        %v2938 = vld [vmem:[%s2380 + $0x99] sm:$0xff]
        %v2939 = vld [vmem:[%s2380 + $0xa9] sm:$0xff]
        %v2940 = vld [vmem:[%s2380 + $0xb1] sm:$0xff]
        %v2941 = vld [vmem:[%s2380 + $0xc1] sm:$0xff]
        %v2942 = vld [vmem:[%s2380 + $0xc9] sm:$0xff]
        %v2943 = vld [vmem:[%s2380 + $0xd9] sm:$0xff]
        %v2944 = vld [vmem:[%s2380 + $0xe1] sm:$0xff]
        %v2945 = vld [vmem:[%s2380 + $0xf1] sm:$0xff]
        %v2946 = vld [vmem:[%s2380 + $0xf9] sm:$0xff]
        %v2947 = vld [vmem:[%s2380 + $0x109] sm:$0xff]
        %v2948 = vld [vmem:[%s2380 + $0x111] sm:$0xff]
        %v2949 = vld [vmem:[%s2380 + $0x121] sm:$0xff]
        %v2950 = vld [vmem:[%s2380 + $0x129] sm:$0xff]
        %v2951 = vld [vmem:[%s2380 + $0x139] sm:$0xff]
        %v2952 = vld [vmem:[%s2380 + $0x141] sm:$0xff]
        %v2953 = vld [vmem:[%s2380 + $0x151] sm:$0xff]
        %v2954 = vld [vmem:[%s2380 + $0x159] sm:$0xff]
        %v2955 = vld [vmem:[%s2380 + $0x169] sm:$0xff]
        %v2956 = vld [vmem:[%s2380 + $0x171] sm:$0xff]
        %v2957 = vld [vmem:[%s2380 + $0x2] sm:$0xff]
        %v2958 = vld [vmem:[%s2380 + $0xa] sm:$0xff]
        %v2959 = vld [vmem:[%s2380 + $0x1a] sm:$0xff]
        %v2960 = vld [vmem:[%s2380 + $0x22] sm:$0xff]
        %v2961 = vld [vmem:[%s2380 + $0x32] sm:$0xff]
        %v2962 = vld [vmem:[%s2380 + $0x3a] sm:$0xff]
        %v2963 = vld [vmem:[%s2380 + $0x4a] sm:$0xff]
        %v2964 = vld [vmem:[%s2380 + $0x52] sm:$0xff]
        %v2965 = vld [vmem:[%s2380 + $0x62] sm:$0xff]
        %v2966 = vld [vmem:[%s2380 + $0x6a] sm:$0xff]
        %v2967 = vld [vmem:[%s2380 + $0x7a] sm:$0xff]
        %v2968 = vld [vmem:[%s2380 + $0x82] sm:$0xff]
        %v2969 = vld [vmem:[%s2380 + $0x92] sm:$0xff]
        %v2970 = vld [vmem:[%s2380 + $0x9a] sm:$0xff]
        %v2971 = vld [vmem:[%s2380 + $0xaa] sm:$0xff]
        %v2972 = vld [vmem:[%s2380 + $0xb2] sm:$0xff]
        %v2973 = vld [vmem:[%s2380 + $0xc2] sm:$0xff]
        %v2974 = vld [vmem:[%s2380 + $0xca] sm:$0xff]
        %v2975 = vld [vmem:[%s2380 + $0xda] sm:$0xff]
        %v2976 = vld [vmem:[%s2380 + $0xe2] sm:$0xff]
        %v2977 = vld [vmem:[%s2380 + $0xf2] sm:$0xff]
        %v2978 = vld [vmem:[%s2380 + $0xfa] sm:$0xff]
        %v2979 = vld [vmem:[%s2380 + $0x10a] sm:$0xff]
        %v2980 = vld [vmem:[%s2380 + $0x112] sm:$0xff]
        %v2981 = vld [vmem:[%s2380 + $0x122] sm:$0xff]
        %v2982 = vld [vmem:[%s2380 + $0x12a] sm:$0xff]
        %v2983 = vld [vmem:[%s2380 + $0x13a] sm:$0xff]
        %v2984 = vld [vmem:[%s2380 + $0x142] sm:$0xff]
        %v2985 = vld [vmem:[%s2380 + $0x152] sm:$0xff]
        %v2986 = vld [vmem:[%s2380 + $0x15a] sm:$0xff]
        %v2987 = vld [vmem:[%s2380 + $0x16a] sm:$0xff]
        %v2988 = vld [vmem:[%s2380 + $0x172] sm:$0xff]
        %v2989 = vld [vmem:[%s2380 + $0x3] sm:$0xff]
        %v2990 = vld [vmem:[%s2380 + $0xb] sm:$0xff]
        %v2991 = vld [vmem:[%s2380 + $0x1b] sm:$0xff]
        %v2992 = vld [vmem:[%s2380 + $0x23] sm:$0xff]
        %v2993 = vld [vmem:[%s2380 + $0x33] sm:$0xff]
        %v2994 = vld [vmem:[%s2380 + $0x3b] sm:$0xff]
        %v2995 = vld [vmem:[%s2380 + $0x4b] sm:$0xff]
        %v2996 = vld [vmem:[%s2380 + $0x53] sm:$0xff]
        %v2997 = vld [vmem:[%s2380 + $0x63] sm:$0xff]
        %v2998 = vld [vmem:[%s2380 + $0x6b] sm:$0xff]
        %v2999 = vld [vmem:[%s2380 + $0x7b] sm:$0xff]
        %v3000 = vld [vmem:[%s2380 + $0x83] sm:$0xff]
        %v3001 = vld [vmem:[%s2380 + $0x93] sm:$0xff]
        %v3002 = vld [vmem:[%s2380 + $0x9b] sm:$0xff]
        %v3003 = vld [vmem:[%s2380 + $0xab] sm:$0xff]
        %v3004 = vld [vmem:[%s2380 + $0xb3] sm:$0xff]
        %v3005 = vld [vmem:[%s2380 + $0xc3] sm:$0xff]
        %v3006 = vld [vmem:[%s2380 + $0xcb] sm:$0xff]
        %v3007 = vld [vmem:[%s2380 + $0xdb] sm:$0xff]
        %v3008 = vld [vmem:[%s2380 + $0xe3] sm:$0xff]
        %v3009 = vld [vmem:[%s2380 + $0xf3] sm:$0xff]
        %v3010 = vld [vmem:[%s2380 + $0xfb] sm:$0xff]
        %v3011 = vld [vmem:[%s2380 + $0x10b] sm:$0xff]
        %v3012 = vld [vmem:[%s2380 + $0x113] sm:$0xff]
        %v3013 = vld [vmem:[%s2380 + $0x123] sm:$0xff]
        %v3014 = vld [vmem:[%s2380 + $0x12b] sm:$0xff]
        %v3015 = vld [vmem:[%s2380 + $0x13b] sm:$0xff]
        %v3016 = vld [vmem:[%s2380 + $0x143] sm:$0xff]
        %v3017 = vld [vmem:[%s2380 + $0x153] sm:$0xff]
        %v3018 = vld [vmem:[%s2380 + $0x15b] sm:$0xff]
        %v3019 = vld [vmem:[%s2380 + $0x16b] sm:$0xff]
        %v3020 = vld [vmem:[%s2380 + $0x173] sm:$0xff]
        %v3021 = vld [vmem:[%s2380 + $0x4] sm:$0xff]
        %v3022 = vld [vmem:[%s2380 + $0xc] sm:$0xff]
        %v3023 = vld [vmem:[%s2380 + $0x1c] sm:$0xff]
        %v3024 = vld [vmem:[%s2380 + $0x24] sm:$0xff]
        %v3025 = vld [vmem:[%s2380 + $0x34] sm:$0xff]
        %v3026 = vld [vmem:[%s2380 + $0x3c] sm:$0xff]
        %v3027 = vld [vmem:[%s2380 + $0x4c] sm:$0xff]
        %v3028 = vld [vmem:[%s2380 + $0x54] sm:$0xff]
        %v3029 = vld [vmem:[%s2380 + $0x64] sm:$0xff]
        %v3030 = vld [vmem:[%s2380 + $0x6c] sm:$0xff]
        %v3031 = vld [vmem:[%s2380 + $0x7c] sm:$0xff]
        %v3032 = vld [vmem:[%s2380 + $0x84] sm:$0xff]
        %v3033 = vld [vmem:[%s2380 + $0x94] sm:$0xff]
        %v3034 = vld [vmem:[%s2380 + $0x9c] sm:$0xff]
        %v3035 = vld [vmem:[%s2380 + $0xac] sm:$0xff]
        %v3036 = vld [vmem:[%s2380 + $0xb4] sm:$0xff]
        %v3037 = vld [vmem:[%s2380 + $0xc4] sm:$0xff]
        %v3038 = vld [vmem:[%s2380 + $0xcc] sm:$0xff]
        %v3039 = vld [vmem:[%s2380 + $0xdc] sm:$0xff]
        %v3040 = vld [vmem:[%s2380 + $0xe4] sm:$0xff]
        %v3041 = vld [vmem:[%s2380 + $0xf4] sm:$0xff]
        %v3042 = vld [vmem:[%s2380 + $0xfc] sm:$0xff]
        %v3043 = vld [vmem:[%s2380 + $0x10c] sm:$0xff]
        %v3044 = vld [vmem:[%s2380 + $0x114] sm:$0xff]
        %v3045 = vld [vmem:[%s2380 + $0x124] sm:$0xff]
        %v3046 = vld [vmem:[%s2380 + $0x12c] sm:$0xff]
        %v3047 = vld [vmem:[%s2380 + $0x13c] sm:$0xff]
        %v3048 = vld [vmem:[%s2380 + $0x144] sm:$0xff]
        %v3049 = vld [vmem:[%s2380 + $0x154] sm:$0xff]
        %v3050 = vld [vmem:[%s2380 + $0x15c] sm:$0xff]
        %v3051 = vld [vmem:[%s2380 + $0x16c] sm:$0xff]
        %v3052 = vld [vmem:[%s2380 + $0x174] sm:$0xff]
        %3085 = vrot.lane.b32.xlu0 %v2957, 32
        %v3086 = vpop.permute.xlu0 %3085
        %3087 = vrot.lane.b32.xlu0 %v2958, 32
        %v3088 = vpop.permute.xlu0 %3087
        %3089 = vrot.lane.b32.xlu0 %v2959, 32
        %v3090 = vpop.permute.xlu0 %3089
        %3091 = vrot.lane.b32.xlu0 %v2960, 32
        %v3092 = vpop.permute.xlu0 %3091
        %3093 = vrot.lane.b32.xlu0 %v2961, 32
        %v3094 = vpop.permute.xlu0 %3093
        %3095 = vrot.lane.b32.xlu0 %v2962, 32
        %v3096 = vpop.permute.xlu0 %3095
        %3097 = vrot.lane.b32.xlu0 %v2963, 32
        %v3098 = vpop.permute.xlu0 %3097
        %3099 = vrot.lane.b32.xlu0 %v2964, 32
        %v3100 = vpop.permute.xlu0 %3099
        %3101 = vrot.lane.b32.xlu0 %v2965, 32
        %v3102 = vpop.permute.xlu0 %3101
        %3103 = vrot.lane.b32.xlu0 %v2966, 32
        %v3104 = vpop.permute.xlu0 %3103
        %3105 = vrot.lane.b32.xlu0 %v2967, 32
        %v3106 = vpop.permute.xlu0 %3105
        %3107 = vrot.lane.b32.xlu0 %v2968, 32
        %v3108 = vpop.permute.xlu0 %3107
        %3109 = vrot.lane.b32.xlu0 %v2969, 32
        %v3110 = vpop.permute.xlu0 %3109
        %3111 = vrot.lane.b32.xlu0 %v2970, 32
        %v3112 = vpop.permute.xlu0 %3111
        %3113 = vrot.lane.b32.xlu0 %v2971, 32
        %v3114 = vpop.permute.xlu0 %3113
        %3115 = vrot.lane.b32.xlu0 %v2972, 32
        %v3116 = vpop.permute.xlu0 %3115
        %3117 = vrot.lane.b32.xlu0 %v2973, 32
        %v3118 = vpop.permute.xlu0 %3117
        %3119 = vrot.lane.b32.xlu0 %v2974, 32
        %v3120 = vpop.permute.xlu0 %3119
        %3121 = vrot.lane.b32.xlu0 %v2975, 32
        %v3122 = vpop.permute.xlu0 %3121
        %3123 = vrot.lane.b32.xlu0 %v2976, 32
        %v3124 = vpop.permute.xlu0 %3123
        %3125 = vrot.lane.b32.xlu0 %v2977, 32
        %v3126 = vpop.permute.xlu0 %3125
        %3127 = vrot.lane.b32.xlu0 %v2978, 32
        %v3128 = vpop.permute.xlu0 %3127
        %3129 = vrot.lane.b32.xlu0 %v2979, 32
        %v3130 = vpop.permute.xlu0 %3129
        %3131 = vrot.lane.b32.xlu0 %v2980, 32
        %v3132 = vpop.permute.xlu0 %3131
        %3133 = vrot.lane.b32.xlu0 %v2981, 32
        %v3134 = vpop.permute.xlu0 %3133
        %3135 = vrot.lane.b32.xlu0 %v2982, 32
        %v3136 = vpop.permute.xlu0 %3135
        %3137 = vrot.lane.b32.xlu0 %v2983, 32
        %v3138 = vpop.permute.xlu0 %3137
        %3139 = vrot.lane.b32.xlu0 %v2984, 32
        %v3140 = vpop.permute.xlu0 %3139
        %3141 = vrot.lane.b32.xlu0 %v2985, 32
        %v3142 = vpop.permute.xlu0 %3141
        %3143 = vrot.lane.b32.xlu0 %v2986, 32
        %v3144 = vpop.permute.xlu0 %3143
        %3145 = vrot.lane.b32.xlu0 %v2987, 32
        %v3146 = vpop.permute.xlu0 %3145
        %3147 = vrot.lane.b32.xlu0 %v2988, 32
        %v3148 = vpop.permute.xlu0 %3147
        %v3181 = vsel %vm241, %v2925, %v3086
        %v3182 = vsel %vm241, %v2926, %v3088
        %v3183 = vsel %vm241, %v2927, %v3090
        %v3184 = vsel %vm241, %v2928, %v3092
        %v3185 = vsel %vm241, %v2929, %v3094
        %v3186 = vsel %vm241, %v2930, %v3096
        %v3187 = vsel %vm241, %v2931, %v3098
        %v3188 = vsel %vm241, %v2932, %v3100
        %v3189 = vsel %vm241, %v2933, %v3102
        %v3190 = vsel %vm241, %v2934, %v3104
        %v3191 = vsel %vm241, %v2935, %v3106
        %v3192 = vsel %vm241, %v2936, %v3108
        %v3193 = vsel %vm241, %v2937, %v3110
        %v3194 = vsel %vm241, %v2938, %v3112
        %v3195 = vsel %vm241, %v2939, %v3114
        %v3196 = vsel %vm241, %v2940, %v3116
        %v3197 = vsel %vm241, %v2941, %v3118
        %v3198 = vsel %vm241, %v2942, %v3120
        %v3199 = vsel %vm241, %v2943, %v3122
        %v3200 = vsel %vm241, %v2944, %v3124
        %v3201 = vsel %vm241, %v2945, %v3126
        %v3202 = vsel %vm241, %v2946, %v3128
        %v3203 = vsel %vm241, %v2947, %v3130
        %v3204 = vsel %vm241, %v2948, %v3132
        %v3205 = vsel %vm241, %v2949, %v3134
        %v3206 = vsel %vm241, %v2950, %v3136
        %v3207 = vsel %vm241, %v2951, %v3138
        %v3208 = vsel %vm241, %v2952, %v3140
        %v3209 = vsel %vm241, %v2953, %v3142
        %v3210 = vsel %vm241, %v2954, %v3144
        %v3211 = vsel %vm241, %v2955, %v3146
        %v3212 = vsel %vm241, %v2956, %v3148
        %3245 = vrot.lane.b32.xlu0 %v3021, 32
        %v3246 = vpop.permute.xlu0 %3245
        %3247 = vrot.lane.b32.xlu0 %v3022, 32
        %v3248 = vpop.permute.xlu0 %3247
        %3249 = vrot.lane.b32.xlu0 %v3023, 32
        %v3250 = vpop.permute.xlu0 %3249
        %3251 = vrot.lane.b32.xlu0 %v3024, 32
        %v3252 = vpop.permute.xlu0 %3251
        %3253 = vrot.lane.b32.xlu0 %v3025, 32
        %v3254 = vpop.permute.xlu0 %3253
        %3255 = vrot.lane.b32.xlu0 %v3026, 32
        %v3256 = vpop.permute.xlu0 %3255
        %3257 = vrot.lane.b32.xlu0 %v3027, 32
        %v3258 = vpop.permute.xlu0 %3257
        %3259 = vrot.lane.b32.xlu0 %v3028, 32
        %v3260 = vpop.permute.xlu0 %3259
        %3261 = vrot.lane.b32.xlu0 %v3029, 32
        %v3262 = vpop.permute.xlu0 %3261
        %3263 = vrot.lane.b32.xlu0 %v3030, 32
        %v3264 = vpop.permute.xlu0 %3263
        %3265 = vrot.lane.b32.xlu0 %v3031, 32
        %v3266 = vpop.permute.xlu0 %3265
        %3267 = vrot.lane.b32.xlu0 %v3032, 32
        %v3268 = vpop.permute.xlu0 %3267
        %3269 = vrot.lane.b32.xlu0 %v3033, 32
        %v3270 = vpop.permute.xlu0 %3269
        %3271 = vrot.lane.b32.xlu0 %v3034, 32
        %v3272 = vpop.permute.xlu0 %3271
        %3273 = vrot.lane.b32.xlu0 %v3035, 32
        %v3274 = vpop.permute.xlu0 %3273
        %3275 = vrot.lane.b32.xlu0 %v3036, 32
        %v3276 = vpop.permute.xlu0 %3275
        %3277 = vrot.lane.b32.xlu0 %v3037, 32
        %v3278 = vpop.permute.xlu0 %3277
        %3279 = vrot.lane.b32.xlu0 %v3038, 32
        %v3280 = vpop.permute.xlu0 %3279
        %3281 = vrot.lane.b32.xlu0 %v3039, 32
        %v3282 = vpop.permute.xlu0 %3281
        %3283 = vrot.lane.b32.xlu0 %v3040, 32
        %v3284 = vpop.permute.xlu0 %3283
        %3285 = vrot.lane.b32.xlu0 %v3041, 32
        %v3286 = vpop.permute.xlu0 %3285
        %3287 = vrot.lane.b32.xlu0 %v3042, 32
        %v3288 = vpop.permute.xlu0 %3287
        %3289 = vrot.lane.b32.xlu0 %v3043, 32
        %v3290 = vpop.permute.xlu0 %3289
        %3291 = vrot.lane.b32.xlu0 %v3044, 32
        %v3292 = vpop.permute.xlu0 %3291
        %3293 = vrot.lane.b32.xlu0 %v3045, 32
        %v3294 = vpop.permute.xlu0 %3293
        %3295 = vrot.lane.b32.xlu0 %v3046, 32
        %v3296 = vpop.permute.xlu0 %3295
        %3297 = vrot.lane.b32.xlu0 %v3047, 32
        %v3298 = vpop.permute.xlu0 %3297
        %3299 = vrot.lane.b32.xlu0 %v3048, 32
        %v3300 = vpop.permute.xlu0 %3299
        %3301 = vrot.lane.b32.xlu0 %v3049, 32
        %v3302 = vpop.permute.xlu0 %3301
        %3303 = vrot.lane.b32.xlu0 %v3050, 32
        %v3304 = vpop.permute.xlu0 %3303
        %3305 = vrot.lane.b32.xlu0 %v3051, 32
        %v3306 = vpop.permute.xlu0 %3305
        %3307 = vrot.lane.b32.xlu0 %v3052, 32
        %v3308 = vpop.permute.xlu0 %3307
        %v3341 = vsel %vm241, %v2989, %v3246
        %v3342 = vsel %vm241, %v2990, %v3248
        %v3343 = vsel %vm241, %v2991, %v3250
        %v3344 = vsel %vm241, %v2992, %v3252
        %v3345 = vsel %vm241, %v2993, %v3254
        %v3346 = vsel %vm241, %v2994, %v3256
        %v3347 = vsel %vm241, %v2995, %v3258
        %v3348 = vsel %vm241, %v2996, %v3260
        %v3349 = vsel %vm241, %v2997, %v3262
        %v3350 = vsel %vm241, %v2998, %v3264
        %v3351 = vsel %vm241, %v2999, %v3266
        %v3352 = vsel %vm241, %v3000, %v3268
        %v3353 = vsel %vm241, %v3001, %v3270
        %v3354 = vsel %vm241, %v3002, %v3272
        %v3355 = vsel %vm241, %v3003, %v3274
        %v3356 = vsel %vm241, %v3004, %v3276
        %v3357 = vsel %vm241, %v3005, %v3278
        %v3358 = vsel %vm241, %v3006, %v3280
        %v3359 = vsel %vm241, %v3007, %v3282
        %v3360 = vsel %vm241, %v3008, %v3284
        %v3361 = vsel %vm241, %v3009, %v3286
        %v3362 = vsel %vm241, %v3010, %v3288
        %v3363 = vsel %vm241, %v3011, %v3290
        %v3364 = vsel %vm241, %v3012, %v3292
        %v3365 = vsel %vm241, %v3013, %v3294
        %v3366 = vsel %vm241, %v3014, %v3296
        %v3367 = vsel %vm241, %v3015, %v3298
        %v3368 = vsel %vm241, %v3016, %v3300
        %v3369 = vsel %vm241, %v3017, %v3302
        %v3370 = vsel %vm241, %v3018, %v3304
        %v3371 = vsel %vm241, %v3019, %v3306
        %v3372 = vsel %vm241, %v3020, %v3308
        %3405 = vrot.lane.b32.xlu0 %v3341, 64
        %v3406 = vpop.permute.xlu0 %3405
        %3407 = vrot.lane.b32.xlu0 %v3342, 64
        %v3408 = vpop.permute.xlu0 %3407
        %3409 = vrot.lane.b32.xlu0 %v3343, 64
        %v3410 = vpop.permute.xlu0 %3409
        %3411 = vrot.lane.b32.xlu0 %v3344, 64
        %v3412 = vpop.permute.xlu0 %3411
        %3413 = vrot.lane.b32.xlu0 %v3345, 64
        %v3414 = vpop.permute.xlu0 %3413
        %3415 = vrot.lane.b32.xlu0 %v3346, 64
        %v3416 = vpop.permute.xlu0 %3415
        %3417 = vrot.lane.b32.xlu0 %v3347, 64
        %v3418 = vpop.permute.xlu0 %3417
        %3419 = vrot.lane.b32.xlu0 %v3348, 64
        %v3420 = vpop.permute.xlu0 %3419
        %3421 = vrot.lane.b32.xlu0 %v3349, 64
        %v3422 = vpop.permute.xlu0 %3421
        %3423 = vrot.lane.b32.xlu0 %v3350, 64
        %v3424 = vpop.permute.xlu0 %3423
        %3425 = vrot.lane.b32.xlu0 %v3351, 64
        %v3426 = vpop.permute.xlu0 %3425
        %3427 = vrot.lane.b32.xlu0 %v3352, 64
        %v3428 = vpop.permute.xlu0 %3427
        %3429 = vrot.lane.b32.xlu0 %v3353, 64
        %v3430 = vpop.permute.xlu0 %3429
        %3431 = vrot.lane.b32.xlu0 %v3354, 64
        %v3432 = vpop.permute.xlu0 %3431
        %3433 = vrot.lane.b32.xlu0 %v3355, 64
        %v3434 = vpop.permute.xlu0 %3433
        %3435 = vrot.lane.b32.xlu0 %v3356, 64
        %v3436 = vpop.permute.xlu0 %3435
        %3437 = vrot.lane.b32.xlu0 %v3357, 64
        %v3438 = vpop.permute.xlu0 %3437
        %3439 = vrot.lane.b32.xlu0 %v3358, 64
        %v3440 = vpop.permute.xlu0 %3439
        %3441 = vrot.lane.b32.xlu0 %v3359, 64
        %v3442 = vpop.permute.xlu0 %3441
        %3443 = vrot.lane.b32.xlu0 %v3360, 64
        %v3444 = vpop.permute.xlu0 %3443
        %3445 = vrot.lane.b32.xlu0 %v3361, 64
        %v3446 = vpop.permute.xlu0 %3445
        %3447 = vrot.lane.b32.xlu0 %v3362, 64
        %v3448 = vpop.permute.xlu0 %3447
        %3449 = vrot.lane.b32.xlu0 %v3363, 64
        %v3450 = vpop.permute.xlu0 %3449
        %3451 = vrot.lane.b32.xlu0 %v3364, 64
        %v3452 = vpop.permute.xlu0 %3451
        %3453 = vrot.lane.b32.xlu0 %v3365, 64
        %v3454 = vpop.permute.xlu0 %3453
        %3455 = vrot.lane.b32.xlu0 %v3366, 64
        %v3456 = vpop.permute.xlu0 %3455
        %3457 = vrot.lane.b32.xlu0 %v3367, 64
        %v3458 = vpop.permute.xlu0 %3457
        %3459 = vrot.lane.b32.xlu0 %v3368, 64
        %v3460 = vpop.permute.xlu0 %3459
        %3461 = vrot.lane.b32.xlu0 %v3369, 64
        %v3462 = vpop.permute.xlu0 %3461
        %3463 = vrot.lane.b32.xlu0 %v3370, 64
        %v3464 = vpop.permute.xlu0 %3463
        %3465 = vrot.lane.b32.xlu0 %v3371, 64
        %v3466 = vpop.permute.xlu0 %3465
        %3467 = vrot.lane.b32.xlu0 %v3372, 64
        %v3468 = vpop.permute.xlu0 %3467
        %v3501 = vsel %vm938, %v3181, %v3406
        %v3502 = vsel %vm938, %v3182, %v3408
        %v3503 = vsel %vm938, %v3183, %v3410
        %v3504 = vsel %vm938, %v3184, %v3412
        %v3505 = vsel %vm938, %v3185, %v3414
        %v3506 = vsel %vm938, %v3186, %v3416
        %v3507 = vsel %vm938, %v3187, %v3418
        %v3508 = vsel %vm938, %v3188, %v3420
        %v3509 = vsel %vm938, %v3189, %v3422
        %v3510 = vsel %vm938, %v3190, %v3424
        %v3511 = vsel %vm938, %v3191, %v3426
        %v3512 = vsel %vm938, %v3192, %v3428
        %v3513 = vsel %vm938, %v3193, %v3430
        %v3514 = vsel %vm938, %v3194, %v3432
        %v3515 = vsel %vm938, %v3195, %v3434
        %v3516 = vsel %vm938, %v3196, %v3436
        %v3517 = vsel %vm938, %v3197, %v3438
        %v3518 = vsel %vm938, %v3198, %v3440
        %v3519 = vsel %vm938, %v3199, %v3442
        %v3520 = vsel %vm938, %v3200, %v3444
        %v3521 = vsel %vm938, %v3201, %v3446
        %v3522 = vsel %vm938, %v3202, %v3448
        %v3523 = vsel %vm938, %v3203, %v3450
        %v3524 = vsel %vm938, %v3204, %v3452
        %v3525 = vsel %vm938, %v3205, %v3454
        %v3526 = vsel %vm938, %v3206, %v3456
        %v3527 = vsel %vm938, %v3207, %v3458
        %v3528 = vsel %vm938, %v3208, %v3460
        %v3529 = vsel %vm938, %v3209, %v3462
        %v3530 = vsel %vm938, %v3210, %v3464
        %v3531 = vsel %vm938, %v3211, %v3466
        %v3532 = vsel %vm938, %v3212, %v3468
        %v3533 = vpack.c.bf16 %v3502, %v3501
        %v3534 = vpack.c.bf16 %v3504, %v3503
        %v3535 = vpack.c.bf16 %v3506, %v3505
        %v3536 = vpack.c.bf16 %v3508, %v3507
        %v3537 = vpack.c.bf16 %v3510, %v3509
        %v3538 = vpack.c.bf16 %v3512, %v3511
        %v3539 = vpack.c.bf16 %v3514, %v3513
        %v3540 = vpack.c.bf16 %v3516, %v3515
        %v3541 = vpack.c.bf16 %v3518, %v3517
        %v3542 = vpack.c.bf16 %v3520, %v3519
        %v3543 = vpack.c.bf16 %v3522, %v3521
        %v3544 = vpack.c.bf16 %v3524, %v3523
        %v3545 = vpack.c.bf16 %v3526, %v3525
        %v3546 = vpack.c.bf16 %v3528, %v3527
        %v3547 = vpack.c.bf16 %v3530, %v3529
        %v3548 = vpack.c.bf16 %v3532, %v3531
        %3549 = vst [vmem:[#allocation3 + $0x20] sm:$0xff] %v3533
        %3550 = vst [vmem:[#allocation3 + $0x58] sm:$0xff] %v3534
        %3551 = vst [vmem:[#allocation3 + $0x90] sm:$0xff] %v3535
        %3552 = vst [vmem:[#allocation3 + $0xc8] sm:$0xff] %v3536
        %3553 = vst [vmem:[#allocation3 + $0x100] sm:$0xff] %v3537
        %3554 = vst [vmem:[#allocation3 + $0x138] sm:$0xff] %v3538
        %3555 = vst [vmem:[#allocation3 + $0x170] sm:$0xff] %v3539
        %3556 = vst [vmem:[#allocation3 + $0x1a8] sm:$0xff] %v3540
        %3557 = vst [vmem:[#allocation3 + $0x1e0] sm:$0xff] %v3541
        %3558 = vst [vmem:[#allocation3 + $0x218] sm:$0xff] %v3542
        %3559 = vst [vmem:[#allocation3 + $0x250] sm:$0xff] %v3543
        %3560 = vst [vmem:[#allocation3 + $0x288] sm:$0xff] %v3544
        %3561 = vst [vmem:[#allocation3 + $0x2c0] sm:$0xff] %v3545
        %3562 = vst [vmem:[#allocation3 + $0x2f8] sm:$0xff] %v3546
        %3563 = vst [vmem:[#allocation3 + $0x330] sm:$0xff] %v3547
        %3564 = vst [vmem:[#allocation3 + $0x368] sm:$0xff] %v3548
        %s3565 = scalar_lea.vmem [#allocation2], 96
        %v3566 = vld [vmem:[%s3565] sm:$0xff]
        %v3567 = vld [vmem:[%s3565 + $0x8] sm:$0xff]
        %v3568 = vld [vmem:[%s3565 + $0x18] sm:$0xff]
        %v3569 = vld [vmem:[%s3565 + $0x20] sm:$0xff]
        %v3570 = vld [vmem:[%s3565 + $0x30] sm:$0xff]
        %v3571 = vld [vmem:[%s3565 + $0x38] sm:$0xff]
        %v3572 = vld [vmem:[%s3565 + $0x48] sm:$0xff]
        %v3573 = vld [vmem:[%s3565 + $0x50] sm:$0xff]
        %v3574 = vld [vmem:[%s3565 + $0x60] sm:$0xff]
        %v3575 = vld [vmem:[%s3565 + $0x68] sm:$0xff]
        %v3576 = vld [vmem:[%s3565 + $0x78] sm:$0xff]
        %v3577 = vld [vmem:[%s3565 + $0x80] sm:$0xff]
        %v3578 = vld [vmem:[%s3565 + $0x90] sm:$0xff]
        %v3579 = vld [vmem:[%s3565 + $0x98] sm:$0xff]
        %v3580 = vld [vmem:[%s3565 + $0xa8] sm:$0xff]
        %v3581 = vld [vmem:[%s3565 + $0xb0] sm:$0xff]
        %v3582 = vld [vmem:[%s3565 + $0xc0] sm:$0xff]
        %v3583 = vld [vmem:[%s3565 + $0xc8] sm:$0xff]
        %v3584 = vld [vmem:[%s3565 + $0xd8] sm:$0xff]
        %v3585 = vld [vmem:[%s3565 + $0xe0] sm:$0xff]
        %v3586 = vld [vmem:[%s3565 + $0xf0] sm:$0xff]
        %v3587 = vld [vmem:[%s3565 + $0xf8] sm:$0xff]
        %v3588 = vld [vmem:[%s3565 + $0x108] sm:$0xff]
        %v3589 = vld [vmem:[%s3565 + $0x110] sm:$0xff]
        %v3590 = vld [vmem:[%s3565 + $0x120] sm:$0xff]
        %v3591 = vld [vmem:[%s3565 + $0x128] sm:$0xff]
        %v3592 = vld [vmem:[%s3565 + $0x138] sm:$0xff]
        %v3593 = vld [vmem:[%s3565 + $0x140] sm:$0xff]
        %v3594 = vld [vmem:[%s3565 + $0x150] sm:$0xff]
        %v3595 = vld [vmem:[%s3565 + $0x158] sm:$0xff]
        %v3596 = vld [vmem:[%s3565 + $0x168] sm:$0xff]
        %v3597 = vld [vmem:[%s3565 + $0x170] sm:$0xff]
        %v3598 = vld [vmem:[%s3565 + $0x1] sm:$0xff]
        %v3599 = vld [vmem:[%s3565 + $0x9] sm:$0xff]
        %v3600 = vld [vmem:[%s3565 + $0x19] sm:$0xff]
        %v3601 = vld [vmem:[%s3565 + $0x21] sm:$0xff]
        %v3602 = vld [vmem:[%s3565 + $0x31] sm:$0xff]
        %v3603 = vld [vmem:[%s3565 + $0x39] sm:$0xff]
        %v3604 = vld [vmem:[%s3565 + $0x49] sm:$0xff]
        %v3605 = vld [vmem:[%s3565 + $0x51] sm:$0xff]
        %v3606 = vld [vmem:[%s3565 + $0x61] sm:$0xff]
        %v3607 = vld [vmem:[%s3565 + $0x69] sm:$0xff]
        %v3608 = vld [vmem:[%s3565 + $0x79] sm:$0xff]
        %v3609 = vld [vmem:[%s3565 + $0x81] sm:$0xff]
        %v3610 = vld [vmem:[%s3565 + $0x91] sm:$0xff]
        %v3611 = vld [vmem:[%s3565 + $0x99] sm:$0xff]
        %v3612 = vld [vmem:[%s3565 + $0xa9] sm:$0xff]
        %v3613 = vld [vmem:[%s3565 + $0xb1] sm:$0xff]
        %v3614 = vld [vmem:[%s3565 + $0xc1] sm:$0xff]
        %v3615 = vld [vmem:[%s3565 + $0xc9] sm:$0xff]
        %v3616 = vld [vmem:[%s3565 + $0xd9] sm:$0xff]
        %v3617 = vld [vmem:[%s3565 + $0xe1] sm:$0xff]
        %v3618 = vld [vmem:[%s3565 + $0xf1] sm:$0xff]
        %v3619 = vld [vmem:[%s3565 + $0xf9] sm:$0xff]
        %v3620 = vld [vmem:[%s3565 + $0x109] sm:$0xff]
        %v3621 = vld [vmem:[%s3565 + $0x111] sm:$0xff]
        %v3622 = vld [vmem:[%s3565 + $0x121] sm:$0xff]
        %v3623 = vld [vmem:[%s3565 + $0x129] sm:$0xff]
        %v3624 = vld [vmem:[%s3565 + $0x139] sm:$0xff]
        %v3625 = vld [vmem:[%s3565 + $0x141] sm:$0xff]
        %v3626 = vld [vmem:[%s3565 + $0x151] sm:$0xff]
        %v3627 = vld [vmem:[%s3565 + $0x159] sm:$0xff]
        %v3628 = vld [vmem:[%s3565 + $0x169] sm:$0xff]
        %v3629 = vld [vmem:[%s3565 + $0x171] sm:$0xff]
        %v3630 = vld [vmem:[%s3565 + $0x2] sm:$0xff]
        %v3631 = vld [vmem:[%s3565 + $0xa] sm:$0xff]
        %v3632 = vld [vmem:[%s3565 + $0x1a] sm:$0xff]
        %v3633 = vld [vmem:[%s3565 + $0x22] sm:$0xff]
        %v3634 = vld [vmem:[%s3565 + $0x32] sm:$0xff]
        %v3635 = vld [vmem:[%s3565 + $0x3a] sm:$0xff]
        %v3636 = vld [vmem:[%s3565 + $0x4a] sm:$0xff]
        %v3637 = vld [vmem:[%s3565 + $0x52] sm:$0xff]
        %v3638 = vld [vmem:[%s3565 + $0x62] sm:$0xff]
        %v3639 = vld [vmem:[%s3565 + $0x6a] sm:$0xff]
        %v3640 = vld [vmem:[%s3565 + $0x7a] sm:$0xff]
        %v3641 = vld [vmem:[%s3565 + $0x82] sm:$0xff]
        %v3642 = vld [vmem:[%s3565 + $0x92] sm:$0xff]
        %v3643 = vld [vmem:[%s3565 + $0x9a] sm:$0xff]
        %v3644 = vld [vmem:[%s3565 + $0xaa] sm:$0xff]
        %v3645 = vld [vmem:[%s3565 + $0xb2] sm:$0xff]
        %v3646 = vld [vmem:[%s3565 + $0xc2] sm:$0xff]
        %v3647 = vld [vmem:[%s3565 + $0xca] sm:$0xff]
        %v3648 = vld [vmem:[%s3565 + $0xda] sm:$0xff]
        %v3649 = vld [vmem:[%s3565 + $0xe2] sm:$0xff]
        %v3650 = vld [vmem:[%s3565 + $0xf2] sm:$0xff]
        %v3651 = vld [vmem:[%s3565 + $0xfa] sm:$0xff]
        %v3652 = vld [vmem:[%s3565 + $0x10a] sm:$0xff]
        %v3653 = vld [vmem:[%s3565 + $0x112] sm:$0xff]
        %v3654 = vld [vmem:[%s3565 + $0x122] sm:$0xff]
        %v3655 = vld [vmem:[%s3565 + $0x12a] sm:$0xff]
        %v3656 = vld [vmem:[%s3565 + $0x13a] sm:$0xff]
        %v3657 = vld [vmem:[%s3565 + $0x142] sm:$0xff]
        %v3658 = vld [vmem:[%s3565 + $0x152] sm:$0xff]
        %v3659 = vld [vmem:[%s3565 + $0x15a] sm:$0xff]
        %v3660 = vld [vmem:[%s3565 + $0x16a] sm:$0xff]
        %v3661 = vld [vmem:[%s3565 + $0x172] sm:$0xff]
        %v3662 = vld [vmem:[%s3565 + $0x3] sm:$0xff]
        %v3663 = vld [vmem:[%s3565 + $0xb] sm:$0xff]
        %v3664 = vld [vmem:[%s3565 + $0x1b] sm:$0xff]
        %v3665 = vld [vmem:[%s3565 + $0x23] sm:$0xff]
        %v3666 = vld [vmem:[%s3565 + $0x33] sm:$0xff]
        %v3667 = vld [vmem:[%s3565 + $0x3b] sm:$0xff]
        %v3668 = vld [vmem:[%s3565 + $0x4b] sm:$0xff]
        %v3669 = vld [vmem:[%s3565 + $0x53] sm:$0xff]
        %v3670 = vld [vmem:[%s3565 + $0x63] sm:$0xff]
        %v3671 = vld [vmem:[%s3565 + $0x6b] sm:$0xff]
        %v3672 = vld [vmem:[%s3565 + $0x7b] sm:$0xff]
        %v3673 = vld [vmem:[%s3565 + $0x83] sm:$0xff]
        %v3674 = vld [vmem:[%s3565 + $0x93] sm:$0xff]
        %v3675 = vld [vmem:[%s3565 + $0x9b] sm:$0xff]
        %v3676 = vld [vmem:[%s3565 + $0xab] sm:$0xff]
        %v3677 = vld [vmem:[%s3565 + $0xb3] sm:$0xff]
        %v3678 = vld [vmem:[%s3565 + $0xc3] sm:$0xff]
        %v3679 = vld [vmem:[%s3565 + $0xcb] sm:$0xff]
        %v3680 = vld [vmem:[%s3565 + $0xdb] sm:$0xff]
        %v3681 = vld [vmem:[%s3565 + $0xe3] sm:$0xff]
        %v3682 = vld [vmem:[%s3565 + $0xf3] sm:$0xff]
        %v3683 = vld [vmem:[%s3565 + $0xfb] sm:$0xff]
        %v3684 = vld [vmem:[%s3565 + $0x10b] sm:$0xff]
        %v3685 = vld [vmem:[%s3565 + $0x113] sm:$0xff]
        %v3686 = vld [vmem:[%s3565 + $0x123] sm:$0xff]
        %v3687 = vld [vmem:[%s3565 + $0x12b] sm:$0xff]
        %v3688 = vld [vmem:[%s3565 + $0x13b] sm:$0xff]
        %v3689 = vld [vmem:[%s3565 + $0x143] sm:$0xff]
        %v3690 = vld [vmem:[%s3565 + $0x153] sm:$0xff]
        %v3691 = vld [vmem:[%s3565 + $0x15b] sm:$0xff]
        %v3692 = vld [vmem:[%s3565 + $0x16b] sm:$0xff]
        %v3693 = vld [vmem:[%s3565 + $0x173] sm:$0xff]
        %3726 = vrot.lane.b32.xlu0 %v3598, 32
        %v3727 = vpop.permute.xlu0 %3726
        %3728 = vrot.lane.b32.xlu0 %v3599, 32
        %v3729 = vpop.permute.xlu0 %3728
        %3730 = vrot.lane.b32.xlu0 %v3600, 32
        %v3731 = vpop.permute.xlu0 %3730
        %3732 = vrot.lane.b32.xlu0 %v3601, 32
        %v3733 = vpop.permute.xlu0 %3732
        %3734 = vrot.lane.b32.xlu0 %v3602, 32
        %v3735 = vpop.permute.xlu0 %3734
        %3736 = vrot.lane.b32.xlu0 %v3603, 32
        %v3737 = vpop.permute.xlu0 %3736
        %3738 = vrot.lane.b32.xlu0 %v3604, 32
        %v3739 = vpop.permute.xlu0 %3738
        %3740 = vrot.lane.b32.xlu0 %v3605, 32
        %v3741 = vpop.permute.xlu0 %3740
        %3742 = vrot.lane.b32.xlu0 %v3606, 32
        %v3743 = vpop.permute.xlu0 %3742
        %3744 = vrot.lane.b32.xlu0 %v3607, 32
        %v3745 = vpop.permute.xlu0 %3744
        %3746 = vrot.lane.b32.xlu0 %v3608, 32
        %v3747 = vpop.permute.xlu0 %3746
        %3748 = vrot.lane.b32.xlu0 %v3609, 32
        %v3749 = vpop.permute.xlu0 %3748
        %3750 = vrot.lane.b32.xlu0 %v3610, 32
        %v3751 = vpop.permute.xlu0 %3750
        %3752 = vrot.lane.b32.xlu0 %v3611, 32
        %v3753 = vpop.permute.xlu0 %3752
        %3754 = vrot.lane.b32.xlu0 %v3612, 32
        %v3755 = vpop.permute.xlu0 %3754
        %3756 = vrot.lane.b32.xlu0 %v3613, 32
        %v3757 = vpop.permute.xlu0 %3756
        %3758 = vrot.lane.b32.xlu0 %v3614, 32
        %v3759 = vpop.permute.xlu0 %3758
        %3760 = vrot.lane.b32.xlu0 %v3615, 32
        %v3761 = vpop.permute.xlu0 %3760
        %3762 = vrot.lane.b32.xlu0 %v3616, 32
        %v3763 = vpop.permute.xlu0 %3762
        %3764 = vrot.lane.b32.xlu0 %v3617, 32
        %v3765 = vpop.permute.xlu0 %3764
        %3766 = vrot.lane.b32.xlu0 %v3618, 32
        %v3767 = vpop.permute.xlu0 %3766
        %3768 = vrot.lane.b32.xlu0 %v3619, 32
        %v3769 = vpop.permute.xlu0 %3768
        %3770 = vrot.lane.b32.xlu0 %v3620, 32
        %v3771 = vpop.permute.xlu0 %3770
        %3772 = vrot.lane.b32.xlu0 %v3621, 32
        %v3773 = vpop.permute.xlu0 %3772
        %3774 = vrot.lane.b32.xlu0 %v3622, 32
        %v3775 = vpop.permute.xlu0 %3774
        %3776 = vrot.lane.b32.xlu0 %v3623, 32
        %v3777 = vpop.permute.xlu0 %3776
        %3778 = vrot.lane.b32.xlu0 %v3624, 32
        %v3779 = vpop.permute.xlu0 %3778
        %3780 = vrot.lane.b32.xlu0 %v3625, 32
        %v3781 = vpop.permute.xlu0 %3780
        %3782 = vrot.lane.b32.xlu0 %v3626, 32
        %v3783 = vpop.permute.xlu0 %3782
        %3784 = vrot.lane.b32.xlu0 %v3627, 32
        %v3785 = vpop.permute.xlu0 %3784
        %3786 = vrot.lane.b32.xlu0 %v3628, 32
        %v3787 = vpop.permute.xlu0 %3786
        %3788 = vrot.lane.b32.xlu0 %v3629, 32
        %v3789 = vpop.permute.xlu0 %3788
        %v3822 = vsel %vm241, %v3566, %v3727
        %v3823 = vsel %vm241, %v3567, %v3729
        %v3824 = vsel %vm241, %v3568, %v3731
        %v3825 = vsel %vm241, %v3569, %v3733
        %v3826 = vsel %vm241, %v3570, %v3735
        %v3827 = vsel %vm241, %v3571, %v3737
        %v3828 = vsel %vm241, %v3572, %v3739
        %v3829 = vsel %vm241, %v3573, %v3741
        %v3830 = vsel %vm241, %v3574, %v3743
        %v3831 = vsel %vm241, %v3575, %v3745
        %v3832 = vsel %vm241, %v3576, %v3747
        %v3833 = vsel %vm241, %v3577, %v3749
        %v3834 = vsel %vm241, %v3578, %v3751
        %v3835 = vsel %vm241, %v3579, %v3753
        %v3836 = vsel %vm241, %v3580, %v3755
        %v3837 = vsel %vm241, %v3581, %v3757
        %v3838 = vsel %vm241, %v3582, %v3759
        %v3839 = vsel %vm241, %v3583, %v3761
        %v3840 = vsel %vm241, %v3584, %v3763
        %v3841 = vsel %vm241, %v3585, %v3765
        %v3842 = vsel %vm241, %v3586, %v3767
        %v3843 = vsel %vm241, %v3587, %v3769
        %v3844 = vsel %vm241, %v3588, %v3771
        %v3845 = vsel %vm241, %v3589, %v3773
        %v3846 = vsel %vm241, %v3590, %v3775
        %v3847 = vsel %vm241, %v3591, %v3777
        %v3848 = vsel %vm241, %v3592, %v3779
        %v3849 = vsel %vm241, %v3593, %v3781
        %v3850 = vsel %vm241, %v3594, %v3783
        %v3851 = vsel %vm241, %v3595, %v3785
        %v3852 = vsel %vm241, %v3596, %v3787
        %v3853 = vsel %vm241, %v3597, %v3789
        %3886 = vrot.lane.b32.xlu0 %v3662, 32
        %v3887 = vpop.permute.xlu0 %3886
        %3888 = vrot.lane.b32.xlu0 %v3663, 32
        %v3889 = vpop.permute.xlu0 %3888
        %3890 = vrot.lane.b32.xlu0 %v3664, 32
        %v3891 = vpop.permute.xlu0 %3890
        %3892 = vrot.lane.b32.xlu0 %v3665, 32
        %v3893 = vpop.permute.xlu0 %3892
        %3894 = vrot.lane.b32.xlu0 %v3666, 32
        %v3895 = vpop.permute.xlu0 %3894
        %3896 = vrot.lane.b32.xlu0 %v3667, 32
        %v3897 = vpop.permute.xlu0 %3896
        %3898 = vrot.lane.b32.xlu0 %v3668, 32
        %v3899 = vpop.permute.xlu0 %3898
        %3900 = vrot.lane.b32.xlu0 %v3669, 32
        %v3901 = vpop.permute.xlu0 %3900
        %3902 = vrot.lane.b32.xlu0 %v3670, 32
        %v3903 = vpop.permute.xlu0 %3902
        %3904 = vrot.lane.b32.xlu0 %v3671, 32
        %v3905 = vpop.permute.xlu0 %3904
        %3906 = vrot.lane.b32.xlu0 %v3672, 32
        %v3907 = vpop.permute.xlu0 %3906
        %3908 = vrot.lane.b32.xlu0 %v3673, 32
        %v3909 = vpop.permute.xlu0 %3908
        %3910 = vrot.lane.b32.xlu0 %v3674, 32
        %v3911 = vpop.permute.xlu0 %3910
        %3912 = vrot.lane.b32.xlu0 %v3675, 32
        %v3913 = vpop.permute.xlu0 %3912
        %3914 = vrot.lane.b32.xlu0 %v3676, 32
        %v3915 = vpop.permute.xlu0 %3914
        %3916 = vrot.lane.b32.xlu0 %v3677, 32
        %v3917 = vpop.permute.xlu0 %3916
        %3918 = vrot.lane.b32.xlu0 %v3678, 32
        %v3919 = vpop.permute.xlu0 %3918
        %3920 = vrot.lane.b32.xlu0 %v3679, 32
        %v3921 = vpop.permute.xlu0 %3920
        %3922 = vrot.lane.b32.xlu0 %v3680, 32
        %v3923 = vpop.permute.xlu0 %3922
        %3924 = vrot.lane.b32.xlu0 %v3681, 32
        %v3925 = vpop.permute.xlu0 %3924
        %3926 = vrot.lane.b32.xlu0 %v3682, 32
        %v3927 = vpop.permute.xlu0 %3926
        %3928 = vrot.lane.b32.xlu0 %v3683, 32
        %v3929 = vpop.permute.xlu0 %3928
        %3930 = vrot.lane.b32.xlu0 %v3684, 32
        %v3931 = vpop.permute.xlu0 %3930
        %3932 = vrot.lane.b32.xlu0 %v3685, 32
        %v3933 = vpop.permute.xlu0 %3932
        %3934 = vrot.lane.b32.xlu0 %v3686, 32
        %v3935 = vpop.permute.xlu0 %3934
        %3936 = vrot.lane.b32.xlu0 %v3687, 32
        %v3937 = vpop.permute.xlu0 %3936
        %3938 = vrot.lane.b32.xlu0 %v3688, 32
        %v3939 = vpop.permute.xlu0 %3938
        %3940 = vrot.lane.b32.xlu0 %v3689, 32
        %v3941 = vpop.permute.xlu0 %3940
        %3942 = vrot.lane.b32.xlu0 %v3690, 32
        %v3943 = vpop.permute.xlu0 %3942
        %3944 = vrot.lane.b32.xlu0 %v3691, 32
        %v3945 = vpop.permute.xlu0 %3944
        %3946 = vrot.lane.b32.xlu0 %v3692, 32
        %v3947 = vpop.permute.xlu0 %3946
        %3948 = vrot.lane.b32.xlu0 %v3693, 32
        %v3949 = vpop.permute.xlu0 %3948
        %v3982 = vsel %vm241, %v3630, %v3887
        %v3983 = vsel %vm241, %v3631, %v3889
        %v3984 = vsel %vm241, %v3632, %v3891
        %v3985 = vsel %vm241, %v3633, %v3893
        %v3986 = vsel %vm241, %v3634, %v3895
        %v3987 = vsel %vm241, %v3635, %v3897
        %v3988 = vsel %vm241, %v3636, %v3899
        %v3989 = vsel %vm241, %v3637, %v3901
        %v3990 = vsel %vm241, %v3638, %v3903
        %v3991 = vsel %vm241, %v3639, %v3905
        %v3992 = vsel %vm241, %v3640, %v3907
        %v3993 = vsel %vm241, %v3641, %v3909
        %v3994 = vsel %vm241, %v3642, %v3911
        %v3995 = vsel %vm241, %v3643, %v3913
        %v3996 = vsel %vm241, %v3644, %v3915
        %v3997 = vsel %vm241, %v3645, %v3917
        %v3998 = vsel %vm241, %v3646, %v3919
        %v3999 = vsel %vm241, %v3647, %v3921
        %v4000 = vsel %vm241, %v3648, %v3923
        %v4001 = vsel %vm241, %v3649, %v3925
        %v4002 = vsel %vm241, %v3650, %v3927
        %v4003 = vsel %vm241, %v3651, %v3929
        %v4004 = vsel %vm241, %v3652, %v3931
        %v4005 = vsel %vm241, %v3653, %v3933
        %v4006 = vsel %vm241, %v3654, %v3935
        %v4007 = vsel %vm241, %v3655, %v3937
        %v4008 = vsel %vm241, %v3656, %v3939
        %v4009 = vsel %vm241, %v3657, %v3941
        %v4010 = vsel %vm241, %v3658, %v3943
        %v4011 = vsel %vm241, %v3659, %v3945
        %v4012 = vsel %vm241, %v3660, %v3947
        %v4013 = vsel %vm241, %v3661, %v3949
        %4046 = vrot.lane.b32.xlu0 %v3982, 64
        %v4047 = vpop.permute.xlu0 %4046
        %4048 = vrot.lane.b32.xlu0 %v3983, 64
        %v4049 = vpop.permute.xlu0 %4048
        %4050 = vrot.lane.b32.xlu0 %v3984, 64
        %v4051 = vpop.permute.xlu0 %4050
        %4052 = vrot.lane.b32.xlu0 %v3985, 64
        %v4053 = vpop.permute.xlu0 %4052
        %4054 = vrot.lane.b32.xlu0 %v3986, 64
        %v4055 = vpop.permute.xlu0 %4054
        %4056 = vrot.lane.b32.xlu0 %v3987, 64
        %v4057 = vpop.permute.xlu0 %4056
        %4058 = vrot.lane.b32.xlu0 %v3988, 64
        %v4059 = vpop.permute.xlu0 %4058
        %4060 = vrot.lane.b32.xlu0 %v3989, 64
        %v4061 = vpop.permute.xlu0 %4060
        %4062 = vrot.lane.b32.xlu0 %v3990, 64
        %v4063 = vpop.permute.xlu0 %4062
        %4064 = vrot.lane.b32.xlu0 %v3991, 64
        %v4065 = vpop.permute.xlu0 %4064
        %4066 = vrot.lane.b32.xlu0 %v3992, 64
        %v4067 = vpop.permute.xlu0 %4066
        %4068 = vrot.lane.b32.xlu0 %v3993, 64
        %v4069 = vpop.permute.xlu0 %4068
        %4070 = vrot.lane.b32.xlu0 %v3994, 64
        %v4071 = vpop.permute.xlu0 %4070
        %4072 = vrot.lane.b32.xlu0 %v3995, 64
        %v4073 = vpop.permute.xlu0 %4072
        %4074 = vrot.lane.b32.xlu0 %v3996, 64
        %v4075 = vpop.permute.xlu0 %4074
        %4076 = vrot.lane.b32.xlu0 %v3997, 64
        %v4077 = vpop.permute.xlu0 %4076
        %4078 = vrot.lane.b32.xlu0 %v3998, 64
        %v4079 = vpop.permute.xlu0 %4078
        %4080 = vrot.lane.b32.xlu0 %v3999, 64
        %v4081 = vpop.permute.xlu0 %4080
        %4082 = vrot.lane.b32.xlu0 %v4000, 64
        %v4083 = vpop.permute.xlu0 %4082
        %4084 = vrot.lane.b32.xlu0 %v4001, 64
        %v4085 = vpop.permute.xlu0 %4084
        %4086 = vrot.lane.b32.xlu0 %v4002, 64
        %v4087 = vpop.permute.xlu0 %4086
        %4088 = vrot.lane.b32.xlu0 %v4003, 64
        %v4089 = vpop.permute.xlu0 %4088
        %4090 = vrot.lane.b32.xlu0 %v4004, 64
        %v4091 = vpop.permute.xlu0 %4090
        %4092 = vrot.lane.b32.xlu0 %v4005, 64
        %v4093 = vpop.permute.xlu0 %4092
        %4094 = vrot.lane.b32.xlu0 %v4006, 64
        %v4095 = vpop.permute.xlu0 %4094
        %4096 = vrot.lane.b32.xlu0 %v4007, 64
        %v4097 = vpop.permute.xlu0 %4096
        %4098 = vrot.lane.b32.xlu0 %v4008, 64
        %v4099 = vpop.permute.xlu0 %4098
        %4100 = vrot.lane.b32.xlu0 %v4009, 64
        %v4101 = vpop.permute.xlu0 %4100
        %4102 = vrot.lane.b32.xlu0 %v4010, 64
        %v4103 = vpop.permute.xlu0 %4102
        %4104 = vrot.lane.b32.xlu0 %v4011, 64
        %v4105 = vpop.permute.xlu0 %4104
        %4106 = vrot.lane.b32.xlu0 %v4012, 64
        %v4107 = vpop.permute.xlu0 %4106
        %4108 = vrot.lane.b32.xlu0 %v4013, 64
        %v4109 = vpop.permute.xlu0 %4108
        %v4142 = vsel %vm938, %v3822, %v4047
        %v4143 = vsel %vm938, %v3823, %v4049
        %v4144 = vsel %vm938, %v3824, %v4051
        %v4145 = vsel %vm938, %v3825, %v4053
        %v4146 = vsel %vm938, %v3826, %v4055
        %v4147 = vsel %vm938, %v3827, %v4057
        %v4148 = vsel %vm938, %v3828, %v4059
        %v4149 = vsel %vm938, %v3829, %v4061
        %v4150 = vsel %vm938, %v3830, %v4063
        %v4151 = vsel %vm938, %v3831, %v4065
        %v4152 = vsel %vm938, %v3832, %v4067
        %v4153 = vsel %vm938, %v3833, %v4069
        %v4154 = vsel %vm938, %v3834, %v4071
        %v4155 = vsel %vm938, %v3835, %v4073
        %v4156 = vsel %vm938, %v3836, %v4075
        %v4157 = vsel %vm938, %v3837, %v4077
        %v4158 = vsel %vm938, %v3838, %v4079
        %v4159 = vsel %vm938, %v3839, %v4081
        %v4160 = vsel %vm938, %v3840, %v4083
        %v4161 = vsel %vm938, %v3841, %v4085
        %v4162 = vsel %vm938, %v3842, %v4087
        %v4163 = vsel %vm938, %v3843, %v4089
        %v4164 = vsel %vm938, %v3844, %v4091
        %v4165 = vsel %vm938, %v3845, %v4093
        %v4166 = vsel %vm938, %v3846, %v4095
        %v4167 = vsel %vm938, %v3847, %v4097
        %v4168 = vsel %vm938, %v3848, %v4099
        %v4169 = vsel %vm938, %v3849, %v4101
        %v4170 = vsel %vm938, %v3850, %v4103
        %v4171 = vsel %vm938, %v3851, %v4105
        %v4172 = vsel %vm938, %v3852, %v4107
        %v4173 = vsel %vm938, %v3853, %v4109
        %v4174 = vpack.c.bf16 %v4143, %v4142
        %v4175 = vpack.c.bf16 %v4145, %v4144
        %v4176 = vpack.c.bf16 %v4147, %v4146
        %v4177 = vpack.c.bf16 %v4149, %v4148
        %v4178 = vpack.c.bf16 %v4151, %v4150
        %v4179 = vpack.c.bf16 %v4153, %v4152
        %v4180 = vpack.c.bf16 %v4155, %v4154
        %v4181 = vpack.c.bf16 %v4157, %v4156
        %v4182 = vpack.c.bf16 %v4159, %v4158
        %v4183 = vpack.c.bf16 %v4161, %v4160
        %v4184 = vpack.c.bf16 %v4163, %v4162
        %v4185 = vpack.c.bf16 %v4165, %v4164
        %v4186 = vpack.c.bf16 %v4167, %v4166
        %v4187 = vpack.c.bf16 %v4169, %v4168
        %v4188 = vpack.c.bf16 %v4171, %v4170
        %v4189 = vpack.c.bf16 %v4173, %v4172
        %4190 = vst [vmem:[#allocation3 + $0x28] sm:$0xff] %v4174
        %4191 = vst [vmem:[#allocation3 + $0x60] sm:$0xff] %v4175
        %4192 = vst [vmem:[#allocation3 + $0x98] sm:$0xff] %v4176
        %4193 = vst [vmem:[#allocation3 + $0xd0] sm:$0xff] %v4177
        %4194 = vst [vmem:[#allocation3 + $0x108] sm:$0xff] %v4178
        %4195 = vst [vmem:[#allocation3 + $0x140] sm:$0xff] %v4179
        %4196 = vst [vmem:[#allocation3 + $0x178] sm:$0xff] %v4180
        %4197 = vst [vmem:[#allocation3 + $0x1b0] sm:$0xff] %v4181
        %4198 = vst [vmem:[#allocation3 + $0x1e8] sm:$0xff] %v4182
        %4199 = vst [vmem:[#allocation3 + $0x220] sm:$0xff] %v4183
        %4200 = vst [vmem:[#allocation3 + $0x258] sm:$0xff] %v4184
        %4201 = vst [vmem:[#allocation3 + $0x290] sm:$0xff] %v4185
        %4202 = vst [vmem:[#allocation3 + $0x2c8] sm:$0xff] %v4186
        %4203 = vst [vmem:[#allocation3 + $0x300] sm:$0xff] %v4187
        %4204 = vst [vmem:[#allocation3 + $0x338] sm:$0xff] %v4188
        %4205 = vst [vmem:[#allocation3 + $0x370] sm:$0xff] %v4189
        %v4206 = vld [vmem:[%s3565 + $0x4] sm:$0xff]
        %v4207 = vld [vmem:[%s3565 + $0xc] sm:$0xff]
        %v4208 = vld [vmem:[%s3565 + $0x1c] sm:$0xff]
        %v4209 = vld [vmem:[%s3565 + $0x24] sm:$0xff]
        %v4210 = vld [vmem:[%s3565 + $0x34] sm:$0xff]
        %v4211 = vld [vmem:[%s3565 + $0x3c] sm:$0xff]
        %v4212 = vld [vmem:[%s3565 + $0x4c] sm:$0xff]
        %v4213 = vld [vmem:[%s3565 + $0x54] sm:$0xff]
        %v4214 = vld [vmem:[%s3565 + $0x64] sm:$0xff]
        %v4215 = vld [vmem:[%s3565 + $0x6c] sm:$0xff]
        %v4216 = vld [vmem:[%s3565 + $0x7c] sm:$0xff]
        %v4217 = vld [vmem:[%s3565 + $0x84] sm:$0xff]
        %v4218 = vld [vmem:[%s3565 + $0x94] sm:$0xff]
        %v4219 = vld [vmem:[%s3565 + $0x9c] sm:$0xff]
        %v4220 = vld [vmem:[%s3565 + $0xac] sm:$0xff]
        %v4221 = vld [vmem:[%s3565 + $0xb4] sm:$0xff]
        %v4222 = vld [vmem:[%s3565 + $0xc4] sm:$0xff]
        %v4223 = vld [vmem:[%s3565 + $0xcc] sm:$0xff]
        %v4224 = vld [vmem:[%s3565 + $0xdc] sm:$0xff]
        %v4225 = vld [vmem:[%s3565 + $0xe4] sm:$0xff]
        %v4226 = vld [vmem:[%s3565 + $0xf4] sm:$0xff]
        %v4227 = vld [vmem:[%s3565 + $0xfc] sm:$0xff]
        %v4228 = vld [vmem:[%s3565 + $0x10c] sm:$0xff]
        %v4229 = vld [vmem:[%s3565 + $0x114] sm:$0xff]
        %v4230 = vld [vmem:[%s3565 + $0x124] sm:$0xff]
        %v4231 = vld [vmem:[%s3565 + $0x12c] sm:$0xff]
        %v4232 = vld [vmem:[%s3565 + $0x13c] sm:$0xff]
        %v4233 = vld [vmem:[%s3565 + $0x144] sm:$0xff]
        %v4234 = vld [vmem:[%s3565 + $0x154] sm:$0xff]
        %v4235 = vld [vmem:[%s3565 + $0x15c] sm:$0xff]
        %v4236 = vld [vmem:[%s3565 + $0x16c] sm:$0xff]
        %v4237 = vld [vmem:[%s3565 + $0x174] sm:$0xff]
        %v4238 = vpack.c.bf16 %v4207, %v4206
        %v4239 = vpack.c.bf16 %v4209, %v4208
        %v4240 = vpack.c.bf16 %v4211, %v4210
        %v4241 = vpack.c.bf16 %v4213, %v4212
        %v4242 = vpack.c.bf16 %v4215, %v4214
        %v4243 = vpack.c.bf16 %v4217, %v4216
        %v4244 = vpack.c.bf16 %v4219, %v4218
        %v4245 = vpack.c.bf16 %v4221, %v4220
        %v4246 = vpack.c.bf16 %v4223, %v4222
        %v4247 = vpack.c.bf16 %v4225, %v4224
        %v4248 = vpack.c.bf16 %v4227, %v4226
        %v4249 = vpack.c.bf16 %v4229, %v4228
        %v4250 = vpack.c.bf16 %v4231, %v4230
        %v4251 = vpack.c.bf16 %v4233, %v4232
        %v4252 = vpack.c.bf16 %v4235, %v4234
        %v4253 = vpack.c.bf16 %v4237, %v4236
        %4254 = vst.msk [vmem:[#allocation3 + $0x30] sm:$0xff] %vm241, %v4238
        %4255 = vst.msk [vmem:[#allocation3 + $0x68] sm:$0xff] %vm241, %v4239
        %4256 = vst.msk [vmem:[#allocation3 + $0xa0] sm:$0xff] %vm241, %v4240
        %4257 = vst.msk [vmem:[#allocation3 + $0xd8] sm:$0xff] %vm241, %v4241
        %4258 = vst.msk [vmem:[#allocation3 + $0x110] sm:$0xff] %vm241, %v4242
        %4259 = vst.msk [vmem:[#allocation3 + $0x148] sm:$0xff] %vm241, %v4243
        %4260 = vst.msk [vmem:[#allocation3 + $0x180] sm:$0xff] %vm241, %v4244
        %4261 = vst.msk [vmem:[#allocation3 + $0x1b8] sm:$0xff] %vm241, %v4245
        %4262 = vst.msk [vmem:[#allocation3 + $0x1f0] sm:$0xff] %vm241, %v4246
        %4263 = vst.msk [vmem:[#allocation3 + $0x228] sm:$0xff] %vm241, %v4247
        %4264 = vst.msk [vmem:[#allocation3 + $0x260] sm:$0xff] %vm241, %v4248
        %4265 = vst.msk [vmem:[#allocation3 + $0x298] sm:$0xff] %vm241, %v4249
        %4266 = vst.msk [vmem:[#allocation3 + $0x2d0] sm:$0xff] %vm241, %v4250
        %4267 = vst.msk [vmem:[#allocation3 + $0x308] sm:$0xff] %vm241, %v4251
        %4268 = vst.msk [vmem:[#allocation3 + $0x340] sm:$0xff] %vm241, %v4252
        %4269 = vst.msk [vmem:[#allocation3 + $0x378] sm:$0xff] %vm241, %v4253
        %v4270 = vld [vmem:[#allocation3] sm:$0xff]
        %v4271 = vld [vmem:[#allocation3 + $0x8] sm:$0xff]
        %v4272 = vld [vmem:[#allocation3 + $0x10] sm:$0xff]
        %v4273 = vld [vmem:[#allocation3 + $0x18] sm:$0xff]
        %v4274 = vld [vmem:[#allocation3 + $0x20] sm:$0xff]
        %v4275 = vld [vmem:[#allocation3 + $0x28] sm:$0xff]
        %v4276 = vld [vmem:[#allocation3 + $0x30] sm:$0xff]
        %v4277 = vld [vmem:[#allocation3 + $0x38] sm:$0xff]
        %v4278 = vld [vmem:[#allocation3 + $0x40] sm:$0xff]
        %v4279 = vld [vmem:[#allocation3 + $0x48] sm:$0xff]
        %v4280 = vld [vmem:[#allocation3 + $0x50] sm:$0xff]
        %v4281 = vld [vmem:[#allocation3 + $0x58] sm:$0xff]
        %v4282 = vld [vmem:[#allocation3 + $0x60] sm:$0xff]
        %v4283 = vld [vmem:[#allocation3 + $0x68] sm:$0xff]
        %v4284 = vld [vmem:[#allocation3 + $0x70] sm:$0xff]
        %v4285 = vld [vmem:[#allocation3 + $0x78] sm:$0xff]
        %v4286 = vld [vmem:[#allocation3 + $0x80] sm:$0xff]
        %v4287 = vld [vmem:[#allocation3 + $0x88] sm:$0xff]
        %v4288 = vld [vmem:[#allocation3 + $0x90] sm:$0xff]
        %v4289 = vld [vmem:[#allocation3 + $0x98] sm:$0xff]
        %v4290 = vld [vmem:[#allocation3 + $0xa0] sm:$0xff]
        %v4291 = vld [vmem:[#allocation3 + $0xa8] sm:$0xff]
        %v4292 = vld [vmem:[#allocation3 + $0xb0] sm:$0xff]
        %v4293 = vld [vmem:[#allocation3 + $0xb8] sm:$0xff]
        %v4294 = vld [vmem:[#allocation3 + $0xc0] sm:$0xff]
        %v4295 = vld [vmem:[#allocation3 + $0xc8] sm:$0xff]
        %v4296 = vld [vmem:[#allocation3 + $0xd0] sm:$0xff]
        %v4297 = vld [vmem:[#allocation3 + $0xd8] sm:$0xff]
        %v4298 = vld [vmem:[#allocation3 + $0xe0] sm:$0xff]
        %v4299 = vld [vmem:[#allocation3 + $0xe8] sm:$0xff]
        %v4300 = vld [vmem:[#allocation3 + $0xf0] sm:$0xff]
        %v4301 = vld [vmem:[#allocation3 + $0xf8] sm:$0xff]
        %v4302 = vld [vmem:[#allocation3 + $0x100] sm:$0xff]
        %v4303 = vld [vmem:[#allocation3 + $0x108] sm:$0xff]
        %v4304 = vld [vmem:[#allocation3 + $0x110] sm:$0xff]
        %v4305 = vld [vmem:[#allocation3 + $0x118] sm:$0xff]
        %v4306 = vld [vmem:[#allocation3 + $0x120] sm:$0xff]
        %v4307 = vld [vmem:[#allocation3 + $0x128] sm:$0xff]
        %v4308 = vld [vmem:[#allocation3 + $0x130] sm:$0xff]
        %v4309 = vld [vmem:[#allocation3 + $0x138] sm:$0xff]
        %v4310 = vld [vmem:[#allocation3 + $0x140] sm:$0xff]
        %v4311 = vld [vmem:[#allocation3 + $0x148] sm:$0xff]
        %v4312 = vld [vmem:[#allocation3 + $0x150] sm:$0xff]
        %v4313 = vld [vmem:[#allocation3 + $0x158] sm:$0xff]
        %v4314 = vld [vmem:[#allocation3 + $0x160] sm:$0xff]
        %v4315 = vld [vmem:[#allocation3 + $0x168] sm:$0xff]
        %v4316 = vld [vmem:[#allocation3 + $0x170] sm:$0xff]
        %v4317 = vld [vmem:[#allocation3 + $0x178] sm:$0xff]
        %v4318 = vld [vmem:[#allocation3 + $0x180] sm:$0xff]
        %v4319 = vld [vmem:[#allocation3 + $0x188] sm:$0xff]
        %v4320 = vld [vmem:[#allocation3 + $0x190] sm:$0xff]
        %v4321 = vld [vmem:[#allocation3 + $0x198] sm:$0xff]
        %v4322 = vld [vmem:[#allocation3 + $0x1a0] sm:$0xff]
        %v4323 = vld [vmem:[#allocation3 + $0x1a8] sm:$0xff]
        %v4324 = vld [vmem:[#allocation3 + $0x1b0] sm:$0xff]
        %v4325 = vld [vmem:[#allocation3 + $0x1b8] sm:$0xff]
        %v4326 = vld [vmem:[#allocation3 + $0x1c0] sm:$0xff]
        %v4327 = vld [vmem:[#allocation3 + $0x1c8] sm:$0xff]
        %v4328 = vld [vmem:[#allocation3 + $0x1d0] sm:$0xff]
        %v4329 = vld [vmem:[#allocation3 + $0x1d8] sm:$0xff]
        %v4330 = vld [vmem:[#allocation3 + $0x1e0] sm:$0xff]
        %v4331 = vld [vmem:[#allocation3 + $0x1e8] sm:$0xff]
        %v4332 = vld [vmem:[#allocation3 + $0x1f0] sm:$0xff]
        %v4333 = vld [vmem:[#allocation3 + $0x1f8] sm:$0xff]
        %v4334 = vld [vmem:[#allocation3 + $0x200] sm:$0xff]
        %v4335 = vld [vmem:[#allocation3 + $0x208] sm:$0xff]
        %v4336 = vld [vmem:[#allocation3 + $0x210] sm:$0xff]
        %v4337 = vld [vmem:[#allocation3 + $0x218] sm:$0xff]
        %v4338 = vld [vmem:[#allocation3 + $0x220] sm:$0xff]
        %v4339 = vld [vmem:[#allocation3 + $0x228] sm:$0xff]
        %v4340 = vld [vmem:[#allocation3 + $0x230] sm:$0xff]
        %v4341 = vld [vmem:[#allocation3 + $0x238] sm:$0xff]
        %v4342 = vld [vmem:[#allocation3 + $0x240] sm:$0xff]
        %v4343 = vld [vmem:[#allocation3 + $0x248] sm:$0xff]
        %v4344 = vld [vmem:[#allocation3 + $0x250] sm:$0xff]
        %v4345 = vld [vmem:[#allocation3 + $0x258] sm:$0xff]
        %v4346 = vld [vmem:[#allocation3 + $0x260] sm:$0xff]
        %v4347 = vld [vmem:[#allocation3 + $0x268] sm:$0xff]
        %v4348 = vld [vmem:[#allocation3 + $0x270] sm:$0xff]
        %v4349 = vld [vmem:[#allocation3 + $0x278] sm:$0xff]
        %v4350 = vld [vmem:[#allocation3 + $0x280] sm:$0xff]
        %v4351 = vld [vmem:[#allocation3 + $0x288] sm:$0xff]
        %v4352 = vld [vmem:[#allocation3 + $0x290] sm:$0xff]
        %v4353 = vld [vmem:[#allocation3 + $0x298] sm:$0xff]
        %v4354 = vld [vmem:[#allocation3 + $0x2a0] sm:$0xff]
        %v4355 = vld [vmem:[#allocation3 + $0x2a8] sm:$0xff]
        %v4356 = vld [vmem:[#allocation3 + $0x2b0] sm:$0xff]
        %v4357 = vld [vmem:[#allocation3 + $0x2b8] sm:$0xff]
        %v4358 = vld [vmem:[#allocation3 + $0x2c0] sm:$0xff]
        %v4359 = vld [vmem:[#allocation3 + $0x2c8] sm:$0xff]
        %v4360 = vld [vmem:[#allocation3 + $0x2d0] sm:$0xff]
        %v4361 = vld [vmem:[#allocation3 + $0x2d8] sm:$0xff]
        %v4362 = vld [vmem:[#allocation3 + $0x2e0] sm:$0xff]
        %v4363 = vld [vmem:[#allocation3 + $0x2e8] sm:$0xff]
        %v4364 = vld [vmem:[#allocation3 + $0x2f0] sm:$0xff]
        %v4365 = vld [vmem:[#allocation3 + $0x2f8] sm:$0xff]
        %v4366 = vld [vmem:[#allocation3 + $0x300] sm:$0xff]
        %v4367 = vld [vmem:[#allocation3 + $0x308] sm:$0xff]
        %v4368 = vld [vmem:[#allocation3 + $0x310] sm:$0xff]
        %v4369 = vld [vmem:[#allocation3 + $0x318] sm:$0xff]
        %v4370 = vld [vmem:[#allocation3 + $0x320] sm:$0xff]
        %v4371 = vld [vmem:[#allocation3 + $0x328] sm:$0xff]
        %v4372 = vld [vmem:[#allocation3 + $0x330] sm:$0xff]
        %v4373 = vld [vmem:[#allocation3 + $0x338] sm:$0xff]
        %v4374 = vld [vmem:[#allocation3 + $0x340] sm:$0xff]
        %v4375 = vld [vmem:[#allocation3 + $0x348] sm:$0xff]
        %v4376 = vld [vmem:[#allocation3 + $0x350] sm:$0xff]
        %v4377 = vld [vmem:[#allocation3 + $0x358] sm:$0xff]
        %v4378 = vld [vmem:[#allocation3 + $0x360] sm:$0xff]
        %v4379 = vld [vmem:[#allocation3 + $0x368] sm:$0xff]
        %v4380 = vld [vmem:[#allocation3 + $0x370] sm:$0xff]
        %v4381 = vld [vmem:[#allocation3 + $0x378] sm:$0xff]
        %v4382 = vld [vmem:[%s1] sm:$0xf]
        %v4383 = vld [vmem:[%s1 + $0x4] sm:$0xf]
        %v4384 = vld [vmem:[%s1 + $0x8] sm:$0xf]
        %v4385 = vld [vmem:[%s1 + $0xc] sm:$0xf]
        %v4386 = vld [vmem:[%s1 + $0x10] sm:$0xf]
        %v4387 = vld [vmem:[%s1 + $0x14] sm:$0xf]
        %v4388 = vld [vmem:[%s1 + $0x18] sm:$0xf]
        %v4389 = vld [vmem:[%s1 + $0x1c] sm:$0xf]
        %v4390 = vld [vmem:[%s1 + $0x20] sm:$0xf]
        %v4391 = vld [vmem:[%s1 + $0x24] sm:$0xf]
        %v4392 = vld [vmem:[%s1 + $0x28] sm:$0xf]
        %v4393 = vld [vmem:[%s1 + $0x2c] sm:$0xf]
        %v4394 = vld [vmem:[%s1 + $0x30] sm:$0xf]
        %v4395 = vld [vmem:[%s1 + $0x34] sm:$0xf]
        %v4396 = vld [vmem:[%s1 + $0x38] sm:$0xf]
        %v4397 = vld [vmem:[%s1 + $0x3c] sm:$0xf]
        %v4398 = vld [vmem:[%s1 + $0x40] sm:$0xf]
        %v4399 = vld [vmem:[%s1 + $0x44] sm:$0xf]
        %v4400 = vld [vmem:[%s1 + $0x48] sm:$0xf]
        %v4401 = vld [vmem:[%s1 + $0x4c] sm:$0xf]
        %v4402 = vld [vmem:[%s1 + $0x50] sm:$0xf]
        %v4403 = vld [vmem:[%s1 + $0x54] sm:$0xf]
        %v4404 = vld [vmem:[%s1 + $0x58] sm:$0xf]
        %v4405 = vld [vmem:[%s1 + $0x5c] sm:$0xf]
        %v4406 = vld [vmem:[%s1 + $0x60] sm:$0xf]
        %v4407 = vld [vmem:[%s1 + $0x64] sm:$0xf]
        %v4408 = vld [vmem:[%s1 + $0x68] sm:$0xf]
        %v4409 = vld [vmem:[%s1 + $0x6c] sm:$0xf]
        %v4410 = vld [vmem:[%s1 + $0x70] sm:$0xf]
        %v4411 = vld [vmem:[%s1 + $0x74] sm:$0xf]
        %v4412 = vld [vmem:[%s1 + $0x78] sm:$0xf]
        %v4413 = vld [vmem:[%s1 + $0x7c] sm:$0xf]
        %v4414 = vld [vmem:[%s1 + $0x80] sm:$0xf]
        %v4415 = vld [vmem:[%s1 + $0x84] sm:$0xf]
        %v4416 = vld [vmem:[%s1 + $0x88] sm:$0xf]
        %v4417 = vld [vmem:[%s1 + $0x8c] sm:$0xf]
        %v4418 = vld [vmem:[%s1 + $0x90] sm:$0xf]
        %v4419 = vld [vmem:[%s1 + $0x94] sm:$0xf]
        %v4420 = vld [vmem:[%s1 + $0x98] sm:$0xf]
        %v4421 = vld [vmem:[%s1 + $0x9c] sm:$0xf]
        %v4422 = vld [vmem:[%s1 + $0xa0] sm:$0xf]
        %v4423 = vld [vmem:[%s1 + $0xa4] sm:$0xf]
        %v4424 = vld [vmem:[%s1 + $0xa8] sm:$0xf]
        %v4425 = vld [vmem:[%s1 + $0xac] sm:$0xf]
        %v4426 = vld [vmem:[%s1 + $0xb0] sm:$0xf]
        %v4427 = vld [vmem:[%s1 + $0xb4] sm:$0xf]
        %v4428 = vld [vmem:[%s1 + $0xb8] sm:$0xf]
        %v4429 = vld [vmem:[%s1 + $0xbc] sm:$0xf]
        %v4430 = vld [vmem:[%s1 + $0xc0] sm:$0xf]
        %v4431 = vld [vmem:[%s1 + $0xc4] sm:$0xf]
        %v4432 = vld [vmem:[%s1 + $0xc8] sm:$0xf]
        %v4433 = vld [vmem:[%s1 + $0xcc] sm:$0xf]
        %v4434 = vld [vmem:[%s1 + $0xd0] sm:$0xf]
        %v4435 = vld [vmem:[%s1 + $0xd4] sm:$0xf]
        %v4436 = vld [vmem:[%s1 + $0xd8] sm:$0xf]
        %v4437 = vld [vmem:[%s1 + $0xdc] sm:$0xf]
        %v4438 = vld [vmem:[%s1 + $0xe0] sm:$0xf]
        %v4439 = vld [vmem:[%s1 + $0xe4] sm:$0xf]
        %v4440 = vld [vmem:[%s1 + $0xe8] sm:$0xf]
        %v4441 = vld [vmem:[%s1 + $0xec] sm:$0xf]
        %v4442 = vld [vmem:[%s1 + $0xf0] sm:$0xf]
        %v4443 = vld [vmem:[%s1 + $0xf4] sm:$0xf]
        %v4444 = vld [vmem:[%s1 + $0xf8] sm:$0xf]
        %v4445 = vld [vmem:[%s1 + $0xfc] sm:$0xf]
        %v4446 = vld [vmem:[%s1 + $0x100] sm:$0xf]
        %v4447 = vld [vmem:[%s1 + $0x104] sm:$0xf]
        %v4448 = vld [vmem:[%s1 + $0x108] sm:$0xf]
        %v4449 = vld [vmem:[%s1 + $0x10c] sm:$0xf]
        %v4450 = vld [vmem:[%s1 + $0x110] sm:$0xf]
        %v4451 = vld [vmem:[%s1 + $0x114] sm:$0xf]
        %v4452 = vld [vmem:[%s1 + $0x118] sm:$0xf]
        %v4453 = vld [vmem:[%s1 + $0x11c] sm:$0xf]
        %v4454 = vld [vmem:[%s1 + $0x120] sm:$0xf]
        %v4455 = vld [vmem:[%s1 + $0x124] sm:$0xf]
        %v4456 = vld [vmem:[%s1 + $0x128] sm:$0xf]
        %v4457 = vld [vmem:[%s1 + $0x12c] sm:$0xf]
        %v4458 = vld [vmem:[%s1 + $0x130] sm:$0xf]
        %v4459 = vld [vmem:[%s1 + $0x134] sm:$0xf]
        %v4460 = vld [vmem:[%s1 + $0x138] sm:$0xf]
        %v4461 = vld [vmem:[%s1 + $0x13c] sm:$0xf]
        %v4462 = vld [vmem:[%s1 + $0x140] sm:$0xf]
        %v4463 = vld [vmem:[%s1 + $0x144] sm:$0xf]
        %v4464 = vld [vmem:[%s1 + $0x148] sm:$0xf]
        %v4465 = vld [vmem:[%s1 + $0x14c] sm:$0xf]
        %v4466 = vld [vmem:[%s1 + $0x150] sm:$0xf]
        %v4467 = vld [vmem:[%s1 + $0x154] sm:$0xf]
        %v4468 = vld [vmem:[%s1 + $0x158] sm:$0xf]
        %v4469 = vld [vmem:[%s1 + $0x15c] sm:$0xf]
        %v4470 = vld [vmem:[%s1 + $0x160] sm:$0xf]
        %v4471 = vld [vmem:[%s1 + $0x164] sm:$0xf]
        %v4472 = vld [vmem:[%s1 + $0x168] sm:$0xf]
        %v4473 = vld [vmem:[%s1 + $0x16c] sm:$0xf]
        %v4474 = vld [vmem:[%s1 + $0x170] sm:$0xf]
        %v4475 = vld [vmem:[%s1 + $0x174] sm:$0xf]
        %v4476 = vld [vmem:[%s1 + $0x178] sm:$0xf]
        %v4477 = vld [vmem:[%s1 + $0x17c] sm:$0xf]
        %v4478 = vld [vmem:[%s1 + $0x180] sm:$0xf]
        %v4479 = vld [vmem:[%s1 + $0x184] sm:$0xf]
        %v4480 = vld [vmem:[%s1 + $0x188] sm:$0xf]
        %v4481 = vld [vmem:[%s1 + $0x18c] sm:$0xf]
        %v4482 = vld [vmem:[%s2] sm:$0x1]
        %v4484 = vlaneseq
        %v4485 = vshrl.u32 %v4484, 7
        %v4486 = vsub.s32 0, %v4485
        %v4487 = vrot.slane %v4482, %v4486
        %v4589 = vunpack.c.l.b16 %v4382
        %v4590 = vunpack.c.l.b16 %v4383
        %v4591 = vunpack.c.l.b16 %v4384
        %v4592 = vunpack.c.l.b16 %v4385
        %v4593 = vunpack.c.l.b16 %v4386
        %v4594 = vunpack.c.l.b16 %v4387
        %v4595 = vunpack.c.l.b16 %v4388
        %v4596 = vunpack.c.l.b16 %v4389
        %v4597 = vunpack.c.l.b16 %v4390
        %v4598 = vunpack.c.l.b16 %v4391
        %v4599 = vunpack.c.l.b16 %v4392
        %v4600 = vunpack.c.l.b16 %v4393
        %v4601 = vunpack.c.l.b16 %v4394
        %v4602 = vunpack.c.l.b16 %v4395
        %v4603 = vunpack.c.l.b16 %v4396
        %v4604 = vunpack.c.l.b16 %v4397
        %v4605 = vunpack.c.l.b16 %v4398
        %v4606 = vunpack.c.l.b16 %v4399
        %v4607 = vunpack.c.l.b16 %v4400
        %v4608 = vunpack.c.l.b16 %v4401
        %v4609 = vunpack.c.l.b16 %v4402
        %v4610 = vunpack.c.l.b16 %v4403
        %v4611 = vunpack.c.l.b16 %v4404
        %v4612 = vunpack.c.l.b16 %v4405
        %v4613 = vunpack.c.l.b16 %v4406
        %v4614 = vunpack.c.l.b16 %v4407
        %v4615 = vunpack.c.l.b16 %v4408
        %v4616 = vunpack.c.l.b16 %v4409
        %v4617 = vunpack.c.l.b16 %v4410
        %v4618 = vunpack.c.l.b16 %v4411
        %v4619 = vunpack.c.l.b16 %v4412
        %v4620 = vunpack.c.l.b16 %v4413
        %v4621 = vunpack.c.l.b16 %v4414
        %v4622 = vunpack.c.l.b16 %v4415
        %v4623 = vunpack.c.l.b16 %v4416
        %v4624 = vunpack.c.l.b16 %v4417
        %v4625 = vunpack.c.l.b16 %v4418
        %v4626 = vunpack.c.l.b16 %v4419
        %v4627 = vunpack.c.l.b16 %v4420
        %v4628 = vunpack.c.l.b16 %v4421
        %v4629 = vunpack.c.l.b16 %v4422
        %v4630 = vunpack.c.l.b16 %v4423
        %v4631 = vunpack.c.l.b16 %v4424
        %v4632 = vunpack.c.l.b16 %v4425
        %v4633 = vunpack.c.l.b16 %v4426
        %v4634 = vunpack.c.l.b16 %v4427
        %v4635 = vunpack.c.l.b16 %v4428
        %v4636 = vunpack.c.l.b16 %v4429
        %v4637 = vunpack.c.l.b16 %v4430
        %v4638 = vunpack.c.l.b16 %v4431
        %v4639 = vunpack.c.l.b16 %v4432
        %v4640 = vunpack.c.l.b16 %v4433
        %v4641 = vunpack.c.l.b16 %v4434
        %v4642 = vunpack.c.l.b16 %v4435
        %v4643 = vunpack.c.l.b16 %v4436
        %v4644 = vunpack.c.l.b16 %v4437
        %v4645 = vunpack.c.l.b16 %v4438
        %v4646 = vunpack.c.l.b16 %v4439
        %v4647 = vunpack.c.l.b16 %v4440
        %v4648 = vunpack.c.l.b16 %v4441
        %v4649 = vunpack.c.l.b16 %v4442
        %v4650 = vunpack.c.l.b16 %v4443
        %v4651 = vunpack.c.l.b16 %v4444
        %v4652 = vunpack.c.l.b16 %v4445
        %v4653 = vunpack.c.l.b16 %v4446
        %v4654 = vunpack.c.l.b16 %v4447
        %v4655 = vunpack.c.l.b16 %v4448
        %v4656 = vunpack.c.l.b16 %v4449
        %v4657 = vunpack.c.l.b16 %v4450
        %v4658 = vunpack.c.l.b16 %v4451
        %v4659 = vunpack.c.l.b16 %v4452
        %v4660 = vunpack.c.l.b16 %v4453
        %v4661 = vunpack.c.l.b16 %v4454
        %v4662 = vunpack.c.l.b16 %v4455
        %v4663 = vunpack.c.l.b16 %v4456
        %v4664 = vunpack.c.l.b16 %v4457
        %v4665 = vunpack.c.l.b16 %v4458
        %v4666 = vunpack.c.l.b16 %v4459
        %v4667 = vunpack.c.l.b16 %v4460
        %v4668 = vunpack.c.l.b16 %v4461
        %v4669 = vunpack.c.l.b16 %v4462
        %v4670 = vunpack.c.l.b16 %v4463
        %v4671 = vunpack.c.l.b16 %v4464
        %v4672 = vunpack.c.l.b16 %v4465
        %v4673 = vunpack.c.l.b16 %v4466
        %v4674 = vunpack.c.l.b16 %v4467
        %v4675 = vunpack.c.l.b16 %v4468
        %v4676 = vunpack.c.l.b16 %v4469
        %v4677 = vunpack.c.l.b16 %v4470
        %v4678 = vunpack.c.l.b16 %v4471
        %v4679 = vunpack.c.l.b16 %v4472
        %v4680 = vunpack.c.l.b16 %v4473
        %v4681 = vunpack.c.l.b16 %v4474
        %v4682 = vunpack.c.l.b16 %v4475
        %v4683 = vunpack.c.l.b16 %v4476
        %v4684 = vunpack.c.l.b16 %v4477
        %v4685 = vunpack.c.l.b16 %v4478
        %v4686 = vunpack.c.l.b16 %v4479
        %v4687 = vunpack.c.l.b16 %v4480
        %v4688 = vunpack.c.l.b16 %v4481
        %v4689 = vpack.c.b16 %v4590, %v4589
        %v4690 = vpack.c.b16 %v4592, %v4591
        %v4691 = vpack.c.b16 %v4594, %v4593
        %v4692 = vpack.c.b16 %v4596, %v4595
        %v4693 = vpack.c.b16 %v4598, %v4597
        %v4694 = vpack.c.b16 %v4600, %v4599
        %v4695 = vpack.c.b16 %v4602, %v4601
        %v4696 = vpack.c.b16 %v4604, %v4603
        %v4697 = vpack.c.b16 %v4606, %v4605
        %v4698 = vpack.c.b16 %v4608, %v4607
        %v4699 = vpack.c.b16 %v4610, %v4609
        %v4700 = vpack.c.b16 %v4612, %v4611
        %v4701 = vpack.c.b16 %v4614, %v4613
        %v4702 = vpack.c.b16 %v4616, %v4615
        %v4703 = vpack.c.b16 %v4618, %v4617
        %v4704 = vpack.c.b16 %v4620, %v4619
        %v4705 = vpack.c.b16 %v4622, %v4621
        %v4706 = vpack.c.b16 %v4624, %v4623
        %v4707 = vpack.c.b16 %v4626, %v4625
        %v4708 = vpack.c.b16 %v4628, %v4627
        %v4709 = vpack.c.b16 %v4630, %v4629
        %v4710 = vpack.c.b16 %v4632, %v4631
        %v4711 = vpack.c.b16 %v4634, %v4633
        %v4712 = vpack.c.b16 %v4636, %v4635
        %v4713 = vpack.c.b16 %v4638, %v4637
        %v4714 = vpack.c.b16 %v4640, %v4639
        %v4715 = vpack.c.b16 %v4642, %v4641
        %v4716 = vpack.c.b16 %v4644, %v4643
        %v4717 = vpack.c.b16 %v4646, %v4645
        %v4718 = vpack.c.b16 %v4648, %v4647
        %v4719 = vpack.c.b16 %v4650, %v4649
        %v4720 = vpack.c.b16 %v4652, %v4651
        %v4721 = vpack.c.b16 %v4654, %v4653
        %v4722 = vpack.c.b16 %v4656, %v4655
        %v4723 = vpack.c.b16 %v4658, %v4657
        %v4724 = vpack.c.b16 %v4660, %v4659
        %v4725 = vpack.c.b16 %v4662, %v4661
        %v4726 = vpack.c.b16 %v4664, %v4663
        %v4727 = vpack.c.b16 %v4666, %v4665
        %v4728 = vpack.c.b16 %v4668, %v4667
        %v4729 = vpack.c.b16 %v4670, %v4669
        %v4730 = vpack.c.b16 %v4672, %v4671
        %v4731 = vpack.c.b16 %v4674, %v4673
        %v4732 = vpack.c.b16 %v4676, %v4675
        %v4733 = vpack.c.b16 %v4678, %v4677
        %v4734 = vpack.c.b16 %v4680, %v4679
        %v4735 = vpack.c.b16 %v4682, %v4681
        %v4736 = vpack.c.b16 %v4684, %v4683
        %v4737 = vpack.c.b16 %v4686, %v4685
        %v4738 = vpack.c.b16 %v4688, %v4687
        %v4790 = vsel %vm241, %v4276, 0
        %v4793 = vsel %vm241, %v4283, 0
        %v4796 = vsel %vm241, %v4290, 0
        %v4799 = vsel %vm241, %v4297, 0
        %v4802 = vsel %vm241, %v4304, 0
        %v4805 = vsel %vm241, %v4311, 0
        %v4808 = vsel %vm241, %v4318, 0
        %v4811 = vsel %vm241, %v4325, 0
        %v4814 = vsel %vm241, %v4332, 0
        %v4817 = vsel %vm241, %v4339, 0
        %v4820 = vsel %vm241, %v4346, 0
        %v4823 = vsel %vm241, %v4353, 0
        %v4826 = vsel %vm241, %v4360, 0
        %v4829 = vsel %vm241, %v4367, 0
        %v4832 = vsel %vm241, %v4374, 0
        %v4835 = vsel %vm241, %v4381, 0
        %4837 = vmatprep.subr.bf16.mxu0 0
        %4838 = vmatpush1.bf16.msra.mxu0 %v4689
        %4839 = vmatprep.subr.bf16.mxu0 0
        %4840 = vmatpush1.bf16.msra.mxu0 %v4690
        %4841 = vmatprep.subr.bf16.mxu0 0
        %4842 = vmatpush1.bf16.msra.mxu0 %v4691
        %4843 = vmatprep.subr.bf16.mxu0 0
        %4844 = vmatpush1.bf16.msra.mxu0 %v4692
        %4845 = vmatprep.subr.bf16.mxu0 0
        %4846 = vmatpush1.bf16.msra.mxu0 %v4693
        %4847 = vmatprep.subr.bf16.mxu0 0
        %4848 = vmatpush1.bf16.msra.mxu0 %v4694
        %4849 = vmatprep.subr.bf16.mxu0 0
        %4850 = vmatpush1.bf16.msra.mxu0 %v4695
        %4851 = vmatprep.subr.bf16.mxu0 0
        %4852 = vmatpush1.bf16.msra.mxu0 %v4696
        %4853 = vmatprep.subr.bf16.mxu0 0
        %4854 = vmatpush1.bf16.msra.mxu0 %v4697
        %4855 = vmatprep.subr.bf16.mxu0 0
        %4856 = vmatpush1.bf16.msra.mxu0 %v4698
        %4857 = vmatprep.subr.bf16.mxu0 0
        %4858 = vmatpush1.bf16.msra.mxu0 %v4699
        %4859 = vmatprep.subr.bf16.mxu0 0
        %4860 = vmatpush1.bf16.msra.mxu0 %v4700
        %4861 = vmatprep.subr.bf16.mxu0 0
        %4862 = vmatpush1.bf16.msra.mxu0 %v4701
        %4863 = vmatprep.subr.bf16.mxu0 0
        %4864 = vmatpush1.bf16.msra.mxu0 %v4702
        %4865 = vmatprep.subr.bf16.mxu0 0
        %4866 = vmatpush1.bf16.msra.mxu0 %v4703
        %4867 = vmatprep.subr.bf16.mxu0 0
        %4868 = vmatpush1.bf16.msra.mxu0 %v4704
        %4869 = vmatprep.mubr.bf16.mxu0 %v4271
        %4870 = vmatmul.mubr.bf16.gmra.mrb[0].mxu0 %v4270
        %v4871 = vpop.f32.mrb[0].mxu0
        %v4872 = vadd.f32 %v4487, %v4871
        %v4873 = vpop.f32.mrb[0].mxu0
        %v4874 = vpop.f32.mrb[0].mxu0
        %v4875 = vadd.f32 %v4487, %v4874
        %v4876 = vpop.f32.mrb[0].mxu0
        %4877 = vmatprep.mubr.bf16.mxu0 %v4278
        %4878 = vmatmul.mubr.bf16.gmra.mrb[0].mxu0 %v4277
        %v4879 = vpop.f32.mrb[0].mxu0
        %v4880 = vadd.f32 %v4487, %v4879
        %v4881 = vpop.f32.mrb[0].mxu0
        %v4882 = vpop.f32.mrb[0].mxu0
        %v4883 = vadd.f32 %v4487, %v4882
        %v4884 = vpop.f32.mrb[0].mxu0
        %4885 = vmatprep.mubr.bf16.mxu0 %v4285
        %4886 = vmatmul.mubr.bf16.gmra.mrb[0].mxu0 %v4284
        %v4887 = vpop.f32.mrb[0].mxu0
        %v4888 = vadd.f32 %v4487, %v4887
        %v4889 = vpop.f32.mrb[0].mxu0
        %v4890 = vpop.f32.mrb[0].mxu0
        %v4891 = vadd.f32 %v4487, %v4890
        %v4892 = vpop.f32.mrb[0].mxu0
        %4893 = vmatprep.mubr.bf16.mxu0 %v4292
        %4894 = vmatmul.mubr.bf16.gmra.mrb[0].mxu0 %v4291
        %v4895 = vpop.f32.mrb[0].mxu0
        %v4896 = vadd.f32 %v4487, %v4895
        %v4897 = vpop.f32.mrb[0].mxu0
        %v4898 = vpop.f32.mrb[0].mxu0
        %v4899 = vadd.f32 %v4487, %v4898
        %v4900 = vpop.f32.mrb[0].mxu0
        %4901 = vmatprep.mubr.bf16.mxu0 %v4299
        %4902 = vmatmul.mubr.bf16.gmra.mrb[0].mxu0 %v4298
        %v4903 = vpop.f32.mrb[0].mxu0
        %v4904 = vadd.f32 %v4487, %v4903
        %v4905 = vpop.f32.mrb[0].mxu0
        %v4906 = vpop.f32.mrb[0].mxu0
        %v4907 = vadd.f32 %v4487, %v4906
        %v4908 = vpop.f32.mrb[0].mxu0
        %4909 = vmatprep.mubr.bf16.mxu0 %v4306
        %4910 = vmatmul.mubr.bf16.gmra.mrb[0].mxu0 %v4305
        %v4911 = vpop.f32.mrb[0].mxu0
        %v4912 = vadd.f32 %v4487, %v4911
        %v4913 = vpop.f32.mrb[0].mxu0
        %v4914 = vpop.f32.mrb[0].mxu0
        %v4915 = vadd.f32 %v4487, %v4914
        %v4916 = vpop.f32.mrb[0].mxu0
        %4917 = vmatprep.mubr.bf16.mxu0 %v4313
        %4918 = vmatmul.mubr.bf16.gmra.mrb[0].mxu0 %v4312
        %v4919 = vpop.f32.mrb[0].mxu0
        %v4920 = vadd.f32 %v4487, %v4919
        %v4921 = vpop.f32.mrb[0].mxu0
        %v4922 = vpop.f32.mrb[0].mxu0
        %v4923 = vadd.f32 %v4487, %v4922
        %v4924 = vpop.f32.mrb[0].mxu0
        %4925 = vmatprep.mubr.bf16.mxu0 %v4320
        %4926 = vmatmul.mubr.bf16.gmra.mrb[0].mxu0 %v4319
        %v4927 = vpop.f32.mrb[0].mxu0
        %v4928 = vadd.f32 %v4487, %v4927
        %v4929 = vpop.f32.mrb[0].mxu0
        %v4930 = vpop.f32.mrb[0].mxu0
        %v4931 = vadd.f32 %v4487, %v4930
        %v4932 = vpop.f32.mrb[0].mxu0
        %4933 = vmatprep.mubr.bf16.mxu0 %v4327
        %4934 = vmatmul.mubr.bf16.gmra.mrb[0].mxu0 %v4326
        %v4935 = vpop.f32.mrb[0].mxu0
        %v4936 = vadd.f32 %v4487, %v4935
        %v4937 = vpop.f32.mrb[0].mxu0
        %v4938 = vpop.f32.mrb[0].mxu0
        %v4939 = vadd.f32 %v4487, %v4938
        %v4940 = vpop.f32.mrb[0].mxu0
        %4941 = vmatprep.mubr.bf16.mxu0 %v4334
        %4942 = vmatmul.mubr.bf16.gmra.mrb[0].mxu0 %v4333
        %v4943 = vpop.f32.mrb[0].mxu0
        %v4944 = vadd.f32 %v4487, %v4943
        %v4945 = vpop.f32.mrb[0].mxu0
        %v4946 = vpop.f32.mrb[0].mxu0
        %v4947 = vadd.f32 %v4487, %v4946
        %v4948 = vpop.f32.mrb[0].mxu0
        %4949 = vmatprep.mubr.bf16.mxu0 %v4341
        %4950 = vmatmul.mubr.bf16.gmra.mrb[0].mxu0 %v4340
        %v4951 = vpop.f32.mrb[0].mxu0
        %v4952 = vadd.f32 %v4487, %v4951
        %v4953 = vpop.f32.mrb[0].mxu0
        %v4954 = vpop.f32.mrb[0].mxu0
        %v4955 = vadd.f32 %v4487, %v4954
        %v4956 = vpop.f32.mrb[0].mxu0
        %4957 = vmatprep.mubr.bf16.mxu0 %v4348
        %4958 = vmatmul.mubr.bf16.gmra.mrb[0].mxu0 %v4347
        %v4959 = vpop.f32.mrb[0].mxu0
        %v4960 = vadd.f32 %v4487, %v4959
        %v4961 = vpop.f32.mrb[0].mxu0
        %v4962 = vpop.f32.mrb[0].mxu0
        %v4963 = vadd.f32 %v4487, %v4962
        %v4964 = vpop.f32.mrb[0].mxu0
        %4965 = vmatprep.mubr.bf16.mxu0 %v4355
        %4966 = vmatmul.mubr.bf16.gmra.mrb[0].mxu0 %v4354
        %v4967 = vpop.f32.mrb[0].mxu0
        %v4968 = vadd.f32 %v4487, %v4967
        %v4969 = vpop.f32.mrb[0].mxu0
        %v4970 = vpop.f32.mrb[0].mxu0
        %v4971 = vadd.f32 %v4487, %v4970
        %v4972 = vpop.f32.mrb[0].mxu0
        %4973 = vmatprep.mubr.bf16.mxu0 %v4362
        %4974 = vmatmul.mubr.bf16.gmra.mrb[0].mxu0 %v4361
        %v4975 = vpop.f32.mrb[0].mxu0
        %v4976 = vadd.f32 %v4487, %v4975
        %v4977 = vpop.f32.mrb[0].mxu0
        %v4978 = vpop.f32.mrb[0].mxu0
        %v4979 = vadd.f32 %v4487, %v4978
        %v4980 = vpop.f32.mrb[0].mxu0
        %4981 = vmatprep.mubr.bf16.mxu0 %v4369
        %4982 = vmatmul.mubr.bf16.gmra.mrb[0].mxu0 %v4368
        %v4983 = vpop.f32.mrb[0].mxu0
        %v4984 = vadd.f32 %v4487, %v4983
        %v4985 = vpop.f32.mrb[0].mxu0
        %v4986 = vpop.f32.mrb[0].mxu0
        %v4987 = vadd.f32 %v4487, %v4986
        %v4988 = vpop.f32.mrb[0].mxu0
        %4989 = vmatprep.mubr.bf16.mxu0 %v4376
        %4990 = vmatmul.mubr.bf16.gmra.mrb[0].mxu0 %v4375
        %v4991 = vpop.f32.mrb[0].mxu0
        %v4992 = vadd.f32 %v4487, %v4991
        %v4993 = vpop.f32.mrb[0].mxu0
        %v4994 = vpop.f32.mrb[0].mxu0
        %v4995 = vadd.f32 %v4487, %v4994
        %v4996 = vpop.f32.mrb[0].mxu0
        %4997 = vdwg.mxu0
        %4998 = vmatprep.subr.bf16.mxu0 0
        %4999 = vmatpush1.bf16.msra.mxu0 %v4705
        %5000 = vmatprep.subr.bf16.mxu0 0
        %5001 = vmatpush1.bf16.msra.mxu0 %v4706
        %5002 = vmatprep.subr.bf16.mxu0 0
        %5003 = vmatpush1.bf16.msra.mxu0 %v4707
        %5004 = vmatprep.subr.bf16.mxu0 0
        %5005 = vmatpush1.bf16.msra.mxu0 %v4708
        %5006 = vmatprep.subr.bf16.mxu0 0
        %5007 = vmatpush1.bf16.msra.mxu0 %v4709
        %5008 = vmatprep.subr.bf16.mxu0 0
        %5009 = vmatpush1.bf16.msra.mxu0 %v4710
        %5010 = vmatprep.subr.bf16.mxu0 0
        %5011 = vmatpush1.bf16.msra.mxu0 %v4711
        %5012 = vmatprep.subr.bf16.mxu0 0
        %5013 = vmatpush1.bf16.msra.mxu0 %v4712
        %5014 = vmatprep.subr.bf16.mxu0 0
        %5015 = vmatpush1.bf16.msra.mxu0 %v4713
        %5016 = vmatprep.subr.bf16.mxu0 0
        %5017 = vmatpush1.bf16.msra.mxu0 %v4714
        %5018 = vmatprep.subr.bf16.mxu0 0
        %5019 = vmatpush1.bf16.msra.mxu0 %v4715
        %5020 = vmatprep.subr.bf16.mxu0 0
        %5021 = vmatpush1.bf16.msra.mxu0 %v4716
        %5022 = vmatprep.subr.bf16.mxu0 0
        %5023 = vmatpush1.bf16.msra.mxu0 %v4717
        %5024 = vmatprep.subr.bf16.mxu0 0
        %5025 = vmatpush1.bf16.msra.mxu0 %v4718
        %5026 = vmatprep.subr.bf16.mxu0 0
        %5027 = vmatpush1.bf16.msra.mxu0 %v4719
        %5028 = vmatprep.subr.bf16.mxu0 0
        %5029 = vmatpush1.bf16.msra.mxu0 %v4720
        %5030 = vmatprep.mubr.bf16.mxu0 %v4273
        %5031 = vmatmul.mubr.bf16.gmra.mrb[0].mxu0 %v4272
        %v5032 = vpop.f32.mrb[0].mxu0
        %v5033 = vadd.f32 %v4872, %v5032
        %v5034 = vpop.f32.mrb[0].mxu0
        %v5035 = vpop.f32.mrb[0].mxu0
        %v5036 = vadd.f32 %v4875, %v5035
        %v5037 = vpop.f32.mrb[0].mxu0
        %5038 = vmatprep.mubr.bf16.mxu0 %v4280
        %5039 = vmatmul.mubr.bf16.gmra.mrb[0].mxu0 %v4279
        %v5040 = vpop.f32.mrb[0].mxu0
        %v5041 = vadd.f32 %v4880, %v5040
        %v5042 = vpop.f32.mrb[0].mxu0
        %v5043 = vpop.f32.mrb[0].mxu0
        %v5044 = vadd.f32 %v4883, %v5043
        %v5045 = vpop.f32.mrb[0].mxu0
        %5046 = vmatprep.mubr.bf16.mxu0 %v4287
        %5047 = vmatmul.mubr.bf16.gmra.mrb[0].mxu0 %v4286
        %v5048 = vpop.f32.mrb[0].mxu0
        %v5049 = vadd.f32 %v4888, %v5048
        %v5050 = vpop.f32.mrb[0].mxu0
        %v5051 = vpop.f32.mrb[0].mxu0
        %v5052 = vadd.f32 %v4891, %v5051
        %v5053 = vpop.f32.mrb[0].mxu0
        %5054 = vmatprep.mubr.bf16.mxu0 %v4294
        %5055 = vmatmul.mubr.bf16.gmra.mrb[0].mxu0 %v4293
        %v5056 = vpop.f32.mrb[0].mxu0
        %v5057 = vadd.f32 %v4896, %v5056
        %v5058 = vpop.f32.mrb[0].mxu0
        %v5059 = vpop.f32.mrb[0].mxu0
        %v5060 = vadd.f32 %v4899, %v5059
        %v5061 = vpop.f32.mrb[0].mxu0
        %5062 = vmatprep.mubr.bf16.mxu0 %v4301
        %5063 = vmatmul.mubr.bf16.gmra.mrb[0].mxu0 %v4300
        %v5064 = vpop.f32.mrb[0].mxu0
        %v5065 = vadd.f32 %v4904, %v5064
        %v5066 = vpop.f32.mrb[0].mxu0
        %v5067 = vpop.f32.mrb[0].mxu0
        %v5068 = vadd.f32 %v4907, %v5067
        %v5069 = vpop.f32.mrb[0].mxu0
        %5070 = vmatprep.mubr.bf16.mxu0 %v4308
        %5071 = vmatmul.mubr.bf16.gmra.mrb[0].mxu0 %v4307
        %v5072 = vpop.f32.mrb[0].mxu0
        %v5073 = vadd.f32 %v4912, %v5072
        %v5074 = vpop.f32.mrb[0].mxu0
        %v5075 = vpop.f32.mrb[0].mxu0
        %v5076 = vadd.f32 %v4915, %v5075
        %v5077 = vpop.f32.mrb[0].mxu0
        %5078 = vmatprep.mubr.bf16.mxu0 %v4315
        %5079 = vmatmul.mubr.bf16.gmra.mrb[0].mxu0 %v4314
        %v5080 = vpop.f32.mrb[0].mxu0
        %v5081 = vadd.f32 %v4920, %v5080
        %v5082 = vpop.f32.mrb[0].mxu0
        %v5083 = vpop.f32.mrb[0].mxu0
        %v5084 = vadd.f32 %v4923, %v5083
        %v5085 = vpop.f32.mrb[0].mxu0
        %5086 = vmatprep.mubr.bf16.mxu0 %v4322
        %5087 = vmatmul.mubr.bf16.gmra.mrb[0].mxu0 %v4321
        %v5088 = vpop.f32.mrb[0].mxu0
        %v5089 = vadd.f32 %v4928, %v5088
        %v5090 = vpop.f32.mrb[0].mxu0
        %v5091 = vpop.f32.mrb[0].mxu0
        %v5092 = vadd.f32 %v4931, %v5091
        %v5093 = vpop.f32.mrb[0].mxu0
        %5094 = vmatprep.mubr.bf16.mxu0 %v4329
        %5095 = vmatmul.mubr.bf16.gmra.mrb[0].mxu0 %v4328
        %v5096 = vpop.f32.mrb[0].mxu0
        %v5097 = vadd.f32 %v4936, %v5096
        %v5098 = vpop.f32.mrb[0].mxu0
        %v5099 = vpop.f32.mrb[0].mxu0
        %v5100 = vadd.f32 %v4939, %v5099
        %v5101 = vpop.f32.mrb[0].mxu0
        %5102 = vmatprep.mubr.bf16.mxu0 %v4336
        %5103 = vmatmul.mubr.bf16.gmra.mrb[0].mxu0 %v4335
        %v5104 = vpop.f32.mrb[0].mxu0
        %v5105 = vadd.f32 %v4944, %v5104
        %v5106 = vpop.f32.mrb[0].mxu0
        %v5107 = vpop.f32.mrb[0].mxu0
        %v5108 = vadd.f32 %v4947, %v5107
        %v5109 = vpop.f32.mrb[0].mxu0
        %5110 = vmatprep.mubr.bf16.mxu0 %v4343
        %5111 = vmatmul.mubr.bf16.gmra.mrb[0].mxu0 %v4342
        %v5112 = vpop.f32.mrb[0].mxu0
        %v5113 = vadd.f32 %v4952, %v5112
        %v5114 = vpop.f32.mrb[0].mxu0
        %v5115 = vpop.f32.mrb[0].mxu0
        %v5116 = vadd.f32 %v4955, %v5115
        %v5117 = vpop.f32.mrb[0].mxu0
        %5118 = vmatprep.mubr.bf16.mxu0 %v4350
        %5119 = vmatmul.mubr.bf16.gmra.mrb[0].mxu0 %v4349
        %v5120 = vpop.f32.mrb[0].mxu0
        %v5121 = vadd.f32 %v4960, %v5120
        %v5122 = vpop.f32.mrb[0].mxu0
        %v5123 = vpop.f32.mrb[0].mxu0
        %v5124 = vadd.f32 %v4963, %v5123
        %v5125 = vpop.f32.mrb[0].mxu0
        %5126 = vmatprep.mubr.bf16.mxu0 %v4357
        %5127 = vmatmul.mubr.bf16.gmra.mrb[0].mxu0 %v4356
        %v5128 = vpop.f32.mrb[0].mxu0
        %v5129 = vadd.f32 %v4968, %v5128
        %v5130 = vpop.f32.mrb[0].mxu0
        %v5131 = vpop.f32.mrb[0].mxu0
        %v5132 = vadd.f32 %v4971, %v5131
        %v5133 = vpop.f32.mrb[0].mxu0
        %5134 = vmatprep.mubr.bf16.mxu0 %v4364
        %5135 = vmatmul.mubr.bf16.gmra.mrb[0].mxu0 %v4363
        %v5136 = vpop.f32.mrb[0].mxu0
        %v5137 = vadd.f32 %v4976, %v5136
        %v5138 = vpop.f32.mrb[0].mxu0
        %v5139 = vpop.f32.mrb[0].mxu0
        %v5140 = vadd.f32 %v4979, %v5139
        %v5141 = vpop.f32.mrb[0].mxu0
        %5142 = vmatprep.mubr.bf16.mxu0 %v4371
        %5143 = vmatmul.mubr.bf16.gmra.mrb[0].mxu0 %v4370
        %v5144 = vpop.f32.mrb[0].mxu0
        %v5145 = vadd.f32 %v4984, %v5144
        %v5146 = vpop.f32.mrb[0].mxu0
        %v5147 = vpop.f32.mrb[0].mxu0
        %v5148 = vadd.f32 %v4987, %v5147
        %v5149 = vpop.f32.mrb[0].mxu0
        %5150 = vmatprep.mubr.bf16.mxu0 %v4378
        %5151 = vmatmul.mubr.bf16.gmra.mrb[0].mxu0 %v4377
        %v5152 = vpop.f32.mrb[0].mxu0
        %v5153 = vadd.f32 %v4992, %v5152
        %v5154 = vpop.f32.mrb[0].mxu0
        %v5155 = vpop.f32.mrb[0].mxu0
        %v5156 = vadd.f32 %v4995, %v5155
        %v5157 = vpop.f32.mrb[0].mxu0
        %5158 = vdwg.mxu0
        %5159 = vmatprep.subr.bf16.mxu0 0
        %5160 = vmatpush1.bf16.msra.mxu0 %v4721
        %5161 = vmatprep.subr.bf16.mxu0 0
        %5162 = vmatpush1.bf16.msra.mxu0 %v4722
        %5163 = vmatprep.subr.bf16.mxu0 0
        %5164 = vmatpush1.bf16.msra.mxu0 %v4723
        %5165 = vmatprep.subr.bf16.mxu0 0
        %5166 = vmatpush1.bf16.msra.mxu0 %v4724
        %5167 = vmatprep.subr.bf16.mxu0 0
        %5168 = vmatpush1.bf16.msra.mxu0 %v4725
        %5169 = vmatprep.subr.bf16.mxu0 0
        %5170 = vmatpush1.bf16.msra.mxu0 %v4726
        %5171 = vmatprep.subr.bf16.mxu0 0
        %5172 = vmatpush1.bf16.msra.mxu0 %v4727
        %5173 = vmatprep.subr.bf16.mxu0 0
        %5174 = vmatpush1.bf16.msra.mxu0 %v4728
        %5175 = vmatprep.subr.bf16.mxu0 0
        %5176 = vmatpush1.bf16.msra.mxu0 %v4729
        %5177 = vmatprep.subr.bf16.mxu0 0
        %5178 = vmatpush1.bf16.msra.mxu0 %v4730
        %5179 = vmatprep.subr.bf16.mxu0 0
        %5180 = vmatpush1.bf16.msra.mxu0 %v4731
        %5181 = vmatprep.subr.bf16.mxu0 0
        %5182 = vmatpush1.bf16.msra.mxu0 %v4732
        %5183 = vmatprep.subr.bf16.mxu0 0
        %5184 = vmatpush1.bf16.msra.mxu0 %v4733
        %5185 = vmatprep.subr.bf16.mxu0 0
        %5186 = vmatpush1.bf16.msra.mxu0 %v4734
        %5187 = vmatprep.subr.bf16.mxu0 0
        %5188 = vmatpush1.bf16.msra.mxu0 %v4735
        %5189 = vmatprep.subr.bf16.mxu0 0
        %5190 = vmatpush1.bf16.msra.mxu0 %v4736
        %5191 = vmatprep.mubr.bf16.mxu0 %v4275
        %5192 = vmatmul.mubr.bf16.gmra.mrb[0].mxu0 %v4274
        %v5193 = vpop.f32.mrb[0].mxu0
        %v5194 = vadd.f32 %v5033, %v5193
        %v5195 = vpop.f32.mrb[0].mxu0
        %v5196 = vpop.f32.mrb[0].mxu0
        %v5197 = vadd.f32 %v5036, %v5196
        %v5198 = vpop.f32.mrb[0].mxu0
        %5199 = vmatprep.mubr.bf16.mxu0 %v4282
        %5200 = vmatmul.mubr.bf16.gmra.mrb[0].mxu0 %v4281
        %v5201 = vpop.f32.mrb[0].mxu0
        %v5202 = vadd.f32 %v5041, %v5201
        %v5203 = vpop.f32.mrb[0].mxu0
        %v5204 = vpop.f32.mrb[0].mxu0
        %v5205 = vadd.f32 %v5044, %v5204
        %v5206 = vpop.f32.mrb[0].mxu0
        %5207 = vmatprep.mubr.bf16.mxu0 %v4289
        %5208 = vmatmul.mubr.bf16.gmra.mrb[0].mxu0 %v4288
        %v5209 = vpop.f32.mrb[0].mxu0
        %v5210 = vadd.f32 %v5049, %v5209
        %v5211 = vpop.f32.mrb[0].mxu0
        %v5212 = vpop.f32.mrb[0].mxu0
        %v5213 = vadd.f32 %v5052, %v5212
        %v5214 = vpop.f32.mrb[0].mxu0
        %5215 = vmatprep.mubr.bf16.mxu0 %v4296
        %5216 = vmatmul.mubr.bf16.gmra.mrb[0].mxu0 %v4295
        %v5217 = vpop.f32.mrb[0].mxu0
        %v5218 = vadd.f32 %v5057, %v5217
        %v5219 = vpop.f32.mrb[0].mxu0
        %v5220 = vpop.f32.mrb[0].mxu0
        %v5221 = vadd.f32 %v5060, %v5220
        %v5222 = vpop.f32.mrb[0].mxu0
        %5223 = vmatprep.mubr.bf16.mxu0 %v4303
        %5224 = vmatmul.mubr.bf16.gmra.mrb[0].mxu0 %v4302
        %v5225 = vpop.f32.mrb[0].mxu0
        %v5226 = vadd.f32 %v5065, %v5225
        %v5227 = vpop.f32.mrb[0].mxu0
        %v5228 = vpop.f32.mrb[0].mxu0
        %v5229 = vadd.f32 %v5068, %v5228
        %v5230 = vpop.f32.mrb[0].mxu0
        %5231 = vmatprep.mubr.bf16.mxu0 %v4310
        %5232 = vmatmul.mubr.bf16.gmra.mrb[0].mxu0 %v4309
        %v5233 = vpop.f32.mrb[0].mxu0
        %v5234 = vadd.f32 %v5073, %v5233
        %v5235 = vpop.f32.mrb[0].mxu0
        %v5236 = vpop.f32.mrb[0].mxu0
        %v5237 = vadd.f32 %v5076, %v5236
        %v5238 = vpop.f32.mrb[0].mxu0
        %5239 = vmatprep.mubr.bf16.mxu0 %v4317
        %5240 = vmatmul.mubr.bf16.gmra.mrb[0].mxu0 %v4316
        %v5241 = vpop.f32.mrb[0].mxu0
        %v5242 = vadd.f32 %v5081, %v5241
        %v5243 = vpop.f32.mrb[0].mxu0
        %v5244 = vpop.f32.mrb[0].mxu0
        %v5245 = vadd.f32 %v5084, %v5244
        %v5246 = vpop.f32.mrb[0].mxu0
        %5247 = vmatprep.mubr.bf16.mxu0 %v4324
        %5248 = vmatmul.mubr.bf16.gmra.mrb[0].mxu0 %v4323
        %v5249 = vpop.f32.mrb[0].mxu0
        %v5250 = vadd.f32 %v5089, %v5249
        %v5251 = vpop.f32.mrb[0].mxu0
        %v5252 = vpop.f32.mrb[0].mxu0
        %v5253 = vadd.f32 %v5092, %v5252
        %v5254 = vpop.f32.mrb[0].mxu0
        %5255 = vmatprep.mubr.bf16.mxu0 %v4331
        %5256 = vmatmul.mubr.bf16.gmra.mrb[0].mxu0 %v4330
        %v5257 = vpop.f32.mrb[0].mxu0
        %v5258 = vadd.f32 %v5097, %v5257
        %v5259 = vpop.f32.mrb[0].mxu0
        %v5260 = vpop.f32.mrb[0].mxu0
        %v5261 = vadd.f32 %v5100, %v5260
        %v5262 = vpop.f32.mrb[0].mxu0
        %5263 = vmatprep.mubr.bf16.mxu0 %v4338
        %5264 = vmatmul.mubr.bf16.gmra.mrb[0].mxu0 %v4337
        %v5265 = vpop.f32.mrb[0].mxu0
        %v5266 = vadd.f32 %v5105, %v5265
        %v5267 = vpop.f32.mrb[0].mxu0
        %v5268 = vpop.f32.mrb[0].mxu0
        %v5269 = vadd.f32 %v5108, %v5268
        %v5270 = vpop.f32.mrb[0].mxu0
        %5271 = vmatprep.mubr.bf16.mxu0 %v4345
        %5272 = vmatmul.mubr.bf16.gmra.mrb[0].mxu0 %v4344
        %v5273 = vpop.f32.mrb[0].mxu0
        %v5274 = vadd.f32 %v5113, %v5273
        %v5275 = vpop.f32.mrb[0].mxu0
        %v5276 = vpop.f32.mrb[0].mxu0
        %v5277 = vadd.f32 %v5116, %v5276
        %v5278 = vpop.f32.mrb[0].mxu0
        %5279 = vmatprep.mubr.bf16.mxu0 %v4352
        %5280 = vmatmul.mubr.bf16.gmra.mrb[0].mxu0 %v4351
        %v5281 = vpop.f32.mrb[0].mxu0
        %v5282 = vadd.f32 %v5121, %v5281
        %v5283 = vpop.f32.mrb[0].mxu0
        %v5284 = vpop.f32.mrb[0].mxu0
        %v5285 = vadd.f32 %v5124, %v5284
        %v5286 = vpop.f32.mrb[0].mxu0
        %5287 = vmatprep.mubr.bf16.mxu0 %v4359
        %5288 = vmatmul.mubr.bf16.gmra.mrb[0].mxu0 %v4358
        %v5289 = vpop.f32.mrb[0].mxu0
        %v5290 = vadd.f32 %v5129, %v5289
        %v5291 = vpop.f32.mrb[0].mxu0
        %v5292 = vpop.f32.mrb[0].mxu0
        %v5293 = vadd.f32 %v5132, %v5292
        %v5294 = vpop.f32.mrb[0].mxu0
        %5295 = vmatprep.mubr.bf16.mxu0 %v4366
        %5296 = vmatmul.mubr.bf16.gmra.mrb[0].mxu0 %v4365
        %v5297 = vpop.f32.mrb[0].mxu0
        %v5298 = vadd.f32 %v5137, %v5297
        %v5299 = vpop.f32.mrb[0].mxu0
        %v5300 = vpop.f32.mrb[0].mxu0
        %v5301 = vadd.f32 %v5140, %v5300
        %v5302 = vpop.f32.mrb[0].mxu0
        %5303 = vmatprep.mubr.bf16.mxu0 %v4373
        %5304 = vmatmul.mubr.bf16.gmra.mrb[0].mxu0 %v4372
        %v5305 = vpop.f32.mrb[0].mxu0
        %v5306 = vadd.f32 %v5145, %v5305
        %v5307 = vpop.f32.mrb[0].mxu0
        %v5308 = vpop.f32.mrb[0].mxu0
        %v5309 = vadd.f32 %v5148, %v5308
        %v5310 = vpop.f32.mrb[0].mxu0
        %5311 = vmatprep.mubr.bf16.mxu0 %v4380
        %5312 = vmatmul.mubr.bf16.gmra.mrb[0].mxu0 %v4379
        %v5313 = vpop.f32.mrb[0].mxu0
        %v5314 = vadd.f32 %v5153, %v5313
        %v5315 = vpop.f32.mrb[0].mxu0
        %v5316 = vpop.f32.mrb[0].mxu0
        %v5317 = vadd.f32 %v5156, %v5316
        %v5318 = vpop.f32.mrb[0].mxu0
        %5319 = vdwg.mxu0
        %5320 = vmatprep.subr.bf16.mxu0 0
        %5321 = vmatpush1.bf16.msra.mxu0 %v4737
        %5322 = vmatprep.subr.bf16.mxu0 0
        %5323 = vmatpush1.bf16.msra.mxu0 %v4738
        %5324 = vmatprep.subr.bf16.mxu0 0
        %5325 = vmatpush1.bf16.msra.mxu0 0
        %5326 = vmatprep.subr.bf16.mxu0 0
        %5327 = vmatpush1.bf16.msra.mxu0 0
        %5328 = vmatprep.subr.bf16.mxu0 0
        %5329 = vmatpush1.bf16.msra.mxu0 0
        %5330 = vmatprep.subr.bf16.mxu0 0
        %5331 = vmatpush1.bf16.msra.mxu0 0
        %5332 = vmatprep.subr.bf16.mxu0 0
        %5333 = vmatpush1.bf16.msra.mxu0 0
        %5334 = vmatprep.subr.bf16.mxu0 0
        %5335 = vmatpush1.bf16.msra.mxu0 0
        %5336 = vmatprep.subr.bf16.mxu0 0
        %5337 = vmatpush1.bf16.msra.mxu0 0
        %5338 = vmatprep.subr.bf16.mxu0 0
        %5339 = vmatpush1.bf16.msra.mxu0 0
        %5340 = vmatprep.subr.bf16.mxu0 0
        %5341 = vmatpush1.bf16.msra.mxu0 0
        %5342 = vmatprep.subr.bf16.mxu0 0
        %5343 = vmatpush1.bf16.msra.mxu0 0
        %5344 = vmatprep.subr.bf16.mxu0 0
        %5345 = vmatpush1.bf16.msra.mxu0 0
        %5346 = vmatprep.subr.bf16.mxu0 0
        %5347 = vmatpush1.bf16.msra.mxu0 0
        %5348 = vmatprep.subr.bf16.mxu0 0
        %5349 = vmatpush1.bf16.msra.mxu0 0
        %5350 = vmatprep.subr.bf16.mxu0 0
        %5351 = vmatpush1.bf16.msra.mxu0 0
        %5352 = vmatprep.mubr.bf16.mxu0 0
        %5353 = vmatmul.mubr.bf16.gmra.mrb[0].mxu0 %v4790
        %v5354 = vpop.f32.mrb[0].mxu0
        %v5355 = vadd.f32 %v5194, %v5354
        %v5356 = vpop.f32.mrb[0].mxu0
        %v5357 = vpop.f32.mrb[0].mxu0
        %v5358 = vadd.f32 %v5197, %v5357
        %v5359 = vpop.f32.mrb[0].mxu0
        %5360 = vmatprep.mubr.bf16.mxu0 0
        %5361 = vmatmul.mubr.bf16.gmra.mrb[0].mxu0 %v4793
        %v5362 = vpop.f32.mrb[0].mxu0
        %v5363 = vadd.f32 %v5202, %v5362
        %v5364 = vpop.f32.mrb[0].mxu0
        %v5365 = vpop.f32.mrb[0].mxu0
        %v5366 = vadd.f32 %v5205, %v5365
        %v5367 = vpop.f32.mrb[0].mxu0
        %5368 = vmatprep.mubr.bf16.mxu0 0
        %5369 = vmatmul.mubr.bf16.gmra.mrb[0].mxu0 %v4796
        %v5370 = vpop.f32.mrb[0].mxu0
        %v5371 = vadd.f32 %v5210, %v5370
        %v5372 = vpop.f32.mrb[0].mxu0
        %v5373 = vpop.f32.mrb[0].mxu0
        %v5374 = vadd.f32 %v5213, %v5373
        %v5375 = vpop.f32.mrb[0].mxu0
        %5376 = vmatprep.mubr.bf16.mxu0 0
        %5377 = vmatmul.mubr.bf16.gmra.mrb[0].mxu0 %v4799
        %v5378 = vpop.f32.mrb[0].mxu0
        %v5379 = vadd.f32 %v5218, %v5378
        %v5380 = vpop.f32.mrb[0].mxu0
        %v5381 = vpop.f32.mrb[0].mxu0
        %v5382 = vadd.f32 %v5221, %v5381
        %v5383 = vpop.f32.mrb[0].mxu0
        %5384 = vmatprep.mubr.bf16.mxu0 0
        %5385 = vmatmul.mubr.bf16.gmra.mrb[0].mxu0 %v4802
        %v5386 = vpop.f32.mrb[0].mxu0
        %v5387 = vadd.f32 %v5226, %v5386
        %v5388 = vpop.f32.mrb[0].mxu0
        %v5389 = vpop.f32.mrb[0].mxu0
        %v5390 = vadd.f32 %v5229, %v5389
        %v5391 = vpop.f32.mrb[0].mxu0
        %5392 = vmatprep.mubr.bf16.mxu0 0
        %5393 = vmatmul.mubr.bf16.gmra.mrb[0].mxu0 %v4805
        %v5394 = vpop.f32.mrb[0].mxu0
        %v5395 = vadd.f32 %v5234, %v5394
        %v5396 = vpop.f32.mrb[0].mxu0
        %v5397 = vpop.f32.mrb[0].mxu0
        %v5398 = vadd.f32 %v5237, %v5397
        %v5399 = vpop.f32.mrb[0].mxu0
        %5400 = vmatprep.mubr.bf16.mxu0 0
        %5401 = vmatmul.mubr.bf16.gmra.mrb[0].mxu0 %v4808
        %v5402 = vpop.f32.mrb[0].mxu0
        %v5403 = vadd.f32 %v5242, %v5402
        %v5404 = vpop.f32.mrb[0].mxu0
        %v5405 = vpop.f32.mrb[0].mxu0
        %v5406 = vadd.f32 %v5245, %v5405
        %v5407 = vpop.f32.mrb[0].mxu0
        %5408 = vmatprep.mubr.bf16.mxu0 0
        %5409 = vmatmul.mubr.bf16.gmra.mrb[0].mxu0 %v4811
        %v5410 = vpop.f32.mrb[0].mxu0
        %v5411 = vadd.f32 %v5250, %v5410
        %v5412 = vpop.f32.mrb[0].mxu0
        %v5413 = vpop.f32.mrb[0].mxu0
        %v5414 = vadd.f32 %v5253, %v5413
        %v5415 = vpop.f32.mrb[0].mxu0
        %5416 = vmatprep.mubr.bf16.mxu0 0
        %5417 = vmatmul.mubr.bf16.gmra.mrb[0].mxu0 %v4814
        %v5418 = vpop.f32.mrb[0].mxu0
        %v5419 = vadd.f32 %v5258, %v5418
        %v5420 = vpop.f32.mrb[0].mxu0
        %v5421 = vpop.f32.mrb[0].mxu0
        %v5422 = vadd.f32 %v5261, %v5421
        %v5423 = vpop.f32.mrb[0].mxu0
        %5424 = vmatprep.mubr.bf16.mxu0 0
        %5425 = vmatmul.mubr.bf16.gmra.mrb[0].mxu0 %v4817
        %v5426 = vpop.f32.mrb[0].mxu0
        %v5427 = vadd.f32 %v5266, %v5426
        %v5428 = vpop.f32.mrb[0].mxu0
        %v5429 = vpop.f32.mrb[0].mxu0
        %v5430 = vadd.f32 %v5269, %v5429
        %v5431 = vpop.f32.mrb[0].mxu0
        %5432 = vmatprep.mubr.bf16.mxu0 0
        %5433 = vmatmul.mubr.bf16.gmra.mrb[0].mxu0 %v4820
        %v5434 = vpop.f32.mrb[0].mxu0
        %v5435 = vadd.f32 %v5274, %v5434
        %v5436 = vpop.f32.mrb[0].mxu0
        %v5437 = vpop.f32.mrb[0].mxu0
        %v5438 = vadd.f32 %v5277, %v5437
        %v5439 = vpop.f32.mrb[0].mxu0
        %5440 = vmatprep.mubr.bf16.mxu0 0
        %5441 = vmatmul.mubr.bf16.gmra.mrb[0].mxu0 %v4823
        %v5442 = vpop.f32.mrb[0].mxu0
        %v5443 = vadd.f32 %v5282, %v5442
        %v5444 = vpop.f32.mrb[0].mxu0
        %v5445 = vpop.f32.mrb[0].mxu0
        %v5446 = vadd.f32 %v5285, %v5445
        %v5447 = vpop.f32.mrb[0].mxu0
        %5448 = vmatprep.mubr.bf16.mxu0 0
        %5449 = vmatmul.mubr.bf16.gmra.mrb[0].mxu0 %v4826
        %v5450 = vpop.f32.mrb[0].mxu0
        %v5451 = vadd.f32 %v5290, %v5450
        %v5452 = vpop.f32.mrb[0].mxu0
        %v5453 = vpop.f32.mrb[0].mxu0
        %v5454 = vadd.f32 %v5293, %v5453
        %v5455 = vpop.f32.mrb[0].mxu0
        %5456 = vmatprep.mubr.bf16.mxu0 0
        %5457 = vmatmul.mubr.bf16.gmra.mrb[0].mxu0 %v4829
        %v5458 = vpop.f32.mrb[0].mxu0
        %v5459 = vadd.f32 %v5298, %v5458
        %v5460 = vpop.f32.mrb[0].mxu0
        %v5461 = vpop.f32.mrb[0].mxu0
        %v5462 = vadd.f32 %v5301, %v5461
        %v5463 = vpop.f32.mrb[0].mxu0
        %5464 = vmatprep.mubr.bf16.mxu0 0
        %5465 = vmatmul.mubr.bf16.gmra.mrb[0].mxu0 %v4832
        %v5466 = vpop.f32.mrb[0].mxu0
        %v5467 = vadd.f32 %v5306, %v5466
        %v5468 = vpop.f32.mrb[0].mxu0
        %v5469 = vpop.f32.mrb[0].mxu0
        %v5470 = vadd.f32 %v5309, %v5469
        %v5471 = vpop.f32.mrb[0].mxu0
        %5472 = vmatprep.mubr.bf16.mxu0 0
        %5473 = vmatmul.mubr.bf16.gmra.mrb[0].mxu0 %v4835
        %v5474 = vpop.f32.mrb[0].mxu0
        %v5475 = vadd.f32 %v5314, %v5474
        %v5476 = vpop.f32.mrb[0].mxu0
        %v5477 = vpop.f32.mrb[0].mxu0
        %v5478 = vadd.f32 %v5317, %v5477
        %v5479 = vpop.f32.mrb[0].mxu0
        %5480 = vdwg.mxu0
        %v5481 = vsel %vm241, %v5355, 0.0
        %v5482 = vsel %vm241, %v5358, 0.0
        %v5483 = vadd.f32 %v5481, %v5482
        %v5484 = vsel %vm241, %v5363, 0.0
        %v5485 = vadd.f32 %v5483, %v5484
        %v5486 = vsel %vm241, %v5366, 0.0
        %v5487 = vadd.f32 %v5485, %v5486
        %v5488 = vsel %vm241, %v5371, 0.0
        %v5489 = vadd.f32 %v5487, %v5488
        %v5490 = vsel %vm241, %v5374, 0.0
        %v5491 = vadd.f32 %v5489, %v5490
        %v5492 = vsel %vm241, %v5379, 0.0
        %v5493 = vadd.f32 %v5491, %v5492
        %v5494 = vsel %vm241, %v5382, 0.0
        %v5495 = vadd.f32 %v5493, %v5494
        %v5496 = vsel %vm241, %v5387, 0.0
        %v5497 = vadd.f32 %v5495, %v5496
        %v5498 = vsel %vm241, %v5390, 0.0
        %v5499 = vadd.f32 %v5497, %v5498
        %v5500 = vsel %vm241, %v5395, 0.0
        %v5501 = vadd.f32 %v5499, %v5500
        %v5502 = vsel %vm241, %v5398, 0.0
        %v5503 = vadd.f32 %v5501, %v5502
        %v5504 = vsel %vm241, %v5403, 0.0
        %v5505 = vadd.f32 %v5503, %v5504
        %v5506 = vsel %vm241, %v5406, 0.0
        %v5507 = vadd.f32 %v5505, %v5506
        %v5508 = vsel %vm241, %v5411, 0.0
        %v5509 = vadd.f32 %v5507, %v5508
        %v5510 = vsel %vm241, %v5414, 0.0
        %v5511 = vadd.f32 %v5509, %v5510
        %v5512 = vsel %vm241, %v5419, 0.0
        %v5513 = vadd.f32 %v5511, %v5512
        %v5514 = vsel %vm241, %v5422, 0.0
        %v5515 = vadd.f32 %v5513, %v5514
        %v5516 = vsel %vm241, %v5427, 0.0
        %v5517 = vadd.f32 %v5515, %v5516
        %v5518 = vsel %vm241, %v5430, 0.0
        %v5519 = vadd.f32 %v5517, %v5518
        %v5520 = vsel %vm241, %v5435, 0.0
        %v5521 = vadd.f32 %v5519, %v5520
        %v5522 = vsel %vm241, %v5438, 0.0
        %v5523 = vadd.f32 %v5521, %v5522
        %v5524 = vsel %vm241, %v5443, 0.0
        %v5525 = vadd.f32 %v5523, %v5524
        %v5526 = vsel %vm241, %v5446, 0.0
        %v5527 = vadd.f32 %v5525, %v5526
        %v5528 = vsel %vm241, %v5451, 0.0
        %v5529 = vadd.f32 %v5527, %v5528
        %v5530 = vsel %vm241, %v5454, 0.0
        %v5531 = vadd.f32 %v5529, %v5530
        %v5532 = vsel %vm241, %v5459, 0.0
        %v5533 = vadd.f32 %v5531, %v5532
        %v5534 = vsel %vm241, %v5462, 0.0
        %v5535 = vadd.f32 %v5533, %v5534
        %v5536 = vsel %vm241, %v5467, 0.0
        %v5537 = vadd.f32 %v5535, %v5536
        %v5538 = vsel %vm241, %v5470, 0.0
        %v5539 = vadd.f32 %v5537, %v5538
        %v5540 = vsel %vm241, %v5475, 0.0
        %v5541 = vadd.f32 %v5539, %v5540
        %v5542 = vsel %vm241, %v5478, 0.0
        %v5543 = vadd.f32 %v5541, %v5542
        %v5544 = vrot.slane %v5543, 4
        %v5545 = vadd.f32 %v5543, %v5544
        %v5546 = vrot.slane %v5545, 2
        %v5547 = vadd.f32 %v5545, %v5546
        %v5548 = vrot.slane %v5547, 1
        %v5549 = vadd.f32 %v5547, %v5548
        %vm5550 = vcmask 253952
        %5551 = vst.msk [vmem:[%s227] sm:$0x1] %vm5550, %v5549
        %v5552 = vmul.f32 %v5355, %v5355
        %v5553 = vmul.f32 %v5358, %v5358
        %v5554 = vmul.f32 %v5363, %v5363
        %v5555 = vmul.f32 %v5366, %v5366
        %v5556 = vmul.f32 %v5371, %v5371
        %v5557 = vmul.f32 %v5374, %v5374
        %v5558 = vmul.f32 %v5379, %v5379
        %v5559 = vmul.f32 %v5382, %v5382
        %v5560 = vmul.f32 %v5387, %v5387
        %v5561 = vmul.f32 %v5390, %v5390
        %v5562 = vmul.f32 %v5395, %v5395
        %v5563 = vmul.f32 %v5398, %v5398
        %v5564 = vmul.f32 %v5403, %v5403
        %v5565 = vmul.f32 %v5406, %v5406
        %v5566 = vmul.f32 %v5411, %v5411
        %v5567 = vmul.f32 %v5414, %v5414
        %v5568 = vmul.f32 %v5419, %v5419
        %v5569 = vmul.f32 %v5422, %v5422
        %v5570 = vmul.f32 %v5427, %v5427
        %v5571 = vmul.f32 %v5430, %v5430
        %v5572 = vmul.f32 %v5435, %v5435
        %v5573 = vmul.f32 %v5438, %v5438
        %v5574 = vmul.f32 %v5443, %v5443
        %v5575 = vmul.f32 %v5446, %v5446
        %v5576 = vmul.f32 %v5451, %v5451
        %v5577 = vmul.f32 %v5454, %v5454
        %v5578 = vmul.f32 %v5459, %v5459
        %v5579 = vmul.f32 %v5462, %v5462
        %v5580 = vmul.f32 %v5467, %v5467
        %v5581 = vmul.f32 %v5470, %v5470
        %v5582 = vmul.f32 %v5475, %v5475
        %v5583 = vmul.f32 %v5478, %v5478
        %v5584 = vsel %vm241, %v5552, 0.0
        %v5585 = vsel %vm241, %v5553, 0.0
        %v5586 = vadd.f32 %v5584, %v5585
        %v5587 = vsel %vm241, %v5554, 0.0
        %v5588 = vadd.f32 %v5586, %v5587
        %v5589 = vsel %vm241, %v5555, 0.0
        %v5590 = vadd.f32 %v5588, %v5589
        %v5591 = vsel %vm241, %v5556, 0.0
        %v5592 = vadd.f32 %v5590, %v5591
        %v5593 = vsel %vm241, %v5557, 0.0
        %v5594 = vadd.f32 %v5592, %v5593
        %v5595 = vsel %vm241, %v5558, 0.0
        %v5596 = vadd.f32 %v5594, %v5595
        %v5597 = vsel %vm241, %v5559, 0.0
        %v5598 = vadd.f32 %v5596, %v5597
        %v5599 = vsel %vm241, %v5560, 0.0
        %v5600 = vadd.f32 %v5598, %v5599
        %v5601 = vsel %vm241, %v5561, 0.0
        %v5602 = vadd.f32 %v5600, %v5601
        %v5603 = vsel %vm241, %v5562, 0.0
        %v5604 = vadd.f32 %v5602, %v5603
        %v5605 = vsel %vm241, %v5563, 0.0
        %v5606 = vadd.f32 %v5604, %v5605
        %v5607 = vsel %vm241, %v5564, 0.0
        %v5608 = vadd.f32 %v5606, %v5607
        %v5609 = vsel %vm241, %v5565, 0.0
        %v5610 = vadd.f32 %v5608, %v5609
        %v5611 = vsel %vm241, %v5566, 0.0
        %v5612 = vadd.f32 %v5610, %v5611
        %v5613 = vsel %vm241, %v5567, 0.0
        %v5614 = vadd.f32 %v5612, %v5613
        %v5615 = vsel %vm241, %v5568, 0.0
        %v5616 = vadd.f32 %v5614, %v5615
        %v5617 = vsel %vm241, %v5569, 0.0
        %v5618 = vadd.f32 %v5616, %v5617
        %v5619 = vsel %vm241, %v5570, 0.0
        %v5620 = vadd.f32 %v5618, %v5619
        %v5621 = vsel %vm241, %v5571, 0.0
        %v5622 = vadd.f32 %v5620, %v5621
        %v5623 = vsel %vm241, %v5572, 0.0
        %v5624 = vadd.f32 %v5622, %v5623
        %v5625 = vsel %vm241, %v5573, 0.0
        %v5626 = vadd.f32 %v5624, %v5625
        %v5627 = vsel %vm241, %v5574, 0.0
        %v5628 = vadd.f32 %v5626, %v5627
        %v5629 = vsel %vm241, %v5575, 0.0
        %v5630 = vadd.f32 %v5628, %v5629
        %v5631 = vsel %vm241, %v5576, 0.0
        %v5632 = vadd.f32 %v5630, %v5631
        %v5633 = vsel %vm241, %v5577, 0.0
        %v5634 = vadd.f32 %v5632, %v5633
        %v5635 = vsel %vm241, %v5578, 0.0
        %v5636 = vadd.f32 %v5634, %v5635
        %v5637 = vsel %vm241, %v5579, 0.0
        %v5638 = vadd.f32 %v5636, %v5637
        %v5639 = vsel %vm241, %v5580, 0.0
        %v5640 = vadd.f32 %v5638, %v5639
        %v5641 = vsel %vm241, %v5581, 0.0
        %v5642 = vadd.f32 %v5640, %v5641
        %v5643 = vsel %vm241, %v5582, 0.0
        %v5644 = vadd.f32 %v5642, %v5643
        %v5645 = vsel %vm241, %v5583, 0.0
        %v5646 = vadd.f32 %v5644, %v5645
        %v5647 = vrot.slane %v5646, 4
        %v5648 = vadd.f32 %v5646, %v5647
        %v5649 = vrot.slane %v5648, 2
        %v5650 = vadd.f32 %v5648, %v5649
        %v5651 = vrot.slane %v5650, 1
        %v5652 = vadd.f32 %v5650, %v5651
        %5653 = vst.msk [vmem:[%s234] sm:$0x1] %vm5550, %v5652
        %v5654 = vpack.c.bf16 %v5358, %v5355
        %v5655 = vpack.c.bf16 %v5366, %v5363
        %v5656 = vpack.c.bf16 %v5374, %v5371
        %v5657 = vpack.c.bf16 %v5382, %v5379
        %v5658 = vpack.c.bf16 %v5390, %v5387
        %v5659 = vpack.c.bf16 %v5398, %v5395
        %v5660 = vpack.c.bf16 %v5406, %v5403
        %v5661 = vpack.c.bf16 %v5414, %v5411
        %v5662 = vpack.c.bf16 %v5422, %v5419
        %v5663 = vpack.c.bf16 %v5430, %v5427
        %v5664 = vpack.c.bf16 %v5438, %v5435
        %v5665 = vpack.c.bf16 %v5446, %v5443
        %v5666 = vpack.c.bf16 %v5454, %v5451
        %v5667 = vpack.c.bf16 %v5462, %v5459
        %v5668 = vpack.c.bf16 %v5470, %v5467
        %v5669 = vpack.c.bf16 %v5478, %v5475
        %v5686 = vunpack.c.l.b16 %v5654
        %v5687 = vunpack.c.h.b16 %v5654
        %v5688 = vunpack.c.l.b16 %v5655
        %v5689 = vunpack.c.h.b16 %v5655
        %v5690 = vunpack.c.l.b16 %v5656
        %v5691 = vunpack.c.h.b16 %v5656
        %v5692 = vunpack.c.l.b16 %v5657
        %v5693 = vunpack.c.h.b16 %v5657
        %v5694 = vunpack.c.l.b16 %v5658
        %v5695 = vunpack.c.h.b16 %v5658
        %v5696 = vunpack.c.l.b16 %v5659
        %v5697 = vunpack.c.h.b16 %v5659
        %v5698 = vunpack.c.l.b16 %v5660
        %v5699 = vunpack.c.h.b16 %v5660
        %v5700 = vunpack.c.l.b16 %v5661
        %v5701 = vunpack.c.h.b16 %v5661
        %v5702 = vunpack.c.l.b16 %v5662
        %v5703 = vunpack.c.h.b16 %v5662
        %v5704 = vunpack.c.l.b16 %v5663
        %v5705 = vunpack.c.h.b16 %v5663
        %v5706 = vunpack.c.l.b16 %v5664
        %v5707 = vunpack.c.h.b16 %v5664
        %v5708 = vunpack.c.l.b16 %v5665
        %v5709 = vunpack.c.h.b16 %v5665
        %v5710 = vunpack.c.l.b16 %v5666
        %v5711 = vunpack.c.h.b16 %v5666
        %v5712 = vunpack.c.l.b16 %v5667
        %v5713 = vunpack.c.h.b16 %v5667
        %v5714 = vunpack.c.l.b16 %v5668
        %v5715 = vunpack.c.h.b16 %v5668
        %v5716 = vunpack.c.l.b16 %v5669
        %v5717 = vunpack.c.h.b16 %v5669
        %v5718 = vpack.c.b16 %v5686, %v5686
        %v5719 = vpack.c.b16 %v5687, %v5687
        %v5720 = vpack.c.b16 %v5688, %v5688
        %v5721 = vpack.c.b16 %v5689, %v5689
        %v5722 = vpack.c.b16 %v5690, %v5690
        %v5723 = vpack.c.b16 %v5691, %v5691
        %v5724 = vpack.c.b16 %v5692, %v5692
        %v5725 = vpack.c.b16 %v5693, %v5693
        %v5726 = vpack.c.b16 %v5694, %v5694
        %v5727 = vpack.c.b16 %v5695, %v5695
        %v5728 = vpack.c.b16 %v5696, %v5696
        %v5729 = vpack.c.b16 %v5697, %v5697
        %v5730 = vpack.c.b16 %v5698, %v5698
        %v5731 = vpack.c.b16 %v5699, %v5699
        %v5732 = vpack.c.b16 %v5700, %v5700
        %v5733 = vpack.c.b16 %v5701, %v5701
        %v5734 = vpack.c.b16 %v5702, %v5702
        %v5735 = vpack.c.b16 %v5703, %v5703
        %v5736 = vpack.c.b16 %v5704, %v5704
        %v5737 = vpack.c.b16 %v5705, %v5705
        %v5738 = vpack.c.b16 %v5706, %v5706
        %v5739 = vpack.c.b16 %v5707, %v5707
        %v5740 = vpack.c.b16 %v5708, %v5708
        %v5741 = vpack.c.b16 %v5709, %v5709
        %v5742 = vpack.c.b16 %v5710, %v5710
        %v5743 = vpack.c.b16 %v5711, %v5711
        %v5744 = vpack.c.b16 %v5712, %v5712
        %v5745 = vpack.c.b16 %v5713, %v5713
        %v5746 = vpack.c.b16 %v5714, %v5714
        %v5747 = vpack.c.b16 %v5715, %v5715
        %v5748 = vpack.c.b16 %v5716, %v5716
        %v5749 = vpack.c.b16 %v5717, %v5717
        %5782 = vst.msk [vmem:[%s220] sm:$0xf] %vm244, %v5718
        %5783 = vst.msk [vmem:[%s220 + $0x4] sm:$0xf] %vm244, %v5719
        %5784 = vst.msk [vmem:[%s220 + $0x8] sm:$0xf] %vm244, %v5720
        %5785 = vst.msk [vmem:[%s220 + $0xc] sm:$0xf] %vm244, %v5721
        %5786 = vst.msk [vmem:[%s220 + $0x10] sm:$0xf] %vm244, %v5722
        %5787 = vst.msk [vmem:[%s220 + $0x14] sm:$0xf] %vm244, %v5723
        %5788 = vst.msk [vmem:[%s220 + $0x18] sm:$0xf] %vm244, %v5724
        %5789 = vst.msk [vmem:[%s220 + $0x1c] sm:$0xf] %vm244, %v5725
        %5790 = vst.msk [vmem:[%s220 + $0x20] sm:$0xf] %vm244, %v5726
        %5791 = vst.msk [vmem:[%s220 + $0x24] sm:$0xf] %vm244, %v5727
        %5792 = vst.msk [vmem:[%s220 + $0x28] sm:$0xf] %vm244, %v5728
        %5793 = vst.msk [vmem:[%s220 + $0x2c] sm:$0xf] %vm244, %v5729
        %5794 = vst.msk [vmem:[%s220 + $0x30] sm:$0xf] %vm244, %v5730
        %5795 = vst.msk [vmem:[%s220 + $0x34] sm:$0xf] %vm244, %v5731
        %5796 = vst.msk [vmem:[%s220 + $0x38] sm:$0xf] %vm244, %v5732
        %5797 = vst.msk [vmem:[%s220 + $0x3c] sm:$0xf] %vm244, %v5733
        %5798 = vst.msk [vmem:[%s220 + $0x40] sm:$0xf] %vm244, %v5734
        %5799 = vst.msk [vmem:[%s220 + $0x44] sm:$0xf] %vm244, %v5735
        %5800 = vst.msk [vmem:[%s220 + $0x48] sm:$0xf] %vm244, %v5736
        %5801 = vst.msk [vmem:[%s220 + $0x4c] sm:$0xf] %vm244, %v5737
        %5802 = vst.msk [vmem:[%s220 + $0x50] sm:$0xf] %vm244, %v5738
        %5803 = vst.msk [vmem:[%s220 + $0x54] sm:$0xf] %vm244, %v5739
        %5804 = vst.msk [vmem:[%s220 + $0x58] sm:$0xf] %vm244, %v5740
        %5805 = vst.msk [vmem:[%s220 + $0x5c] sm:$0xf] %vm244, %v5741
        %5806 = vst.msk [vmem:[%s220 + $0x60] sm:$0xf] %vm244, %v5742
        %5807 = vst.msk [vmem:[%s220 + $0x64] sm:$0xf] %vm244, %v5743
        %5808 = vst.msk [vmem:[%s220 + $0x68] sm:$0xf] %vm244, %v5744
        %5809 = vst.msk [vmem:[%s220 + $0x6c] sm:$0xf] %vm244, %v5745
        %5810 = vst.msk [vmem:[%s220 + $0x70] sm:$0xf] %vm244, %v5746
        %5811 = vst.msk [vmem:[%s220 + $0x74] sm:$0xf] %vm244, %v5747
        %5812 = vst.msk [vmem:[%s220 + $0x78] sm:$0xf] %vm244, %v5748
        %5813 = vst.msk [vmem:[%s220 + $0x7c] sm:$0xf] %vm244, %v5749
        %vm5814 = vcmask 523520
        %v5815 = vsel %vm5814, %v5355, 0.0
        %v5816 = vsel %vm5814, %v5358, 0.0
        %v5817 = vadd.f32 %v5815, %v5816
        %v5818 = vsel %vm5814, %v5363, 0.0
        %v5819 = vadd.f32 %v5817, %v5818
        %v5820 = vsel %vm5814, %v5366, 0.0
        %v5821 = vadd.f32 %v5819, %v5820
        %v5822 = vsel %vm5814, %v5371, 0.0
        %v5823 = vadd.f32 %v5821, %v5822
        %v5824 = vsel %vm5814, %v5374, 0.0
        %v5825 = vadd.f32 %v5823, %v5824
        %v5826 = vsel %vm5814, %v5379, 0.0
        %v5827 = vadd.f32 %v5825, %v5826
        %v5828 = vsel %vm5814, %v5382, 0.0
        %v5829 = vadd.f32 %v5827, %v5828
        %v5830 = vsel %vm5814, %v5387, 0.0
        %v5831 = vadd.f32 %v5829, %v5830
        %v5832 = vsel %vm5814, %v5390, 0.0
        %v5833 = vadd.f32 %v5831, %v5832
        %v5834 = vsel %vm5814, %v5395, 0.0
        %v5835 = vadd.f32 %v5833, %v5834
        %v5836 = vsel %vm5814, %v5398, 0.0
        %v5837 = vadd.f32 %v5835, %v5836
        %v5838 = vsel %vm5814, %v5403, 0.0
        %v5839 = vadd.f32 %v5837, %v5838
        %v5840 = vsel %vm5814, %v5406, 0.0
        %v5841 = vadd.f32 %v5839, %v5840
        %v5842 = vsel %vm5814, %v5411, 0.0
        %v5843 = vadd.f32 %v5841, %v5842
        %v5844 = vsel %vm5814, %v5414, 0.0
        %v5845 = vadd.f32 %v5843, %v5844
        %v5846 = vsel %vm5814, %v5419, 0.0
        %v5847 = vadd.f32 %v5845, %v5846
        %v5848 = vsel %vm5814, %v5422, 0.0
        %v5849 = vadd.f32 %v5847, %v5848
        %v5850 = vsel %vm5814, %v5427, 0.0
        %v5851 = vadd.f32 %v5849, %v5850
        %v5852 = vsel %vm5814, %v5430, 0.0
        %v5853 = vadd.f32 %v5851, %v5852
        %v5854 = vsel %vm5814, %v5435, 0.0
        %v5855 = vadd.f32 %v5853, %v5854
        %v5856 = vsel %vm5814, %v5438, 0.0
        %v5857 = vadd.f32 %v5855, %v5856
        %v5858 = vsel %vm5814, %v5443, 0.0
        %v5859 = vadd.f32 %v5857, %v5858
        %v5860 = vsel %vm5814, %v5446, 0.0
        %v5861 = vadd.f32 %v5859, %v5860
        %v5862 = vsel %vm5814, %v5451, 0.0
        %v5863 = vadd.f32 %v5861, %v5862
        %v5864 = vsel %vm5814, %v5454, 0.0
        %v5865 = vadd.f32 %v5863, %v5864
        %v5866 = vsel %vm5814, %v5459, 0.0
        %v5867 = vadd.f32 %v5865, %v5866
        %v5868 = vsel %vm5814, %v5462, 0.0
        %v5869 = vadd.f32 %v5867, %v5868
        %v5870 = vsel %vm5814, %v5467, 0.0
        %v5871 = vadd.f32 %v5869, %v5870
        %v5872 = vsel %vm5814, %v5470, 0.0
        %v5873 = vadd.f32 %v5871, %v5872
        %v5874 = vsel %vm5814, %v5475, 0.0
        %v5875 = vadd.f32 %v5873, %v5874
        %v5876 = vsel %vm5814, %v5478, 0.0
        %v5877 = vadd.f32 %v5875, %v5876
        %v5878 = vrot.slane %v5877, 4
        %v5879 = vadd.f32 %v5877, %v5878
        %v5880 = vrot.slane %v5879, 2
        %v5881 = vadd.f32 %v5879, %v5880
        %v5882 = vrot.slane %v5881, 1
        %v5883 = vadd.f32 %v5881, %v5882
        %5885 = vrot.lane.b32.xlu0 %v5883, 96
        %v5886 = vpop.permute.xlu0 %5885
        %5888 = vst.msk [vmem:[%s227 + $0x1] sm:$0x1] %vm5550, %v5886
        %v5889 = vsel %vm5814, %v5552, 0.0
        %v5890 = vsel %vm5814, %v5553, 0.0
        %v5891 = vadd.f32 %v5889, %v5890
        %v5892 = vsel %vm5814, %v5554, 0.0
        %v5893 = vadd.f32 %v5891, %v5892
        %v5894 = vsel %vm5814, %v5555, 0.0
        %v5895 = vadd.f32 %v5893, %v5894
        %v5896 = vsel %vm5814, %v5556, 0.0
        %v5897 = vadd.f32 %v5895, %v5896
        %v5898 = vsel %vm5814, %v5557, 0.0
        %v5899 = vadd.f32 %v5897, %v5898
        %v5900 = vsel %vm5814, %v5558, 0.0
        %v5901 = vadd.f32 %v5899, %v5900
        %v5902 = vsel %vm5814, %v5559, 0.0
        %v5903 = vadd.f32 %v5901, %v5902
        %v5904 = vsel %vm5814, %v5560, 0.0
        %v5905 = vadd.f32 %v5903, %v5904
        %v5906 = vsel %vm5814, %v5561, 0.0
        %v5907 = vadd.f32 %v5905, %v5906
        %v5908 = vsel %vm5814, %v5562, 0.0
        %v5909 = vadd.f32 %v5907, %v5908
        %v5910 = vsel %vm5814, %v5563, 0.0
        %v5911 = vadd.f32 %v5909, %v5910
        %v5912 = vsel %vm5814, %v5564, 0.0
        %v5913 = vadd.f32 %v5911, %v5912
        %v5914 = vsel %vm5814, %v5565, 0.0
        %v5915 = vadd.f32 %v5913, %v5914
        %v5916 = vsel %vm5814, %v5566, 0.0
        %v5917 = vadd.f32 %v5915, %v5916
        %v5918 = vsel %vm5814, %v5567, 0.0
        %v5919 = vadd.f32 %v5917, %v5918
        %v5920 = vsel %vm5814, %v5568, 0.0
        %v5921 = vadd.f32 %v5919, %v5920
        %v5922 = vsel %vm5814, %v5569, 0.0
        %v5923 = vadd.f32 %v5921, %v5922
        %v5924 = vsel %vm5814, %v5570, 0.0
        %v5925 = vadd.f32 %v5923, %v5924
        %v5926 = vsel %vm5814, %v5571, 0.0
        %v5927 = vadd.f32 %v5925, %v5926
        %v5928 = vsel %vm5814, %v5572, 0.0
        %v5929 = vadd.f32 %v5927, %v5928
        %v5930 = vsel %vm5814, %v5573, 0.0
        %v5931 = vadd.f32 %v5929, %v5930
        %v5932 = vsel %vm5814, %v5574, 0.0
        %v5933 = vadd.f32 %v5931, %v5932
        %v5934 = vsel %vm5814, %v5575, 0.0
        %v5935 = vadd.f32 %v5933, %v5934
        %v5936 = vsel %vm5814, %v5576, 0.0
        %v5937 = vadd.f32 %v5935, %v5936
        %v5938 = vsel %vm5814, %v5577, 0.0
        %v5939 = vadd.f32 %v5937, %v5938
        %v5940 = vsel %vm5814, %v5578, 0.0
        %v5941 = vadd.f32 %v5939, %v5940
        %v5942 = vsel %vm5814, %v5579, 0.0
        %v5943 = vadd.f32 %v5941, %v5942
        %v5944 = vsel %vm5814, %v5580, 0.0
        %v5945 = vadd.f32 %v5943, %v5944
        %v5946 = vsel %vm5814, %v5581, 0.0
        %v5947 = vadd.f32 %v5945, %v5946
        %v5948 = vsel %vm5814, %v5582, 0.0
        %v5949 = vadd.f32 %v5947, %v5948
        %v5950 = vsel %vm5814, %v5583, 0.0
        %v5951 = vadd.f32 %v5949, %v5950
        %v5952 = vrot.slane %v5951, 4
        %v5953 = vadd.f32 %v5951, %v5952
        %v5954 = vrot.slane %v5953, 2
        %v5955 = vadd.f32 %v5953, %v5954
        %v5956 = vrot.slane %v5955, 1
        %v5957 = vadd.f32 %v5955, %v5956
        %5959 = vrot.lane.b32.xlu0 %v5957, 96
        %v5960 = vpop.permute.xlu0 %5959
        %5962 = vst.msk [vmem:[%s234 + $0x1] sm:$0x1] %vm5550, %v5960
        %5963 = vrot.lane.b32.xlu0 %v5718, 96
        %v5964 = vpop.permute.xlu0 %5963
        %5965 = vrot.lane.b32.xlu0 %v5719, 96
        %v5966 = vpop.permute.xlu0 %5965
        %5967 = vrot.lane.b32.xlu0 %v5720, 96
        %v5968 = vpop.permute.xlu0 %5967
        %5969 = vrot.lane.b32.xlu0 %v5721, 96
        %v5970 = vpop.permute.xlu0 %5969
        %5971 = vrot.lane.b32.xlu0 %v5722, 96
        %v5972 = vpop.permute.xlu0 %5971
        %5973 = vrot.lane.b32.xlu0 %v5723, 96
        %v5974 = vpop.permute.xlu0 %5973
        %5975 = vrot.lane.b32.xlu0 %v5724, 96
        %v5976 = vpop.permute.xlu0 %5975
        %5977 = vrot.lane.b32.xlu0 %v5725, 96
        %v5978 = vpop.permute.xlu0 %5977
        %5979 = vrot.lane.b32.xlu0 %v5726, 96
        %v5980 = vpop.permute.xlu0 %5979
        %5981 = vrot.lane.b32.xlu0 %v5727, 96
        %v5982 = vpop.permute.xlu0 %5981
        %5983 = vrot.lane.b32.xlu0 %v5728, 96
        %v5984 = vpop.permute.xlu0 %5983
        %5985 = vrot.lane.b32.xlu0 %v5729, 96
        %v5986 = vpop.permute.xlu0 %5985
        %5987 = vrot.lane.b32.xlu0 %v5730, 96
        %v5988 = vpop.permute.xlu0 %5987
        %5989 = vrot.lane.b32.xlu0 %v5731, 96
        %v5990 = vpop.permute.xlu0 %5989
        %5991 = vrot.lane.b32.xlu0 %v5732, 96
        %v5992 = vpop.permute.xlu0 %5991
        %5993 = vrot.lane.b32.xlu0 %v5733, 96
        %v5994 = vpop.permute.xlu0 %5993
        %5995 = vrot.lane.b32.xlu0 %v5734, 96
        %v5996 = vpop.permute.xlu0 %5995
        %5997 = vrot.lane.b32.xlu0 %v5735, 96
        %v5998 = vpop.permute.xlu0 %5997
        %5999 = vrot.lane.b32.xlu0 %v5736, 96
        %v6000 = vpop.permute.xlu0 %5999
        %6001 = vrot.lane.b32.xlu0 %v5737, 96
        %v6002 = vpop.permute.xlu0 %6001
        %6003 = vrot.lane.b32.xlu0 %v5738, 96
        %v6004 = vpop.permute.xlu0 %6003
        %6005 = vrot.lane.b32.xlu0 %v5739, 96
        %v6006 = vpop.permute.xlu0 %6005
        %6007 = vrot.lane.b32.xlu0 %v5740, 96
        %v6008 = vpop.permute.xlu0 %6007
        %6009 = vrot.lane.b32.xlu0 %v5741, 96
        %v6010 = vpop.permute.xlu0 %6009
        %6011 = vrot.lane.b32.xlu0 %v5742, 96
        %v6012 = vpop.permute.xlu0 %6011
        %6013 = vrot.lane.b32.xlu0 %v5743, 96
        %v6014 = vpop.permute.xlu0 %6013
        %6015 = vrot.lane.b32.xlu0 %v5744, 96
        %v6016 = vpop.permute.xlu0 %6015
        %6017 = vrot.lane.b32.xlu0 %v5745, 96
        %v6018 = vpop.permute.xlu0 %6017
        %6019 = vrot.lane.b32.xlu0 %v5746, 96
        %v6020 = vpop.permute.xlu0 %6019
        %6021 = vrot.lane.b32.xlu0 %v5747, 96
        %v6022 = vpop.permute.xlu0 %6021
        %6023 = vrot.lane.b32.xlu0 %v5748, 96
        %v6024 = vpop.permute.xlu0 %6023
        %6025 = vrot.lane.b32.xlu0 %v5749, 96
        %v6026 = vpop.permute.xlu0 %6025
        %s6059 = scalar_lea.vmem %s220, 128 [#allocation4]
        %6060 = vst.msk [vmem:[%s6059] sm:$0xf] %vm244, %v5964
        %6061 = vst.msk [vmem:[%s6059 + $0x4] sm:$0xf] %vm244, %v5966
        %6062 = vst.msk [vmem:[%s6059 + $0x8] sm:$0xf] %vm244, %v5968
        %6063 = vst.msk [vmem:[%s6059 + $0xc] sm:$0xf] %vm244, %v5970
        %6064 = vst.msk [vmem:[%s6059 + $0x10] sm:$0xf] %vm244, %v5972
        %6065 = vst.msk [vmem:[%s6059 + $0x14] sm:$0xf] %vm244, %v5974
        %6066 = vst.msk [vmem:[%s6059 + $0x18] sm:$0xf] %vm244, %v5976
        %6067 = vst.msk [vmem:[%s6059 + $0x1c] sm:$0xf] %vm244, %v5978
        %6068 = vst.msk [vmem:[%s6059 + $0x20] sm:$0xf] %vm244, %v5980
        %6069 = vst.msk [vmem:[%s6059 + $0x24] sm:$0xf] %vm244, %v5982
        %6070 = vst.msk [vmem:[%s6059 + $0x28] sm:$0xf] %vm244, %v5984
        %6071 = vst.msk [vmem:[%s6059 + $0x2c] sm:$0xf] %vm244, %v5986
        %6072 = vst.msk [vmem:[%s6059 + $0x30] sm:$0xf] %vm244, %v5988
        %6073 = vst.msk [vmem:[%s6059 + $0x34] sm:$0xf] %vm244, %v5990
        %6074 = vst.msk [vmem:[%s6059 + $0x38] sm:$0xf] %vm244, %v5992
        %6075 = vst.msk [vmem:[%s6059 + $0x3c] sm:$0xf] %vm244, %v5994
        %6076 = vst.msk [vmem:[%s6059 + $0x40] sm:$0xf] %vm244, %v5996
        %6077 = vst.msk [vmem:[%s6059 + $0x44] sm:$0xf] %vm244, %v5998
        %6078 = vst.msk [vmem:[%s6059 + $0x48] sm:$0xf] %vm244, %v6000
        %6079 = vst.msk [vmem:[%s6059 + $0x4c] sm:$0xf] %vm244, %v6002
        %6080 = vst.msk [vmem:[%s6059 + $0x50] sm:$0xf] %vm244, %v6004
        %6081 = vst.msk [vmem:[%s6059 + $0x54] sm:$0xf] %vm244, %v6006
        %6082 = vst.msk [vmem:[%s6059 + $0x58] sm:$0xf] %vm244, %v6008
        %6083 = vst.msk [vmem:[%s6059 + $0x5c] sm:$0xf] %vm244, %v6010
        %6084 = vst.msk [vmem:[%s6059 + $0x60] sm:$0xf] %vm244, %v6012
        %6085 = vst.msk [vmem:[%s6059 + $0x64] sm:$0xf] %vm244, %v6014
        %6086 = vst.msk [vmem:[%s6059 + $0x68] sm:$0xf] %vm244, %v6016
        %6087 = vst.msk [vmem:[%s6059 + $0x6c] sm:$0xf] %vm244, %v6018
        %6088 = vst.msk [vmem:[%s6059 + $0x70] sm:$0xf] %vm244, %v6020
        %6089 = vst.msk [vmem:[%s6059 + $0x74] sm:$0xf] %vm244, %v6022
        %6090 = vst.msk [vmem:[%s6059 + $0x78] sm:$0xf] %vm244, %v6024
        %6091 = vst.msk [vmem:[%s6059 + $0x7c] sm:$0xf] %vm244, %v6026
        %s6092 = sand.u32 %s99, 1
        %s6093 = sand.u32 %s99, 1
        %s6094 = smul.addr %s6093, 256
        %s6095 = scalar_lea.vmem [#allocation4], %s6094
        %s6096 = sand.u32 %s125, 1
        %s6097 = scalar_lea.sflag [#allocation6], %s6096
        %s6098 = sand.u32 %s125, 1
        %s6099 = smul.addr %s6098, 2
        %s6100 = scalar_lea.vmem [#allocation5], %s6099
        %s6101 = sand.u32 %s151, 1
        %s6102 = scalar_lea.sflag [#allocation8], %s6101
        %s6103 = sand.u32 %s151, 1
        %s6104 = smul.addr %s6103, 2
        %s6105 = scalar_lea.vmem [#allocation7], %s6104
        // Predicated region
        $region33: #{tpu_custom_call.1} parent=31 // pred_check
          %p6106 = pneg %p109
        $region34: #{tpu_custom_call.1} parent=31 // pred_check_branch
          %6108 = sbr.rel (%p6106) target = $region36
        $region35: #{tpu_custom_call.1} parent=31 // pred_region
          %s6109 = smul.addr %s23, 32
          %s6110 = smul.addr %s6109, 4
          %s6111 = scalar_lea.vmem %s3, %s6110
          // Predicated region
          $region37: #{tpu_custom_call.1} parent=35 // pred_check
            _
          $region38: #{tpu_custom_call.1} parent=35 // pred_check_branch
            %6113 = sbr.rel (0) target = $region40
          $region39: #{tpu_custom_call.1} parent=35 // pred_region
            // Predicated region
            $region41: #{tpu_custom_call.1} parent=39 // pred_check
              _
            $region42: #{tpu_custom_call.1} parent=39 // pred_check_branch
              %6115 = sbr.rel target = $region44
            $region43: #{tpu_custom_call.1} parent=39 // pred_region
              // Predicated region
              $region56: #{tpu_custom_call.1} parent=43 // pred_check
                _
              $region57: #{tpu_custom_call.1} parent=43 // pred_check_branch
                %6256 = sbr.rel (0) target = $region59
              $region58: #{tpu_custom_call.1} parent=43 // pred_region
                loop: start=0, step=1, limit=1
                $region60: #{tpu_custom_call.1} parent=58 // loop_pre_header
                  _
                $region61: #{tpu_custom_call.1} parent=58 // loop_header
                  %s6258 = sphi 0, %s6262
                  %p6259 = scmp.ge.s32.totalorder %s6258, 1
                  %s6263 = sphi %s6095, %s6095
                  %s6264 = sphi %s6111, %s6111
                $region62: #{tpu_custom_call.1} parent=58 // loop_header_branch
                  %6261 = sbr.rel (%p6259) target = $region66
                $region63: #{tpu_custom_call.1} parent=58 // loop_body
                  _
                $region64: #{tpu_custom_call.1} parent=58 // loop_footer
                  %s6262 = sadd.s32 1, %s6258
                $region65: #{tpu_custom_call.1} parent=58 // loop_footer_branch
                  %6257 = sbr.rel target = $region61
                $region66: #{tpu_custom_call.1} parent=58 // loop_exit
                  _
                loop: start=0, step=1, limit=1
                $region67: #{tpu_custom_call.1} parent=58 // loop_pre_header
                  _
                $region68: #{tpu_custom_call.1} parent=58 // loop_header
                  %s6267 = sphi 0, %s6271
                  %p6268 = scmp.ge.s32.totalorder %s6267, 1
                  %s6272 = sphi %s6095, %s6095
                  %s6273 = sphi %s6111, %s6111
                $region69: #{tpu_custom_call.1} parent=58 // loop_header_branch
                  %6270 = sbr.rel (%p6268) target = $region73
                $region70: #{tpu_custom_call.1} parent=58 // loop_body
                  %v6274 = vld [vmem:[%s6272] sm:$0xf]
                  %6275 = vst [vmem:[%s6273] sm:$0xf] %v6274
                  %v6276 = vld [vmem:[%s6272 + $0x4] sm:$0xf]
                  %6277 = vst [vmem:[%s6273 + $0x4] sm:$0xf] %v6276
                  %v6278 = vld [vmem:[%s6272 + $0x8] sm:$0xf]
                  %6279 = vst [vmem:[%s6273 + $0x8] sm:$0xf] %v6278
                  %v6280 = vld [vmem:[%s6272 + $0xc] sm:$0xf]
                  %6281 = vst [vmem:[%s6273 + $0xc] sm:$0xf] %v6280
                  %v6282 = vld [vmem:[%s6272 + $0x10] sm:$0xf]
                  %6283 = vst [vmem:[%s6273 + $0x10] sm:$0xf] %v6282
                  %v6284 = vld [vmem:[%s6272 + $0x14] sm:$0xf]
                  %6285 = vst [vmem:[%s6273 + $0x14] sm:$0xf] %v6284
                  %v6286 = vld [vmem:[%s6272 + $0x18] sm:$0xf]
                  %6287 = vst [vmem:[%s6273 + $0x18] sm:$0xf] %v6286
                  %v6288 = vld [vmem:[%s6272 + $0x1c] sm:$0xf]
                  %6289 = vst [vmem:[%s6273 + $0x1c] sm:$0xf] %v6288
                  %v6290 = vld [vmem:[%s6272 + $0x20] sm:$0xf]
                  %6291 = vst [vmem:[%s6273 + $0x20] sm:$0xf] %v6290
                  %v6292 = vld [vmem:[%s6272 + $0x24] sm:$0xf]
                  %6293 = vst [vmem:[%s6273 + $0x24] sm:$0xf] %v6292
                  %v6294 = vld [vmem:[%s6272 + $0x28] sm:$0xf]
                  %6295 = vst [vmem:[%s6273 + $0x28] sm:$0xf] %v6294
                  %v6296 = vld [vmem:[%s6272 + $0x2c] sm:$0xf]
                  %6297 = vst [vmem:[%s6273 + $0x2c] sm:$0xf] %v6296
                  %v6298 = vld [vmem:[%s6272 + $0x30] sm:$0xf]
                  %6299 = vst [vmem:[%s6273 + $0x30] sm:$0xf] %v6298
                  %v6300 = vld [vmem:[%s6272 + $0x34] sm:$0xf]
                  %6301 = vst [vmem:[%s6273 + $0x34] sm:$0xf] %v6300
                  %v6302 = vld [vmem:[%s6272 + $0x38] sm:$0xf]
                  %6303 = vst [vmem:[%s6273 + $0x38] sm:$0xf] %v6302
                  %v6304 = vld [vmem:[%s6272 + $0x3c] sm:$0xf]
                  %6305 = vst [vmem:[%s6273 + $0x3c] sm:$0xf] %v6304
                  %v6306 = vld [vmem:[%s6272 + $0x40] sm:$0xf]
                  %6307 = vst [vmem:[%s6273 + $0x40] sm:$0xf] %v6306
                  %v6308 = vld [vmem:[%s6272 + $0x44] sm:$0xf]
                  %6309 = vst [vmem:[%s6273 + $0x44] sm:$0xf] %v6308
                  %v6310 = vld [vmem:[%s6272 + $0x48] sm:$0xf]
                  %6311 = vst [vmem:[%s6273 + $0x48] sm:$0xf] %v6310
                  %v6312 = vld [vmem:[%s6272 + $0x4c] sm:$0xf]
                  %6313 = vst [vmem:[%s6273 + $0x4c] sm:$0xf] %v6312
                  %v6314 = vld [vmem:[%s6272 + $0x50] sm:$0xf]
                  %6315 = vst [vmem:[%s6273 + $0x50] sm:$0xf] %v6314
                  %v6316 = vld [vmem:[%s6272 + $0x54] sm:$0xf]
                  %6317 = vst [vmem:[%s6273 + $0x54] sm:$0xf] %v6316
                  %v6318 = vld [vmem:[%s6272 + $0x58] sm:$0xf]
                  %6319 = vst [vmem:[%s6273 + $0x58] sm:$0xf] %v6318
                  %v6320 = vld [vmem:[%s6272 + $0x5c] sm:$0xf]
                  %6321 = vst [vmem:[%s6273 + $0x5c] sm:$0xf] %v6320
                  %v6322 = vld [vmem:[%s6272 + $0x60] sm:$0xf]
                  %6323 = vst [vmem:[%s6273 + $0x60] sm:$0xf] %v6322
                  %v6324 = vld [vmem:[%s6272 + $0x64] sm:$0xf]
                  %6325 = vst [vmem:[%s6273 + $0x64] sm:$0xf] %v6324
                  %v6326 = vld [vmem:[%s6272 + $0x68] sm:$0xf]
                  %6327 = vst [vmem:[%s6273 + $0x68] sm:$0xf] %v6326
                  %v6328 = vld [vmem:[%s6272 + $0x6c] sm:$0xf]
                  %6329 = vst [vmem:[%s6273 + $0x6c] sm:$0xf] %v6328
                  %v6330 = vld [vmem:[%s6272 + $0x70] sm:$0xf]
                  %6331 = vst [vmem:[%s6273 + $0x70] sm:$0xf] %v6330
                  %v6332 = vld [vmem:[%s6272 + $0x74] sm:$0xf]
                  %6333 = vst [vmem:[%s6273 + $0x74] sm:$0xf] %v6332
                  %v6334 = vld [vmem:[%s6272 + $0x78] sm:$0xf]
                  %6335 = vst [vmem:[%s6273 + $0x78] sm:$0xf] %v6334
                  %v6336 = vld [vmem:[%s6272 + $0x7c] sm:$0xf]
                  %6337 = vst [vmem:[%s6273 + $0x7c] sm:$0xf] %v6336
                  %v6338 = vld [vmem:[%s6272 + $0x80] sm:$0xf]
                  %6339 = vst [vmem:[%s6273 + $0x100] sm:$0xf] %v6338
                  %v6340 = vld [vmem:[%s6272 + $0x84] sm:$0xf]
                  %6341 = vst [vmem:[%s6273 + $0x104] sm:$0xf] %v6340
                  %v6342 = vld [vmem:[%s6272 + $0x88] sm:$0xf]
                  %6343 = vst [vmem:[%s6273 + $0x108] sm:$0xf] %v6342
                  %v6344 = vld [vmem:[%s6272 + $0x8c] sm:$0xf]
                  %6345 = vst [vmem:[%s6273 + $0x10c] sm:$0xf] %v6344
                  %v6346 = vld [vmem:[%s6272 + $0x90] sm:$0xf]
                  %6347 = vst [vmem:[%s6273 + $0x110] sm:$0xf] %v6346
                  %v6348 = vld [vmem:[%s6272 + $0x94] sm:$0xf]
                  %6349 = vst [vmem:[%s6273 + $0x114] sm:$0xf] %v6348
                  %v6350 = vld [vmem:[%s6272 + $0x98] sm:$0xf]
                  %6351 = vst [vmem:[%s6273 + $0x118] sm:$0xf] %v6350
                  %v6352 = vld [vmem:[%s6272 + $0x9c] sm:$0xf]
                  %6353 = vst [vmem:[%s6273 + $0x11c] sm:$0xf] %v6352
                  %v6354 = vld [vmem:[%s6272 + $0xa0] sm:$0xf]
                  %6355 = vst [vmem:[%s6273 + $0x120] sm:$0xf] %v6354
                  %v6356 = vld [vmem:[%s6272 + $0xa4] sm:$0xf]
                  %6357 = vst [vmem:[%s6273 + $0x124] sm:$0xf] %v6356
                  %v6358 = vld [vmem:[%s6272 + $0xa8] sm:$0xf]
                  %6359 = vst [vmem:[%s6273 + $0x128] sm:$0xf] %v6358
                  %v6360 = vld [vmem:[%s6272 + $0xac] sm:$0xf]
                  %6361 = vst [vmem:[%s6273 + $0x12c] sm:$0xf] %v6360
                  %v6362 = vld [vmem:[%s6272 + $0xb0] sm:$0xf]
                  %6363 = vst [vmem:[%s6273 + $0x130] sm:$0xf] %v6362
                  %v6364 = vld [vmem:[%s6272 + $0xb4] sm:$0xf]
                  %6365 = vst [vmem:[%s6273 + $0x134] sm:$0xf] %v6364
                  %v6366 = vld [vmem:[%s6272 + $0xb8] sm:$0xf]
                  %6367 = vst [vmem:[%s6273 + $0x138] sm:$0xf] %v6366
                  %v6368 = vld [vmem:[%s6272 + $0xbc] sm:$0xf]
                  %6369 = vst [vmem:[%s6273 + $0x13c] sm:$0xf] %v6368
                  %v6370 = vld [vmem:[%s6272 + $0xc0] sm:$0xf]
                  %6371 = vst [vmem:[%s6273 + $0x140] sm:$0xf] %v6370
                  %v6372 = vld [vmem:[%s6272 + $0xc4] sm:$0xf]
                  %6373 = vst [vmem:[%s6273 + $0x144] sm:$0xf] %v6372
                  %v6374 = vld [vmem:[%s6272 + $0xc8] sm:$0xf]
                  %6375 = vst [vmem:[%s6273 + $0x148] sm:$0xf] %v6374
                  %v6376 = vld [vmem:[%s6272 + $0xcc] sm:$0xf]
                  %6377 = vst [vmem:[%s6273 + $0x14c] sm:$0xf] %v6376
                  %v6378 = vld [vmem:[%s6272 + $0xd0] sm:$0xf]
                  %6379 = vst [vmem:[%s6273 + $0x150] sm:$0xf] %v6378
                  %v6380 = vld [vmem:[%s6272 + $0xd4] sm:$0xf]
                  %6381 = vst [vmem:[%s6273 + $0x154] sm:$0xf] %v6380
                  %v6382 = vld [vmem:[%s6272 + $0xd8] sm:$0xf]
                  %6383 = vst [vmem:[%s6273 + $0x158] sm:$0xf] %v6382
                  %v6384 = vld [vmem:[%s6272 + $0xdc] sm:$0xf]
                  %6385 = vst [vmem:[%s6273 + $0x15c] sm:$0xf] %v6384
                  %v6386 = vld [vmem:[%s6272 + $0xe0] sm:$0xf]
                  %6387 = vst [vmem:[%s6273 + $0x160] sm:$0xf] %v6386
                  %v6388 = vld [vmem:[%s6272 + $0xe4] sm:$0xf]
                  %6389 = vst [vmem:[%s6273 + $0x164] sm:$0xf] %v6388
                  %v6390 = vld [vmem:[%s6272 + $0xe8] sm:$0xf]
                  %6391 = vst [vmem:[%s6273 + $0x168] sm:$0xf] %v6390
                  %v6392 = vld [vmem:[%s6272 + $0xec] sm:$0xf]
                  %6393 = vst [vmem:[%s6273 + $0x16c] sm:$0xf] %v6392
                  %v6394 = vld [vmem:[%s6272 + $0xf0] sm:$0xf]
                  %6395 = vst [vmem:[%s6273 + $0x170] sm:$0xf] %v6394
                  %v6396 = vld [vmem:[%s6272 + $0xf4] sm:$0xf]
                  %6397 = vst [vmem:[%s6273 + $0x174] sm:$0xf] %v6396
                  %v6398 = vld [vmem:[%s6272 + $0xf8] sm:$0xf]
                  %6399 = vst [vmem:[%s6273 + $0x178] sm:$0xf] %v6398
                  %v6400 = vld [vmem:[%s6272 + $0xfc] sm:$0xf]
                  %6401 = vst [vmem:[%s6273 + $0x17c] sm:$0xf] %v6400
                $region71: #{tpu_custom_call.1} parent=58 // loop_footer
                  %s6271 = sadd.s32 1, %s6267
                $region72: #{tpu_custom_call.1} parent=58 // loop_footer_branch
                  %6266 = sbr.rel target = $region68
                $region73: #{tpu_custom_call.1} parent=58 // loop_exit
                  _
              $region59: #{tpu_custom_call.1} parent=43 // pred_fallthru
                _
            $region44: #{tpu_custom_call.1} parent=39 // pred_fallthru
              _
            // Predicated region
            $region45: #{tpu_custom_call.1} parent=39 // pred_check
              _
            $region46: #{tpu_custom_call.1} parent=39 // pred_check_branch
              %6117 = sbr.rel (0) target = $region48
            $region47: #{tpu_custom_call.1} parent=39 // pred_region
              loop: start=0, step=1, limit=1
              $region49: #{tpu_custom_call.1} parent=47 // loop_pre_header
                _
              $region50: #{tpu_custom_call.1} parent=47 // loop_header
                %s6120 = sphi 0, %s6124
                %p6121 = scmp.ge.s32.totalorder %s6120, 1
                %s6125 = sphi %s6095, %s6095
                %s6126 = sphi %s6111, %s6111
              $region51: #{tpu_custom_call.1} parent=47 // loop_header_branch
                %6123 = sbr.rel (%p6121) target = $region55
              $region52: #{tpu_custom_call.1} parent=47 // loop_body
                %v6127 = vld [vmem:[%s6125] sm:$0xf]
                %6128 = vst [vmem:[%s6126] sm:$0xf] %v6127
                %v6129 = vld [vmem:[%s6125 + $0x4] sm:$0xf]
                %6130 = vst [vmem:[%s6126 + $0x4] sm:$0xf] %v6129
                %v6131 = vld [vmem:[%s6125 + $0x8] sm:$0xf]
                %6132 = vst [vmem:[%s6126 + $0x8] sm:$0xf] %v6131
                %v6133 = vld [vmem:[%s6125 + $0xc] sm:$0xf]
                %6134 = vst [vmem:[%s6126 + $0xc] sm:$0xf] %v6133
                %v6135 = vld [vmem:[%s6125 + $0x10] sm:$0xf]
                %6136 = vst [vmem:[%s6126 + $0x10] sm:$0xf] %v6135
                %v6137 = vld [vmem:[%s6125 + $0x14] sm:$0xf]
                %6138 = vst [vmem:[%s6126 + $0x14] sm:$0xf] %v6137
                %v6139 = vld [vmem:[%s6125 + $0x18] sm:$0xf]
                %6140 = vst [vmem:[%s6126 + $0x18] sm:$0xf] %v6139
                %v6141 = vld [vmem:[%s6125 + $0x1c] sm:$0xf]
                %6142 = vst [vmem:[%s6126 + $0x1c] sm:$0xf] %v6141
                %v6143 = vld [vmem:[%s6125 + $0x20] sm:$0xf]
                %6144 = vst [vmem:[%s6126 + $0x20] sm:$0xf] %v6143
                %v6145 = vld [vmem:[%s6125 + $0x24] sm:$0xf]
                %6146 = vst [vmem:[%s6126 + $0x24] sm:$0xf] %v6145
                %v6147 = vld [vmem:[%s6125 + $0x28] sm:$0xf]
                %6148 = vst [vmem:[%s6126 + $0x28] sm:$0xf] %v6147
                %v6149 = vld [vmem:[%s6125 + $0x2c] sm:$0xf]
                %6150 = vst [vmem:[%s6126 + $0x2c] sm:$0xf] %v6149
                %v6151 = vld [vmem:[%s6125 + $0x30] sm:$0xf]
                %6152 = vst [vmem:[%s6126 + $0x30] sm:$0xf] %v6151
                %v6153 = vld [vmem:[%s6125 + $0x34] sm:$0xf]
                %6154 = vst [vmem:[%s6126 + $0x34] sm:$0xf] %v6153
                %v6155 = vld [vmem:[%s6125 + $0x38] sm:$0xf]
                %6156 = vst [vmem:[%s6126 + $0x38] sm:$0xf] %v6155
                %v6157 = vld [vmem:[%s6125 + $0x3c] sm:$0xf]
                %6158 = vst [vmem:[%s6126 + $0x3c] sm:$0xf] %v6157
                %v6159 = vld [vmem:[%s6125 + $0x40] sm:$0xf]
                %6160 = vst [vmem:[%s6126 + $0x40] sm:$0xf] %v6159
                %v6161 = vld [vmem:[%s6125 + $0x44] sm:$0xf]
                %6162 = vst [vmem:[%s6126 + $0x44] sm:$0xf] %v6161
                %v6163 = vld [vmem:[%s6125 + $0x48] sm:$0xf]
                %6164 = vst [vmem:[%s6126 + $0x48] sm:$0xf] %v6163
                %v6165 = vld [vmem:[%s6125 + $0x4c] sm:$0xf]
                %6166 = vst [vmem:[%s6126 + $0x4c] sm:$0xf] %v6165
                %v6167 = vld [vmem:[%s6125 + $0x50] sm:$0xf]
                %6168 = vst [vmem:[%s6126 + $0x50] sm:$0xf] %v6167
                %v6169 = vld [vmem:[%s6125 + $0x54] sm:$0xf]
                %6170 = vst [vmem:[%s6126 + $0x54] sm:$0xf] %v6169
                %v6171 = vld [vmem:[%s6125 + $0x58] sm:$0xf]
                %6172 = vst [vmem:[%s6126 + $0x58] sm:$0xf] %v6171
                %v6173 = vld [vmem:[%s6125 + $0x5c] sm:$0xf]
                %6174 = vst [vmem:[%s6126 + $0x5c] sm:$0xf] %v6173
                %v6175 = vld [vmem:[%s6125 + $0x60] sm:$0xf]
                %6176 = vst [vmem:[%s6126 + $0x60] sm:$0xf] %v6175
                %v6177 = vld [vmem:[%s6125 + $0x64] sm:$0xf]
                %6178 = vst [vmem:[%s6126 + $0x64] sm:$0xf] %v6177
                %v6179 = vld [vmem:[%s6125 + $0x68] sm:$0xf]
                %6180 = vst [vmem:[%s6126 + $0x68] sm:$0xf] %v6179
                %v6181 = vld [vmem:[%s6125 + $0x6c] sm:$0xf]
                %6182 = vst [vmem:[%s6126 + $0x6c] sm:$0xf] %v6181
                %v6183 = vld [vmem:[%s6125 + $0x70] sm:$0xf]
                %6184 = vst [vmem:[%s6126 + $0x70] sm:$0xf] %v6183
                %v6185 = vld [vmem:[%s6125 + $0x74] sm:$0xf]
                %6186 = vst [vmem:[%s6126 + $0x74] sm:$0xf] %v6185
                %v6187 = vld [vmem:[%s6125 + $0x78] sm:$0xf]
                %6188 = vst [vmem:[%s6126 + $0x78] sm:$0xf] %v6187
                %v6189 = vld [vmem:[%s6125 + $0x7c] sm:$0xf]
                %6190 = vst [vmem:[%s6126 + $0x7c] sm:$0xf] %v6189
                %v6191 = vld [vmem:[%s6125 + $0x80] sm:$0xf]
                %6192 = vst [vmem:[%s6126 + $0x100] sm:$0xf] %v6191
                %v6193 = vld [vmem:[%s6125 + $0x84] sm:$0xf]
                %6194 = vst [vmem:[%s6126 + $0x104] sm:$0xf] %v6193
                %v6195 = vld [vmem:[%s6125 + $0x88] sm:$0xf]
                %6196 = vst [vmem:[%s6126 + $0x108] sm:$0xf] %v6195
                %v6197 = vld [vmem:[%s6125 + $0x8c] sm:$0xf]
                %6198 = vst [vmem:[%s6126 + $0x10c] sm:$0xf] %v6197
                %v6199 = vld [vmem:[%s6125 + $0x90] sm:$0xf]
                %6200 = vst [vmem:[%s6126 + $0x110] sm:$0xf] %v6199
                %v6201 = vld [vmem:[%s6125 + $0x94] sm:$0xf]
                %6202 = vst [vmem:[%s6126 + $0x114] sm:$0xf] %v6201
                %v6203 = vld [vmem:[%s6125 + $0x98] sm:$0xf]
                %6204 = vst [vmem:[%s6126 + $0x118] sm:$0xf] %v6203
                %v6205 = vld [vmem:[%s6125 + $0x9c] sm:$0xf]
                %6206 = vst [vmem:[%s6126 + $0x11c] sm:$0xf] %v6205
                %v6207 = vld [vmem:[%s6125 + $0xa0] sm:$0xf]
                %6208 = vst [vmem:[%s6126 + $0x120] sm:$0xf] %v6207
                %v6209 = vld [vmem:[%s6125 + $0xa4] sm:$0xf]
                %6210 = vst [vmem:[%s6126 + $0x124] sm:$0xf] %v6209
                %v6211 = vld [vmem:[%s6125 + $0xa8] sm:$0xf]
                %6212 = vst [vmem:[%s6126 + $0x128] sm:$0xf] %v6211
                %v6213 = vld [vmem:[%s6125 + $0xac] sm:$0xf]
                %6214 = vst [vmem:[%s6126 + $0x12c] sm:$0xf] %v6213
                %v6215 = vld [vmem:[%s6125 + $0xb0] sm:$0xf]
                %6216 = vst [vmem:[%s6126 + $0x130] sm:$0xf] %v6215
                %v6217 = vld [vmem:[%s6125 + $0xb4] sm:$0xf]
                %6218 = vst [vmem:[%s6126 + $0x134] sm:$0xf] %v6217
                %v6219 = vld [vmem:[%s6125 + $0xb8] sm:$0xf]
                %6220 = vst [vmem:[%s6126 + $0x138] sm:$0xf] %v6219
                %v6221 = vld [vmem:[%s6125 + $0xbc] sm:$0xf]
                %6222 = vst [vmem:[%s6126 + $0x13c] sm:$0xf] %v6221
                %v6223 = vld [vmem:[%s6125 + $0xc0] sm:$0xf]
                %6224 = vst [vmem:[%s6126 + $0x140] sm:$0xf] %v6223
                %v6225 = vld [vmem:[%s6125 + $0xc4] sm:$0xf]
                %6226 = vst [vmem:[%s6126 + $0x144] sm:$0xf] %v6225
                %v6227 = vld [vmem:[%s6125 + $0xc8] sm:$0xf]
                %6228 = vst [vmem:[%s6126 + $0x148] sm:$0xf] %v6227
                %v6229 = vld [vmem:[%s6125 + $0xcc] sm:$0xf]
                %6230 = vst [vmem:[%s6126 + $0x14c] sm:$0xf] %v6229
                %v6231 = vld [vmem:[%s6125 + $0xd0] sm:$0xf]
                %6232 = vst [vmem:[%s6126 + $0x150] sm:$0xf] %v6231
                %v6233 = vld [vmem:[%s6125 + $0xd4] sm:$0xf]
                %6234 = vst [vmem:[%s6126 + $0x154] sm:$0xf] %v6233
                %v6235 = vld [vmem:[%s6125 + $0xd8] sm:$0xf]
                %6236 = vst [vmem:[%s6126 + $0x158] sm:$0xf] %v6235
                %v6237 = vld [vmem:[%s6125 + $0xdc] sm:$0xf]
                %6238 = vst [vmem:[%s6126 + $0x15c] sm:$0xf] %v6237
                %v6239 = vld [vmem:[%s6125 + $0xe0] sm:$0xf]
                %6240 = vst [vmem:[%s6126 + $0x160] sm:$0xf] %v6239
                %v6241 = vld [vmem:[%s6125 + $0xe4] sm:$0xf]
                %6242 = vst [vmem:[%s6126 + $0x164] sm:$0xf] %v6241
                %v6243 = vld [vmem:[%s6125 + $0xe8] sm:$0xf]
                %6244 = vst [vmem:[%s6126 + $0x168] sm:$0xf] %v6243
                %v6245 = vld [vmem:[%s6125 + $0xec] sm:$0xf]
                %6246 = vst [vmem:[%s6126 + $0x16c] sm:$0xf] %v6245
                %v6247 = vld [vmem:[%s6125 + $0xf0] sm:$0xf]
                %6248 = vst [vmem:[%s6126 + $0x170] sm:$0xf] %v6247
                %v6249 = vld [vmem:[%s6125 + $0xf4] sm:$0xf]
                %6250 = vst [vmem:[%s6126 + $0x174] sm:$0xf] %v6249
                %v6251 = vld [vmem:[%s6125 + $0xf8] sm:$0xf]
                %6252 = vst [vmem:[%s6126 + $0x178] sm:$0xf] %v6251
                %v6253 = vld [vmem:[%s6125 + $0xfc] sm:$0xf]
                %6254 = vst [vmem:[%s6126 + $0x17c] sm:$0xf] %v6253
              $region53: #{tpu_custom_call.1} parent=47 // loop_footer
                %s6124 = sadd.s32 1, %s6120
              $region54: #{tpu_custom_call.1} parent=47 // loop_footer_branch
                %6119 = sbr.rel target = $region50
              $region55: #{tpu_custom_call.1} parent=47 // loop_exit
                _
            $region48: #{tpu_custom_call.1} parent=39 // pred_fallthru
              _
          $region40: #{tpu_custom_call.1} parent=35 // pred_fallthru
            _
          %6402 = vnop
        $region36: #{tpu_custom_call.1} parent=31 // pred_fallthru
          _
        // Predicated region
        $region74: #{tpu_custom_call.1} parent=31 // pred_check
          %p6403 = pneg %p135
        $region75: #{tpu_custom_call.1} parent=31 // pred_check_branch
          %6405 = sbr.rel (%p6403) target = $region77
        $region76: #{tpu_custom_call.1} parent=31 // pred_region
          %s6407 = ssub.s32 32, 32
          %6408 = vsyncadd %s6097, %s6407
          %s6409 = smul.addr %s23, 32
          %s6410 = scalar_lea.hbm %s4, %s6409
          %s6412 = sshll.u32 %s6100, 4
          %s6413 = int_to_ptr.vmem [resolvable:$true] %s6412
          %6415 = dma.vmem_to_hbm [thread:$0]  %s6413, 32, %s6410, %s6097
        $region77: #{tpu_custom_call.1} parent=31 // pred_fallthru
          _
        // Predicated region
        $region78: #{tpu_custom_call.1} parent=31 // pred_check
          %p6416 = pneg %p161
        $region79: #{tpu_custom_call.1} parent=31 // pred_check_branch
          %6418 = sbr.rel (%p6416) target = $region81
        $region80: #{tpu_custom_call.1} parent=31 // pred_region
          %s6420 = ssub.s32 32, 32
          %6421 = vsyncadd %s6102, %s6420
          %s6422 = smul.addr %s23, 32
          %s6423 = scalar_lea.hbm %s5, %s6422
          %s6425 = sshll.u32 %s6105, 4
          %s6426 = int_to_ptr.vmem [resolvable:$true] %s6425
          %6428 = dma.vmem_to_hbm [thread:$0]  %s6426, 32, %s6423, %s6102
        $region81: #{tpu_custom_call.1} parent=31 // pred_fallthru
          _
      $region32: #{tpu_custom_call.1} parent=5 // pred_fallthru
        _
      %p6429 = scmp.le.s32.totalorder 2, %s18
      // Predicated region
      $region82: #{tpu_custom_call.1} parent=5 // pred_check
        %p6430 = pneg %p6429
      $region83: #{tpu_custom_call.1} parent=5 // pred_check_branch
        %6432 = sbr.rel (%p6430) target = $region85
      $region84: #{tpu_custom_call.1} parent=5 // pred_region
        %s6433 = ssub.s32 %s18, 2
        // Predicated region
        $region86: #{tpu_custom_call.1} parent=84 // pred_check
          %p6434 = pneg %p115
        $region87: #{tpu_custom_call.1} parent=84 // pred_check_branch
          %6436 = sbr.rel (%p6434) target = $region89
        $region88: #{tpu_custom_call.1} parent=84 // pred_region
          %s6437 = sand.u32 %s100, 1
          %s6438 = sand.u32 %s100, 1
          %s6439 = smul.addr %s6438, 256
          %s6440 = scalar_lea.vmem [#allocation4], %s6439
        $region89: #{tpu_custom_call.1} parent=84 // pred_fallthru
          _
        // Predicated region
        $region90: #{tpu_custom_call.1} parent=84 // pred_check
          %p6441 = pneg %p141
        $region91: #{tpu_custom_call.1} parent=84 // pred_check_branch
          %6443 = sbr.rel (%p6441) target = $region93
        $region92: #{tpu_custom_call.1} parent=84 // pred_region
          %s6444 = sand.u32 %s126, 1
          %s6445 = scalar_lea.sflag [#allocation6], %s6444
          %s6446 = sand.u32 %s126, 1
          %s6447 = smul.addr %s6446, 2
          %s6448 = scalar_lea.vmem [#allocation5], %s6447
          %6449 = dma.done %s6445, 32
        $region93: #{tpu_custom_call.1} parent=84 // pred_fallthru
          _
        // Predicated region
        $region94: #{tpu_custom_call.1} parent=84 // pred_check
          %p6450 = pneg %p167
        $region95: #{tpu_custom_call.1} parent=84 // pred_check_branch
          %6452 = sbr.rel (%p6450) target = $region97
        $region96: #{tpu_custom_call.1} parent=84 // pred_region
          %s6453 = sand.u32 %s152, 1
          %s6454 = scalar_lea.sflag [#allocation8], %s6453
          %s6455 = sand.u32 %s152, 1
          %s6456 = smul.addr %s6455, 2
          %s6457 = scalar_lea.vmem [#allocation7], %s6456
          %6458 = dma.done %s6454, 32
        $region97: #{tpu_custom_call.1} parent=84 // pred_fallthru
          _
      $region85: #{tpu_custom_call.1} parent=5 // pred_fallthru
        _
    $region6: #{tpu_custom_call.1} parent=1 // loop_footer
      %s22 = sadd.s32 1, %s18
    $region7: #{tpu_custom_call.1} parent=1 // loop_footer_branch
      %17 = sbr.rel target = $region3
    $region8: #{tpu_custom_call.1} parent=1 // loop_exit
      _
    %6459 = vsyncpa [#allocation6], 1
    %s6460 = scalar_lea.sflag [#allocation6], 1
    %6461 = vsyncpa %s6460, 1
    %6462 = vsyncpa [#allocation8], 1
    %s6463 = scalar_lea.sflag [#allocation8], 1
    %6464 = vsyncpa %s6463, 1

</llo_original>
